<compile_context>
chip_gen: v5e
topology: v5e:2x2
jax: 0.10.0
libtpu: 0.0.40
codegen_flags: <defaults>
</compile_context>

<pallas_src>
import jax
import jax.numpy as jnp
from jax.experimental import pallas as pl
from jax.experimental.pallas import tpu as pltpu


# ----------------------------------------------------------------------------
# Fused kernel: LSTM (unrolled, state in vregs) + linear + ResNet head + final FC
# ----------------------------------------------------------------------------
def lstm_resnet_kernel(x2d_ref, lstm_w_ref, lstm_b_ref, lin_w_ref, lin_b_ref,
                       fc_wt_ref, wp_ref, bp_ref,
                       w64_hbm, win2_hbm, wsm2_hbm, win3_hbm, wsm3_hbm,
                       win4_hbm, wsm4_hbm,
                       out_ref,
                       w64_v, win2_v, wsm2_v, win3_v, wsm3_v, win4_v, wsm4_v,
                       copy_sem):
    f32 = jnp.float32
    bf16 = jnp.bfloat16
    B = out_ref.shape[0]
    I = x2d_ref.shape[1]
    H4 = lstm_w_ref.shape[1]          # 4H (== 128 here -> one lane-dense vreg)
    H = H4 // 4
    T = x2d_ref.shape[0] // B

    # -------- kick off ResNet head-weight DMAs; they hide behind the LSTM ----
    head_copies = ((w64_hbm, w64_v), (win2_hbm, win2_v), (wsm2_hbm, wsm2_v),
                   (win3_hbm, win3_v), (wsm3_hbm, wsm3_v),
                   (win4_hbm, win4_v), (wsm4_hbm, wsm4_v))
    for i, (src, dst) in enumerate(head_copies):
        pltpu.make_async_copy(src, dst, copy_sem.at[i]).start()

    def fdot(a, w):                   # f32 matmul, f32 accumulation
        return jnp.dot(a, w, preferred_element_type=f32)

    def bdot(a, w):                   # bf16 MXU matmul, f32 accumulation
        return jnp.dot(a.astype(bf16), w, preferred_element_type=f32)

    def sigm(v):                      # sigmoid via a single tanh EUP push
        return 0.5 * jnp.tanh(0.5 * v) + 0.5

    # ---------------- LSTM (2 layers, PyTorch gate order i,f,g,o) ------------
    # Gate-packed bf16 weights, stacked by rows in one slab (row offsets are
    # multiples of the bf16 sublane tile, so these slices are clean views).
    wih0 = lstm_w_ref[0:I, :]                     # (I,  4H)
    whh0 = lstm_w_ref[I:I + H, :]                 # (H,  4H)
    w1 = lstm_w_ref[I + H:I + 3 * H, :]           # (2H, 4H) = [wih1 ; whh1]
    b0 = lstm_b_ref[0:1, :]                       # (1, 4H)  (b_ih + b_hh, layer 0)
    b1 = jnp.broadcast_to(lstm_b_ref[1:2, :], (B, H4))   # hoisted broadcast (layer 1)

    # Hoisted layer-0 input projection: ONE (T*B, I) @ (I, 4H) matmul + bias.
    xp0 = bdot(x2d_ref[...], wih0) + b0           # (T*B, 4H) f32

    def cell(z, c):                               # z: (B, 4H) pre-activations
        i = sigm(z[:, 0 * H:1 * H])
        f = sigm(z[:, 1 * H:2 * H])
        g = jnp.tanh(z[:, 2 * H:3 * H])
        o = sigm(z[:, 3 * H:4 * H])
        c_new = f * c + i * g
        return o * jnp.tanh(c_new), c_new

    h0 = jnp.zeros((B, H), f32); c0 = jnp.zeros((B, H), f32)
    h1 = jnp.zeros((B, H), f32); c1 = jnp.zeros((B, H), f32)

    # T is small & static -> fully unrolled; states stay in vregs.
    # TODO(synk): if T is scaled well beyond 8, switch to lax.fori_loop carrying
    # (h0,c0,h1,c1) to bound live ranges.
    for t in range(T):
        z0 = xp0[t * B:(t + 1) * B, :] + bdot(h0, whh0)           # 1 MXU op
        h0, c0 = cell(z0, c0)
        hcat = jnp.concatenate([h0, h1], axis=1)                  # (B, 2H)
        z1 = bdot(hcat, w1) + b1                                  # 1 MXU op
        h1, c1 = cell(z1, c1)

    # ---------------- Linear H -> 64 (feeds ResNet head AND final FC) --------
    feat64 = fdot(h1, lin_w_ref[...]) + lin_b_ref[...]            # (B, 64)

    # ---------------- wait for the head weights (DMAs issued at the top) -----
    for i, (src, dst) in enumerate(head_copies):
        pltpu.make_async_copy(src, dst, copy_sem.at[i]).wait()

    # ---------------- ResNet18-1D head (L == 1 => matmul chain) --------------
    # stem conv1 + bn1 + relu (+ maxpool identity at L==1); folded BN bias is 0.
    r = jnp.maximum(bdot(feat64, w64_v[0]), 0.0)

    # layer1: two identity residual blocks (64 -> 64)
    for blk in range(2):
        out = jnp.maximum(bdot(r, w64_v[1 + 2 * blk]), 0.0)
        out = bdot(out, w64_v[2 + 2 * blk])
        r = jnp.maximum(out + r, 0.0)

    # layer2..layer4: block1 conv1 and downsample fused into one packed matmul
    for wcat_v, wsm_v in ((win2_v, wsm2_v), (win3_v, wsm3_v), (win4_v, wsm4_v)):
        c_out = wsm_v.shape[1]
        tmp = bdot(r, wcat_v[...])                 # (B, 2*c_out) = [conv1 | downsample]
        out = jnp.maximum(tmp[:, :c_out], 0.0)     # block1 conv1+bn+relu
        out = bdot(out, wsm_v[0])                  # block1 conv2+bn
        r = jnp.maximum(out + tmp[:, c_out:], 0.0)
        out = jnp.maximum(bdot(r, wsm_v[1]), 0.0)  # block2 conv1+bn+relu
        out = bdot(out, wsm_v[2])                  # block2 conv2+bn
        r = jnp.maximum(out + r, 0.0)

    # avgpool (identity) + ResNet fc folded into the final FC:
    #   out = feat64 @ fc_wt + r @ (rfc_w @ fc_wb) + (rfc_b @ fc_wb + fc_b)
    out_ref[...] = fdot(feat64, fc_wt_ref[...]) + fdot(r, wp_ref[...]) + bp_ref[...]


def lstm_resnet_forward(x_btI, params):
    """x_btI: (B, T, I) batch_first; params: packed tuple from build_params."""
    (lstm_w, lstm_b, lin_w, lin_b, fc_wt, wprime, bprime,
     w64, win2, wsm2, win3, wsm3, win4, wsm4) = params
    B, T, I = x_btI.shape
    num_classes = fc_wt.shape[1]
    # Time-major 2-D slab for the single hoisted input-projection matmul.
    x_tm2d = jnp.transpose(x_btI, (1, 0, 2)).reshape(T * B, I)

    head_ws = (w64, win2, wsm2, win3, wsm3, win4, wsm4)
    small_args = (x_tm2d, lstm_w, lstm_b, lin_w, lin_b, fc_wt, wprime, bprime)

    vmem = pl.BlockSpec(memory_space=pltpu.MemorySpace.VMEM)
    hbm = pl.BlockSpec(memory_space=pl.ANY)   # head weights: manual overlapped DMA

    return pl.pallas_call(
        lstm_resnet_kernel,
        out_shape=jax.ShapeDtypeStruct((B, num_classes), jnp.float32),
        in_specs=[vmem] * len(small_args) + [hbm] * len(head_ws),
        out_specs=vmem,
        scratch_shapes=[pltpu.VMEM(w.shape, w.dtype) for w in head_ws]
                      + [pltpu.SemaphoreType.DMA((len(head_ws),))],
        compiler_params=pltpu.CompilerParams(
            # ~2.7 MB of head scratch + small inputs: comfortably under the scoped
            # limit on every generation (budgeted against v7x's 64 MiB physical).
            vmem_limit_bytes=32 * 1024 * 1024),
    )(*(small_args + head_ws))
    # TODO(synk): for production batch sizes, add a batch grid axis with
    # dimension_semantics=("parallel",) so both TensorCores are used on v7x.


# ----------------------------------------------------------------------------
# Deterministic parameter construction (PyTorch-like inits) + BN folding + packing
# ----------------------------------------------------------------------------
class KeyGen:
    def __init__(self, key):
        self.key = key

    def __call__(self):
        self.key, sub = jax.random.split(self.key)
        return sub


def _uniform(key, shape, bound):
    return jax.random.uniform(key, shape, dtype=jnp.float32,
                              minval=-bound, maxval=bound)


def conv_bn_fold(kg, c_in, c_out, ksize, tap):
    """Conv1d(c_in,c_out,k,bias=False) + BatchNorm1d(c_out) (inference mode,
    mean=0, var=1, gamma=1, beta=0, eps=1e-5) on a length-1 input: only kernel
    tap `tap` touches real data -> a (c_in, c_out) matmul with zero bias."""
    bound = 1.0 / (c_in * ksize) ** 0.5
    w = _uniform(kg(), (c_out, c_in, ksize), bound)      # PyTorch Conv1d layout
    scale = (1.0 + 1e-5) ** -0.5                         # folded BN scale
    return (w[:, :, tap] * scale).T.astype(jnp.float32)  # (c_in, c_out)


def build_params(input_size, hidden_size, num_classes, kg):
    H = hidden_size
    I = input_size
    kb = 1.0 / H ** 0.5
    bf16 = jnp.bfloat16

    # --- LSTM (2 layers), PyTorch layout, gate order i,f,g,o ---
    wih0 = _uniform(kg(), (4 * H, I), kb)
    whh0 = _uniform(kg(), (4 * H, H), kb)
    bih0 = _uniform(kg(), (4 * H,), kb)
    bhh0 = _uniform(kg(), (4 * H,), kb)
    wih1 = _uniform(kg(), (4 * H, H), kb)
    whh1 = _uniform(kg(), (4 * H, H), kb)
    bih1 = _uniform(kg(), (4 * H,), kb)
    bhh1 = _uniform(kg(), (4 * H,), kb)

    # Gate-packed (in, 4H) weights stacked by rows into one bf16 slab:
    #   rows [0:I]      = wih0.T      (hoisted layer-0 input projection)
    #   rows [I:I+H]    = whh0.T      (layer-0 hidden projection)
    #   rows [I+H:I+3H] = [wih1.T ; whh1.T]   (fused layer-1 projection)
    lstm_w = jnp.concatenate([wih0.T, whh0.T, wih1.T, whh1.T], axis=0).astype(bf16)
    lstm_b = jnp.stack([bih0 + bhh0, bih1 + bhh1], axis=0)          # (2, 4H) f32

    # --- Linear H -> 64 ---
    lin_w = _uniform(kg(), (64, H), kb).T                            # (H, 64)
    lin_b = _uniform(kg(), (64,), kb).reshape(1, 64)

    # --- ResNet conv+BN folded weights (bf16, MXU-native) ---
    conv1 = conv_bn_fold(kg, 64, 64, 7, 3)                           # stem, center tap
    layer1 = [conv_bn_fold(kg, 64, 64, 3, 1) for _ in range(4)]      # b1c1,b1c2,b2c1,b2c2
    w64 = jnp.stack([conv1] + layer1).astype(bf16)                   # (5, 64, 64)

    def stage(c_in, c_out):
        b1c1 = conv_bn_fold(kg, c_in, c_out, 3, 1)
        b1c2 = conv_bn_fold(kg, c_out, c_out, 3, 1)
        ds = conv_bn_fold(kg, c_in, c_out, 1, 0)
        b2c1 = conv_bn_fold(kg, c_out, c_out, 3, 1)
        b2c2 = conv_bn_fold(kg, c_out, c_out, 3, 1)
        wcat = jnp.concatenate([b1c1, ds], axis=1).astype(bf16)      # (c_in, 2*c_out)
        wsm = jnp.stack([b1c2, b2c1, b2c2]).astype(bf16)             # (3, c_out, c_out)
        return wcat, wsm

    win2, wsm2 = stage(64, 128)
    win3, wsm3 = stage(128, 256)
    win4, wsm4 = stage(256, 512)

    # --- ResNet fc (512 -> C) + final fc (66 -> C); rfc folded into the final fc ---
    kr = 1.0 / 512 ** 0.5
    rfc_w = _uniform(kg(), (num_classes, 512), kr).T                 # (512, C)
    rfc_b = _uniform(kg(), (num_classes,), kr).reshape(1, num_classes)
    kf = 1.0 / 66 ** 0.5
    fc_w = _uniform(kg(), (num_classes, 66), kf)
    fc_b = _uniform(kg(), (num_classes,), kf).reshape(1, num_classes)
    fc_wt = fc_w[:, :64].T                                           # (64, C)
    fc_wb = fc_w[:, 64:].T                                           # (2, C)
    wprime = jnp.dot(rfc_w, fc_wb)                                   # (512, C)  exact fold
    bprime = jnp.dot(rfc_b, fc_wb) + fc_b                            # (1, C)

    kernel_params = (lstm_w, lstm_b, lin_w, lin_b, fc_wt, wprime, bprime,
                     w64, win2, wsm2, win3, wsm3, win4, wsm4)
    ref_extras = dict(rfc_w=rfc_w, rfc_b=rfc_b, fc_wt=fc_wt, fc_wb=fc_wb, fc_b=fc_b)
    return kernel_params, ref_extras


# ----------------------------------------------------------------------------
# Pure-JAX reference: UNFUSED structure (per-step projections, separate downsample
# branch, un-folded ResNet fc) so the algebraic fusions in the kernel are validated.
# ----------------------------------------------------------------------------
def ref_forward(x_btI, params, extras):
    (lstm_w, lstm_b, lin_w, lin_b, fc_wt, wprime, bprime,
     w64, win2, wsm2, win3, wsm3, win4, wsm4) = params
    B, T, I = x_btI.shape
    H = lstm_w.shape[1] // 4
    f32 = jnp.float32
    bf16 = jnp.bfloat16

    wih0 = lstm_w[0:I, :]
    whh0 = lstm_w[I:I + H, :]
    wih1 = lstm_w[I + H:I + 2 * H, :]
    whh1 = lstm_w[I + 2 * H:I + 3 * H, :]
    b0 = lstm_b[0:1, :]
    b1 = lstm_b[1:2, :]

    def bdot(a, w):
        return jnp.dot(a.astype(bf16), w, preferred_element_type=f32)

    def fdot(a, w):
        return jnp.dot(a, w, preferred_element_type=f32)

    def sigm(v):
        return 0.5 * jnp.tanh(0.5 * v) + 0.5

    def cell(z, c):
        i = sigm(z[:, :H]); f = sigm(z[:, H:2 * H])
        g = jnp.tanh(z[:, 2 * H:3 * H]); o = sigm(z[:, 3 * H:])
        c = f * c + i * g
        return o * jnp.tanh(c), c

    h0 = jnp.zeros((B, H), f32); c0 = jnp.zeros((B, H), f32)
    h1 = jnp.zeros((B, H), f32); c1 = jnp.zeros((B, H), f32)
    for t in range(T):
        xt = x_btI[:, t, :]
        h0, c0 = cell(bdot(xt, wih0) + bdot(h0, whh0) + b0, c0)
        h1, c1 = cell(bdot(h0, wih1) + bdot(h1, whh1) + b1, c1)

    feat64 = fdot(h1, lin_w) + lin_b
    r = jnp.maximum(bdot(feat64, w64[0]), 0.0)
    for blk in range(2):
        out = jnp.maximum(bdot(r, w64[1 + 2 * blk]), 0.0)
        out = bdot(out, w64[2 + 2 * blk])
        r = jnp.maximum(out + r, 0.0)
    for wcat, wsm in ((win2, wsm2), (win3, wsm3), (win4, wsm4)):
        c_out = wsm.shape[1]
        out = jnp.maximum(bdot(r, wcat[:, :c_out]), 0.0)   # block1 conv1+bn+relu
        out = bdot(out, wsm[0])                            # block1 conv2+bn
        res = bdot(r, wcat[:, c_out:])                     # downsample conv+bn
        r = jnp.maximum(out + res, 0.0)
        out = jnp.maximum(bdot(r, wsm[1]), 0.0)
        out = bdot(out, wsm[2])
        r = jnp.maximum(out + r, 0.0)

    resnet_out = fdot(r, extras["rfc_w"]) + extras["rfc_b"]
    return (fdot(feat64, extras["fc_wt"])
            + fdot(resnet_out, extras["fc_wb"]) + extras["fc_b"])


# ----------------------------------------------------------------------------
if __name__ == "__main__":
    B, T, I, H, NUM_CLASSES = 2, 8, 16, 32, 2   # 4H == 128: one lane-dense vreg

    kg = KeyGen(jax.random.PRNGKey(0))
    params, extras = build_params(I, H, NUM_CLASSES, kg)
    x = jax.random.normal(kg(), (B, T, I), dtype=jnp.float32)

    out = lstm_resnet_forward(x, params)
    out = jax.block_until_ready(out)

    ref = ref_forward(x, params, extras)
    assert out.shape == (B, NUM_CLASSES)
    assert jnp.allclose(out, ref, atol=1e-2, rtol=1e-2), (out, ref)

    print("KERNEL_OK")
</pallas_src>

<mosaic_0001>
module attributes {stable_mosaic.version = 11 : i64} {
  func.func @lstm_resnet_kernel(%arg0: memref<16x16xf32, #tpu.memory_space<vmem>>, %arg1: memref<112x128xbf16, #tpu.memory_space<vmem>>, %arg2: memref<2x128xf32, #tpu.memory_space<vmem>>, %arg3: memref<32x64xf32, #tpu.memory_space<vmem>>, %arg4: memref<1x64xf32, #tpu.memory_space<vmem>>, %arg5: memref<64x2xf32, #tpu.memory_space<vmem>>, %arg6: memref<512x2xf32, #tpu.memory_space<vmem>>, %arg7: memref<1x2xf32, #tpu.memory_space<vmem>>, %arg8: memref<5x64x64xbf16, #tpu.memory_space<any>>, %arg9: memref<64x256xbf16, #tpu.memory_space<any>>, %arg10: memref<3x128x128xbf16, #tpu.memory_space<any>>, %arg11: memref<128x512xbf16, #tpu.memory_space<any>>, %arg12: memref<3x256x256xbf16, #tpu.memory_space<any>>, %arg13: memref<256x1024xbf16, #tpu.memory_space<any>>, %arg14: memref<3x512x512xbf16, #tpu.memory_space<any>>, %arg15: memref<2x2xf32, #tpu.memory_space<vmem>>, %arg16: memref<5x64x64xbf16, #tpu.memory_space<vmem>>, %arg17: memref<64x256xbf16, #tpu.memory_space<vmem>>, %arg18: memref<3x128x128xbf16, #tpu.memory_space<vmem>>, %arg19: memref<128x512xbf16, #tpu.memory_space<vmem>>, %arg20: memref<3x256x256xbf16, #tpu.memory_space<vmem>>, %arg21: memref<256x1024xbf16, #tpu.memory_space<vmem>>, %arg22: memref<3x512x512xbf16, #tpu.memory_space<vmem>>, %arg23: memref<7x!tpu.dma_semaphore, #tpu.memory_space<semaphore_mem>>) attributes {dimension_semantics = [], scalar_prefetch = 0 : i64, scratch_operands = 8 : i64, tpu.core_type = #tpu.core_type<tc>} {
    %c0_i32 = arith.constant 0 : i32
    %0 = tpu.memref_slice %arg23[%c0_i32] : memref<7x!tpu.dma_semaphore, #tpu.memory_space<semaphore_mem>> -> memref<1x!tpu.dma_semaphore, #tpu.memory_space<semaphore_mem>>
    %1 = tpu.memref_squeeze %0 : memref<1x!tpu.dma_semaphore, #tpu.memory_space<semaphore_mem>> -> memref<!tpu.dma_semaphore, #tpu.memory_space<semaphore_mem>>
    tpu.enqueue_dma source(%arg8 : memref<5x64x64xbf16, #tpu.memory_space<any>>) target(%arg16 : memref<5x64x64xbf16, #tpu.memory_space<vmem>>) target_semaphore(%1 : memref<!tpu.dma_semaphore, #tpu.memory_space<semaphore_mem>>)
    %c1_i32 = arith.constant 1 : i32
    %2 = tpu.memref_slice %arg23[%c1_i32] : memref<7x!tpu.dma_semaphore, #tpu.memory_space<semaphore_mem>> -> memref<1x!tpu.dma_semaphore, #tpu.memory_space<semaphore_mem>>
    %3 = tpu.memref_squeeze %2 : memref<1x!tpu.dma_semaphore, #tpu.memory_space<semaphore_mem>> -> memref<!tpu.dma_semaphore, #tpu.memory_space<semaphore_mem>>
    tpu.enqueue_dma source(%arg9 : memref<64x256xbf16, #tpu.memory_space<any>>) target(%arg17 : memref<64x256xbf16, #tpu.memory_space<vmem>>) target_semaphore(%3 : memref<!tpu.dma_semaphore, #tpu.memory_space<semaphore_mem>>)
    %c2_i32 = arith.constant 2 : i32
    %4 = tpu.memref_slice %arg23[%c2_i32] : memref<7x!tpu.dma_semaphore, #tpu.memory_space<semaphore_mem>> -> memref<1x!tpu.dma_semaphore, #tpu.memory_space<semaphore_mem>>
    %5 = tpu.memref_squeeze %4 : memref<1x!tpu.dma_semaphore, #tpu.memory_space<semaphore_mem>> -> memref<!tpu.dma_semaphore, #tpu.memory_space<semaphore_mem>>
    tpu.enqueue_dma source(%arg10 : memref<3x128x128xbf16, #tpu.memory_space<any>>) target(%arg18 : memref<3x128x128xbf16, #tpu.memory_space<vmem>>) target_semaphore(%5 : memref<!tpu.dma_semaphore, #tpu.memory_space<semaphore_mem>>)
    %c3_i32 = arith.constant 3 : i32
    %6 = tpu.memref_slice %arg23[%c3_i32] : memref<7x!tpu.dma_semaphore, #tpu.memory_space<semaphore_mem>> -> memref<1x!tpu.dma_semaphore, #tpu.memory_space<semaphore_mem>>
    %7 = tpu.memref_squeeze %6 : memref<1x!tpu.dma_semaphore, #tpu.memory_space<semaphore_mem>> -> memref<!tpu.dma_semaphore, #tpu.memory_space<semaphore_mem>>
    tpu.enqueue_dma source(%arg11 : memref<128x512xbf16, #tpu.memory_space<any>>) target(%arg19 : memref<128x512xbf16, #tpu.memory_space<vmem>>) target_semaphore(%7 : memref<!tpu.dma_semaphore, #tpu.memory_space<semaphore_mem>>)
    %c4_i32 = arith.constant 4 : i32
    %8 = tpu.memref_slice %arg23[%c4_i32] : memref<7x!tpu.dma_semaphore, #tpu.memory_space<semaphore_mem>> -> memref<1x!tpu.dma_semaphore, #tpu.memory_space<semaphore_mem>>
    %9 = tpu.memref_squeeze %8 : memref<1x!tpu.dma_semaphore, #tpu.memory_space<semaphore_mem>> -> memref<!tpu.dma_semaphore, #tpu.memory_space<semaphore_mem>>
    tpu.enqueue_dma source(%arg12 : memref<3x256x256xbf16, #tpu.memory_space<any>>) target(%arg20 : memref<3x256x256xbf16, #tpu.memory_space<vmem>>) target_semaphore(%9 : memref<!tpu.dma_semaphore, #tpu.memory_space<semaphore_mem>>)
    %c5_i32 = arith.constant 5 : i32
    %10 = tpu.memref_slice %arg23[%c5_i32] : memref<7x!tpu.dma_semaphore, #tpu.memory_space<semaphore_mem>> -> memref<1x!tpu.dma_semaphore, #tpu.memory_space<semaphore_mem>>
    %11 = tpu.memref_squeeze %10 : memref<1x!tpu.dma_semaphore, #tpu.memory_space<semaphore_mem>> -> memref<!tpu.dma_semaphore, #tpu.memory_space<semaphore_mem>>
    tpu.enqueue_dma source(%arg13 : memref<256x1024xbf16, #tpu.memory_space<any>>) target(%arg21 : memref<256x1024xbf16, #tpu.memory_space<vmem>>) target_semaphore(%11 : memref<!tpu.dma_semaphore, #tpu.memory_space<semaphore_mem>>)
    %c6_i32 = arith.constant 6 : i32
    %12 = tpu.memref_slice %arg23[%c6_i32] : memref<7x!tpu.dma_semaphore, #tpu.memory_space<semaphore_mem>> -> memref<1x!tpu.dma_semaphore, #tpu.memory_space<semaphore_mem>>
    %13 = tpu.memref_squeeze %12 : memref<1x!tpu.dma_semaphore, #tpu.memory_space<semaphore_mem>> -> memref<!tpu.dma_semaphore, #tpu.memory_space<semaphore_mem>>
    tpu.enqueue_dma source(%arg14 : memref<3x512x512xbf16, #tpu.memory_space<any>>) target(%arg22 : memref<3x512x512xbf16, #tpu.memory_space<vmem>>) target_semaphore(%13 : memref<!tpu.dma_semaphore, #tpu.memory_space<semaphore_mem>>)
    %c0 = arith.constant 0 : index
    %c0_0 = arith.constant 0 : index
    %14 = vector.load %arg1[%c0, %c0_0] : memref<112x128xbf16, #tpu.memory_space<vmem>>, vector<16x128xbf16>
    %c16 = arith.constant 16 : index
    %c0_1 = arith.constant 0 : index
    %15 = vector.load %arg1[%c16, %c0_1] : memref<112x128xbf16, #tpu.memory_space<vmem>>, vector<32x128xbf16>
    %c48 = arith.constant 48 : index
    %c0_2 = arith.constant 0 : index
    %16 = vector.load %arg1[%c48, %c0_2] : memref<112x128xbf16, #tpu.memory_space<vmem>>, vector<64x128xbf16>
    %c0_3 = arith.constant 0 : index
    %c0_4 = arith.constant 0 : index
    %17 = vector.load %arg2[%c0_3, %c0_4] : memref<2x128xf32, #tpu.memory_space<vmem>>, vector<1x128xf32>
    %c1 = arith.constant 1 : index
    %c0_5 = arith.constant 0 : index
    %18 = vector.load %arg2[%c1, %c0_5] : memref<2x128xf32, #tpu.memory_space<vmem>>, vector<1x128xf32>
    %19 = vector.shape_cast %18 : vector<1x128xf32> to vector<1x128xf32>
    %20 = vector.broadcast %19 : vector<1x128xf32> to vector<2x128xf32>
    %c0_6 = arith.constant 0 : index
    %c0_7 = arith.constant 0 : index
    %21 = vector.load %arg0[%c0_6, %c0_7] : memref<16x16xf32, #tpu.memory_space<vmem>>, vector<16x16xf32>
    %22 = arith.truncf %21 : vector<16x16xf32> to vector<16x16xbf16>
    %cst = arith.constant dense<0.000000e+00> : vector<16x128xf32>
    %23 = tpu.matmul %22, %14, %cst {dimension_numbers = #tpu.dot_dimension_numbers<[1], [0], [0], [1], [0, 0, 1, 1], [], []>} : vector<16x16xbf16>, vector<16x128xbf16>, vector<16x128xf32> -> vector<16x128xf32>
    %24 = vector.broadcast %17 : vector<1x128xf32> to vector<16x128xf32>
    %25 = arith.addf %23, %24 : vector<16x128xf32>
    %cst_8 = arith.constant 0.000000e+00 : f32
    %26 = vector.broadcast %cst_8 : f32 to vector<2x32xf32>
    %cst_9 = arith.constant 0.000000e+00 : f32
    %27 = vector.broadcast %cst_9 : f32 to vector<2x32xf32>
    %cst_10 = arith.constant 0.000000e+00 : f32
    %28 = vector.broadcast %cst_10 : f32 to vector<2x32xf32>
    %cst_11 = arith.constant 0.000000e+00 : f32
    %29 = vector.broadcast %cst_11 : f32 to vector<2x32xf32>
    %30 = vector.extract_strided_slice %25 {offsets = [0, 0], sizes = [2, 128], strides = [1, 1]} : vector<16x128xf32> to vector<2x128xf32>
    %31 = arith.truncf %26 : vector<2x32xf32> to vector<2x32xbf16>
    %cst_12 = arith.constant dense<0.000000e+00> : vector<2x128xf32>
    %32 = tpu.matmul %31, %15, %cst_12 {dimension_numbers = #tpu.dot_dimension_numbers<[1], [0], [0], [1], [0, 0, 1, 1], [], []>} : vector<2x32xbf16>, vector<32x128xbf16>, vector<2x128xf32> -> vector<2x128xf32>
    %33 = arith.addf %30, %32 : vector<2x128xf32>
    %34 = vector.extract_strided_slice %33 {offsets = [0, 0], sizes = [2, 32], strides = [1, 1]} : vector<2x128xf32> to vector<2x32xf32>
    %cst_13 = arith.constant 5.000000e-01 : f32
    %35 = vector.broadcast %cst_13 : f32 to vector<2x32xf32>
    %36 = arith.mulf %35, %34 : vector<2x32xf32>
    %37 = math.tanh %36 : vector<2x32xf32>
    %cst_14 = arith.constant 5.000000e-01 : f32
    %38 = vector.broadcast %cst_14 : f32 to vector<2x32xf32>
    %39 = arith.mulf %38, %37 : vector<2x32xf32>
    %cst_15 = arith.constant 5.000000e-01 : f32
    %40 = vector.broadcast %cst_15 : f32 to vector<2x32xf32>
    %41 = arith.addf %39, %40 : vector<2x32xf32>
    %42 = vector.extract_strided_slice %33 {offsets = [0, 32], sizes = [2, 32], strides = [1, 1]} : vector<2x128xf32> to vector<2x32xf32>
    %cst_16 = arith.constant 5.000000e-01 : f32
    %43 = vector.broadcast %cst_16 : f32 to vector<2x32xf32>
    %44 = arith.mulf %43, %42 : vector<2x32xf32>
    %45 = math.tanh %44 : vector<2x32xf32>
    %cst_17 = arith.constant 5.000000e-01 : f32
    %46 = vector.broadcast %cst_17 : f32 to vector<2x32xf32>
    %47 = arith.mulf %46, %45 : vector<2x32xf32>
    %cst_18 = arith.constant 5.000000e-01 : f32
    %48 = vector.broadcast %cst_18 : f32 to vector<2x32xf32>
    %49 = arith.addf %47, %48 : vector<2x32xf32>
    %50 = vector.extract_strided_slice %33 {offsets = [0, 64], sizes = [2, 32], strides = [1, 1]} : vector<2x128xf32> to vector<2x32xf32>
    %51 = math.tanh %50 : vector<2x32xf32>
    %52 = vector.extract_strided_slice %33 {offsets = [0, 96], sizes = [2, 32], strides = [1, 1]} : vector<2x128xf32> to vector<2x32xf32>
    %cst_19 = arith.constant 5.000000e-01 : f32
    %53 = vector.broadcast %cst_19 : f32 to vector<2x32xf32>
    %54 = arith.mulf %53, %52 : vector<2x32xf32>
    %55 = math.tanh %54 : vector<2x32xf32>
    %cst_20 = arith.constant 5.000000e-01 : f32
    %56 = vector.broadcast %cst_20 : f32 to vector<2x32xf32>
    %57 = arith.mulf %56, %55 : vector<2x32xf32>
    %cst_21 = arith.constant 5.000000e-01 : f32
    %58 = vector.broadcast %cst_21 : f32 to vector<2x32xf32>
    %59 = arith.addf %57, %58 : vector<2x32xf32>
    %60 = arith.mulf %49, %27 : vector<2x32xf32>
    %61 = arith.mulf %41, %51 : vector<2x32xf32>
    %62 = arith.addf %60, %61 : vector<2x32xf32>
    %63 = math.tanh %62 : vector<2x32xf32>
    %64 = arith.mulf %59, %63 : vector<2x32xf32>
    %65 = tpu.concatenate %64, %28 in 1 : vector<2x32xf32>, vector<2x32xf32> -> vector<2x64xf32>
    %66 = arith.truncf %65 : vector<2x64xf32> to vector<2x64xbf16>
    %cst_22 = arith.constant dense<0.000000e+00> : vector<2x128xf32>
    %67 = tpu.matmul %66, %16, %cst_22 {dimension_numbers = #tpu.dot_dimension_numbers<[1], [0], [0], [1], [0, 0, 1, 1], [], []>} : vector<2x64xbf16>, vector<64x128xbf16>, vector<2x128xf32> -> vector<2x128xf32>
    %68 = arith.addf %67, %20 : vector<2x128xf32>
    %69 = vector.extract_strided_slice %68 {offsets = [0, 0], sizes = [2, 32], strides = [1, 1]} : vector<2x128xf32> to vector<2x32xf32>
    %cst_23 = arith.constant 5.000000e-01 : f32
    %70 = vector.broadcast %cst_23 : f32 to vector<2x32xf32>
    %71 = arith.mulf %70, %69 : vector<2x32xf32>
    %72 = math.tanh %71 : vector<2x32xf32>
    %cst_24 = arith.constant 5.000000e-01 : f32
    %73 = vector.broadcast %cst_24 : f32 to vector<2x32xf32>
    %74 = arith.mulf %73, %72 : vector<2x32xf32>
    %cst_25 = arith.constant 5.000000e-01 : f32
    %75 = vector.broadcast %cst_25 : f32 to vector<2x32xf32>
    %76 = arith.addf %74, %75 : vector<2x32xf32>
    %77 = vector.extract_strided_slice %68 {offsets = [0, 32], sizes = [2, 32], strides = [1, 1]} : vector<2x128xf32> to vector<2x32xf32>
    %cst_26 = arith.constant 5.000000e-01 : f32
    %78 = vector.broadcast %cst_26 : f32 to vector<2x32xf32>
    %79 = arith.mulf %78, %77 : vector<2x32xf32>
    %80 = math.tanh %79 : vector<2x32xf32>
    %cst_27 = arith.constant 5.000000e-01 : f32
    %81 = vector.broadcast %cst_27 : f32 to vector<2x32xf32>
    %82 = arith.mulf %81, %80 : vector<2x32xf32>
    %cst_28 = arith.constant 5.000000e-01 : f32
    %83 = vector.broadcast %cst_28 : f32 to vector<2x32xf32>
    %84 = arith.addf %82, %83 : vector<2x32xf32>
    %85 = vector.extract_strided_slice %68 {offsets = [0, 64], sizes = [2, 32], strides = [1, 1]} : vector<2x128xf32> to vector<2x32xf32>
    %86 = math.tanh %85 : vector<2x32xf32>
    %87 = vector.extract_strided_slice %68 {offsets = [0, 96], sizes = [2, 32], strides = [1, 1]} : vector<2x128xf32> to vector<2x32xf32>
    %cst_29 = arith.constant 5.000000e-01 : f32
    %88 = vector.broadcast %cst_29 : f32 to vector<2x32xf32>
    %89 = arith.mulf %88, %87 : vector<2x32xf32>
    %90 = math.tanh %89 : vector<2x32xf32>
    %cst_30 = arith.constant 5.000000e-01 : f32
    %91 = vector.broadcast %cst_30 : f32 to vector<2x32xf32>
    %92 = arith.mulf %91, %90 : vector<2x32xf32>
    %cst_31 = arith.constant 5.000000e-01 : f32
    %93 = vector.broadcast %cst_31 : f32 to vector<2x32xf32>
    %94 = arith.addf %92, %93 : vector<2x32xf32>
    %95 = arith.mulf %84, %29 : vector<2x32xf32>
    %96 = arith.mulf %76, %86 : vector<2x32xf32>
    %97 = arith.addf %95, %96 : vector<2x32xf32>
    %98 = math.tanh %97 : vector<2x32xf32>
    %99 = arith.mulf %94, %98 : vector<2x32xf32>
    %100 = vector.extract_strided_slice %25 {offsets = [2, 0], sizes = [2, 128], strides = [1, 1]} : vector<16x128xf32> to vector<2x128xf32>
    %101 = arith.truncf %64 : vector<2x32xf32> to vector<2x32xbf16>
    %cst_32 = arith.constant dense<0.000000e+00> : vector<2x128xf32>
    %102 = tpu.matmul %101, %15, %cst_32 {dimension_numbers = #tpu.dot_dimension_numbers<[1], [0], [0], [1], [0, 0, 1, 1], [], []>} : vector<2x32xbf16>, vector<32x128xbf16>, vector<2x128xf32> -> vector<2x128xf32>
    %103 = arith.addf %100, %102 : vector<2x128xf32>
    %104 = vector.extract_strided_slice %103 {offsets = [0, 0], sizes = [2, 32], strides = [1, 1]} : vector<2x128xf32> to vector<2x32xf32>
    %cst_33 = arith.constant 5.000000e-01 : f32
    %105 = vector.broadcast %cst_33 : f32 to vector<2x32xf32>
    %106 = arith.mulf %105, %104 : vector<2x32xf32>
    %107 = math.tanh %106 : vector<2x32xf32>
    %cst_34 = arith.constant 5.000000e-01 : f32
    %108 = vector.broadcast %cst_34 : f32 to vector<2x32xf32>
    %109 = arith.mulf %108, %107 : vector<2x32xf32>
    %cst_35 = arith.constant 5.000000e-01 : f32
    %110 = vector.broadcast %cst_35 : f32 to vector<2x32xf32>
    %111 = arith.addf %109, %110 : vector<2x32xf32>
    %112 = vector.extract_strided_slice %103 {offsets = [0, 32], sizes = [2, 32], strides = [1, 1]} : vector<2x128xf32> to vector<2x32xf32>
    %cst_36 = arith.constant 5.000000e-01 : f32
    %113 = vector.broadcast %cst_36 : f32 to vector<2x32xf32>
    %114 = arith.mulf %113, %112 : vector<2x32xf32>
    %115 = math.tanh %114 : vector<2x32xf32>
    %cst_37 = arith.constant 5.000000e-01 : f32
    %116 = vector.broadcast %cst_37 : f32 to vector<2x32xf32>
    %117 = arith.mulf %116, %115 : vector<2x32xf32>
    %cst_38 = arith.constant 5.000000e-01 : f32
    %118 = vector.broadcast %cst_38 : f32 to vector<2x32xf32>
    %119 = arith.addf %117, %118 : vector<2x32xf32>
    %120 = vector.extract_strided_slice %103 {offsets = [0, 64], sizes = [2, 32], strides = [1, 1]} : vector<2x128xf32> to vector<2x32xf32>
    %121 = math.tanh %120 : vector<2x32xf32>
    %122 = vector.extract_strided_slice %103 {offsets = [0, 96], sizes = [2, 32], strides = [1, 1]} : vector<2x128xf32> to vector<2x32xf32>
    %cst_39 = arith.constant 5.000000e-01 : f32
    %123 = vector.broadcast %cst_39 : f32 to vector<2x32xf32>
    %124 = arith.mulf %123, %122 : vector<2x32xf32>
    %125 = math.tanh %124 : vector<2x32xf32>
    %cst_40 = arith.constant 5.000000e-01 : f32
    %126 = vector.broadcast %cst_40 : f32 to vector<2x32xf32>
    %127 = arith.mulf %126, %125 : vector<2x32xf32>
    %cst_41 = arith.constant 5.000000e-01 : f32
    %128 = vector.broadcast %cst_41 : f32 to vector<2x32xf32>
    %129 = arith.addf %127, %128 : vector<2x32xf32>
    %130 = arith.mulf %119, %62 : vector<2x32xf32>
    %131 = arith.mulf %111, %121 : vector<2x32xf32>
    %132 = arith.addf %130, %131 : vector<2x32xf32>
    %133 = math.tanh %132 : vector<2x32xf32>
    %134 = arith.mulf %129, %133 : vector<2x32xf32>
    %135 = tpu.concatenate %134, %99 in 1 : vector<2x32xf32>, vector<2x32xf32> -> vector<2x64xf32>
    %136 = arith.truncf %135 : vector<2x64xf32> to vector<2x64xbf16>
    %cst_42 = arith.constant dense<0.000000e+00> : vector<2x128xf32>
    %137 = tpu.matmul %136, %16, %cst_42 {dimension_numbers = #tpu.dot_dimension_numbers<[1], [0], [0], [1], [0, 0, 1, 1], [], []>} : vector<2x64xbf16>, vector<64x128xbf16>, vector<2x128xf32> -> vector<2x128xf32>
    %138 = arith.addf %137, %20 : vector<2x128xf32>
    %139 = vector.extract_strided_slice %138 {offsets = [0, 0], sizes = [2, 32], strides = [1, 1]} : vector<2x128xf32> to vector<2x32xf32>
    %cst_43 = arith.constant 5.000000e-01 : f32
    %140 = vector.broadcast %cst_43 : f32 to vector<2x32xf32>
    %141 = arith.mulf %140, %139 : vector<2x32xf32>
    %142 = math.tanh %141 : vector<2x32xf32>
    %cst_44 = arith.constant 5.000000e-01 : f32
    %143 = vector.broadcast %cst_44 : f32 to vector<2x32xf32>
    %144 = arith.mulf %143, %142 : vector<2x32xf32>
    %cst_45 = arith.constant 5.000000e-01 : f32
    %145 = vector.broadcast %cst_45 : f32 to vector<2x32xf32>
    %146 = arith.addf %144, %145 : vector<2x32xf32>
    %147 = vector.extract_strided_slice %138 {offsets = [0, 32], sizes = [2, 32], strides = [1, 1]} : vector<2x128xf32> to vector<2x32xf32>
    %cst_46 = arith.constant 5.000000e-01 : f32
    %148 = vector.broadcast %cst_46 : f32 to vector<2x32xf32>
    %149 = arith.mulf %148, %147 : vector<2x32xf32>
    %150 = math.tanh %149 : vector<2x32xf32>
    %cst_47 = arith.constant 5.000000e-01 : f32
    %151 = vector.broadcast %cst_47 : f32 to vector<2x32xf32>
    %152 = arith.mulf %151, %150 : vector<2x32xf32>
    %cst_48 = arith.constant 5.000000e-01 : f32
    %153 = vector.broadcast %cst_48 : f32 to vector<2x32xf32>
    %154 = arith.addf %152, %153 : vector<2x32xf32>
    %155 = vector.extract_strided_slice %138 {offsets = [0, 64], sizes = [2, 32], strides = [1, 1]} : vector<2x128xf32> to vector<2x32xf32>
    %156 = math.tanh %155 : vector<2x32xf32>
    %157 = vector.extract_strided_slice %138 {offsets = [0, 96], sizes = [2, 32], strides = [1, 1]} : vector<2x128xf32> to vector<2x32xf32>
    %cst_49 = arith.constant 5.000000e-01 : f32
    %158 = vector.broadcast %cst_49 : f32 to vector<2x32xf32>
    %159 = arith.mulf %158, %157 : vector<2x32xf32>
    %160 = math.tanh %159 : vector<2x32xf32>
    %cst_50 = arith.constant 5.000000e-01 : f32
    %161 = vector.broadcast %cst_50 : f32 to vector<2x32xf32>
    %162 = arith.mulf %161, %160 : vector<2x32xf32>
    %cst_51 = arith.constant 5.000000e-01 : f32
    %163 = vector.broadcast %cst_51 : f32 to vector<2x32xf32>
    %164 = arith.addf %162, %163 : vector<2x32xf32>
    %165 = arith.mulf %154, %97 : vector<2x32xf32>
    %166 = arith.mulf %146, %156 : vector<2x32xf32>
    %167 = arith.addf %165, %166 : vector<2x32xf32>
    %168 = math.tanh %167 : vector<2x32xf32>
    %169 = arith.mulf %164, %168 : vector<2x32xf32>
    %170 = vector.extract_strided_slice %25 {offsets = [4, 0], sizes = [2, 128], strides = [1, 1]} : vector<16x128xf32> to vector<2x128xf32>
    %171 = arith.truncf %134 : vector<2x32xf32> to vector<2x32xbf16>
    %cst_52 = arith.constant dense<0.000000e+00> : vector<2x128xf32>
    %172 = tpu.matmul %171, %15, %cst_52 {dimension_numbers = #tpu.dot_dimension_numbers<[1], [0], [0], [1], [0, 0, 1, 1], [], []>} : vector<2x32xbf16>, vector<32x128xbf16>, vector<2x128xf32> -> vector<2x128xf32>
    %173 = arith.addf %170, %172 : vector<2x128xf32>
    %174 = vector.extract_strided_slice %173 {offsets = [0, 0], sizes = [2, 32], strides = [1, 1]} : vector<2x128xf32> to vector<2x32xf32>
    %cst_53 = arith.constant 5.000000e-01 : f32
    %175 = vector.broadcast %cst_53 : f32 to vector<2x32xf32>
    %176 = arith.mulf %175, %174 : vector<2x32xf32>
    %177 = math.tanh %176 : vector<2x32xf32>
    %cst_54 = arith.constant 5.000000e-01 : f32
    %178 = vector.broadcast %cst_54 : f32 to vector<2x32xf32>
    %179 = arith.mulf %178, %177 : vector<2x32xf32>
    %cst_55 = arith.constant 5.000000e-01 : f32
    %180 = vector.broadcast %cst_55 : f32 to vector<2x32xf32>
    %181 = arith.addf %179, %180 : vector<2x32xf32>
    %182 = vector.extract_strided_slice %173 {offsets = [0, 32], sizes = [2, 32], strides = [1, 1]} : vector<2x128xf32> to vector<2x32xf32>
    %cst_56 = arith.constant 5.000000e-01 : f32
    %183 = vector.broadcast %cst_56 : f32 to vector<2x32xf32>
    %184 = arith.mulf %183, %182 : vector<2x32xf32>
    %185 = math.tanh %184 : vector<2x32xf32>
    %cst_57 = arith.constant 5.000000e-01 : f32
    %186 = vector.broadcast %cst_57 : f32 to vector<2x32xf32>
    %187 = arith.mulf %186, %185 : vector<2x32xf32>
    %cst_58 = arith.constant 5.000000e-01 : f32
    %188 = vector.broadcast %cst_58 : f32 to vector<2x32xf32>
    %189 = arith.addf %187, %188 : vector<2x32xf32>
    %190 = vector.extract_strided_slice %173 {offsets = [0, 64], sizes = [2, 32], strides = [1, 1]} : vector<2x128xf32> to vector<2x32xf32>
    %191 = math.tanh %190 : vector<2x32xf32>
    %192 = vector.extract_strided_slice %173 {offsets = [0, 96], sizes = [2, 32], strides = [1, 1]} : vector<2x128xf32> to vector<2x32xf32>
    %cst_59 = arith.constant 5.000000e-01 : f32
    %193 = vector.broadcast %cst_59 : f32 to vector<2x32xf32>
    %194 = arith.mulf %193, %192 : vector<2x32xf32>
    %195 = math.tanh %194 : vector<2x32xf32>
    %cst_60 = arith.constant 5.000000e-01 : f32
    %196 = vector.broadcast %cst_60 : f32 to vector<2x32xf32>
    %197 = arith.mulf %196, %195 : vector<2x32xf32>
    %cst_61 = arith.constant 5.000000e-01 : f32
    %198 = vector.broadcast %cst_61 : f32 to vector<2x32xf32>
    %199 = arith.addf %197, %198 : vector<2x32xf32>
    %200 = arith.mulf %189, %132 : vector<2x32xf32>
    %201 = arith.mulf %181, %191 : vector<2x32xf32>
    %202 = arith.addf %200, %201 : vector<2x32xf32>
    %203 = math.tanh %202 : vector<2x32xf32>
    %204 = arith.mulf %199, %203 : vector<2x32xf32>
    %205 = tpu.concatenate %204, %169 in 1 : vector<2x32xf32>, vector<2x32xf32> -> vector<2x64xf32>
    %206 = arith.truncf %205 : vector<2x64xf32> to vector<2x64xbf16>
    %cst_62 = arith.constant dense<0.000000e+00> : vector<2x128xf32>
    %207 = tpu.matmul %206, %16, %cst_62 {dimension_numbers = #tpu.dot_dimension_numbers<[1], [0], [0], [1], [0, 0, 1, 1], [], []>} : vector<2x64xbf16>, vector<64x128xbf16>, vector<2x128xf32> -> vector<2x128xf32>
    %208 = arith.addf %207, %20 : vector<2x128xf32>
    %209 = vector.extract_strided_slice %208 {offsets = [0, 0], sizes = [2, 32], strides = [1, 1]} : vector<2x128xf32> to vector<2x32xf32>
    %cst_63 = arith.constant 5.000000e-01 : f32
    %210 = vector.broadcast %cst_63 : f32 to vector<2x32xf32>
    %211 = arith.mulf %210, %209 : vector<2x32xf32>
    %212 = math.tanh %211 : vector<2x32xf32>
    %cst_64 = arith.constant 5.000000e-01 : f32
    %213 = vector.broadcast %cst_64 : f32 to vector<2x32xf32>
    %214 = arith.mulf %213, %212 : vector<2x32xf32>
    %cst_65 = arith.constant 5.000000e-01 : f32
    %215 = vector.broadcast %cst_65 : f32 to vector<2x32xf32>
    %216 = arith.addf %214, %215 : vector<2x32xf32>
    %217 = vector.extract_strided_slice %208 {offsets = [0, 32], sizes = [2, 32], strides = [1, 1]} : vector<2x128xf32> to vector<2x32xf32>
    %cst_66 = arith.constant 5.000000e-01 : f32
    %218 = vector.broadcast %cst_66 : f32 to vector<2x32xf32>
    %219 = arith.mulf %218, %217 : vector<2x32xf32>
    %220 = math.tanh %219 : vector<2x32xf32>
    %cst_67 = arith.constant 5.000000e-01 : f32
    %221 = vector.broadcast %cst_67 : f32 to vector<2x32xf32>
    %222 = arith.mulf %221, %220 : vector<2x32xf32>
    %cst_68 = arith.constant 5.000000e-01 : f32
    %223 = vector.broadcast %cst_68 : f32 to vector<2x32xf32>
    %224 = arith.addf %222, %223 : vector<2x32xf32>
    %225 = vector.extract_strided_slice %208 {offsets = [0, 64], sizes = [2, 32], strides = [1, 1]} : vector<2x128xf32> to vector<2x32xf32>
    %226 = math.tanh %225 : vector<2x32xf32>
    %227 = vector.extract_strided_slice %208 {offsets = [0, 96], sizes = [2, 32], strides = [1, 1]} : vector<2x128xf32> to vector<2x32xf32>
    %cst_69 = arith.constant 5.000000e-01 : f32
    %228 = vector.broadcast %cst_69 : f32 to vector<2x32xf32>
    %229 = arith.mulf %228, %227 : vector<2x32xf32>
    %230 = math.tanh %229 : vector<2x32xf32>
    %cst_70 = arith.constant 5.000000e-01 : f32
    %231 = vector.broadcast %cst_70 : f32 to vector<2x32xf32>
    %232 = arith.mulf %231, %230 : vector<2x32xf32>
    %cst_71 = arith.constant 5.000000e-01 : f32
    %233 = vector.broadcast %cst_71 : f32 to vector<2x32xf32>
    %234 = arith.addf %232, %233 : vector<2x32xf32>
    %235 = arith.mulf %224, %167 : vector<2x32xf32>
    %236 = arith.mulf %216, %226 : vector<2x32xf32>
    %237 = arith.addf %235, %236 : vector<2x32xf32>
    %238 = math.tanh %237 : vector<2x32xf32>
    %239 = arith.mulf %234, %238 : vector<2x32xf32>
    %240 = vector.extract_strided_slice %25 {offsets = [6, 0], sizes = [2, 128], strides = [1, 1]} : vector<16x128xf32> to vector<2x128xf32>
    %241 = arith.truncf %204 : vector<2x32xf32> to vector<2x32xbf16>
    %cst_72 = arith.constant dense<0.000000e+00> : vector<2x128xf32>
    %242 = tpu.matmul %241, %15, %cst_72 {dimension_numbers = #tpu.dot_dimension_numbers<[1], [0], [0], [1], [0, 0, 1, 1], [], []>} : vector<2x32xbf16>, vector<32x128xbf16>, vector<2x128xf32> -> vector<2x128xf32>
    %243 = arith.addf %240, %242 : vector<2x128xf32>
    %244 = vector.extract_strided_slice %243 {offsets = [0, 0], sizes = [2, 32], strides = [1, 1]} : vector<2x128xf32> to vector<2x32xf32>
    %cst_73 = arith.constant 5.000000e-01 : f32
    %245 = vector.broadcast %cst_73 : f32 to vector<2x32xf32>
    %246 = arith.mulf %245, %244 : vector<2x32xf32>
    %247 = math.tanh %246 : vector<2x32xf32>
    %cst_74 = arith.constant 5.000000e-01 : f32
    %248 = vector.broadcast %cst_74 : f32 to vector<2x32xf32>
    %249 = arith.mulf %248, %247 : vector<2x32xf32>
    %cst_75 = arith.constant 5.000000e-01 : f32
    %250 = vector.broadcast %cst_75 : f32 to vector<2x32xf32>
    %251 = arith.addf %249, %250 : vector<2x32xf32>
    %252 = vector.extract_strided_slice %243 {offsets = [0, 32], sizes = [2, 32], strides = [1, 1]} : vector<2x128xf32> to vector<2x32xf32>
    %cst_76 = arith.constant 5.000000e-01 : f32
    %253 = vector.broadcast %cst_76 : f32 to vector<2x32xf32>
    %254 = arith.mulf %253, %252 : vector<2x32xf32>
    %255 = math.tanh %254 : vector<2x32xf32>
    %cst_77 = arith.constant 5.000000e-01 : f32
    %256 = vector.broadcast %cst_77 : f32 to vector<2x32xf32>
    %257 = arith.mulf %256, %255 : vector<2x32xf32>
    %cst_78 = arith.constant 5.000000e-01 : f32
    %258 = vector.broadcast %cst_78 : f32 to vector<2x32xf32>
    %259 = arith.addf %257, %258 : vector<2x32xf32>
    %260 = vector.extract_strided_slice %243 {offsets = [0, 64], sizes = [2, 32], strides = [1, 1]} : vector<2x128xf32> to vector<2x32xf32>
    %261 = math.tanh %260 : vector<2x32xf32>
    %262 = vector.extract_strided_slice %243 {offsets = [0, 96], sizes = [2, 32], strides = [1, 1]} : vector<2x128xf32> to vector<2x32xf32>
    %cst_79 = arith.constant 5.000000e-01 : f32
    %263 = vector.broadcast %cst_79 : f32 to vector<2x32xf32>
    %264 = arith.mulf %263, %262 : vector<2x32xf32>
    %265 = math.tanh %264 : vector<2x32xf32>
    %cst_80 = arith.constant 5.000000e-01 : f32
    %266 = vector.broadcast %cst_80 : f32 to vector<2x32xf32>
    %267 = arith.mulf %266, %265 : vector<2x32xf32>
    %cst_81 = arith.constant 5.000000e-01 : f32
    %268 = vector.broadcast %cst_81 : f32 to vector<2x32xf32>
    %269 = arith.addf %267, %268 : vector<2x32xf32>
    %270 = arith.mulf %259, %202 : vector<2x32xf32>
    %271 = arith.mulf %251, %261 : vector<2x32xf32>
    %272 = arith.addf %270, %271 : vector<2x32xf32>
    %273 = math.tanh %272 : vector<2x32xf32>
    %274 = arith.mulf %269, %273 : vector<2x32xf32>
    %275 = tpu.concatenate %274, %239 in 1 : vector<2x32xf32>, vector<2x32xf32> -> vector<2x64xf32>
    %276 = arith.truncf %275 : vector<2x64xf32> to vector<2x64xbf16>
    %cst_82 = arith.constant dense<0.000000e+00> : vector<2x128xf32>
    %277 = tpu.matmul %276, %16, %cst_82 {dimension_numbers = #tpu.dot_dimension_numbers<[1], [0], [0], [1], [0, 0, 1, 1], [], []>} : vector<2x64xbf16>, vector<64x128xbf16>, vector<2x128xf32> -> vector<2x128xf32>
    %278 = arith.addf %277, %20 : vector<2x128xf32>
    %279 = vector.extract_strided_slice %278 {offsets = [0, 0], sizes = [2, 32], strides = [1, 1]} : vector<2x128xf32> to vector<2x32xf32>
    %cst_83 = arith.constant 5.000000e-01 : f32
    %280 = vector.broadcast %cst_83 : f32 to vector<2x32xf32>
    %281 = arith.mulf %280, %279 : vector<2x32xf32>
    %282 = math.tanh %281 : vector<2x32xf32>
    %cst_84 = arith.constant 5.000000e-01 : f32
    %283 = vector.broadcast %cst_84 : f32 to vector<2x32xf32>
    %284 = arith.mulf %283, %282 : vector<2x32xf32>
    %cst_85 = arith.constant 5.000000e-01 : f32
    %285 = vector.broadcast %cst_85 : f32 to vector<2x32xf32>
    %286 = arith.addf %284, %285 : vector<2x32xf32>
    %287 = vector.extract_strided_slice %278 {offsets = [0, 32], sizes = [2, 32], strides = [1, 1]} : vector<2x128xf32> to vector<2x32xf32>
    %cst_86 = arith.constant 5.000000e-01 : f32
    %288 = vector.broadcast %cst_86 : f32 to vector<2x32xf32>
    %289 = arith.mulf %288, %287 : vector<2x32xf32>
    %290 = math.tanh %289 : vector<2x32xf32>
    %cst_87 = arith.constant 5.000000e-01 : f32
    %291 = vector.broadcast %cst_87 : f32 to vector<2x32xf32>
    %292 = arith.mulf %291, %290 : vector<2x32xf32>
    %cst_88 = arith.constant 5.000000e-01 : f32
    %293 = vector.broadcast %cst_88 : f32 to vector<2x32xf32>
    %294 = arith.addf %292, %293 : vector<2x32xf32>
    %295 = vector.extract_strided_slice %278 {offsets = [0, 64], sizes = [2, 32], strides = [1, 1]} : vector<2x128xf32> to vector<2x32xf32>
    %296 = math.tanh %295 : vector<2x32xf32>
    %297 = vector.extract_strided_slice %278 {offsets = [0, 96], sizes = [2, 32], strides = [1, 1]} : vector<2x128xf32> to vector<2x32xf32>
    %cst_89 = arith.constant 5.000000e-01 : f32
    %298 = vector.broadcast %cst_89 : f32 to vector<2x32xf32>
    %299 = arith.mulf %298, %297 : vector<2x32xf32>
    %300 = math.tanh %299 : vector<2x32xf32>
    %cst_90 = arith.constant 5.000000e-01 : f32
    %301 = vector.broadcast %cst_90 : f32 to vector<2x32xf32>
    %302 = arith.mulf %301, %300 : vector<2x32xf32>
    %cst_91 = arith.constant 5.000000e-01 : f32
    %303 = vector.broadcast %cst_91 : f32 to vector<2x32xf32>
    %304 = arith.addf %302, %303 : vector<2x32xf32>
    %305 = arith.mulf %294, %237 : vector<2x32xf32>
    %306 = arith.mulf %286, %296 : vector<2x32xf32>
    %307 = arith.addf %305, %306 : vector<2x32xf32>
    %308 = math.tanh %307 : vector<2x32xf32>
    %309 = arith.mulf %304, %308 : vector<2x32xf32>
    %310 = vector.extract_strided_slice %25 {offsets = [8, 0], sizes = [2, 128], strides = [1, 1]} : vector<16x128xf32> to vector<2x128xf32>
    %311 = arith.truncf %274 : vector<2x32xf32> to vector<2x32xbf16>
    %cst_92 = arith.constant dense<0.000000e+00> : vector<2x128xf32>
    %312 = tpu.matmul %311, %15, %cst_92 {dimension_numbers = #tpu.dot_dimension_numbers<[1], [0], [0], [1], [0, 0, 1, 1], [], []>} : vector<2x32xbf16>, vector<32x128xbf16>, vector<2x128xf32> -> vector<2x128xf32>
    %313 = arith.addf %310, %312 : vector<2x128xf32>
    %314 = vector.extract_strided_slice %313 {offsets = [0, 0], sizes = [2, 32], strides = [1, 1]} : vector<2x128xf32> to vector<2x32xf32>
    %cst_93 = arith.constant 5.000000e-01 : f32
    %315 = vector.broadcast %cst_93 : f32 to vector<2x32xf32>
    %316 = arith.mulf %315, %314 : vector<2x32xf32>
    %317 = math.tanh %316 : vector<2x32xf32>
    %cst_94 = arith.constant 5.000000e-01 : f32
    %318 = vector.broadcast %cst_94 : f32 to vector<2x32xf32>
    %319 = arith.mulf %318, %317 : vector<2x32xf32>
    %cst_95 = arith.constant 5.000000e-01 : f32
    %320 = vector.broadcast %cst_95 : f32 to vector<2x32xf32>
    %321 = arith.addf %319, %320 : vector<2x32xf32>
    %322 = vector.extract_strided_slice %313 {offsets = [0, 32], sizes = [2, 32], strides = [1, 1]} : vector<2x128xf32> to vector<2x32xf32>
    %cst_96 = arith.constant 5.000000e-01 : f32
    %323 = vector.broadcast %cst_96 : f32 to vector<2x32xf32>
    %324 = arith.mulf %323, %322 : vector<2x32xf32>
    %325 = math.tanh %324 : vector<2x32xf32>
    %cst_97 = arith.constant 5.000000e-01 : f32
    %326 = vector.broadcast %cst_97 : f32 to vector<2x32xf32>
    %327 = arith.mulf %326, %325 : vector<2x32xf32>
    %cst_98 = arith.constant 5.000000e-01 : f32
    %328 = vector.broadcast %cst_98 : f32 to vector<2x32xf32>
    %329 = arith.addf %327, %328 : vector<2x32xf32>
    %330 = vector.extract_strided_slice %313 {offsets = [0, 64], sizes = [2, 32], strides = [1, 1]} : vector<2x128xf32> to vector<2x32xf32>
    %331 = math.tanh %330 : vector<2x32xf32>
    %332 = vector.extract_strided_slice %313 {offsets = [0, 96], sizes = [2, 32], strides = [1, 1]} : vector<2x128xf32> to vector<2x32xf32>
    %cst_99 = arith.constant 5.000000e-01 : f32
    %333 = vector.broadcast %cst_99 : f32 to vector<2x32xf32>
    %334 = arith.mulf %333, %332 : vector<2x32xf32>
    %335 = math.tanh %334 : vector<2x32xf32>
    %cst_100 = arith.constant 5.000000e-01 : f32
    %336 = vector.broadcast %cst_100 : f32 to vector<2x32xf32>
    %337 = arith.mulf %336, %335 : vector<2x32xf32>
    %cst_101 = arith.constant 5.000000e-01 : f32
    %338 = vector.broadcast %cst_101 : f32 to vector<2x32xf32>
    %339 = arith.addf %337, %338 : vector<2x32xf32>
    %340 = arith.mulf %329, %272 : vector<2x32xf32>
    %341 = arith.mulf %321, %331 : vector<2x32xf32>
    %342 = arith.addf %340, %341 : vector<2x32xf32>
    %343 = math.tanh %342 : vector<2x32xf32>
    %344 = arith.mulf %339, %343 : vector<2x32xf32>
    %345 = tpu.concatenate %344, %309 in 1 : vector<2x32xf32>, vector<2x32xf32> -> vector<2x64xf32>
    %346 = arith.truncf %345 : vector<2x64xf32> to vector<2x64xbf16>
    %cst_102 = arith.constant dense<0.000000e+00> : vector<2x128xf32>
    %347 = tpu.matmul %346, %16, %cst_102 {dimension_numbers = #tpu.dot_dimension_numbers<[1], [0], [0], [1], [0, 0, 1, 1], [], []>} : vector<2x64xbf16>, vector<64x128xbf16>, vector<2x128xf32> -> vector<2x128xf32>
    %348 = arith.addf %347, %20 : vector<2x128xf32>
    %349 = vector.extract_strided_slice %348 {offsets = [0, 0], sizes = [2, 32], strides = [1, 1]} : vector<2x128xf32> to vector<2x32xf32>
    %cst_103 = arith.constant 5.000000e-01 : f32
    %350 = vector.broadcast %cst_103 : f32 to vector<2x32xf32>
    %351 = arith.mulf %350, %349 : vector<2x32xf32>
    %352 = math.tanh %351 : vector<2x32xf32>
    %cst_104 = arith.constant 5.000000e-01 : f32
    %353 = vector.broadcast %cst_104 : f32 to vector<2x32xf32>
    %354 = arith.mulf %353, %352 : vector<2x32xf32>
    %cst_105 = arith.constant 5.000000e-01 : f32
    %355 = vector.broadcast %cst_105 : f32 to vector<2x32xf32>
    %356 = arith.addf %354, %355 : vector<2x32xf32>
    %357 = vector.extract_strided_slice %348 {offsets = [0, 32], sizes = [2, 32], strides = [1, 1]} : vector<2x128xf32> to vector<2x32xf32>
    %cst_106 = arith.constant 5.000000e-01 : f32
    %358 = vector.broadcast %cst_106 : f32 to vector<2x32xf32>
    %359 = arith.mulf %358, %357 : vector<2x32xf32>
    %360 = math.tanh %359 : vector<2x32xf32>
    %cst_107 = arith.constant 5.000000e-01 : f32
    %361 = vector.broadcast %cst_107 : f32 to vector<2x32xf32>
    %362 = arith.mulf %361, %360 : vector<2x32xf32>
    %cst_108 = arith.constant 5.000000e-01 : f32
    %363 = vector.broadcast %cst_108 : f32 to vector<2x32xf32>
    %364 = arith.addf %362, %363 : vector<2x32xf32>
    %365 = vector.extract_strided_slice %348 {offsets = [0, 64], sizes = [2, 32], strides = [1, 1]} : vector<2x128xf32> to vector<2x32xf32>
    %366 = math.tanh %365 : vector<2x32xf32>
    %367 = vector.extract_strided_slice %348 {offsets = [0, 96], sizes = [2, 32], strides = [1, 1]} : vector<2x128xf32> to vector<2x32xf32>
    %cst_109 = arith.constant 5.000000e-01 : f32
    %368 = vector.broadcast %cst_109 : f32 to vector<2x32xf32>
    %369 = arith.mulf %368, %367 : vector<2x32xf32>
    %370 = math.tanh %369 : vector<2x32xf32>
    %cst_110 = arith.constant 5.000000e-01 : f32
    %371 = vector.broadcast %cst_110 : f32 to vector<2x32xf32>
    %372 = arith.mulf %371, %370 : vector<2x32xf32>
    %cst_111 = arith.constant 5.000000e-01 : f32
    %373 = vector.broadcast %cst_111 : f32 to vector<2x32xf32>
    %374 = arith.addf %372, %373 : vector<2x32xf32>
    %375 = arith.mulf %364, %307 : vector<2x32xf32>
    %376 = arith.mulf %356, %366 : vector<2x32xf32>
    %377 = arith.addf %375, %376 : vector<2x32xf32>
    %378 = math.tanh %377 : vector<2x32xf32>
    %379 = arith.mulf %374, %378 : vector<2x32xf32>
    %380 = vector.extract_strided_slice %25 {offsets = [10, 0], sizes = [2, 128], strides = [1, 1]} : vector<16x128xf32> to vector<2x128xf32>
    %381 = arith.truncf %344 : vector<2x32xf32> to vector<2x32xbf16>
    %cst_112 = arith.constant dense<0.000000e+00> : vector<2x128xf32>
    %382 = tpu.matmul %381, %15, %cst_112 {dimension_numbers = #tpu.dot_dimension_numbers<[1], [0], [0], [1], [0, 0, 1, 1], [], []>} : vector<2x32xbf16>, vector<32x128xbf16>, vector<2x128xf32> -> vector<2x128xf32>
    %383 = arith.addf %380, %382 : vector<2x128xf32>
    %384 = vector.extract_strided_slice %383 {offsets = [0, 0], sizes = [2, 32], strides = [1, 1]} : vector<2x128xf32> to vector<2x32xf32>
    %cst_113 = arith.constant 5.000000e-01 : f32
    %385 = vector.broadcast %cst_113 : f32 to vector<2x32xf32>
    %386 = arith.mulf %385, %384 : vector<2x32xf32>
    %387 = math.tanh %386 : vector<2x32xf32>
    %cst_114 = arith.constant 5.000000e-01 : f32
    %388 = vector.broadcast %cst_114 : f32 to vector<2x32xf32>
    %389 = arith.mulf %388, %387 : vector<2x32xf32>
    %cst_115 = arith.constant 5.000000e-01 : f32
    %390 = vector.broadcast %cst_115 : f32 to vector<2x32xf32>
    %391 = arith.addf %389, %390 : vector<2x32xf32>
    %392 = vector.extract_strided_slice %383 {offsets = [0, 32], sizes = [2, 32], strides = [1, 1]} : vector<2x128xf32> to vector<2x32xf32>
    %cst_116 = arith.constant 5.000000e-01 : f32
    %393 = vector.broadcast %cst_116 : f32 to vector<2x32xf32>
    %394 = arith.mulf %393, %392 : vector<2x32xf32>
    %395 = math.tanh %394 : vector<2x32xf32>
    %cst_117 = arith.constant 5.000000e-01 : f32
    %396 = vector.broadcast %cst_117 : f32 to vector<2x32xf32>
    %397 = arith.mulf %396, %395 : vector<2x32xf32>
    %cst_118 = arith.constant 5.000000e-01 : f32
    %398 = vector.broadcast %cst_118 : f32 to vector<2x32xf32>
    %399 = arith.addf %397, %398 : vector<2x32xf32>
    %400 = vector.extract_strided_slice %383 {offsets = [0, 64], sizes = [2, 32], strides = [1, 1]} : vector<2x128xf32> to vector<2x32xf32>
    %401 = math.tanh %400 : vector<2x32xf32>
    %402 = vector.extract_strided_slice %383 {offsets = [0, 96], sizes = [2, 32], strides = [1, 1]} : vector<2x128xf32> to vector<2x32xf32>
    %cst_119 = arith.constant 5.000000e-01 : f32
    %403 = vector.broadcast %cst_119 : f32 to vector<2x32xf32>
    %404 = arith.mulf %403, %402 : vector<2x32xf32>
    %405 = math.tanh %404 : vector<2x32xf32>
    %cst_120 = arith.constant 5.000000e-01 : f32
    %406 = vector.broadcast %cst_120 : f32 to vector<2x32xf32>
    %407 = arith.mulf %406, %405 : vector<2x32xf32>
    %cst_121 = arith.constant 5.000000e-01 : f32
    %408 = vector.broadcast %cst_121 : f32 to vector<2x32xf32>
    %409 = arith.addf %407, %408 : vector<2x32xf32>
    %410 = arith.mulf %399, %342 : vector<2x32xf32>
    %411 = arith.mulf %391, %401 : vector<2x32xf32>
    %412 = arith.addf %410, %411 : vector<2x32xf32>
    %413 = math.tanh %412 : vector<2x32xf32>
    %414 = arith.mulf %409, %413 : vector<2x32xf32>
    %415 = tpu.concatenate %414, %379 in 1 : vector<2x32xf32>, vector<2x32xf32> -> vector<2x64xf32>
    %416 = arith.truncf %415 : vector<2x64xf32> to vector<2x64xbf16>
    %cst_122 = arith.constant dense<0.000000e+00> : vector<2x128xf32>
    %417 = tpu.matmul %416, %16, %cst_122 {dimension_numbers = #tpu.dot_dimension_numbers<[1], [0], [0], [1], [0, 0, 1, 1], [], []>} : vector<2x64xbf16>, vector<64x128xbf16>, vector<2x128xf32> -> vector<2x128xf32>
    %418 = arith.addf %417, %20 : vector<2x128xf32>
    %419 = vector.extract_strided_slice %418 {offsets = [0, 0], sizes = [2, 32], strides = [1, 1]} : vector<2x128xf32> to vector<2x32xf32>
    %cst_123 = arith.constant 5.000000e-01 : f32
    %420 = vector.broadcast %cst_123 : f32 to vector<2x32xf32>
    %421 = arith.mulf %420, %419 : vector<2x32xf32>
    %422 = math.tanh %421 : vector<2x32xf32>
    %cst_124 = arith.constant 5.000000e-01 : f32
    %423 = vector.broadcast %cst_124 : f32 to vector<2x32xf32>
    %424 = arith.mulf %423, %422 : vector<2x32xf32>
    %cst_125 = arith.constant 5.000000e-01 : f32
    %425 = vector.broadcast %cst_125 : f32 to vector<2x32xf32>
    %426 = arith.addf %424, %425 : vector<2x32xf32>
    %427 = vector.extract_strided_slice %418 {offsets = [0, 32], sizes = [2, 32], strides = [1, 1]} : vector<2x128xf32> to vector<2x32xf32>
    %cst_126 = arith.constant 5.000000e-01 : f32
    %428 = vector.broadcast %cst_126 : f32 to vector<2x32xf32>
    %429 = arith.mulf %428, %427 : vector<2x32xf32>
    %430 = math.tanh %429 : vector<2x32xf32>
    %cst_127 = arith.constant 5.000000e-01 : f32
    %431 = vector.broadcast %cst_127 : f32 to vector<2x32xf32>
    %432 = arith.mulf %431, %430 : vector<2x32xf32>
    %cst_128 = arith.constant 5.000000e-01 : f32
    %433 = vector.broadcast %cst_128 : f32 to vector<2x32xf32>
    %434 = arith.addf %432, %433 : vector<2x32xf32>
    %435 = vector.extract_strided_slice %418 {offsets = [0, 64], sizes = [2, 32], strides = [1, 1]} : vector<2x128xf32> to vector<2x32xf32>
    %436 = math.tanh %435 : vector<2x32xf32>
    %437 = vector.extract_strided_slice %418 {offsets = [0, 96], sizes = [2, 32], strides = [1, 1]} : vector<2x128xf32> to vector<2x32xf32>
    %cst_129 = arith.constant 5.000000e-01 : f32
    %438 = vector.broadcast %cst_129 : f32 to vector<2x32xf32>
    %439 = arith.mulf %438, %437 : vector<2x32xf32>
    %440 = math.tanh %439 : vector<2x32xf32>
    %cst_130 = arith.constant 5.000000e-01 : f32
    %441 = vector.broadcast %cst_130 : f32 to vector<2x32xf32>
    %442 = arith.mulf %441, %440 : vector<2x32xf32>
    %cst_131 = arith.constant 5.000000e-01 : f32
    %443 = vector.broadcast %cst_131 : f32 to vector<2x32xf32>
    %444 = arith.addf %442, %443 : vector<2x32xf32>
    %445 = arith.mulf %434, %377 : vector<2x32xf32>
    %446 = arith.mulf %426, %436 : vector<2x32xf32>
    %447 = arith.addf %445, %446 : vector<2x32xf32>
    %448 = math.tanh %447 : vector<2x32xf32>
    %449 = arith.mulf %444, %448 : vector<2x32xf32>
    %450 = vector.extract_strided_slice %25 {offsets = [12, 0], sizes = [2, 128], strides = [1, 1]} : vector<16x128xf32> to vector<2x128xf32>
    %451 = arith.truncf %414 : vector<2x32xf32> to vector<2x32xbf16>
    %cst_132 = arith.constant dense<0.000000e+00> : vector<2x128xf32>
    %452 = tpu.matmul %451, %15, %cst_132 {dimension_numbers = #tpu.dot_dimension_numbers<[1], [0], [0], [1], [0, 0, 1, 1], [], []>} : vector<2x32xbf16>, vector<32x128xbf16>, vector<2x128xf32> -> vector<2x128xf32>
    %453 = arith.addf %450, %452 : vector<2x128xf32>
    %454 = vector.extract_strided_slice %453 {offsets = [0, 0], sizes = [2, 32], strides = [1, 1]} : vector<2x128xf32> to vector<2x32xf32>
    %cst_133 = arith.constant 5.000000e-01 : f32
    %455 = vector.broadcast %cst_133 : f32 to vector<2x32xf32>
    %456 = arith.mulf %455, %454 : vector<2x32xf32>
    %457 = math.tanh %456 : vector<2x32xf32>
    %cst_134 = arith.constant 5.000000e-01 : f32
    %458 = vector.broadcast %cst_134 : f32 to vector<2x32xf32>
    %459 = arith.mulf %458, %457 : vector<2x32xf32>
    %cst_135 = arith.constant 5.000000e-01 : f32
    %460 = vector.broadcast %cst_135 : f32 to vector<2x32xf32>
    %461 = arith.addf %459, %460 : vector<2x32xf32>
    %462 = vector.extract_strided_slice %453 {offsets = [0, 32], sizes = [2, 32], strides = [1, 1]} : vector<2x128xf32> to vector<2x32xf32>
    %cst_136 = arith.constant 5.000000e-01 : f32
    %463 = vector.broadcast %cst_136 : f32 to vector<2x32xf32>
    %464 = arith.mulf %463, %462 : vector<2x32xf32>
    %465 = math.tanh %464 : vector<2x32xf32>
    %cst_137 = arith.constant 5.000000e-01 : f32
    %466 = vector.broadcast %cst_137 : f32 to vector<2x32xf32>
    %467 = arith.mulf %466, %465 : vector<2x32xf32>
    %cst_138 = arith.constant 5.000000e-01 : f32
    %468 = vector.broadcast %cst_138 : f32 to vector<2x32xf32>
    %469 = arith.addf %467, %468 : vector<2x32xf32>
    %470 = vector.extract_strided_slice %453 {offsets = [0, 64], sizes = [2, 32], strides = [1, 1]} : vector<2x128xf32> to vector<2x32xf32>
    %471 = math.tanh %470 : vector<2x32xf32>
    %472 = vector.extract_strided_slice %453 {offsets = [0, 96], sizes = [2, 32], strides = [1, 1]} : vector<2x128xf32> to vector<2x32xf32>
    %cst_139 = arith.constant 5.000000e-01 : f32
    %473 = vector.broadcast %cst_139 : f32 to vector<2x32xf32>
    %474 = arith.mulf %473, %472 : vector<2x32xf32>
    %475 = math.tanh %474 : vector<2x32xf32>
    %cst_140 = arith.constant 5.000000e-01 : f32
    %476 = vector.broadcast %cst_140 : f32 to vector<2x32xf32>
    %477 = arith.mulf %476, %475 : vector<2x32xf32>
    %cst_141 = arith.constant 5.000000e-01 : f32
    %478 = vector.broadcast %cst_141 : f32 to vector<2x32xf32>
    %479 = arith.addf %477, %478 : vector<2x32xf32>
    %480 = arith.mulf %469, %412 : vector<2x32xf32>
    %481 = arith.mulf %461, %471 : vector<2x32xf32>
    %482 = arith.addf %480, %481 : vector<2x32xf32>
    %483 = math.tanh %482 : vector<2x32xf32>
    %484 = arith.mulf %479, %483 : vector<2x32xf32>
    %485 = tpu.concatenate %484, %449 in 1 : vector<2x32xf32>, vector<2x32xf32> -> vector<2x64xf32>
    %486 = arith.truncf %485 : vector<2x64xf32> to vector<2x64xbf16>
    %cst_142 = arith.constant dense<0.000000e+00> : vector<2x128xf32>
    %487 = tpu.matmul %486, %16, %cst_142 {dimension_numbers = #tpu.dot_dimension_numbers<[1], [0], [0], [1], [0, 0, 1, 1], [], []>} : vector<2x64xbf16>, vector<64x128xbf16>, vector<2x128xf32> -> vector<2x128xf32>
    %488 = arith.addf %487, %20 : vector<2x128xf32>
    %489 = vector.extract_strided_slice %488 {offsets = [0, 0], sizes = [2, 32], strides = [1, 1]} : vector<2x128xf32> to vector<2x32xf32>
    %cst_143 = arith.constant 5.000000e-01 : f32
    %490 = vector.broadcast %cst_143 : f32 to vector<2x32xf32>
    %491 = arith.mulf %490, %489 : vector<2x32xf32>
    %492 = math.tanh %491 : vector<2x32xf32>
    %cst_144 = arith.constant 5.000000e-01 : f32
    %493 = vector.broadcast %cst_144 : f32 to vector<2x32xf32>
    %494 = arith.mulf %493, %492 : vector<2x32xf32>
    %cst_145 = arith.constant 5.000000e-01 : f32
    %495 = vector.broadcast %cst_145 : f32 to vector<2x32xf32>
    %496 = arith.addf %494, %495 : vector<2x32xf32>
    %497 = vector.extract_strided_slice %488 {offsets = [0, 32], sizes = [2, 32], strides = [1, 1]} : vector<2x128xf32> to vector<2x32xf32>
    %cst_146 = arith.constant 5.000000e-01 : f32
    %498 = vector.broadcast %cst_146 : f32 to vector<2x32xf32>
    %499 = arith.mulf %498, %497 : vector<2x32xf32>
    %500 = math.tanh %499 : vector<2x32xf32>
    %cst_147 = arith.constant 5.000000e-01 : f32
    %501 = vector.broadcast %cst_147 : f32 to vector<2x32xf32>
    %502 = arith.mulf %501, %500 : vector<2x32xf32>
    %cst_148 = arith.constant 5.000000e-01 : f32
    %503 = vector.broadcast %cst_148 : f32 to vector<2x32xf32>
    %504 = arith.addf %502, %503 : vector<2x32xf32>
    %505 = vector.extract_strided_slice %488 {offsets = [0, 64], sizes = [2, 32], strides = [1, 1]} : vector<2x128xf32> to vector<2x32xf32>
    %506 = math.tanh %505 : vector<2x32xf32>
    %507 = vector.extract_strided_slice %488 {offsets = [0, 96], sizes = [2, 32], strides = [1, 1]} : vector<2x128xf32> to vector<2x32xf32>
    %cst_149 = arith.constant 5.000000e-01 : f32
    %508 = vector.broadcast %cst_149 : f32 to vector<2x32xf32>
    %509 = arith.mulf %508, %507 : vector<2x32xf32>
    %510 = math.tanh %509 : vector<2x32xf32>
    %cst_150 = arith.constant 5.000000e-01 : f32
    %511 = vector.broadcast %cst_150 : f32 to vector<2x32xf32>
    %512 = arith.mulf %511, %510 : vector<2x32xf32>
    %cst_151 = arith.constant 5.000000e-01 : f32
    %513 = vector.broadcast %cst_151 : f32 to vector<2x32xf32>
    %514 = arith.addf %512, %513 : vector<2x32xf32>
    %515 = arith.mulf %504, %447 : vector<2x32xf32>
    %516 = arith.mulf %496, %506 : vector<2x32xf32>
    %517 = arith.addf %515, %516 : vector<2x32xf32>
    %518 = math.tanh %517 : vector<2x32xf32>
    %519 = arith.mulf %514, %518 : vector<2x32xf32>
    %520 = vector.extract_strided_slice %25 {offsets = [14, 0], sizes = [2, 128], strides = [1, 1]} : vector<16x128xf32> to vector<2x128xf32>
    %521 = arith.truncf %484 : vector<2x32xf32> to vector<2x32xbf16>
    %cst_152 = arith.constant dense<0.000000e+00> : vector<2x128xf32>
    %522 = tpu.matmul %521, %15, %cst_152 {dimension_numbers = #tpu.dot_dimension_numbers<[1], [0], [0], [1], [0, 0, 1, 1], [], []>} : vector<2x32xbf16>, vector<32x128xbf16>, vector<2x128xf32> -> vector<2x128xf32>
    %523 = arith.addf %520, %522 : vector<2x128xf32>
    %524 = vector.extract_strided_slice %523 {offsets = [0, 0], sizes = [2, 32], strides = [1, 1]} : vector<2x128xf32> to vector<2x32xf32>
    %cst_153 = arith.constant 5.000000e-01 : f32
    %525 = vector.broadcast %cst_153 : f32 to vector<2x32xf32>
    %526 = arith.mulf %525, %524 : vector<2x32xf32>
    %527 = math.tanh %526 : vector<2x32xf32>
    %cst_154 = arith.constant 5.000000e-01 : f32
    %528 = vector.broadcast %cst_154 : f32 to vector<2x32xf32>
    %529 = arith.mulf %528, %527 : vector<2x32xf32>
    %cst_155 = arith.constant 5.000000e-01 : f32
    %530 = vector.broadcast %cst_155 : f32 to vector<2x32xf32>
    %531 = arith.addf %529, %530 : vector<2x32xf32>
    %532 = vector.extract_strided_slice %523 {offsets = [0, 32], sizes = [2, 32], strides = [1, 1]} : vector<2x128xf32> to vector<2x32xf32>
    %cst_156 = arith.constant 5.000000e-01 : f32
    %533 = vector.broadcast %cst_156 : f32 to vector<2x32xf32>
    %534 = arith.mulf %533, %532 : vector<2x32xf32>
    %535 = math.tanh %534 : vector<2x32xf32>
    %cst_157 = arith.constant 5.000000e-01 : f32
    %536 = vector.broadcast %cst_157 : f32 to vector<2x32xf32>
    %537 = arith.mulf %536, %535 : vector<2x32xf32>
    %cst_158 = arith.constant 5.000000e-01 : f32
    %538 = vector.broadcast %cst_158 : f32 to vector<2x32xf32>
    %539 = arith.addf %537, %538 : vector<2x32xf32>
    %540 = vector.extract_strided_slice %523 {offsets = [0, 64], sizes = [2, 32], strides = [1, 1]} : vector<2x128xf32> to vector<2x32xf32>
    %541 = math.tanh %540 : vector<2x32xf32>
    %542 = vector.extract_strided_slice %523 {offsets = [0, 96], sizes = [2, 32], strides = [1, 1]} : vector<2x128xf32> to vector<2x32xf32>
    %cst_159 = arith.constant 5.000000e-01 : f32
    %543 = vector.broadcast %cst_159 : f32 to vector<2x32xf32>
    %544 = arith.mulf %543, %542 : vector<2x32xf32>
    %545 = math.tanh %544 : vector<2x32xf32>
    %cst_160 = arith.constant 5.000000e-01 : f32
    %546 = vector.broadcast %cst_160 : f32 to vector<2x32xf32>
    %547 = arith.mulf %546, %545 : vector<2x32xf32>
    %cst_161 = arith.constant 5.000000e-01 : f32
    %548 = vector.broadcast %cst_161 : f32 to vector<2x32xf32>
    %549 = arith.addf %547, %548 : vector<2x32xf32>
    %550 = arith.mulf %539, %482 : vector<2x32xf32>
    %551 = arith.mulf %531, %541 : vector<2x32xf32>
    %552 = arith.addf %550, %551 : vector<2x32xf32>
    %553 = math.tanh %552 : vector<2x32xf32>
    %554 = arith.mulf %549, %553 : vector<2x32xf32>
    %555 = tpu.concatenate %554, %519 in 1 : vector<2x32xf32>, vector<2x32xf32> -> vector<2x64xf32>
    %556 = arith.truncf %555 : vector<2x64xf32> to vector<2x64xbf16>
    %cst_162 = arith.constant dense<0.000000e+00> : vector<2x128xf32>
    %557 = tpu.matmul %556, %16, %cst_162 {dimension_numbers = #tpu.dot_dimension_numbers<[1], [0], [0], [1], [0, 0, 1, 1], [], []>} : vector<2x64xbf16>, vector<64x128xbf16>, vector<2x128xf32> -> vector<2x128xf32>
    %558 = arith.addf %557, %20 : vector<2x128xf32>
    %559 = vector.extract_strided_slice %558 {offsets = [0, 0], sizes = [2, 32], strides = [1, 1]} : vector<2x128xf32> to vector<2x32xf32>
    %cst_163 = arith.constant 5.000000e-01 : f32
    %560 = vector.broadcast %cst_163 : f32 to vector<2x32xf32>
    %561 = arith.mulf %560, %559 : vector<2x32xf32>
    %562 = math.tanh %561 : vector<2x32xf32>
    %cst_164 = arith.constant 5.000000e-01 : f32
    %563 = vector.broadcast %cst_164 : f32 to vector<2x32xf32>
    %564 = arith.mulf %563, %562 : vector<2x32xf32>
    %cst_165 = arith.constant 5.000000e-01 : f32
    %565 = vector.broadcast %cst_165 : f32 to vector<2x32xf32>
    %566 = arith.addf %564, %565 : vector<2x32xf32>
    %567 = vector.extract_strided_slice %558 {offsets = [0, 32], sizes = [2, 32], strides = [1, 1]} : vector<2x128xf32> to vector<2x32xf32>
    %cst_166 = arith.constant 5.000000e-01 : f32
    %568 = vector.broadcast %cst_166 : f32 to vector<2x32xf32>
    %569 = arith.mulf %568, %567 : vector<2x32xf32>
    %570 = math.tanh %569 : vector<2x32xf32>
    %cst_167 = arith.constant 5.000000e-01 : f32
    %571 = vector.broadcast %cst_167 : f32 to vector<2x32xf32>
    %572 = arith.mulf %571, %570 : vector<2x32xf32>
    %cst_168 = arith.constant 5.000000e-01 : f32
    %573 = vector.broadcast %cst_168 : f32 to vector<2x32xf32>
    %574 = arith.addf %572, %573 : vector<2x32xf32>
    %575 = vector.extract_strided_slice %558 {offsets = [0, 64], sizes = [2, 32], strides = [1, 1]} : vector<2x128xf32> to vector<2x32xf32>
    %576 = math.tanh %575 : vector<2x32xf32>
    %577 = vector.extract_strided_slice %558 {offsets = [0, 96], sizes = [2, 32], strides = [1, 1]} : vector<2x128xf32> to vector<2x32xf32>
    %cst_169 = arith.constant 5.000000e-01 : f32
    %578 = vector.broadcast %cst_169 : f32 to vector<2x32xf32>
    %579 = arith.mulf %578, %577 : vector<2x32xf32>
    %580 = math.tanh %579 : vector<2x32xf32>
    %cst_170 = arith.constant 5.000000e-01 : f32
    %581 = vector.broadcast %cst_170 : f32 to vector<2x32xf32>
    %582 = arith.mulf %581, %580 : vector<2x32xf32>
    %cst_171 = arith.constant 5.000000e-01 : f32
    %583 = vector.broadcast %cst_171 : f32 to vector<2x32xf32>
    %584 = arith.addf %582, %583 : vector<2x32xf32>
    %585 = arith.mulf %574, %517 : vector<2x32xf32>
    %586 = arith.mulf %566, %576 : vector<2x32xf32>
    %587 = arith.addf %585, %586 : vector<2x32xf32>
    %588 = math.tanh %587 : vector<2x32xf32>
    %589 = arith.mulf %584, %588 : vector<2x32xf32>
    %c0_172 = arith.constant 0 : index
    %c0_173 = arith.constant 0 : index
    %590 = vector.load %arg3[%c0_172, %c0_173] : memref<32x64xf32, #tpu.memory_space<vmem>>, vector<32x64xf32>
    %cst_174 = arith.constant dense<0.000000e+00> : vector<2x64xf32>
    %591 = tpu.matmul %589, %590, %cst_174 {dimension_numbers = #tpu.dot_dimension_numbers<[1], [0], [0], [1], [0, 0, 1, 1], [], []>} : vector<2x32xf32>, vector<32x64xf32>, vector<2x64xf32> -> vector<2x64xf32>
    %c0_175 = arith.constant 0 : index
    %c0_176 = arith.constant 0 : index
    %592 = vector.load %arg4[%c0_175, %c0_176] : memref<1x64xf32, #tpu.memory_space<vmem>>, vector<1x64xf32>
    %593 = vector.broadcast %592 : vector<1x64xf32> to vector<2x64xf32>
    %594 = arith.addf %591, %593 : vector<2x64xf32>
    %c0_i32_177 = arith.constant 0 : i32
    %595 = tpu.memref_slice %arg23[%c0_i32_177] : memref<7x!tpu.dma_semaphore, #tpu.memory_space<semaphore_mem>> -> memref<1x!tpu.dma_semaphore, #tpu.memory_space<semaphore_mem>>
    %596 = tpu.memref_squeeze %595 : memref<1x!tpu.dma_semaphore, #tpu.memory_space<semaphore_mem>> -> memref<!tpu.dma_semaphore, #tpu.memory_space<semaphore_mem>>
    tpu.wait_dma2 semaphore(%596 : memref<!tpu.dma_semaphore, #tpu.memory_space<semaphore_mem>>) src(%arg8 : memref<5x64x64xbf16, #tpu.memory_space<any>>) dst(%arg16 : memref<5x64x64xbf16, #tpu.memory_space<vmem>>)
    %c1_i32_178 = arith.constant 1 : i32
    %597 = tpu.memref_slice %arg23[%c1_i32_178] : memref<7x!tpu.dma_semaphore, #tpu.memory_space<semaphore_mem>> -> memref<1x!tpu.dma_semaphore, #tpu.memory_space<semaphore_mem>>
    %598 = tpu.memref_squeeze %597 : memref<1x!tpu.dma_semaphore, #tpu.memory_space<semaphore_mem>> -> memref<!tpu.dma_semaphore, #tpu.memory_space<semaphore_mem>>
    tpu.wait_dma2 semaphore(%598 : memref<!tpu.dma_semaphore, #tpu.memory_space<semaphore_mem>>) src(%arg9 : memref<64x256xbf16, #tpu.memory_space<any>>) dst(%arg17 : memref<64x256xbf16, #tpu.memory_space<vmem>>)
    %c2_i32_179 = arith.constant 2 : i32
    %599 = tpu.memref_slice %arg23[%c2_i32_179] : memref<7x!tpu.dma_semaphore, #tpu.memory_space<semaphore_mem>> -> memref<1x!tpu.dma_semaphore, #tpu.memory_space<semaphore_mem>>
    %600 = tpu.memref_squeeze %599 : memref<1x!tpu.dma_semaphore, #tpu.memory_space<semaphore_mem>> -> memref<!tpu.dma_semaphore, #tpu.memory_space<semaphore_mem>>
    tpu.wait_dma2 semaphore(%600 : memref<!tpu.dma_semaphore, #tpu.memory_space<semaphore_mem>>) src(%arg10 : memref<3x128x128xbf16, #tpu.memory_space<any>>) dst(%arg18 : memref<3x128x128xbf16, #tpu.memory_space<vmem>>)
    %c3_i32_180 = arith.constant 3 : i32
    %601 = tpu.memref_slice %arg23[%c3_i32_180] : memref<7x!tpu.dma_semaphore, #tpu.memory_space<semaphore_mem>> -> memref<1x!tpu.dma_semaphore, #tpu.memory_space<semaphore_mem>>
    %602 = tpu.memref_squeeze %601 : memref<1x!tpu.dma_semaphore, #tpu.memory_space<semaphore_mem>> -> memref<!tpu.dma_semaphore, #tpu.memory_space<semaphore_mem>>
    tpu.wait_dma2 semaphore(%602 : memref<!tpu.dma_semaphore, #tpu.memory_space<semaphore_mem>>) src(%arg11 : memref<128x512xbf16, #tpu.memory_space<any>>) dst(%arg19 : memref<128x512xbf16, #tpu.memory_space<vmem>>)
    %c4_i32_181 = arith.constant 4 : i32
    %603 = tpu.memref_slice %arg23[%c4_i32_181] : memref<7x!tpu.dma_semaphore, #tpu.memory_space<semaphore_mem>> -> memref<1x!tpu.dma_semaphore, #tpu.memory_space<semaphore_mem>>
    %604 = tpu.memref_squeeze %603 : memref<1x!tpu.dma_semaphore, #tpu.memory_space<semaphore_mem>> -> memref<!tpu.dma_semaphore, #tpu.memory_space<semaphore_mem>>
    tpu.wait_dma2 semaphore(%604 : memref<!tpu.dma_semaphore, #tpu.memory_space<semaphore_mem>>) src(%arg12 : memref<3x256x256xbf16, #tpu.memory_space<any>>) dst(%arg20 : memref<3x256x256xbf16, #tpu.memory_space<vmem>>)
    %c5_i32_182 = arith.constant 5 : i32
    %605 = tpu.memref_slice %arg23[%c5_i32_182] : memref<7x!tpu.dma_semaphore, #tpu.memory_space<semaphore_mem>> -> memref<1x!tpu.dma_semaphore, #tpu.memory_space<semaphore_mem>>
    %606 = tpu.memref_squeeze %605 : memref<1x!tpu.dma_semaphore, #tpu.memory_space<semaphore_mem>> -> memref<!tpu.dma_semaphore, #tpu.memory_space<semaphore_mem>>
    tpu.wait_dma2 semaphore(%606 : memref<!tpu.dma_semaphore, #tpu.memory_space<semaphore_mem>>) src(%arg13 : memref<256x1024xbf16, #tpu.memory_space<any>>) dst(%arg21 : memref<256x1024xbf16, #tpu.memory_space<vmem>>)
    %c6_i32_183 = arith.constant 6 : i32
    %607 = tpu.memref_slice %arg23[%c6_i32_183] : memref<7x!tpu.dma_semaphore, #tpu.memory_space<semaphore_mem>> -> memref<1x!tpu.dma_semaphore, #tpu.memory_space<semaphore_mem>>
    %608 = tpu.memref_squeeze %607 : memref<1x!tpu.dma_semaphore, #tpu.memory_space<semaphore_mem>> -> memref<!tpu.dma_semaphore, #tpu.memory_space<semaphore_mem>>
    tpu.wait_dma2 semaphore(%608 : memref<!tpu.dma_semaphore, #tpu.memory_space<semaphore_mem>>) src(%arg14 : memref<3x512x512xbf16, #tpu.memory_space<any>>) dst(%arg22 : memref<3x512x512xbf16, #tpu.memory_space<vmem>>)
    %c0_184 = arith.constant 0 : index
    %c0_185 = arith.constant 0 : index
    %c0_186 = arith.constant 0 : index
    %609 = vector.load %arg16[%c0_184, %c0_185, %c0_186] : memref<5x64x64xbf16, #tpu.memory_space<vmem>>, vector<1x64x64xbf16>
    %610 = vector.shape_cast %609 : vector<1x64x64xbf16> to vector<64x64xbf16>
    %611 = arith.truncf %594 : vector<2x64xf32> to vector<2x64xbf16>
    %cst_187 = arith.constant dense<0.000000e+00> : vector<2x64xf32>
    %612 = tpu.matmul %611, %610, %cst_187 {dimension_numbers = #tpu.dot_dimension_numbers<[1], [0], [0], [1], [0, 0, 1, 1], [], []>} : vector<2x64xbf16>, vector<64x64xbf16>, vector<2x64xf32> -> vector<2x64xf32>
    %cst_188 = arith.constant 0.000000e+00 : f32
    %613 = vector.broadcast %cst_188 : f32 to vector<2x64xf32>
    %614 = arith.maximumf %612, %613 : vector<2x64xf32>
    %c1_189 = arith.constant 1 : index
    %c0_190 = arith.constant 0 : index
    %c0_191 = arith.constant 0 : index
    %615 = vector.load %arg16[%c1_189, %c0_190, %c0_191] : memref<5x64x64xbf16, #tpu.memory_space<vmem>>, vector<1x64x64xbf16>
    %616 = vector.shape_cast %615 : vector<1x64x64xbf16> to vector<64x64xbf16>
    %617 = arith.truncf %614 : vector<2x64xf32> to vector<2x64xbf16>
    %cst_192 = arith.constant dense<0.000000e+00> : vector<2x64xf32>
    %618 = tpu.matmul %617, %616, %cst_192 {dimension_numbers = #tpu.dot_dimension_numbers<[1], [0], [0], [1], [0, 0, 1, 1], [], []>} : vector<2x64xbf16>, vector<64x64xbf16>, vector<2x64xf32> -> vector<2x64xf32>
    %cst_193 = arith.constant 0.000000e+00 : f32
    %619 = vector.broadcast %cst_193 : f32 to vector<2x64xf32>
    %620 = arith.maximumf %618, %619 : vector<2x64xf32>
    %c2 = arith.constant 2 : index
    %c0_194 = arith.constant 0 : index
    %c0_195 = arith.constant 0 : index
    %621 = vector.load %arg16[%c2, %c0_194, %c0_195] : memref<5x64x64xbf16, #tpu.memory_space<vmem>>, vector<1x64x64xbf16>
    %622 = vector.shape_cast %621 : vector<1x64x64xbf16> to vector<64x64xbf16>
    %623 = arith.truncf %620 : vector<2x64xf32> to vector<2x64xbf16>
    %cst_196 = arith.constant dense<0.000000e+00> : vector<2x64xf32>
    %624 = tpu.matmul %623, %622, %cst_196 {dimension_numbers = #tpu.dot_dimension_numbers<[1], [0], [0], [1], [0, 0, 1, 1], [], []>} : vector<2x64xbf16>, vector<64x64xbf16>, vector<2x64xf32> -> vector<2x64xf32>
    %625 = arith.addf %624, %614 : vector<2x64xf32>
    %cst_197 = arith.constant 0.000000e+00 : f32
    %626 = vector.broadcast %cst_197 : f32 to vector<2x64xf32>
    %627 = arith.maximumf %625, %626 : vector<2x64xf32>
    %c3 = arith.constant 3 : index
    %c0_198 = arith.constant 0 : index
    %c0_199 = arith.constant 0 : index
    %628 = vector.load %arg16[%c3, %c0_198, %c0_199] : memref<5x64x64xbf16, #tpu.memory_space<vmem>>, vector<1x64x64xbf16>
    %629 = vector.shape_cast %628 : vector<1x64x64xbf16> to vector<64x64xbf16>
    %630 = arith.truncf %627 : vector<2x64xf32> to vector<2x64xbf16>
    %cst_200 = arith.constant dense<0.000000e+00> : vector<2x64xf32>
    %631 = tpu.matmul %630, %629, %cst_200 {dimension_numbers = #tpu.dot_dimension_numbers<[1], [0], [0], [1], [0, 0, 1, 1], [], []>} : vector<2x64xbf16>, vector<64x64xbf16>, vector<2x64xf32> -> vector<2x64xf32>
    %cst_201 = arith.constant 0.000000e+00 : f32
    %632 = vector.broadcast %cst_201 : f32 to vector<2x64xf32>
    %633 = arith.maximumf %631, %632 : vector<2x64xf32>
    %c4 = arith.constant 4 : index
    %c0_202 = arith.constant 0 : index
    %c0_203 = arith.constant 0 : index
    %634 = vector.load %arg16[%c4, %c0_202, %c0_203] : memref<5x64x64xbf16, #tpu.memory_space<vmem>>, vector<1x64x64xbf16>
    %635 = vector.shape_cast %634 : vector<1x64x64xbf16> to vector<64x64xbf16>
    %636 = arith.truncf %633 : vector<2x64xf32> to vector<2x64xbf16>
    %cst_204 = arith.constant dense<0.000000e+00> : vector<2x64xf32>
    %637 = tpu.matmul %636, %635, %cst_204 {dimension_numbers = #tpu.dot_dimension_numbers<[1], [0], [0], [1], [0, 0, 1, 1], [], []>} : vector<2x64xbf16>, vector<64x64xbf16>, vector<2x64xf32> -> vector<2x64xf32>
    %638 = arith.addf %637, %627 : vector<2x64xf32>
    %cst_205 = arith.constant 0.000000e+00 : f32
    %639 = vector.broadcast %cst_205 : f32 to vector<2x64xf32>
    %640 = arith.maximumf %638, %639 : vector<2x64xf32>
    %c0_206 = arith.constant 0 : index
    %c0_207 = arith.constant 0 : index
    %641 = vector.load %arg17[%c0_206, %c0_207] : memref<64x256xbf16, #tpu.memory_space<vmem>>, vector<64x256xbf16>
    %642 = arith.truncf %640 : vector<2x64xf32> to vector<2x64xbf16>
    %cst_208 = arith.constant dense<0.000000e+00> : vector<2x256xf32>
    %643 = tpu.matmul %642, %641, %cst_208 {dimension_numbers = #tpu.dot_dimension_numbers<[1], [0], [0], [1], [0, 0, 1, 1], [], []>} : vector<2x64xbf16>, vector<64x256xbf16>, vector<2x256xf32> -> vector<2x256xf32>
    %644 = vector.extract_strided_slice %643 {offsets = [0, 0], sizes = [2, 128], strides = [1, 1]} : vector<2x256xf32> to vector<2x128xf32>
    %cst_209 = arith.constant 0.000000e+00 : f32
    %645 = vector.broadcast %cst_209 : f32 to vector<2x128xf32>
    %646 = arith.maximumf %644, %645 : vector<2x128xf32>
    %c0_210 = arith.constant 0 : index
    %c0_211 = arith.constant 0 : index
    %c0_212 = arith.constant 0 : index
    %647 = vector.load %arg18[%c0_210, %c0_211, %c0_212] : memref<3x128x128xbf16, #tpu.memory_space<vmem>>, vector<1x128x128xbf16>
    %648 = vector.shape_cast %647 : vector<1x128x128xbf16> to vector<128x128xbf16>
    %649 = arith.truncf %646 : vector<2x128xf32> to vector<2x128xbf16>
    %cst_213 = arith.constant dense<0.000000e+00> : vector<2x128xf32>
    %650 = tpu.matmul %649, %648, %cst_213 {dimension_numbers = #tpu.dot_dimension_numbers<[1], [0], [0], [1], [0, 0, 1, 1], [], []>} : vector<2x128xbf16>, vector<128x128xbf16>, vector<2x128xf32> -> vector<2x128xf32>
    %651 = vector.extract_strided_slice %643 {offsets = [0, 128], sizes = [2, 128], strides = [1, 1]} : vector<2x256xf32> to vector<2x128xf32>
    %652 = arith.addf %650, %651 : vector<2x128xf32>
    %cst_214 = arith.constant 0.000000e+00 : f32
    %653 = vector.broadcast %cst_214 : f32 to vector<2x128xf32>
    %654 = arith.maximumf %652, %653 : vector<2x128xf32>
    %c1_215 = arith.constant 1 : index
    %c0_216 = arith.constant 0 : index
    %c0_217 = arith.constant 0 : index
    %655 = vector.load %arg18[%c1_215, %c0_216, %c0_217] : memref<3x128x128xbf16, #tpu.memory_space<vmem>>, vector<1x128x128xbf16>
    %656 = vector.shape_cast %655 : vector<1x128x128xbf16> to vector<128x128xbf16>
    %657 = arith.truncf %654 : vector<2x128xf32> to vector<2x128xbf16>
    %cst_218 = arith.constant dense<0.000000e+00> : vector<2x128xf32>
    %658 = tpu.matmul %657, %656, %cst_218 {dimension_numbers = #tpu.dot_dimension_numbers<[1], [0], [0], [1], [0, 0, 1, 1], [], []>} : vector<2x128xbf16>, vector<128x128xbf16>, vector<2x128xf32> -> vector<2x128xf32>
    %cst_219 = arith.constant 0.000000e+00 : f32
    %659 = vector.broadcast %cst_219 : f32 to vector<2x128xf32>
    %660 = arith.maximumf %658, %659 : vector<2x128xf32>
    %c2_220 = arith.constant 2 : index
    %c0_221 = arith.constant 0 : index
    %c0_222 = arith.constant 0 : index
    %661 = vector.load %arg18[%c2_220, %c0_221, %c0_222] : memref<3x128x128xbf16, #tpu.memory_space<vmem>>, vector<1x128x128xbf16>
    %662 = vector.shape_cast %661 : vector<1x128x128xbf16> to vector<128x128xbf16>
    %663 = arith.truncf %660 : vector<2x128xf32> to vector<2x128xbf16>
    %cst_223 = arith.constant dense<0.000000e+00> : vector<2x128xf32>
    %664 = tpu.matmul %663, %662, %cst_223 {dimension_numbers = #tpu.dot_dimension_numbers<[1], [0], [0], [1], [0, 0, 1, 1], [], []>} : vector<2x128xbf16>, vector<128x128xbf16>, vector<2x128xf32> -> vector<2x128xf32>
    %665 = arith.addf %664, %654 : vector<2x128xf32>
    %cst_224 = arith.constant 0.000000e+00 : f32
    %666 = vector.broadcast %cst_224 : f32 to vector<2x128xf32>
    %667 = arith.maximumf %665, %666 : vector<2x128xf32>
    %c0_225 = arith.constant 0 : index
    %c0_226 = arith.constant 0 : index
    %668 = vector.load %arg19[%c0_225, %c0_226] : memref<128x512xbf16, #tpu.memory_space<vmem>>, vector<128x512xbf16>
    %669 = arith.truncf %667 : vector<2x128xf32> to vector<2x128xbf16>
    %cst_227 = arith.constant dense<0.000000e+00> : vector<2x512xf32>
    %670 = tpu.matmul %669, %668, %cst_227 {dimension_numbers = #tpu.dot_dimension_numbers<[1], [0], [0], [1], [0, 0, 1, 1], [], []>} : vector<2x128xbf16>, vector<128x512xbf16>, vector<2x512xf32> -> vector<2x512xf32>
    %671 = vector.extract_strided_slice %670 {offsets = [0, 0], sizes = [2, 256], strides = [1, 1]} : vector<2x512xf32> to vector<2x256xf32>
    %cst_228 = arith.constant 0.000000e+00 : f32
    %672 = vector.broadcast %cst_228 : f32 to vector<2x256xf32>
    %673 = arith.maximumf %671, %672 : vector<2x256xf32>
    %c0_229 = arith.constant 0 : index
    %c0_230 = arith.constant 0 : index
    %c0_231 = arith.constant 0 : index
    %674 = vector.load %arg20[%c0_229, %c0_230, %c0_231] : memref<3x256x256xbf16, #tpu.memory_space<vmem>>, vector<1x256x256xbf16>
    %675 = vector.shape_cast %674 : vector<1x256x256xbf16> to vector<256x256xbf16>
    %676 = arith.truncf %673 : vector<2x256xf32> to vector<2x256xbf16>
    %cst_232 = arith.constant dense<0.000000e+00> : vector<2x256xf32>
    %677 = tpu.matmul %676, %675, %cst_232 {dimension_numbers = #tpu.dot_dimension_numbers<[1], [0], [0], [1], [0, 0, 1, 1], [], []>} : vector<2x256xbf16>, vector<256x256xbf16>, vector<2x256xf32> -> vector<2x256xf32>
    %678 = vector.extract_strided_slice %670 {offsets = [0, 256], sizes = [2, 256], strides = [1, 1]} : vector<2x512xf32> to vector<2x256xf32>
    %679 = arith.addf %677, %678 : vector<2x256xf32>
    %cst_233 = arith.constant 0.000000e+00 : f32
    %680 = vector.broadcast %cst_233 : f32 to vector<2x256xf32>
    %681 = arith.maximumf %679, %680 : vector<2x256xf32>
    %c1_234 = arith.constant 1 : index
    %c0_235 = arith.constant 0 : index
    %c0_236 = arith.constant 0 : index
    %682 = vector.load %arg20[%c1_234, %c0_235, %c0_236] : memref<3x256x256xbf16, #tpu.memory_space<vmem>>, vector<1x256x256xbf16>
    %683 = vector.shape_cast %682 : vector<1x256x256xbf16> to vector<256x256xbf16>
    %684 = arith.truncf %681 : vector<2x256xf32> to vector<2x256xbf16>
    %cst_237 = arith.constant dense<0.000000e+00> : vector<2x256xf32>
    %685 = tpu.matmul %684, %683, %cst_237 {dimension_numbers = #tpu.dot_dimension_numbers<[1], [0], [0], [1], [0, 0, 1, 1], [], []>} : vector<2x256xbf16>, vector<256x256xbf16>, vector<2x256xf32> -> vector<2x256xf32>
    %cst_238 = arith.constant 0.000000e+00 : f32
    %686 = vector.broadcast %cst_238 : f32 to vector<2x256xf32>
    %687 = arith.maximumf %685, %686 : vector<2x256xf32>
    %c2_239 = arith.constant 2 : index
    %c0_240 = arith.constant 0 : index
    %c0_241 = arith.constant 0 : index
    %688 = vector.load %arg20[%c2_239, %c0_240, %c0_241] : memref<3x256x256xbf16, #tpu.memory_space<vmem>>, vector<1x256x256xbf16>
    %689 = vector.shape_cast %688 : vector<1x256x256xbf16> to vector<256x256xbf16>
    %690 = arith.truncf %687 : vector<2x256xf32> to vector<2x256xbf16>
    %cst_242 = arith.constant dense<0.000000e+00> : vector<2x256xf32>
    %691 = tpu.matmul %690, %689, %cst_242 {dimension_numbers = #tpu.dot_dimension_numbers<[1], [0], [0], [1], [0, 0, 1, 1], [], []>} : vector<2x256xbf16>, vector<256x256xbf16>, vector<2x256xf32> -> vector<2x256xf32>
    %692 = arith.addf %691, %681 : vector<2x256xf32>
    %cst_243 = arith.constant 0.000000e+00 : f32
    %693 = vector.broadcast %cst_243 : f32 to vector<2x256xf32>
    %694 = arith.maximumf %692, %693 : vector<2x256xf32>
    %c0_244 = arith.constant 0 : index
    %c0_245 = arith.constant 0 : index
    %695 = vector.load %arg21[%c0_244, %c0_245] : memref<256x1024xbf16, #tpu.memory_space<vmem>>, vector<256x1024xbf16>
    %696 = arith.truncf %694 : vector<2x256xf32> to vector<2x256xbf16>
    %cst_246 = arith.constant dense<0.000000e+00> : vector<2x1024xf32>
    %697 = tpu.matmul %696, %695, %cst_246 {dimension_numbers = #tpu.dot_dimension_numbers<[1], [0], [0], [1], [0, 0, 1, 1], [], []>} : vector<2x256xbf16>, vector<256x1024xbf16>, vector<2x1024xf32> -> vector<2x1024xf32>
    %698 = vector.extract_strided_slice %697 {offsets = [0, 0], sizes = [2, 512], strides = [1, 1]} : vector<2x1024xf32> to vector<2x512xf32>
    %cst_247 = arith.constant 0.000000e+00 : f32
    %699 = vector.broadcast %cst_247 : f32 to vector<2x512xf32>
    %700 = arith.maximumf %698, %699 : vector<2x512xf32>
    %c0_248 = arith.constant 0 : index
    %c0_249 = arith.constant 0 : index
    %c0_250 = arith.constant 0 : index
    %701 = vector.load %arg22[%c0_248, %c0_249, %c0_250] : memref<3x512x512xbf16, #tpu.memory_space<vmem>>, vector<1x512x512xbf16>
    %702 = vector.shape_cast %701 : vector<1x512x512xbf16> to vector<512x512xbf16>
    %703 = arith.truncf %700 : vector<2x512xf32> to vector<2x512xbf16>
    %cst_251 = arith.constant dense<0.000000e+00> : vector<2x512xf32>
    %704 = tpu.matmul %703, %702, %cst_251 {dimension_numbers = #tpu.dot_dimension_numbers<[1], [0], [0], [1], [0, 0, 1, 1], [], []>} : vector<2x512xbf16>, vector<512x512xbf16>, vector<2x512xf32> -> vector<2x512xf32>
    %705 = vector.extract_strided_slice %697 {offsets = [0, 512], sizes = [2, 512], strides = [1, 1]} : vector<2x1024xf32> to vector<2x512xf32>
    %706 = arith.addf %704, %705 : vector<2x512xf32>
    %cst_252 = arith.constant 0.000000e+00 : f32
    %707 = vector.broadcast %cst_252 : f32 to vector<2x512xf32>
    %708 = arith.maximumf %706, %707 : vector<2x512xf32>
    %c1_253 = arith.constant 1 : index
    %c0_254 = arith.constant 0 : index
    %c0_255 = arith.constant 0 : index
    %709 = vector.load %arg22[%c1_253, %c0_254, %c0_255] : memref<3x512x512xbf16, #tpu.memory_space<vmem>>, vector<1x512x512xbf16>
    %710 = vector.shape_cast %709 : vector<1x512x512xbf16> to vector<512x512xbf16>
    %711 = arith.truncf %708 : vector<2x512xf32> to vector<2x512xbf16>
    %cst_256 = arith.constant dense<0.000000e+00> : vector<2x512xf32>
    %712 = tpu.matmul %711, %710, %cst_256 {dimension_numbers = #tpu.dot_dimension_numbers<[1], [0], [0], [1], [0, 0, 1, 1], [], []>} : vector<2x512xbf16>, vector<512x512xbf16>, vector<2x512xf32> -> vector<2x512xf32>
    %cst_257 = arith.constant 0.000000e+00 : f32
    %713 = vector.broadcast %cst_257 : f32 to vector<2x512xf32>
    %714 = arith.maximumf %712, %713 : vector<2x512xf32>
    %c2_258 = arith.constant 2 : index
    %c0_259 = arith.constant 0 : index
    %c0_260 = arith.constant 0 : index
    %715 = vector.load %arg22[%c2_258, %c0_259, %c0_260] : memref<3x512x512xbf16, #tpu.memory_space<vmem>>, vector<1x512x512xbf16>
    %716 = vector.shape_cast %715 : vector<1x512x512xbf16> to vector<512x512xbf16>
    %717 = arith.truncf %714 : vector<2x512xf32> to vector<2x512xbf16>
    %cst_261 = arith.constant dense<0.000000e+00> : vector<2x512xf32>
    %718 = tpu.matmul %717, %716, %cst_261 {dimension_numbers = #tpu.dot_dimension_numbers<[1], [0], [0], [1], [0, 0, 1, 1], [], []>} : vector<2x512xbf16>, vector<512x512xbf16>, vector<2x512xf32> -> vector<2x512xf32>
    %719 = arith.addf %718, %708 : vector<2x512xf32>
    %cst_262 = arith.constant 0.000000e+00 : f32
    %720 = vector.broadcast %cst_262 : f32 to vector<2x512xf32>
    %721 = arith.maximumf %719, %720 : vector<2x512xf32>
    %c0_263 = arith.constant 0 : index
    %c0_264 = arith.constant 0 : index
    %722 = vector.load %arg5[%c0_263, %c0_264] : memref<64x2xf32, #tpu.memory_space<vmem>>, vector<64x2xf32>
    %cst_265 = arith.constant dense<0.000000e+00> : vector<2x2xf32>
    %723 = tpu.matmul %594, %722, %cst_265 {dimension_numbers = #tpu.dot_dimension_numbers<[1], [0], [0], [1], [0, 0, 1, 1], [], []>} : vector<2x64xf32>, vector<64x2xf32>, vector<2x2xf32> -> vector<2x2xf32>
    %c0_266 = arith.constant 0 : index
    %c0_267 = arith.constant 0 : index
    %724 = vector.load %arg6[%c0_266, %c0_267] : memref<512x2xf32, #tpu.memory_space<vmem>>, vector<512x2xf32>
    %cst_268 = arith.constant dense<0.000000e+00> : vector<2x2xf32>
    %725 = tpu.matmul %721, %724, %cst_268 {dimension_numbers = #tpu.dot_dimension_numbers<[1], [0], [0], [1], [0, 0, 1, 1], [], []>} : vector<2x512xf32>, vector<512x2xf32>, vector<2x2xf32> -> vector<2x2xf32>
    %726 = arith.addf %723, %725 : vector<2x2xf32>
    %c0_269 = arith.constant 0 : index
    %c0_270 = arith.constant 0 : index
    %727 = vector.load %arg7[%c0_269, %c0_270] : memref<1x2xf32, #tpu.memory_space<vmem>>, vector<1x2xf32>
    %728 = vector.broadcast %727 : vector<1x2xf32> to vector<2x2xf32>
    %729 = arith.addf %726, %728 : vector<2x2xf32>
    %c0_271 = arith.constant 0 : index
    %c0_272 = arith.constant 0 : index
    %730 = vector.load %arg15[%c0_271, %c0_272] : memref<2x2xf32, #tpu.memory_space<vmem>>, vector<2x2xf32>
    tpu.vector_store %arg15[%c0_271, %c0_272], %729 {strides = array<i32>} : memref<2x2xf32, #tpu.memory_space<vmem>>, vector<2x2xf32>,
    return
  }
}

</mosaic_0001>

<llo_original>
// kernel: tpu_custom_call.1
$region0: #{tpu_custom_call.1}
  #allocation0 [shape = 'u32[]', space=smem, size = 0x4, offset = 0x4, fixed_abs, tag = 'smem constant byte address 0x4 - core index']
  #allocation1 [shape = 'u32[72,128]{1,0:T(1,128)}', space=vmem, size = 0x9000, scoped, tag = 'internal scratch']
  #allocation2 [shape = 'bf16[5,64,64]{2,1,0:T(8,128)(2,1)}', space=vmem, size = 0x14000, scoped, tag = 'scratch operand']
  #allocation3 [shape = 'bf16[64,256]{1,0:T(8,128)(2,1)}', space=vmem, size = 0x8000, scoped, tag = 'scratch operand']
  #allocation4 [shape = 'bf16[3,128,128]{2,1,0:T(8,128)(2,1)}', space=vmem, size = 0x18000, scoped, tag = 'scratch operand']
  #allocation5 [shape = 'bf16[128,512]{1,0:T(8,128)(2,1)}', space=vmem, size = 0x20000, scoped, tag = 'scratch operand']
  #allocation6 [shape = 'bf16[3,256,256]{2,1,0:T(8,128)(2,1)}', space=vmem, size = 0x60000, scoped, tag = 'scratch operand']
  #allocation7 [shape = 'bf16[256,1024]{1,0:T(8,128)(2,1)}', space=vmem, size = 0x80000, scoped, tag = 'scratch operand']
  #allocation8 [shape = 'bf16[3,512,512]{2,1,0:T(8,128)(2,1)}', space=vmem, size = 0x180000, scoped, tag = 'scratch operand']
  #allocation9 [shape = 's32[7]{0}', space=sflag, size = 0x1c, scoped, tag = 'scratch operand']
  #allocation22 [shape = 's32[]', space=sflag, size = 0x4, offset = 0, fixed_abs, tag = 'sflag constant byte address 0x0 - dummy sync flag']
  #allocation23 [shape = 's32[]', space=sflag, size = 0x4, offset = 0, fixed_abs, tag = 'sflag constant byte address 0x0 - dummy sync flag']
  #allocation24 [shape = 'u32[]', space=smem, size = 0x4, offset = 0x44, fixed_abs, tag = 'smem constant byte address 0x44 - assertion arg 0']
  #allocation25 [shape = 'u32[]', space=smem, size = 0x4, offset = 0x48, fixed_abs, tag = 'smem constant byte address 0x48 - assertion arg 1']
  #allocation26 [shape = 's32[]', space=sflag, size = 0x4, offset = 0, fixed_abs, tag = 'sflag constant byte address 0x0 - dummy sync flag']
  #allocation27 [shape = 's32[]', space=sflag, size = 0x4, offset = 0, fixed_abs, tag = 'sflag constant byte address 0x0 - dummy sync flag']
  #allocation28 [shape = 's32[]', space=sflag, size = 0x4, offset = 0, fixed_abs, tag = 'sflag constant byte address 0x0 - dummy sync flag']
  #allocation29 [shape = 's32[]', space=sflag, size = 0x4, offset = 0, fixed_abs, tag = 'sflag constant byte address 0x0 - dummy sync flag']
  #allocation30 [shape = 's32[]', space=sflag, size = 0x4, offset = 0, fixed_abs, tag = 'sflag constant byte address 0x0 - dummy sync flag']
  #allocation31 [shape = 's32[]', space=sflag, size = 0x4, offset = 0, fixed_abs, tag = 'sflag constant byte address 0x0 - dummy sync flag']
  #allocation32 [shape = 's32[]', space=sflag, size = 0x4, offset = 0, fixed_abs, tag = 'sflag constant byte address 0x0 - dummy sync flag']
  #allocation33 [shape = 's32[]', space=sflag, size = 0x4, offset = 0, fixed_abs, tag = 'sflag constant byte address 0x0 - dummy sync flag']
  #allocation34 [shape = 's32[]', space=sflag, size = 0x4, offset = 0, fixed_abs, tag = 'sflag constant byte address 0x0 - dummy sync flag']
  #allocation35 [shape = 's32[]', space=sflag, size = 0x4, offset = 0, fixed_abs, tag = 'sflag constant byte address 0x0 - dummy sync flag']
  #allocation36 [shape = 's32[]', space=sflag, size = 0x4, offset = 0, fixed_abs, tag = 'sflag constant byte address 0x0 - dummy sync flag']
  #allocation37 [shape = 's32[]', space=sflag, size = 0x4, offset = 0, fixed_abs, tag = 'sflag constant byte address 0x0 - dummy sync flag']
  %s0 = inlined_call_operand.hbm [shape: f32[16,16], index: 0, kind: input, shape index: {}]
  %s1 = inlined_call_operand.hbm [shape: bf16[112,128], index: 1, kind: input, shape index: {}]
  %s2 = inlined_call_operand.hbm [shape: f32[2,128], index: 2, kind: input, shape index: {}]
  %s3 = inlined_call_operand.hbm [shape: f32[32,64], index: 3, kind: input, shape index: {}]
  %s4 = inlined_call_operand.hbm [shape: f32[1,64], index: 4, kind: input, shape index: {}]
  %s5 = inlined_call_operand.vmem [shape: f32[64,2], index: 5, kind: input, shape index: {}]
  %s6 = inlined_call_operand.vmem [shape: f32[512,2], index: 6, kind: input, shape index: {}]
  %s7 = inlined_call_operand.hbm [shape: f32[1,2], index: 7, kind: input, shape index: {}]
  %s8 = inlined_call_operand.hbm [shape: bf16[5,64,64], index: 8, kind: input, shape index: {}]
  %s9 = inlined_call_operand.hbm [shape: bf16[64,256], index: 9, kind: input, shape index: {}]
  %s10 = inlined_call_operand.hbm [shape: bf16[3,128,128], index: 10, kind: input, shape index: {}]
  %s11 = inlined_call_operand.hbm [shape: bf16[128,512], index: 11, kind: input, shape index: {}]
  %s12 = inlined_call_operand.hbm [shape: bf16[3,256,256], index: 12, kind: input, shape index: {}]
  %s13 = inlined_call_operand.hbm [shape: bf16[256,1024], index: 13, kind: input, shape index: {}]
  %s14 = inlined_call_operand.hbm [shape: bf16[3,512,512], index: 14, kind: input, shape index: {}]
  %s15 = inlined_call_operand.hbm [shape: f32[2,2], index: 15, kind: output, shape index: {}]
  %s16 = sld [smem:[#allocation0]]
  $region94: #{tpu_custom_call.1} parent=0
    _
  %s18 = ssub.s32 1, %s16
  %s19 = scalar_select 0, %s18, %s16
  $region1: #{tpu_custom_call.1} parent=0
    #allocation10 [shape = 'u8[8192]{0}', space=vmem, size = 0x2000, scoped, tag = 'input window, operand 0, single buffered']
    #allocation11 [shape = 's32[1]{0}', space=sflag, size = 0x4, scoped, tag = 'scoped memory for tpu_custom_call.1']
    #allocation12 [shape = 's32[1]{0}', space=sflag, size = 0x4, scoped, tag = 'scoped memory for tpu_custom_call.1']
    #allocation13 [shape = 'u8[28672]{0}', space=vmem, size = 0x7000, scoped, tag = 'input window, operand 1, single buffered']
    #allocation14 [shape = 's32[1]{0}', space=sflag, size = 0x4, scoped, tag = 'scoped memory for tpu_custom_call.1']
    #allocation15 [shape = 'u8[1024]{0}', space=vmem, size = 0x400, scoped, tag = 'input window, operand 2, single buffered']
    #allocation16 [shape = 'u8[16384]{0}', space=vmem, size = 0x4000, scoped, tag = 'input window, operand 3, single buffered']
    #allocation17 [shape = 's32[1]{0}', space=sflag, size = 0x4, scoped, tag = 'scoped memory for tpu_custom_call.1']
    #allocation18 [shape = 'u8[512]{0}', space=vmem, size = 0x400, scoped, tag = 'input window, operand 4, single buffered']
    #allocation19 [shape = 'u8[512]{0}', space=vmem, size = 0x400, scoped, tag = 'input window, operand 7, single buffered']
    #allocation20 [shape = 's32[1]{0}', space=sflag, size = 0x4, scoped, tag = 'scoped memory for tpu_custom_call.1']
    #allocation21 [shape = 'u8[1024]{0}', space=vmem, size = 0x400, scoped, tag = 'output window, operand 0, single buffered']
    %20 = vsyncpa [#allocation11], 0
    %21 = vsyncpa [#allocation14], 0
    %22 = vsyncpa [#allocation17], 0
    %23 = vsyncpa [#allocation20], 0
    %24 = vsyncpa [#allocation12], 0
    // Predicated region
    $region2: #{tpu_custom_call.1} parent=1 // pred_check
      _
    $region3: #{tpu_custom_call.1} parent=1 // pred_check_branch
      %26 = sbr.rel (0) target = $region5
    $region4: #{tpu_custom_call.1} parent=1 // pred_region
      %28 = vsyncadd [#allocation11], 0
      %s29 = sshll.u32 %s0, 4
      %s30 = int_to_ptr.hbm [resolvable:$true] %s29
      %s31 = sshll.u32 [#allocation10], 4
      %s32 = int_to_ptr.vmem [resolvable:$true] %s31
      %37 = dma.hbm_to_vmem [thread:$0]  %s30, 256, %s32, [#allocation11], 128, 128, 8
    $region5: #{tpu_custom_call.1} parent=1 // pred_fallthru
      _
    // Predicated region
    $region6: #{tpu_custom_call.1} parent=1 // pred_check
      _
    $region7: #{tpu_custom_call.1} parent=1 // pred_check_branch
      %39 = sbr.rel (0) target = $region9
    $region8: #{tpu_custom_call.1} parent=1 // pred_region
      %41 = vsyncadd [#allocation14], 0
      %s42 = sshll.u32 %s1, 4
      %s43 = int_to_ptr.hbm [resolvable:$true] %s42
      %s44 = sshll.u32 [#allocation13], 4
      %s45 = int_to_ptr.vmem [resolvable:$true] %s44
      %50 = dma.hbm_to_vmem [thread:$0]  %s43, 896, %s45, [#allocation14], 64, 64, 4
    $region9: #{tpu_custom_call.1} parent=1 // pred_fallthru
      _
    // Predicated region
    $region10: #{tpu_custom_call.1} parent=1 // pred_check
      _
    $region11: #{tpu_custom_call.1} parent=1 // pred_check_branch
      %52 = sbr.rel (0) target = $region13
    $region12: #{tpu_custom_call.1} parent=1 // pred_region
      %54 = vsyncadd [#allocation14], 0
      %s56 = sshll.u32 %s2, 4
      %s57 = int_to_ptr.hbm [resolvable:$true] %s56
      %s58 = sshll.u32 [#allocation15], 4
      %s59 = int_to_ptr.vmem [resolvable:$true] %s58
      %61 = dma.hbm_to_vmem [thread:$0]  %s57, 32, %s59, [#allocation14]
    $region13: #{tpu_custom_call.1} parent=1 // pred_fallthru
      _
    // Predicated region
    $region14: #{tpu_custom_call.1} parent=1 // pred_check
      _
    $region15: #{tpu_custom_call.1} parent=1 // pred_check_branch
      %63 = sbr.rel (0) target = $region17
    $region16: #{tpu_custom_call.1} parent=1 // pred_region
      %65 = vsyncadd [#allocation17], 0
      %s66 = sshll.u32 %s3, 4
      %s67 = int_to_ptr.hbm [resolvable:$true] %s66
      %s68 = sshll.u32 [#allocation16], 4
      %s69 = int_to_ptr.vmem [resolvable:$true] %s68
      %74 = dma.hbm_to_vmem [thread:$0]  %s67, 512, %s69, [#allocation17], 128, 128, 8
    $region17: #{tpu_custom_call.1} parent=1 // pred_fallthru
      _
    // Predicated region
    $region18: #{tpu_custom_call.1} parent=1 // pred_check
      _
    $region19: #{tpu_custom_call.1} parent=1 // pred_check_branch
      %76 = sbr.rel (0) target = $region21
    $region20: #{tpu_custom_call.1} parent=1 // pred_region
      %78 = vsyncadd [#allocation17], 0
      %s80 = sshll.u32 %s4, 4
      %s81 = int_to_ptr.hbm [resolvable:$true] %s80
      %s82 = sshll.u32 [#allocation18], 4
      %s83 = int_to_ptr.vmem [resolvable:$true] %s82
      %85 = dma.hbm_to_vmem [thread:$0]  %s81, 16, %s83, [#allocation17]
    $region21: #{tpu_custom_call.1} parent=1 // pred_fallthru
      _
    // Predicated region
    $region22: #{tpu_custom_call.1} parent=1 // pred_check
      _
    $region23: #{tpu_custom_call.1} parent=1 // pred_check_branch
      %87 = sbr.rel (0) target = $region25
    $region24: #{tpu_custom_call.1} parent=1 // pred_region
      _
    $region25: #{tpu_custom_call.1} parent=1 // pred_fallthru
      _
    // Predicated region
    $region26: #{tpu_custom_call.1} parent=1 // pred_check
      _
    $region27: #{tpu_custom_call.1} parent=1 // pred_check_branch
      %89 = sbr.rel (0) target = $region29
    $region28: #{tpu_custom_call.1} parent=1 // pred_region
      _
    $region29: #{tpu_custom_call.1} parent=1 // pred_fallthru
      _
    // Predicated region
    $region30: #{tpu_custom_call.1} parent=1 // pred_check
      _
    $region31: #{tpu_custom_call.1} parent=1 // pred_check_branch
      %91 = sbr.rel (0) target = $region33
    $region32: #{tpu_custom_call.1} parent=1 // pred_region
      %93 = vsyncadd [#allocation20], 0
      %s95 = sshll.u32 %s7, 4
      %s96 = int_to_ptr.hbm [resolvable:$true] %s95
      %s97 = sshll.u32 [#allocation19], 4
      %s98 = int_to_ptr.vmem [resolvable:$true] %s97
      %100 = dma.hbm_to_vmem [thread:$0]  %s96, 16, %s98, [#allocation20]
    $region33: #{tpu_custom_call.1} parent=1 // pred_fallthru
      _
    // Predicated region
    $region34: #{tpu_custom_call.1} parent=1 // pred_check
      _
    $region35: #{tpu_custom_call.1} parent=1 // pred_check_branch
      %102 = sbr.rel (0) target = $region37
    $region36: #{tpu_custom_call.1} parent=1 // pred_region
      %104 = dma.done [#allocation11], 256
    $region37: #{tpu_custom_call.1} parent=1 // pred_fallthru
      _
    // Predicated region
    $region38: #{tpu_custom_call.1} parent=1 // pred_check
      _
    $region39: #{tpu_custom_call.1} parent=1 // pred_check_branch
      %106 = sbr.rel (0) target = $region41
    $region40: #{tpu_custom_call.1} parent=1 // pred_region
      %108 = dma.done [#allocation14], 896
    $region41: #{tpu_custom_call.1} parent=1 // pred_fallthru
      _
    // Predicated region
    $region42: #{tpu_custom_call.1} parent=1 // pred_check
      _
    $region43: #{tpu_custom_call.1} parent=1 // pred_check_branch
      %110 = sbr.rel (0) target = $region45
    $region44: #{tpu_custom_call.1} parent=1 // pred_region
      %112 = dma.done [#allocation14], 32
    $region45: #{tpu_custom_call.1} parent=1 // pred_fallthru
      _
    // Predicated region
    $region46: #{tpu_custom_call.1} parent=1 // pred_check
      _
    $region47: #{tpu_custom_call.1} parent=1 // pred_check_branch
      %114 = sbr.rel (0) target = $region49
    $region48: #{tpu_custom_call.1} parent=1 // pred_region
      %116 = dma.done [#allocation17], 512
    $region49: #{tpu_custom_call.1} parent=1 // pred_fallthru
      _
    // Predicated region
    $region50: #{tpu_custom_call.1} parent=1 // pred_check
      _
    $region51: #{tpu_custom_call.1} parent=1 // pred_check_branch
      %118 = sbr.rel (0) target = $region53
    $region52: #{tpu_custom_call.1} parent=1 // pred_region
      %120 = dma.done [#allocation17], 16
    $region53: #{tpu_custom_call.1} parent=1 // pred_fallthru
      _
    // Predicated region
    $region54: #{tpu_custom_call.1} parent=1 // pred_check
      _
    $region55: #{tpu_custom_call.1} parent=1 // pred_check_branch
      %122 = sbr.rel (0) target = $region57
    $region56: #{tpu_custom_call.1} parent=1 // pred_region
      %124 = dma.done [#allocation20], 16
    $region57: #{tpu_custom_call.1} parent=1 // pred_fallthru
      _
    // Predicated region
    $region58: #{tpu_custom_call.1} parent=1 // pred_check
      _
    $region59: #{tpu_custom_call.1} parent=1 // pred_check_branch
      %127 = sbr.rel target = $region61
    $region60: #{tpu_custom_call.1} parent=1 // pred_region
      %128 = sst [smem:[#allocation24]] [#allocation23]
      %129 = sst [smem:[#allocation25]] [#allocation22]
    $region61: #{tpu_custom_call.1} parent=1 // pred_fallthru
      _
    %131 = shalt.err (0)
    %s133 = sshll.u32 %s8, 4
    %s134 = int_to_ptr.hbm [resolvable:$true] %s133
    %s135 = sshll.u32 [#allocation2], 4
    %s136 = int_to_ptr.vmem [resolvable:$true] %s135
    %138 = dma.hbm_to_vmem [thread:$0]  %s134, 2560, %s136, [#allocation9]
    %s139 = scalar_lea.sflag [#allocation9], 1
    // Predicated region
    $region62: #{tpu_custom_call.1} parent=1 // pred_check
      _
    $region63: #{tpu_custom_call.1} parent=1 // pred_check_branch
      %141 = sbr.rel target = $region65
    $region64: #{tpu_custom_call.1} parent=1 // pred_region
      %142 = sst [smem:[#allocation24]] [#allocation27]
      %143 = sst [smem:[#allocation25]] [#allocation26]
    $region65: #{tpu_custom_call.1} parent=1 // pred_fallthru
      _
    %145 = shalt.err (0)
    %s147 = sshll.u32 %s9, 4
    %s148 = int_to_ptr.hbm [resolvable:$true] %s147
    %s149 = sshll.u32 [#allocation3], 4
    %s150 = int_to_ptr.vmem [resolvable:$true] %s149
    %152 = dma.hbm_to_vmem [thread:$0]  %s148, 1024, %s150, %s139
    %s153 = scalar_lea.sflag [#allocation9], 2
    // Predicated region
    $region66: #{tpu_custom_call.1} parent=1 // pred_check
      _
    $region67: #{tpu_custom_call.1} parent=1 // pred_check_branch
      %155 = sbr.rel target = $region69
    $region68: #{tpu_custom_call.1} parent=1 // pred_region
      %156 = sst [smem:[#allocation24]] [#allocation29]
      %157 = sst [smem:[#allocation25]] [#allocation28]
    $region69: #{tpu_custom_call.1} parent=1 // pred_fallthru
      _
    %159 = shalt.err (0)
    %s161 = sshll.u32 %s10, 4
    %s162 = int_to_ptr.hbm [resolvable:$true] %s161
    %s163 = sshll.u32 [#allocation4], 4
    %s164 = int_to_ptr.vmem [resolvable:$true] %s163
    %166 = dma.hbm_to_vmem [thread:$0]  %s162, 3072, %s164, %s153
    %s167 = scalar_lea.sflag [#allocation9], 3
    // Predicated region
    $region70: #{tpu_custom_call.1} parent=1 // pred_check
      _
    $region71: #{tpu_custom_call.1} parent=1 // pred_check_branch
      %169 = sbr.rel target = $region73
    $region72: #{tpu_custom_call.1} parent=1 // pred_region
      %170 = sst [smem:[#allocation24]] [#allocation31]
      %171 = sst [smem:[#allocation25]] [#allocation30]
    $region73: #{tpu_custom_call.1} parent=1 // pred_fallthru
      _
    %173 = shalt.err (0)
    %s175 = sshll.u32 %s11, 4
    %s176 = int_to_ptr.hbm [resolvable:$true] %s175
    %s177 = sshll.u32 [#allocation5], 4
    %s178 = int_to_ptr.vmem [resolvable:$true] %s177
    %180 = dma.hbm_to_vmem [thread:$0]  %s176, 4096, %s178, %s167
    %s181 = scalar_lea.sflag [#allocation9], 4
    // Predicated region
    $region74: #{tpu_custom_call.1} parent=1 // pred_check
      _
    $region75: #{tpu_custom_call.1} parent=1 // pred_check_branch
      %183 = sbr.rel target = $region77
    $region76: #{tpu_custom_call.1} parent=1 // pred_region
      %184 = sst [smem:[#allocation24]] [#allocation33]
      %185 = sst [smem:[#allocation25]] [#allocation32]
    $region77: #{tpu_custom_call.1} parent=1 // pred_fallthru
      _
    %187 = shalt.err (0)
    %s189 = sshll.u32 %s12, 4
    %s190 = int_to_ptr.hbm [resolvable:$true] %s189
    %s191 = sshll.u32 [#allocation6], 4
    %s192 = int_to_ptr.vmem [resolvable:$true] %s191
    %194 = dma.hbm_to_vmem [thread:$0]  %s190, 12288, %s192, %s181
    %s195 = scalar_lea.sflag [#allocation9], 5
    // Predicated region
    $region78: #{tpu_custom_call.1} parent=1 // pred_check
      _
    $region79: #{tpu_custom_call.1} parent=1 // pred_check_branch
      %197 = sbr.rel target = $region81
    $region80: #{tpu_custom_call.1} parent=1 // pred_region
      %198 = sst [smem:[#allocation24]] [#allocation35]
      %199 = sst [smem:[#allocation25]] [#allocation34]
    $region81: #{tpu_custom_call.1} parent=1 // pred_fallthru
      _
    %201 = shalt.err (0)
    %s203 = sshll.u32 %s13, 4
    %s204 = int_to_ptr.hbm [resolvable:$true] %s203
    %s205 = sshll.u32 [#allocation7], 4
    %s206 = int_to_ptr.vmem [resolvable:$true] %s205
    %208 = dma.hbm_to_vmem [thread:$0]  %s204, 16384, %s206, %s195
    %s209 = scalar_lea.sflag [#allocation9], 6
    // Predicated region
    $region82: #{tpu_custom_call.1} parent=1 // pred_check
      _
    $region83: #{tpu_custom_call.1} parent=1 // pred_check_branch
      %211 = sbr.rel target = $region85
    $region84: #{tpu_custom_call.1} parent=1 // pred_region
      %212 = sst [smem:[#allocation24]] [#allocation37]
      %213 = sst [smem:[#allocation25]] [#allocation36]
    $region85: #{tpu_custom_call.1} parent=1 // pred_fallthru
      _
    %215 = shalt.err (0)
    %s217 = sshll.u32 %s14, 4
    %s218 = int_to_ptr.hbm [resolvable:$true] %s217
    %s219 = sshll.u32 [#allocation8], 4
    %s220 = int_to_ptr.vmem [resolvable:$true] %s219
    %222 = dma.hbm_to_vmem [thread:$0]  %s218, 49152, %s220, %s209
    %v223 = vld [vmem:[#allocation13] sm:$0xf]
    %v224 = vld [vmem:[#allocation13 + $0x4] sm:$0xf]
    %v225 = vld [vmem:[#allocation13 + $0x8] sm:$0xf]
    %v226 = vld [vmem:[#allocation13 + $0xc] sm:$0xf]
    %v227 = vld [vmem:[#allocation13 + $0x10] sm:$0xf]
    %v228 = vld [vmem:[#allocation13 + $0x14] sm:$0xf]
    %v229 = vld [vmem:[#allocation13 + $0x18] sm:$0xf]
    %v230 = vld [vmem:[#allocation13 + $0x1c] sm:$0xf]
    %v231 = vld [vmem:[#allocation13 + $0x20] sm:$0xf]
    %v232 = vld [vmem:[#allocation13 + $0x24] sm:$0xf]
    %v233 = vld [vmem:[#allocation13 + $0x28] sm:$0xf]
    %v234 = vld [vmem:[#allocation13 + $0x2c] sm:$0xf]
    %v235 = vld [vmem:[#allocation13 + $0x30] sm:$0xf]
    %v236 = vld [vmem:[#allocation13 + $0x34] sm:$0xf]
    %v237 = vld [vmem:[#allocation15] sm:$0x1]
    %v238 = vld [vmem:[#allocation15 + $0x1] sm:$0x1]
    %v239 = vperm.slane %v238, 0
    %v240 = vld [vmem:[#allocation10] sm:$0xff]
    %v241 = vld [vmem:[#allocation10 + $0x8] sm:$0xff]
    %v242 = vpack.c.bf16 %v241, %v240
    %v243 = vperm.slane %v237, 0
    %v246 = vunpack.c.l.b16 %v223
    %v247 = vunpack.c.l.b16 %v224
    %v248 = vpack.c.b16 %v247, %v246
    %vm250 = vcmask 130048
    %v252 = vsel %vm250, %v242, 0
    %254 = vmatpush.bf16.msra.mxu0 0
    %255 = vmatpush.bf16.msra.mxu0 0
    %256 = vmatpush.bf16.msra.mxu0 0
    %257 = vmatpush.bf16.msra.mxu0 0
    %258 = vmatpush.bf16.msra.mxu0 0
    %259 = vmatpush.bf16.msra.mxu0 0
    %260 = vmatpush.bf16.msra.mxu0 0
    %261 = vmatpush.bf16.msra.mxu0 %v248
    %262 = vmatmul.bf16.gmra.mxu0 %v252
    %v263 = vpop.f32.mrf.mxu0
    %v264 = vadd.f32 %v243, %v263
    %v265 = vpop.f32.mrf.mxu0
    %v266 = vadd.f32 %v243, %v265
    %267 = vdwg.mxu0
    %v272 = vunpack.c.l.b16 %v225
    %v273 = vunpack.c.l.b16 %v226
    %v274 = vunpack.c.l.b16 %v227
    %v275 = vunpack.c.l.b16 %v228
    %v276 = vpack.c.b16 %v273, %v272
    %v277 = vpack.c.b16 %v275, %v274
    %vm280 = vcmask 261120
    %v282 = vsel %vm280, 0, 0
    %284 = vmatpush.bf16.msra.mxu0 0
    %285 = vmatpush.bf16.msra.mxu0 0
    %286 = vmatpush.bf16.msra.mxu0 0
    %287 = vmatpush.bf16.msra.mxu0 0
    %288 = vmatpush.bf16.msra.mxu0 0
    %289 = vmatpush.bf16.msra.mxu0 0
    %290 = vmatpush.bf16.msra.mxu0 %v277
    %291 = vmatpush.bf16.msra.mxu0 %v276
    %292 = vmatmul.bf16.gmra.mxu0 %v282
    %v293 = vpop.f32.mrf.mxu0
    %v294 = vadd.f32 0.0, %v293
    %v295 = vpop.f32.mrf.mxu0
    %296 = vdwg.mxu0
    %v297 = vadd.f32 %v264, %v294
    %v298 = vmul.f32 %v297, 0.5
    %v299 = vtanh.pop %v298
    %v300 = vmul.f32 %v299, 0.5
    %v301 = vadd.f32 %v300, 0.5
    %v302 = vtanh.pop %v297
    %v303 = vmul.f32 %v301, 0.0
    %305 = vrot.lane.b32.xlu0 %v302, 64
    %v306 = vpop.permute.xlu0 %305
    %v308 = vmul.f32 %v301, %v306
    %310 = vrot.lane.b32.xlu0 %v308, 32
    %v311 = vpop.permute.xlu0 %310
    %v313 = vadd.f32 %v303, %v311
    %v314 = vtanh.pop %v313
    %316 = vrot.lane.b32.xlu0 %v314, 64
    %v317 = vpop.permute.xlu0 %316
    %v319 = vmul.f32 %v301, %v317
    %321 = vrot.lane.b32.xlu0 %v319, 32
    %v322 = vpop.permute.xlu0 %321
    %v324 = vsel %vm280, %v322, 0.0
    %v325 = vpack.c.bf16 %v324, %v324
    %v334 = vunpack.c.l.b16 %v229
    %v335 = vunpack.c.l.b16 %v230
    %v336 = vunpack.c.l.b16 %v231
    %v337 = vunpack.c.l.b16 %v232
    %v338 = vunpack.c.l.b16 %v233
    %v339 = vunpack.c.l.b16 %v234
    %v340 = vunpack.c.l.b16 %v235
    %v341 = vunpack.c.l.b16 %v236
    %v342 = vpack.c.b16 %v335, %v334
    %v343 = vpack.c.b16 %v337, %v336
    %v344 = vpack.c.b16 %v339, %v338
    %v345 = vpack.c.b16 %v341, %v340
    %vm350 = vcmask 523264
    %v352 = vsel %vm350, %v325, 0
    %354 = vmatpush.bf16.msra.mxu0 0
    %355 = vmatpush.bf16.msra.mxu0 0
    %356 = vmatpush.bf16.msra.mxu0 0
    %357 = vmatpush.bf16.msra.mxu0 0
    %358 = vmatpush.bf16.msra.mxu0 %v345
    %359 = vmatpush.bf16.msra.mxu0 %v344
    %360 = vmatpush.bf16.msra.mxu0 %v343
    %361 = vmatpush.bf16.msra.mxu0 %v342
    %362 = vmatmul.bf16.gmra.mxu0 %v352
    %v363 = vpop.f32.mrf.mxu0
    %v364 = vadd.f32 %v239, %v363
    %v365 = vpop.f32.mrf.mxu0
    %366 = vdwg.mxu0
    %v367 = vmul.f32 %v364, 0.5
    %v368 = vtanh.pop %v367
    %v369 = vmul.f32 %v368, 0.5
    %v370 = vadd.f32 %v369, 0.5
    %v371 = vtanh.pop %v364
    %v372 = vmul.f32 %v370, 0.0
    %374 = vrot.lane.b32.xlu0 %v371, 64
    %v375 = vpop.permute.xlu0 %374
    %v377 = vmul.f32 %v370, %v375
    %379 = vrot.lane.b32.xlu0 %v377, 32
    %v380 = vpop.permute.xlu0 %379
    %v382 = vadd.f32 %v372, %v380
    %v383 = vtanh.pop %v382
    %385 = vrot.lane.b32.xlu0 %v383, 64
    %v386 = vpop.permute.xlu0 %385
    %v388 = vmul.f32 %v370, %v386
    %v389 = vpack.c.bf16 %v319, %v319
    %391 = vrot.lane.b32.xlu0 %v389, 32
    %v392 = vpop.permute.xlu0 %391
    %v394 = vsel %vm280, %v392, 0
    %396 = vmatpush.bf16.msra.mxu0 0
    %397 = vmatpush.bf16.msra.mxu0 0
    %398 = vmatpush.bf16.msra.mxu0 0
    %399 = vmatpush.bf16.msra.mxu0 0
    %400 = vmatpush.bf16.msra.mxu0 0
    %401 = vmatpush.bf16.msra.mxu0 0
    %402 = vmatpush.bf16.msra.mxu0 %v277
    %403 = vmatpush.bf16.msra.mxu0 %v276
    %404 = vmatmul.bf16.gmra.mxu0 %v394
    %v405 = vpop.f32.mrf.mxu0
    %v406 = vadd.f32 0.0, %v405
    %v407 = vpop.f32.mrf.mxu0
    %408 = vdwg.mxu0
    %v410 = vrot.slane %v406, 6
    %v412 = vadd.f32 %v264, %v410
    %v413 = vmul.f32 %v412, 0.5
    %v414 = vtanh.pop %v413
    %v415 = vmul.f32 %v414, 0.5
    %v416 = vadd.f32 %v415, 0.5
    %v417 = vtanh.pop %v412
    %v419 = vrot.slane %v313, 6
    %v421 = vmul.f32 %v416, %v419
    %423 = vrot.lane.b32.xlu0 %v417, 64
    %v424 = vpop.permute.xlu0 %423
    %v426 = vmul.f32 %v416, %v424
    %428 = vrot.lane.b32.xlu0 %v426, 32
    %v429 = vpop.permute.xlu0 %428
    %v431 = vadd.f32 %v421, %v429
    %v432 = vtanh.pop %v431
    %434 = vrot.lane.b32.xlu0 %v432, 64
    %v435 = vpop.permute.xlu0 %434
    %v437 = vmul.f32 %v416, %v435
    %439 = vrot.lane.b32.xlu0 %v437, 32
    %v440 = vpop.permute.xlu0 %439
    %v443 = vrot.slane %v388, 6
    %444 = vrot.lane.b32.xlu0 %v443, 64
    %v445 = vpop.permute.xlu0 %444
    %v447 = vsel %vm280, %v440, %v445
    %v448 = vpack.c.bf16 %v447, %v447
    %v450 = vrot.slane %v448, 1
    %v452 = vsel %vm350, %v450, 0
    %454 = vmatpush.bf16.msra.mxu0 0
    %455 = vmatpush.bf16.msra.mxu0 0
    %456 = vmatpush.bf16.msra.mxu0 0
    %457 = vmatpush.bf16.msra.mxu0 0
    %458 = vmatpush.bf16.msra.mxu0 %v345
    %459 = vmatpush.bf16.msra.mxu0 %v344
    %460 = vmatpush.bf16.msra.mxu0 %v343
    %461 = vmatpush.bf16.msra.mxu0 %v342
    %462 = vmatmul.bf16.gmra.mxu0 %v452
    %v463 = vpop.f32.mrf.mxu0
    %v464 = vadd.f32 %v239, %v463
    %v465 = vpop.f32.mrf.mxu0
    %466 = vdwg.mxu0
    %v467 = vmul.f32 %v464, 0.5
    %v468 = vtanh.pop %v467
    %v469 = vmul.f32 %v468, 0.5
    %v470 = vadd.f32 %v469, 0.5
    %v471 = vtanh.pop %v464
    %v472 = vmul.f32 %v470, %v382
    %474 = vrot.lane.b32.xlu0 %v471, 64
    %v475 = vpop.permute.xlu0 %474
    %v477 = vmul.f32 %v470, %v475
    %479 = vrot.lane.b32.xlu0 %v477, 32
    %v480 = vpop.permute.xlu0 %479
    %v482 = vadd.f32 %v472, %v480
    %v483 = vtanh.pop %v482
    %485 = vrot.lane.b32.xlu0 %v483, 64
    %v486 = vpop.permute.xlu0 %485
    %v488 = vmul.f32 %v470, %v486
    %v489 = vpack.c.bf16 %v437, %v437
    %v491 = vrot.slane %v489, 1
    %492 = vrot.lane.b32.xlu0 %v491, 32
    %v493 = vpop.permute.xlu0 %492
    %v495 = vsel %vm280, %v493, 0
    %497 = vmatpush.bf16.msra.mxu0 0
    %498 = vmatpush.bf16.msra.mxu0 0
    %499 = vmatpush.bf16.msra.mxu0 0
    %500 = vmatpush.bf16.msra.mxu0 0
    %501 = vmatpush.bf16.msra.mxu0 0
    %502 = vmatpush.bf16.msra.mxu0 0
    %503 = vmatpush.bf16.msra.mxu0 %v277
    %504 = vmatpush.bf16.msra.mxu0 %v276
    %505 = vmatmul.bf16.gmra.mxu0 %v495
    %v506 = vpop.f32.mrf.mxu0
    %v507 = vadd.f32 0.0, %v506
    %v508 = vpop.f32.mrf.mxu0
    %509 = vdwg.mxu0
    %v511 = vrot.slane %v507, 4
    %v513 = vadd.f32 %v264, %v511
    %v514 = vmul.f32 %v513, 0.5
    %v515 = vtanh.pop %v514
    %v516 = vmul.f32 %v515, 0.5
    %v517 = vadd.f32 %v516, 0.5
    %v518 = vtanh.pop %v513
    %v520 = vrot.slane %v431, 6
    %v522 = vmul.f32 %v517, %v520
    %524 = vrot.lane.b32.xlu0 %v518, 64
    %v525 = vpop.permute.xlu0 %524
    %v527 = vmul.f32 %v517, %v525
    %529 = vrot.lane.b32.xlu0 %v527, 32
    %v530 = vpop.permute.xlu0 %529
    %v532 = vadd.f32 %v522, %v530
    %v533 = vtanh.pop %v532
    %535 = vrot.lane.b32.xlu0 %v533, 64
    %v536 = vpop.permute.xlu0 %535
    %v538 = vmul.f32 %v517, %v536
    %540 = vrot.lane.b32.xlu0 %v538, 32
    %v541 = vpop.permute.xlu0 %540
    %v544 = vrot.slane %v488, 4
    %545 = vrot.lane.b32.xlu0 %v544, 64
    %v546 = vpop.permute.xlu0 %545
    %v548 = vsel %vm280, %v541, %v546
    %v549 = vpack.c.bf16 %v548, %v548
    %v551 = vrot.slane %v549, 2
    %v553 = vsel %vm350, %v551, 0
    %555 = vmatpush.bf16.msra.mxu0 0
    %556 = vmatpush.bf16.msra.mxu0 0
    %557 = vmatpush.bf16.msra.mxu0 0
    %558 = vmatpush.bf16.msra.mxu0 0
    %559 = vmatpush.bf16.msra.mxu0 %v345
    %560 = vmatpush.bf16.msra.mxu0 %v344
    %561 = vmatpush.bf16.msra.mxu0 %v343
    %562 = vmatpush.bf16.msra.mxu0 %v342
    %563 = vmatmul.bf16.gmra.mxu0 %v553
    %v564 = vpop.f32.mrf.mxu0
    %v565 = vadd.f32 %v239, %v564
    %v566 = vpop.f32.mrf.mxu0
    %567 = vdwg.mxu0
    %v568 = vmul.f32 %v565, 0.5
    %v569 = vtanh.pop %v568
    %v570 = vmul.f32 %v569, 0.5
    %v571 = vadd.f32 %v570, 0.5
    %v572 = vtanh.pop %v565
    %v573 = vmul.f32 %v571, %v482
    %575 = vrot.lane.b32.xlu0 %v572, 64
    %v576 = vpop.permute.xlu0 %575
    %v578 = vmul.f32 %v571, %v576
    %580 = vrot.lane.b32.xlu0 %v578, 32
    %v581 = vpop.permute.xlu0 %580
    %v583 = vadd.f32 %v573, %v581
    %v584 = vtanh.pop %v583
    %586 = vrot.lane.b32.xlu0 %v584, 64
    %v587 = vpop.permute.xlu0 %586
    %v589 = vmul.f32 %v571, %v587
    %v590 = vpack.c.bf16 %v538, %v538
    %v592 = vrot.slane %v590, 2
    %593 = vrot.lane.b32.xlu0 %v592, 32
    %v594 = vpop.permute.xlu0 %593
    %v596 = vsel %vm280, %v594, 0
    %598 = vmatpush.bf16.msra.mxu0 0
    %599 = vmatpush.bf16.msra.mxu0 0
    %600 = vmatpush.bf16.msra.mxu0 0
    %601 = vmatpush.bf16.msra.mxu0 0
    %602 = vmatpush.bf16.msra.mxu0 0
    %603 = vmatpush.bf16.msra.mxu0 0
    %604 = vmatpush.bf16.msra.mxu0 %v277
    %605 = vmatpush.bf16.msra.mxu0 %v276
    %606 = vmatmul.bf16.gmra.mxu0 %v596
    %v607 = vpop.f32.mrf.mxu0
    %v608 = vadd.f32 0.0, %v607
    %v609 = vpop.f32.mrf.mxu0
    %610 = vdwg.mxu0
    %v612 = vrot.slane %v608, 2
    %v614 = vadd.f32 %v264, %v612
    %v615 = vmul.f32 %v614, 0.5
    %v616 = vtanh.pop %v615
    %v617 = vmul.f32 %v616, 0.5
    %v618 = vadd.f32 %v617, 0.5
    %v619 = vtanh.pop %v614
    %v621 = vrot.slane %v532, 6
    %v623 = vmul.f32 %v618, %v621
    %625 = vrot.lane.b32.xlu0 %v619, 64
    %v626 = vpop.permute.xlu0 %625
    %v628 = vmul.f32 %v618, %v626
    %630 = vrot.lane.b32.xlu0 %v628, 32
    %v631 = vpop.permute.xlu0 %630
    %v633 = vadd.f32 %v623, %v631
    %v634 = vtanh.pop %v633
    %636 = vrot.lane.b32.xlu0 %v634, 64
    %v637 = vpop.permute.xlu0 %636
    %v639 = vmul.f32 %v618, %v637
    %641 = vrot.lane.b32.xlu0 %v639, 32
    %v642 = vpop.permute.xlu0 %641
    %v645 = vrot.slane %v589, 2
    %646 = vrot.lane.b32.xlu0 %v645, 64
    %v647 = vpop.permute.xlu0 %646
    %v649 = vsel %vm280, %v642, %v647
    %v650 = vpack.c.bf16 %v649, %v649
    %v652 = vrot.slane %v650, 3
    %v654 = vsel %vm350, %v652, 0
    %656 = vmatpush.bf16.msra.mxu0 0
    %657 = vmatpush.bf16.msra.mxu0 0
    %658 = vmatpush.bf16.msra.mxu0 0
    %659 = vmatpush.bf16.msra.mxu0 0
    %660 = vmatpush.bf16.msra.mxu0 %v345
    %661 = vmatpush.bf16.msra.mxu0 %v344
    %662 = vmatpush.bf16.msra.mxu0 %v343
    %663 = vmatpush.bf16.msra.mxu0 %v342
    %664 = vmatmul.bf16.gmra.mxu0 %v654
    %v665 = vpop.f32.mrf.mxu0
    %v666 = vadd.f32 %v239, %v665
    %v667 = vpop.f32.mrf.mxu0
    %668 = vdwg.mxu0
    %v669 = vmul.f32 %v666, 0.5
    %v670 = vtanh.pop %v669
    %v671 = vmul.f32 %v670, 0.5
    %v672 = vadd.f32 %v671, 0.5
    %v673 = vtanh.pop %v666
    %v674 = vmul.f32 %v672, %v583
    %676 = vrot.lane.b32.xlu0 %v673, 64
    %v677 = vpop.permute.xlu0 %676
    %v679 = vmul.f32 %v672, %v677
    %681 = vrot.lane.b32.xlu0 %v679, 32
    %v682 = vpop.permute.xlu0 %681
    %v684 = vadd.f32 %v674, %v682
    %v685 = vtanh.pop %v684
    %687 = vrot.lane.b32.xlu0 %v685, 64
    %v688 = vpop.permute.xlu0 %687
    %v690 = vmul.f32 %v672, %v688
    %v691 = vpack.c.bf16 %v639, %v639
    %v693 = vrot.slane %v691, 3
    %694 = vrot.lane.b32.xlu0 %v693, 32
    %v695 = vpop.permute.xlu0 %694
    %v697 = vsel %vm280, %v695, 0
    %699 = vmatpush.bf16.msra.mxu0 0
    %700 = vmatpush.bf16.msra.mxu0 0
    %701 = vmatpush.bf16.msra.mxu0 0
    %702 = vmatpush.bf16.msra.mxu0 0
    %703 = vmatpush.bf16.msra.mxu0 0
    %704 = vmatpush.bf16.msra.mxu0 0
    %705 = vmatpush.bf16.msra.mxu0 %v277
    %706 = vmatpush.bf16.msra.mxu0 %v276
    %707 = vmatmul.bf16.gmra.mxu0 %v697
    %v708 = vpop.f32.mrf.mxu0
    %v709 = vadd.f32 0.0, %v708
    %v710 = vpop.f32.mrf.mxu0
    %711 = vdwg.mxu0
    %v712 = vadd.f32 %v266, %v709
    %v713 = vmul.f32 %v712, 0.5
    %v714 = vtanh.pop %v713
    %v715 = vmul.f32 %v714, 0.5
    %v716 = vadd.f32 %v715, 0.5
    %v717 = vtanh.pop %v712
    %v719 = vrot.slane %v633, 6
    %v721 = vmul.f32 %v716, %v719
    %723 = vrot.lane.b32.xlu0 %v717, 64
    %v724 = vpop.permute.xlu0 %723
    %v726 = vmul.f32 %v716, %v724
    %728 = vrot.lane.b32.xlu0 %v726, 32
    %v729 = vpop.permute.xlu0 %728
    %v731 = vadd.f32 %v721, %v729
    %v732 = vtanh.pop %v731
    %734 = vrot.lane.b32.xlu0 %v732, 64
    %v735 = vpop.permute.xlu0 %734
    %v737 = vmul.f32 %v716, %v735
    %739 = vrot.lane.b32.xlu0 %v737, 32
    %v740 = vpop.permute.xlu0 %739
    %743 = vrot.lane.b32.xlu0 %v690, 64
    %v744 = vpop.permute.xlu0 %743
    %v746 = vsel %vm280, %v740, %v744
    %v747 = vpack.c.bf16 %v746, %v746
    %v749 = vsel %vm350, %v747, 0
    %751 = vmatpush.bf16.msra.mxu0 0
    %752 = vmatpush.bf16.msra.mxu0 0
    %753 = vmatpush.bf16.msra.mxu0 0
    %754 = vmatpush.bf16.msra.mxu0 0
    %755 = vmatpush.bf16.msra.mxu0 %v345
    %756 = vmatpush.bf16.msra.mxu0 %v344
    %757 = vmatpush.bf16.msra.mxu0 %v343
    %758 = vmatpush.bf16.msra.mxu0 %v342
    %759 = vmatmul.bf16.gmra.mxu0 %v749
    %v760 = vpop.f32.mrf.mxu0
    %v761 = vadd.f32 %v239, %v760
    %v762 = vpop.f32.mrf.mxu0
    %763 = vdwg.mxu0
    %v764 = vmul.f32 %v761, 0.5
    %v765 = vtanh.pop %v764
    %v766 = vmul.f32 %v765, 0.5
    %v767 = vadd.f32 %v766, 0.5
    %v768 = vtanh.pop %v761
    %v769 = vmul.f32 %v767, %v684
    %771 = vrot.lane.b32.xlu0 %v768, 64
    %v772 = vpop.permute.xlu0 %771
    %v774 = vmul.f32 %v767, %v772
    %776 = vrot.lane.b32.xlu0 %v774, 32
    %v777 = vpop.permute.xlu0 %776
    %v779 = vadd.f32 %v769, %v777
    %v780 = vtanh.pop %v779
    %782 = vrot.lane.b32.xlu0 %v780, 64
    %v783 = vpop.permute.xlu0 %782
    %v785 = vmul.f32 %v767, %v783
    %v786 = vpack.c.bf16 %v737, %v737
    %788 = vrot.lane.b32.xlu0 %v786, 32
    %v789 = vpop.permute.xlu0 %788
    %v791 = vsel %vm280, %v789, 0
    %793 = vmatpush.bf16.msra.mxu0 0
    %794 = vmatpush.bf16.msra.mxu0 0
    %795 = vmatpush.bf16.msra.mxu0 0
    %796 = vmatpush.bf16.msra.mxu0 0
    %797 = vmatpush.bf16.msra.mxu0 0
    %798 = vmatpush.bf16.msra.mxu0 0
    %799 = vmatpush.bf16.msra.mxu0 %v277
    %800 = vmatpush.bf16.msra.mxu0 %v276
    %801 = vmatmul.bf16.gmra.mxu0 %v791
    %v802 = vpop.f32.mrf.mxu0
    %v803 = vadd.f32 0.0, %v802
    %v804 = vpop.f32.mrf.mxu0
    %805 = vdwg.mxu0
    %v807 = vrot.slane %v803, 6
    %v809 = vadd.f32 %v266, %v807
    %v810 = vmul.f32 %v809, 0.5
    %v811 = vtanh.pop %v810
    %v812 = vmul.f32 %v811, 0.5
    %v813 = vadd.f32 %v812, 0.5
    %v814 = vtanh.pop %v809
    %v816 = vrot.slane %v731, 6
    %v818 = vmul.f32 %v813, %v816
    %820 = vrot.lane.b32.xlu0 %v814, 64
    %v821 = vpop.permute.xlu0 %820
    %v823 = vmul.f32 %v813, %v821
    %825 = vrot.lane.b32.xlu0 %v823, 32
    %v826 = vpop.permute.xlu0 %825
    %v828 = vadd.f32 %v818, %v826
    %v829 = vtanh.pop %v828
    %831 = vrot.lane.b32.xlu0 %v829, 64
    %v832 = vpop.permute.xlu0 %831
    %v834 = vmul.f32 %v813, %v832
    %836 = vrot.lane.b32.xlu0 %v834, 32
    %v837 = vpop.permute.xlu0 %836
    %v840 = vrot.slane %v785, 6
    %841 = vrot.lane.b32.xlu0 %v840, 64
    %v842 = vpop.permute.xlu0 %841
    %v844 = vsel %vm280, %v837, %v842
    %v845 = vpack.c.bf16 %v844, %v844
    %v847 = vrot.slane %v845, 1
    %v849 = vsel %vm350, %v847, 0
    %851 = vmatpush.bf16.msra.mxu0 0
    %852 = vmatpush.bf16.msra.mxu0 0
    %853 = vmatpush.bf16.msra.mxu0 0
    %854 = vmatpush.bf16.msra.mxu0 0
    %855 = vmatpush.bf16.msra.mxu0 %v345
    %856 = vmatpush.bf16.msra.mxu0 %v344
    %857 = vmatpush.bf16.msra.mxu0 %v343
    %858 = vmatpush.bf16.msra.mxu0 %v342
    %859 = vmatmul.bf16.gmra.mxu0 %v849
    %v860 = vpop.f32.mrf.mxu0
    %v861 = vadd.f32 %v239, %v860
    %v862 = vpop.f32.mrf.mxu0
    %863 = vdwg.mxu0
    %v864 = vmul.f32 %v861, 0.5
    %v865 = vtanh.pop %v864
    %v866 = vmul.f32 %v865, 0.5
    %v867 = vadd.f32 %v866, 0.5
    %v868 = vtanh.pop %v861
    %v869 = vmul.f32 %v867, %v779
    %871 = vrot.lane.b32.xlu0 %v868, 64
    %v872 = vpop.permute.xlu0 %871
    %v874 = vmul.f32 %v867, %v872
    %876 = vrot.lane.b32.xlu0 %v874, 32
    %v877 = vpop.permute.xlu0 %876
    %v879 = vadd.f32 %v869, %v877
    %v880 = vtanh.pop %v879
    %882 = vrot.lane.b32.xlu0 %v880, 64
    %v883 = vpop.permute.xlu0 %882
    %v885 = vmul.f32 %v867, %v883
    %v886 = vpack.c.bf16 %v834, %v834
    %v888 = vrot.slane %v886, 1
    %889 = vrot.lane.b32.xlu0 %v888, 32
    %v890 = vpop.permute.xlu0 %889
    %v892 = vsel %vm280, %v890, 0
    %894 = vmatpush.bf16.msra.mxu0 0
    %895 = vmatpush.bf16.msra.mxu0 0
    %896 = vmatpush.bf16.msra.mxu0 0
    %897 = vmatpush.bf16.msra.mxu0 0
    %898 = vmatpush.bf16.msra.mxu0 0
    %899 = vmatpush.bf16.msra.mxu0 0
    %900 = vmatpush.bf16.msra.mxu0 %v277
    %901 = vmatpush.bf16.msra.mxu0 %v276
    %902 = vmatmul.bf16.gmra.mxu0 %v892
    %v903 = vpop.f32.mrf.mxu0
    %v904 = vadd.f32 0.0, %v903
    %v905 = vpop.f32.mrf.mxu0
    %906 = vdwg.mxu0
    %v908 = vrot.slane %v904, 4
    %v910 = vadd.f32 %v266, %v908
    %v911 = vmul.f32 %v910, 0.5
    %v912 = vtanh.pop %v911
    %v913 = vmul.f32 %v912, 0.5
    %v914 = vadd.f32 %v913, 0.5
    %v915 = vtanh.pop %v910
    %v917 = vrot.slane %v828, 6
    %v919 = vmul.f32 %v914, %v917
    %921 = vrot.lane.b32.xlu0 %v915, 64
    %v922 = vpop.permute.xlu0 %921
    %v924 = vmul.f32 %v914, %v922
    %926 = vrot.lane.b32.xlu0 %v924, 32
    %v927 = vpop.permute.xlu0 %926
    %v929 = vadd.f32 %v919, %v927
    %v930 = vtanh.pop %v929
    %932 = vrot.lane.b32.xlu0 %v930, 64
    %v933 = vpop.permute.xlu0 %932
    %v935 = vmul.f32 %v914, %v933
    %937 = vrot.lane.b32.xlu0 %v935, 32
    %v938 = vpop.permute.xlu0 %937
    %v941 = vrot.slane %v885, 4
    %942 = vrot.lane.b32.xlu0 %v941, 64
    %v943 = vpop.permute.xlu0 %942
    %v945 = vsel %vm280, %v938, %v943
    %v946 = vpack.c.bf16 %v945, %v945
    %v948 = vrot.slane %v946, 2
    %v950 = vsel %vm350, %v948, 0
    %952 = vmatpush.bf16.msra.mxu0 0
    %953 = vmatpush.bf16.msra.mxu0 0
    %954 = vmatpush.bf16.msra.mxu0 0
    %955 = vmatpush.bf16.msra.mxu0 0
    %956 = vmatpush.bf16.msra.mxu0 %v345
    %957 = vmatpush.bf16.msra.mxu0 %v344
    %958 = vmatpush.bf16.msra.mxu0 %v343
    %959 = vmatpush.bf16.msra.mxu0 %v342
    %960 = vmatmul.bf16.gmra.mxu0 %v950
    %v961 = vpop.f32.mrf.mxu0
    %v962 = vadd.f32 %v239, %v961
    %v963 = vpop.f32.mrf.mxu0
    %964 = vdwg.mxu0
    %v965 = vmul.f32 %v962, 0.5
    %v966 = vtanh.pop %v965
    %v967 = vmul.f32 %v966, 0.5
    %v968 = vadd.f32 %v967, 0.5
    %v969 = vtanh.pop %v962
    %v970 = vmul.f32 %v968, %v879
    %972 = vrot.lane.b32.xlu0 %v969, 64
    %v973 = vpop.permute.xlu0 %972
    %v975 = vmul.f32 %v968, %v973
    %977 = vrot.lane.b32.xlu0 %v975, 32
    %v978 = vpop.permute.xlu0 %977
    %v980 = vadd.f32 %v970, %v978
    %v981 = vtanh.pop %v980
    %983 = vrot.lane.b32.xlu0 %v981, 64
    %v984 = vpop.permute.xlu0 %983
    %v986 = vmul.f32 %v968, %v984
    %v987 = vpack.c.bf16 %v935, %v935
    %v989 = vrot.slane %v987, 2
    %990 = vrot.lane.b32.xlu0 %v989, 32
    %v991 = vpop.permute.xlu0 %990
    %v993 = vsel %vm280, %v991, 0
    %995 = vmatpush.bf16.msra.mxu0 0
    %996 = vmatpush.bf16.msra.mxu0 0
    %997 = vmatpush.bf16.msra.mxu0 0
    %998 = vmatpush.bf16.msra.mxu0 0
    %999 = vmatpush.bf16.msra.mxu0 0
    %1000 = vmatpush.bf16.msra.mxu0 0
    %1001 = vmatpush.bf16.msra.mxu0 %v277
    %1002 = vmatpush.bf16.msra.mxu0 %v276
    %1003 = vmatmul.bf16.gmra.mxu0 %v993
    %v1004 = vpop.f32.mrf.mxu0
    %v1005 = vadd.f32 0.0, %v1004
    %v1006 = vpop.f32.mrf.mxu0
    %1007 = vdwg.mxu0
    %v1009 = vrot.slane %v1005, 2
    %v1011 = vadd.f32 %v266, %v1009
    %v1012 = vmul.f32 %v1011, 0.5
    %v1013 = vtanh.pop %v1012
    %v1014 = vmul.f32 %v1013, 0.5
    %v1015 = vadd.f32 %v1014, 0.5
    %v1016 = vtanh.pop %v1011
    %v1018 = vrot.slane %v929, 6
    %v1020 = vmul.f32 %v1015, %v1018
    %1022 = vrot.lane.b32.xlu0 %v1016, 64
    %v1023 = vpop.permute.xlu0 %1022
    %v1025 = vmul.f32 %v1015, %v1023
    %1027 = vrot.lane.b32.xlu0 %v1025, 32
    %v1028 = vpop.permute.xlu0 %1027
    %v1030 = vadd.f32 %v1020, %v1028
    %v1031 = vtanh.pop %v1030
    %1033 = vrot.lane.b32.xlu0 %v1031, 64
    %v1034 = vpop.permute.xlu0 %1033
    %v1036 = vmul.f32 %v1015, %v1034
    %1038 = vrot.lane.b32.xlu0 %v1036, 32
    %v1039 = vpop.permute.xlu0 %1038
    %v1042 = vrot.slane %v986, 2
    %1043 = vrot.lane.b32.xlu0 %v1042, 64
    %v1044 = vpop.permute.xlu0 %1043
    %v1046 = vsel %vm280, %v1039, %v1044
    %v1047 = vpack.c.bf16 %v1046, %v1046
    %v1049 = vrot.slane %v1047, 3
    %v1051 = vsel %vm350, %v1049, 0
    %1053 = vmatpush.bf16.msra.mxu0 0
    %1054 = vmatpush.bf16.msra.mxu0 0
    %1055 = vmatpush.bf16.msra.mxu0 0
    %1056 = vmatpush.bf16.msra.mxu0 0
    %1057 = vmatpush.bf16.msra.mxu0 %v345
    %1058 = vmatpush.bf16.msra.mxu0 %v344
    %1059 = vmatpush.bf16.msra.mxu0 %v343
    %1060 = vmatpush.bf16.msra.mxu0 %v342
    %1061 = vmatmul.bf16.gmra.mxu0 %v1051
    %v1062 = vpop.f32.mrf.mxu0
    %v1063 = vadd.f32 %v239, %v1062
    %v1064 = vpop.f32.mrf.mxu0
    %1065 = vdwg.mxu0
    %v1066 = vmul.f32 %v1063, 0.5
    %v1067 = vtanh.pop %v1066
    %v1068 = vmul.f32 %v1067, 0.5
    %v1069 = vadd.f32 %v1068, 0.5
    %v1070 = vtanh.pop %v1063
    %v1071 = vmul.f32 %v1069, %v980
    %1073 = vrot.lane.b32.xlu0 %v1070, 64
    %v1074 = vpop.permute.xlu0 %1073
    %v1076 = vmul.f32 %v1069, %v1074
    %1078 = vrot.lane.b32.xlu0 %v1076, 32
    %v1079 = vpop.permute.xlu0 %1078
    %v1081 = vadd.f32 %v1071, %v1079
    %v1082 = vtanh.pop %v1081
    %1084 = vrot.lane.b32.xlu0 %v1082, 64
    %v1085 = vpop.permute.xlu0 %1084
    %v1087 = vmul.f32 %v1069, %v1085
    %v1088 = vld [vmem:[#allocation16] sm:$0xff]
    %v1089 = vld [vmem:[#allocation16 + $0x8] sm:$0xff]
    %v1090 = vld [vmem:[#allocation16 + $0x10] sm:$0xff]
    %v1091 = vld [vmem:[#allocation16 + $0x18] sm:$0xff]
    %v1092 = vld [vmem:[#allocation18] sm:$0x1]
    %v1094 = vperm.slane %v1092, 0
    %1097 = vrot.lane.b32.xlu0 %v1087, 32
    %v1098 = vpop.permute.xlu0 %1097
    %v1099 = vsel %vm280, %v1098, 0
    %1101 = vmatpush.msra.mxu0 0.0
    %1102 = vmatpush.msra.mxu0 0.0
    %1103 = vmatpush.msra.mxu0 0.0
    %1104 = vmatpush.msra.mxu0 0.0
    %1105 = vmatpush.msra.mxu0 0.0
    %1106 = vmatpush.msra.mxu0 0.0
    %1107 = vmatpush.msra.mxu0 0.0
    %1108 = vmatpush.msra.mxu0 0.0
    %1109 = vmatpush.msra.mxu0 0.0
    %1110 = vmatpush.msra.mxu0 0.0
    %1111 = vmatpush.msra.mxu0 0.0
    %1112 = vmatpush.msra.mxu0 0.0
    %1113 = vmatpush.msra.mxu0 %v1091
    %1114 = vmatpush.msra.mxu0 %v1090
    %1115 = vmatpush.msra.mxu0 %v1089
    %1116 = vmatpush.msra.mxu0 %v1088
    %1117 = vmatmul.f32.gmra.mxu0 %v1099
    %v1118 = vpop.f32.mrf.mxu0
    %v1119 = vadd.f32 %v1094, %v1118
    %1120 = vdwg.mxu0
    %s1121 = smul.u32 4, 5
    %s1122 = smul.u32 %s1121, 8
    %s1123 = smul.u32 %s1122, 1
    %s1124 = sshll.u32 %s1123, 4
    %1125 = dma.done [#allocation9], %s1124
    %s1126 = smul.u32 4, 8
    %s1127 = smul.u32 %s1126, 2
    %s1128 = sshll.u32 %s1127, 4
    %1129 = dma.done %s139, %s1128
    %s1130 = smul.u32 4, 3
    %s1131 = smul.u32 %s1130, 16
    %s1132 = smul.u32 %s1131, 1
    %s1133 = sshll.u32 %s1132, 4
    %1134 = dma.done %s153, %s1133
    %s1135 = smul.u32 4, 16
    %s1136 = smul.u32 %s1135, 4
    %s1137 = sshll.u32 %s1136, 4
    %1138 = dma.done %s167, %s1137
    %s1139 = smul.u32 %s1130, 32
    %s1140 = smul.u32 %s1139, 2
    %s1141 = sshll.u32 %s1140, 4
    %1142 = dma.done %s181, %s1141
    %s1143 = smul.u32 4, 32
    %s1144 = smul.u32 %s1143, 8
    %s1145 = sshll.u32 %s1144, 4
    %1146 = dma.done %s195, %s1145
    %s1147 = smul.u32 %s1130, 64
    %s1148 = smul.u32 %s1147, 4
    %s1149 = sshll.u32 %s1148, 4
    %1150 = dma.done %s209, %s1149
    %v1151 = vld [vmem:[#allocation2] sm:$0xf]
    %v1152 = vld [vmem:[#allocation2 + $0x4] sm:$0xf]
    %v1153 = vld [vmem:[#allocation2 + $0x8] sm:$0xf]
    %v1154 = vld [vmem:[#allocation2 + $0xc] sm:$0xf]
    %v1155 = vld [vmem:[#allocation2 + $0x10] sm:$0xf]
    %v1156 = vld [vmem:[#allocation2 + $0x14] sm:$0xf]
    %v1157 = vld [vmem:[#allocation2 + $0x18] sm:$0xf]
    %v1158 = vld [vmem:[#allocation2 + $0x1c] sm:$0xf]
    %v1159 = vpack.c.bf16 %v1119, %v1119
    %v1168 = vunpack.c.l.b16 %v1151
    %v1169 = vunpack.c.l.b16 %v1152
    %v1170 = vunpack.c.l.b16 %v1153
    %v1171 = vunpack.c.l.b16 %v1154
    %v1172 = vunpack.c.l.b16 %v1155
    %v1173 = vunpack.c.l.b16 %v1156
    %v1174 = vunpack.c.l.b16 %v1157
    %v1175 = vunpack.c.l.b16 %v1158
    %v1176 = vpack.c.b16 %v1169, %v1168
    %v1177 = vpack.c.b16 %v1171, %v1170
    %v1178 = vpack.c.b16 %v1173, %v1172
    %v1179 = vpack.c.b16 %v1175, %v1174
    %v1185 = vsel %vm350, %v1159, 0
    %1187 = vmatpush.bf16.msra.mxu0 0
    %1188 = vmatpush.bf16.msra.mxu0 0
    %1189 = vmatpush.bf16.msra.mxu0 0
    %1190 = vmatpush.bf16.msra.mxu0 0
    %1191 = vmatpush.bf16.msra.mxu0 %v1179
    %1192 = vmatpush.bf16.msra.mxu0 %v1178
    %1193 = vmatpush.bf16.msra.mxu0 %v1177
    %1194 = vmatpush.bf16.msra.mxu0 %v1176
    %1195 = vmatmul.bf16.gmra.mxu0 %v1185
    %v1196 = vpop.f32.mrf.mxu0
    %v1197 = vadd.f32 0.0, %v1196
    %v1198 = vpop.f32.mrf.mxu0
    %1199 = vdwg.mxu0
    %v1200 = vmax.f32 %v1197, 0.0
    %s1201 = scalar_lea.vmem [#allocation2], 32
    %v1202 = vld [vmem:[%s1201] sm:$0xf]
    %v1203 = vld [vmem:[%s1201 + $0x4] sm:$0xf]
    %v1204 = vld [vmem:[%s1201 + $0x8] sm:$0xf]
    %v1205 = vld [vmem:[%s1201 + $0xc] sm:$0xf]
    %v1206 = vld [vmem:[%s1201 + $0x10] sm:$0xf]
    %v1207 = vld [vmem:[%s1201 + $0x14] sm:$0xf]
    %v1208 = vld [vmem:[%s1201 + $0x18] sm:$0xf]
    %v1209 = vld [vmem:[%s1201 + $0x1c] sm:$0xf]
    %v1210 = vpack.c.bf16 %v1200, %v1200
    %v1219 = vunpack.c.l.b16 %v1202
    %v1220 = vunpack.c.l.b16 %v1203
    %v1221 = vunpack.c.l.b16 %v1204
    %v1222 = vunpack.c.l.b16 %v1205
    %v1223 = vunpack.c.l.b16 %v1206
    %v1224 = vunpack.c.l.b16 %v1207
    %v1225 = vunpack.c.l.b16 %v1208
    %v1226 = vunpack.c.l.b16 %v1209
    %v1227 = vpack.c.b16 %v1220, %v1219
    %v1228 = vpack.c.b16 %v1222, %v1221
    %v1229 = vpack.c.b16 %v1224, %v1223
    %v1230 = vpack.c.b16 %v1226, %v1225
    %v1236 = vsel %vm350, %v1210, 0
    %1238 = vmatpush.bf16.msra.mxu0 0
    %1239 = vmatpush.bf16.msra.mxu0 0
    %1240 = vmatpush.bf16.msra.mxu0 0
    %1241 = vmatpush.bf16.msra.mxu0 0
    %1242 = vmatpush.bf16.msra.mxu0 %v1230
    %1243 = vmatpush.bf16.msra.mxu0 %v1229
    %1244 = vmatpush.bf16.msra.mxu0 %v1228
    %1245 = vmatpush.bf16.msra.mxu0 %v1227
    %1246 = vmatmul.bf16.gmra.mxu0 %v1236
    %v1247 = vpop.f32.mrf.mxu0
    %v1248 = vadd.f32 0.0, %v1247
    %v1249 = vpop.f32.mrf.mxu0
    %1250 = vdwg.mxu0
    %v1251 = vmax.f32 %v1248, 0.0
    %s1252 = scalar_lea.vmem [#allocation2], 64
    %v1253 = vld [vmem:[%s1252] sm:$0xf]
    %v1254 = vld [vmem:[%s1252 + $0x4] sm:$0xf]
    %v1255 = vld [vmem:[%s1252 + $0x8] sm:$0xf]
    %v1256 = vld [vmem:[%s1252 + $0xc] sm:$0xf]
    %v1257 = vld [vmem:[%s1252 + $0x10] sm:$0xf]
    %v1258 = vld [vmem:[%s1252 + $0x14] sm:$0xf]
    %v1259 = vld [vmem:[%s1252 + $0x18] sm:$0xf]
    %v1260 = vld [vmem:[%s1252 + $0x1c] sm:$0xf]
    %v1261 = vpack.c.bf16 %v1251, %v1251
    %v1270 = vunpack.c.l.b16 %v1253
    %v1271 = vunpack.c.l.b16 %v1254
    %v1272 = vunpack.c.l.b16 %v1255
    %v1273 = vunpack.c.l.b16 %v1256
    %v1274 = vunpack.c.l.b16 %v1257
    %v1275 = vunpack.c.l.b16 %v1258
    %v1276 = vunpack.c.l.b16 %v1259
    %v1277 = vunpack.c.l.b16 %v1260
    %v1278 = vpack.c.b16 %v1271, %v1270
    %v1279 = vpack.c.b16 %v1273, %v1272
    %v1280 = vpack.c.b16 %v1275, %v1274
    %v1281 = vpack.c.b16 %v1277, %v1276
    %v1287 = vsel %vm350, %v1261, 0
    %1289 = vmatpush.bf16.msra.mxu0 0
    %1290 = vmatpush.bf16.msra.mxu0 0
    %1291 = vmatpush.bf16.msra.mxu0 0
    %1292 = vmatpush.bf16.msra.mxu0 0
    %1293 = vmatpush.bf16.msra.mxu0 %v1281
    %1294 = vmatpush.bf16.msra.mxu0 %v1280
    %1295 = vmatpush.bf16.msra.mxu0 %v1279
    %1296 = vmatpush.bf16.msra.mxu0 %v1278
    %1297 = vmatmul.bf16.gmra.mxu0 %v1287
    %v1298 = vpop.f32.mrf.mxu0
    %v1299 = vadd.f32 %v1200, %v1298
    %v1300 = vpop.f32.mrf.mxu0
    %1301 = vdwg.mxu0
    %v1302 = vmax.f32 %v1299, 0.0
    %s1303 = scalar_lea.vmem [#allocation2], 96
    %v1304 = vld [vmem:[%s1303] sm:$0xf]
    %v1305 = vld [vmem:[%s1303 + $0x4] sm:$0xf]
    %v1306 = vld [vmem:[%s1303 + $0x8] sm:$0xf]
    %v1307 = vld [vmem:[%s1303 + $0xc] sm:$0xf]
    %v1308 = vld [vmem:[%s1303 + $0x10] sm:$0xf]
    %v1309 = vld [vmem:[%s1303 + $0x14] sm:$0xf]
    %v1310 = vld [vmem:[%s1303 + $0x18] sm:$0xf]
    %v1311 = vld [vmem:[%s1303 + $0x1c] sm:$0xf]
    %v1312 = vpack.c.bf16 %v1302, %v1302
    %v1321 = vunpack.c.l.b16 %v1304
    %v1322 = vunpack.c.l.b16 %v1305
    %v1323 = vunpack.c.l.b16 %v1306
    %v1324 = vunpack.c.l.b16 %v1307
    %v1325 = vunpack.c.l.b16 %v1308
    %v1326 = vunpack.c.l.b16 %v1309
    %v1327 = vunpack.c.l.b16 %v1310
    %v1328 = vunpack.c.l.b16 %v1311
    %v1329 = vpack.c.b16 %v1322, %v1321
    %v1330 = vpack.c.b16 %v1324, %v1323
    %v1331 = vpack.c.b16 %v1326, %v1325
    %v1332 = vpack.c.b16 %v1328, %v1327
    %v1338 = vsel %vm350, %v1312, 0
    %1340 = vmatpush.bf16.msra.mxu0 0
    %1341 = vmatpush.bf16.msra.mxu0 0
    %1342 = vmatpush.bf16.msra.mxu0 0
    %1343 = vmatpush.bf16.msra.mxu0 0
    %1344 = vmatpush.bf16.msra.mxu0 %v1332
    %1345 = vmatpush.bf16.msra.mxu0 %v1331
    %1346 = vmatpush.bf16.msra.mxu0 %v1330
    %1347 = vmatpush.bf16.msra.mxu0 %v1329
    %1348 = vmatmul.bf16.gmra.mxu0 %v1338
    %v1349 = vpop.f32.mrf.mxu0
    %v1350 = vadd.f32 0.0, %v1349
    %v1351 = vpop.f32.mrf.mxu0
    %1352 = vdwg.mxu0
    %v1353 = vmax.f32 %v1350, 0.0
    %s1354 = scalar_lea.vmem [#allocation2], 128
    %v1355 = vld [vmem:[%s1354] sm:$0xf]
    %v1356 = vld [vmem:[%s1354 + $0x4] sm:$0xf]
    %v1357 = vld [vmem:[%s1354 + $0x8] sm:$0xf]
    %v1358 = vld [vmem:[%s1354 + $0xc] sm:$0xf]
    %v1359 = vld [vmem:[%s1354 + $0x10] sm:$0xf]
    %v1360 = vld [vmem:[%s1354 + $0x14] sm:$0xf]
    %v1361 = vld [vmem:[%s1354 + $0x18] sm:$0xf]
    %v1362 = vld [vmem:[%s1354 + $0x1c] sm:$0xf]
    %v1363 = vpack.c.bf16 %v1353, %v1353
    %v1372 = vunpack.c.l.b16 %v1355
    %v1373 = vunpack.c.l.b16 %v1356
    %v1374 = vunpack.c.l.b16 %v1357
    %v1375 = vunpack.c.l.b16 %v1358
    %v1376 = vunpack.c.l.b16 %v1359
    %v1377 = vunpack.c.l.b16 %v1360
    %v1378 = vunpack.c.l.b16 %v1361
    %v1379 = vunpack.c.l.b16 %v1362
    %v1380 = vpack.c.b16 %v1373, %v1372
    %v1381 = vpack.c.b16 %v1375, %v1374
    %v1382 = vpack.c.b16 %v1377, %v1376
    %v1383 = vpack.c.b16 %v1379, %v1378
    %v1389 = vsel %vm350, %v1363, 0
    %1391 = vmatpush.bf16.msra.mxu0 0
    %1392 = vmatpush.bf16.msra.mxu0 0
    %1393 = vmatpush.bf16.msra.mxu0 0
    %1394 = vmatpush.bf16.msra.mxu0 0
    %1395 = vmatpush.bf16.msra.mxu0 %v1383
    %1396 = vmatpush.bf16.msra.mxu0 %v1382
    %1397 = vmatpush.bf16.msra.mxu0 %v1381
    %1398 = vmatpush.bf16.msra.mxu0 %v1380
    %1399 = vmatmul.bf16.gmra.mxu0 %v1389
    %v1400 = vpop.f32.mrf.mxu0
    %v1401 = vadd.f32 %v1302, %v1400
    %v1402 = vpop.f32.mrf.mxu0
    %1403 = vdwg.mxu0
    %v1404 = vmax.f32 %v1401, 0.0
    %v1405 = vld [vmem:[#allocation3] sm:$0xff]
    %v1406 = vld [vmem:[#allocation3 + $0x8] sm:$0xff]
    %v1407 = vld [vmem:[#allocation3 + $0x10] sm:$0xff]
    %v1408 = vld [vmem:[#allocation3 + $0x18] sm:$0xff]
    %v1409 = vld [vmem:[#allocation3 + $0x20] sm:$0xff]
    %v1410 = vld [vmem:[#allocation3 + $0x28] sm:$0xff]
    %v1411 = vld [vmem:[#allocation3 + $0x30] sm:$0xff]
    %v1412 = vld [vmem:[#allocation3 + $0x38] sm:$0xff]
    %v1413 = vpack.c.bf16 %v1404, %v1404
    %v1422 = vunpack.c.l.b16 %v1405
    %v1423 = vunpack.c.h.b16 %v1405
    %v1424 = vunpack.c.l.b16 %v1406
    %v1425 = vunpack.c.h.b16 %v1406
    %v1426 = vunpack.c.l.b16 %v1407
    %v1427 = vunpack.c.h.b16 %v1407
    %v1428 = vunpack.c.l.b16 %v1408
    %v1429 = vunpack.c.h.b16 %v1408
    %v1430 = vunpack.c.l.b16 %v1409
    %v1431 = vunpack.c.h.b16 %v1409
    %v1432 = vunpack.c.l.b16 %v1410
    %v1433 = vunpack.c.h.b16 %v1410
    %v1434 = vunpack.c.l.b16 %v1411
    %v1435 = vunpack.c.h.b16 %v1411
    %v1436 = vunpack.c.l.b16 %v1412
    %v1437 = vunpack.c.h.b16 %v1412
    %v1438 = vpack.c.b16 %v1424, %v1422
    %v1439 = vpack.c.b16 %v1425, %v1423
    %v1440 = vpack.c.b16 %v1428, %v1426
    %v1441 = vpack.c.b16 %v1429, %v1427
    %v1442 = vpack.c.b16 %v1432, %v1430
    %v1443 = vpack.c.b16 %v1433, %v1431
    %v1444 = vpack.c.b16 %v1436, %v1434
    %v1445 = vpack.c.b16 %v1437, %v1435
    %v1455 = vsel %vm350, %v1413, 0
    %1457 = vmatpush.bf16.msra.mxu0 0
    %1458 = vmatpush.bf16.msra.mxu0 0
    %1459 = vmatpush.bf16.msra.mxu0 0
    %1460 = vmatpush.bf16.msra.mxu0 0
    %1461 = vmatpush.bf16.msra.mxu0 %v1444
    %1462 = vmatpush.bf16.msra.mxu0 %v1442
    %1463 = vmatpush.bf16.msra.mxu0 %v1440
    %1464 = vmatpush.bf16.msra.mxu0 %v1438
    %1465 = vmatmul.bf16.gmra.mxu0 %v1455
    %v1466 = vpop.f32.mrf.mxu0
    %v1467 = vadd.f32 0.0, %v1466
    %v1468 = vpop.f32.mrf.mxu0
    %1469 = vdwg.mxu0
    %1470 = vmatpush.bf16.msra.mxu0 0
    %1471 = vmatpush.bf16.msra.mxu0 0
    %1472 = vmatpush.bf16.msra.mxu0 0
    %1473 = vmatpush.bf16.msra.mxu0 0
    %1474 = vmatpush.bf16.msra.mxu0 %v1445
    %1475 = vmatpush.bf16.msra.mxu0 %v1443
    %1476 = vmatpush.bf16.msra.mxu0 %v1441
    %1477 = vmatpush.bf16.msra.mxu0 %v1439
    %1478 = vmatmul.bf16.gmra.mxu0 %v1455
    %v1479 = vpop.f32.mrf.mxu0
    %v1480 = vadd.f32 0.0, %v1479
    %v1481 = vpop.f32.mrf.mxu0
    %1482 = vdwg.mxu0
    %v1483 = vmax.f32 %v1467, 0.0
    %v1484 = vld [vmem:[#allocation4] sm:$0xf]
    %v1485 = vld [vmem:[#allocation4 + $0x4] sm:$0xf]
    %v1486 = vld [vmem:[#allocation4 + $0x8] sm:$0xf]
    %v1487 = vld [vmem:[#allocation4 + $0xc] sm:$0xf]
    %v1488 = vld [vmem:[#allocation4 + $0x10] sm:$0xf]
    %v1489 = vld [vmem:[#allocation4 + $0x14] sm:$0xf]
    %v1490 = vld [vmem:[#allocation4 + $0x18] sm:$0xf]
    %v1491 = vld [vmem:[#allocation4 + $0x1c] sm:$0xf]
    %v1492 = vld [vmem:[#allocation4 + $0x20] sm:$0xf]
    %v1493 = vld [vmem:[#allocation4 + $0x24] sm:$0xf]
    %v1494 = vld [vmem:[#allocation4 + $0x28] sm:$0xf]
    %v1495 = vld [vmem:[#allocation4 + $0x2c] sm:$0xf]
    %v1496 = vld [vmem:[#allocation4 + $0x30] sm:$0xf]
    %v1497 = vld [vmem:[#allocation4 + $0x34] sm:$0xf]
    %v1498 = vld [vmem:[#allocation4 + $0x38] sm:$0xf]
    %v1499 = vld [vmem:[#allocation4 + $0x3c] sm:$0xf]
    %v1500 = vpack.c.bf16 %v1483, %v1483
    %v1517 = vunpack.c.l.b16 %v1484
    %v1518 = vunpack.c.l.b16 %v1485
    %v1519 = vunpack.c.l.b16 %v1486
    %v1520 = vunpack.c.l.b16 %v1487
    %v1521 = vunpack.c.l.b16 %v1488
    %v1522 = vunpack.c.l.b16 %v1489
    %v1523 = vunpack.c.l.b16 %v1490
    %v1524 = vunpack.c.l.b16 %v1491
    %v1525 = vunpack.c.l.b16 %v1492
    %v1526 = vunpack.c.l.b16 %v1493
    %v1527 = vunpack.c.l.b16 %v1494
    %v1528 = vunpack.c.l.b16 %v1495
    %v1529 = vunpack.c.l.b16 %v1496
    %v1530 = vunpack.c.l.b16 %v1497
    %v1531 = vunpack.c.l.b16 %v1498
    %v1532 = vunpack.c.l.b16 %v1499
    %v1533 = vpack.c.b16 %v1518, %v1517
    %v1534 = vpack.c.b16 %v1520, %v1519
    %v1535 = vpack.c.b16 %v1522, %v1521
    %v1536 = vpack.c.b16 %v1524, %v1523
    %v1537 = vpack.c.b16 %v1526, %v1525
    %v1538 = vpack.c.b16 %v1528, %v1527
    %v1539 = vpack.c.b16 %v1530, %v1529
    %v1540 = vpack.c.b16 %v1532, %v1531
    %1549 = vmatpush.bf16.msra.mxu0 %v1540
    %1550 = vmatpush.bf16.msra.mxu0 %v1539
    %1551 = vmatpush.bf16.msra.mxu0 %v1538
    %1552 = vmatpush.bf16.msra.mxu0 %v1537
    %1553 = vmatpush.bf16.msra.mxu0 %v1536
    %1554 = vmatpush.bf16.msra.mxu0 %v1535
    %1555 = vmatpush.bf16.msra.mxu0 %v1534
    %1556 = vmatpush.bf16.msra.mxu0 %v1533
    %1557 = vmatmul.bf16.gmra.mxu0 %v1500
    %v1558 = vpop.f32.mrf.mxu0
    %v1559 = vadd.f32 %v1480, %v1558
    %v1560 = vpop.f32.mrf.mxu0
    %1561 = vdwg.mxu0
    %v1562 = vmax.f32 %v1559, 0.0
    %s1563 = scalar_lea.vmem [#allocation4], 64
    %v1564 = vld [vmem:[%s1563] sm:$0xf]
    %v1565 = vld [vmem:[%s1563 + $0x4] sm:$0xf]
    %v1566 = vld [vmem:[%s1563 + $0x8] sm:$0xf]
    %v1567 = vld [vmem:[%s1563 + $0xc] sm:$0xf]
    %v1568 = vld [vmem:[%s1563 + $0x10] sm:$0xf]
    %v1569 = vld [vmem:[%s1563 + $0x14] sm:$0xf]
    %v1570 = vld [vmem:[%s1563 + $0x18] sm:$0xf]
    %v1571 = vld [vmem:[%s1563 + $0x1c] sm:$0xf]
    %v1572 = vld [vmem:[%s1563 + $0x20] sm:$0xf]
    %v1573 = vld [vmem:[%s1563 + $0x24] sm:$0xf]
    %v1574 = vld [vmem:[%s1563 + $0x28] sm:$0xf]
    %v1575 = vld [vmem:[%s1563 + $0x2c] sm:$0xf]
    %v1576 = vld [vmem:[%s1563 + $0x30] sm:$0xf]
    %v1577 = vld [vmem:[%s1563 + $0x34] sm:$0xf]
    %v1578 = vld [vmem:[%s1563 + $0x38] sm:$0xf]
    %v1579 = vld [vmem:[%s1563 + $0x3c] sm:$0xf]
    %v1580 = vpack.c.bf16 %v1562, %v1562
    %v1597 = vunpack.c.l.b16 %v1564
    %v1598 = vunpack.c.l.b16 %v1565
    %v1599 = vunpack.c.l.b16 %v1566
    %v1600 = vunpack.c.l.b16 %v1567
    %v1601 = vunpack.c.l.b16 %v1568
    %v1602 = vunpack.c.l.b16 %v1569
    %v1603 = vunpack.c.l.b16 %v1570
    %v1604 = vunpack.c.l.b16 %v1571
    %v1605 = vunpack.c.l.b16 %v1572
    %v1606 = vunpack.c.l.b16 %v1573
    %v1607 = vunpack.c.l.b16 %v1574
    %v1608 = vunpack.c.l.b16 %v1575
    %v1609 = vunpack.c.l.b16 %v1576
    %v1610 = vunpack.c.l.b16 %v1577
    %v1611 = vunpack.c.l.b16 %v1578
    %v1612 = vunpack.c.l.b16 %v1579
    %v1613 = vpack.c.b16 %v1598, %v1597
    %v1614 = vpack.c.b16 %v1600, %v1599
    %v1615 = vpack.c.b16 %v1602, %v1601
    %v1616 = vpack.c.b16 %v1604, %v1603
    %v1617 = vpack.c.b16 %v1606, %v1605
    %v1618 = vpack.c.b16 %v1608, %v1607
    %v1619 = vpack.c.b16 %v1610, %v1609
    %v1620 = vpack.c.b16 %v1612, %v1611
    %1629 = vmatpush.bf16.msra.mxu0 %v1620
    %1630 = vmatpush.bf16.msra.mxu0 %v1619
    %1631 = vmatpush.bf16.msra.mxu0 %v1618
    %1632 = vmatpush.bf16.msra.mxu0 %v1617
    %1633 = vmatpush.bf16.msra.mxu0 %v1616
    %1634 = vmatpush.bf16.msra.mxu0 %v1615
    %1635 = vmatpush.bf16.msra.mxu0 %v1614
    %1636 = vmatpush.bf16.msra.mxu0 %v1613
    %1637 = vmatmul.bf16.gmra.mxu0 %v1580
    %v1638 = vpop.f32.mrf.mxu0
    %v1639 = vadd.f32 0.0, %v1638
    %v1640 = vpop.f32.mrf.mxu0
    %1641 = vdwg.mxu0
    %v1642 = vmax.f32 %v1639, 0.0
    %s1643 = scalar_lea.vmem [#allocation4], 128
    %v1644 = vld [vmem:[%s1643] sm:$0xf]
    %v1645 = vld [vmem:[%s1643 + $0x4] sm:$0xf]
    %v1646 = vld [vmem:[%s1643 + $0x8] sm:$0xf]
    %v1647 = vld [vmem:[%s1643 + $0xc] sm:$0xf]
    %v1648 = vld [vmem:[%s1643 + $0x10] sm:$0xf]
    %v1649 = vld [vmem:[%s1643 + $0x14] sm:$0xf]
    %v1650 = vld [vmem:[%s1643 + $0x18] sm:$0xf]
    %v1651 = vld [vmem:[%s1643 + $0x1c] sm:$0xf]
    %v1652 = vld [vmem:[%s1643 + $0x20] sm:$0xf]
    %v1653 = vld [vmem:[%s1643 + $0x24] sm:$0xf]
    %v1654 = vld [vmem:[%s1643 + $0x28] sm:$0xf]
    %v1655 = vld [vmem:[%s1643 + $0x2c] sm:$0xf]
    %v1656 = vld [vmem:[%s1643 + $0x30] sm:$0xf]
    %v1657 = vld [vmem:[%s1643 + $0x34] sm:$0xf]
    %v1658 = vld [vmem:[%s1643 + $0x38] sm:$0xf]
    %v1659 = vld [vmem:[%s1643 + $0x3c] sm:$0xf]
    %v1660 = vpack.c.bf16 %v1642, %v1642
    %v1677 = vunpack.c.l.b16 %v1644
    %v1678 = vunpack.c.l.b16 %v1645
    %v1679 = vunpack.c.l.b16 %v1646
    %v1680 = vunpack.c.l.b16 %v1647
    %v1681 = vunpack.c.l.b16 %v1648
    %v1682 = vunpack.c.l.b16 %v1649
    %v1683 = vunpack.c.l.b16 %v1650
    %v1684 = vunpack.c.l.b16 %v1651
    %v1685 = vunpack.c.l.b16 %v1652
    %v1686 = vunpack.c.l.b16 %v1653
    %v1687 = vunpack.c.l.b16 %v1654
    %v1688 = vunpack.c.l.b16 %v1655
    %v1689 = vunpack.c.l.b16 %v1656
    %v1690 = vunpack.c.l.b16 %v1657
    %v1691 = vunpack.c.l.b16 %v1658
    %v1692 = vunpack.c.l.b16 %v1659
    %v1693 = vpack.c.b16 %v1678, %v1677
    %v1694 = vpack.c.b16 %v1680, %v1679
    %v1695 = vpack.c.b16 %v1682, %v1681
    %v1696 = vpack.c.b16 %v1684, %v1683
    %v1697 = vpack.c.b16 %v1686, %v1685
    %v1698 = vpack.c.b16 %v1688, %v1687
    %v1699 = vpack.c.b16 %v1690, %v1689
    %v1700 = vpack.c.b16 %v1692, %v1691
    %1709 = vmatpush.bf16.msra.mxu0 %v1700
    %1710 = vmatpush.bf16.msra.mxu0 %v1699
    %1711 = vmatpush.bf16.msra.mxu0 %v1698
    %1712 = vmatpush.bf16.msra.mxu0 %v1697
    %1713 = vmatpush.bf16.msra.mxu0 %v1696
    %1714 = vmatpush.bf16.msra.mxu0 %v1695
    %1715 = vmatpush.bf16.msra.mxu0 %v1694
    %1716 = vmatpush.bf16.msra.mxu0 %v1693
    %1717 = vmatmul.bf16.gmra.mxu0 %v1660
    %v1718 = vpop.f32.mrf.mxu0
    %v1719 = vadd.f32 %v1562, %v1718
    %v1720 = vpop.f32.mrf.mxu0
    %1721 = vdwg.mxu0
    %v1722 = vmax.f32 %v1719, 0.0
    %v1723 = vld [vmem:[#allocation5] sm:$0xff]
    %v1724 = vld [vmem:[#allocation5 + $0x8] sm:$0xff]
    %v1725 = vld [vmem:[#allocation5 + $0x10] sm:$0xff]
    %v1726 = vld [vmem:[#allocation5 + $0x18] sm:$0xff]
    %v1727 = vld [vmem:[#allocation5 + $0x20] sm:$0xff]
    %v1728 = vld [vmem:[#allocation5 + $0x28] sm:$0xff]
    %v1729 = vld [vmem:[#allocation5 + $0x30] sm:$0xff]
    %v1730 = vld [vmem:[#allocation5 + $0x38] sm:$0xff]
    %v1731 = vld [vmem:[#allocation5 + $0x40] sm:$0xff]
    %v1732 = vld [vmem:[#allocation5 + $0x48] sm:$0xff]
    %v1733 = vld [vmem:[#allocation5 + $0x50] sm:$0xff]
    %v1734 = vld [vmem:[#allocation5 + $0x58] sm:$0xff]
    %v1735 = vld [vmem:[#allocation5 + $0x60] sm:$0xff]
    %v1736 = vld [vmem:[#allocation5 + $0x68] sm:$0xff]
    %v1737 = vld [vmem:[#allocation5 + $0x70] sm:$0xff]
    %v1738 = vld [vmem:[#allocation5 + $0x78] sm:$0xff]
    %v1739 = vld [vmem:[#allocation5 + $0x80] sm:$0xff]
    %v1740 = vld [vmem:[#allocation5 + $0x88] sm:$0xff]
    %v1741 = vld [vmem:[#allocation5 + $0x90] sm:$0xff]
    %v1742 = vld [vmem:[#allocation5 + $0x98] sm:$0xff]
    %v1743 = vld [vmem:[#allocation5 + $0xa0] sm:$0xff]
    %v1744 = vld [vmem:[#allocation5 + $0xa8] sm:$0xff]
    %v1745 = vld [vmem:[#allocation5 + $0xb0] sm:$0xff]
    %v1746 = vld [vmem:[#allocation5 + $0xb8] sm:$0xff]
    %v1747 = vld [vmem:[#allocation5 + $0xc0] sm:$0xff]
    %v1748 = vld [vmem:[#allocation5 + $0xc8] sm:$0xff]
    %v1749 = vld [vmem:[#allocation5 + $0xd0] sm:$0xff]
    %v1750 = vld [vmem:[#allocation5 + $0xd8] sm:$0xff]
    %v1751 = vld [vmem:[#allocation5 + $0xe0] sm:$0xff]
    %v1752 = vld [vmem:[#allocation5 + $0xe8] sm:$0xff]
    %v1753 = vld [vmem:[#allocation5 + $0xf0] sm:$0xff]
    %v1754 = vld [vmem:[#allocation5 + $0xf8] sm:$0xff]
    %v1755 = vpack.c.bf16 %v1722, %v1722
    %v1788 = vunpack.c.l.b16 %v1723
    %v1789 = vunpack.c.h.b16 %v1723
    %v1790 = vunpack.c.l.b16 %v1724
    %v1791 = vunpack.c.h.b16 %v1724
    %v1792 = vunpack.c.l.b16 %v1725
    %v1793 = vunpack.c.h.b16 %v1725
    %v1794 = vunpack.c.l.b16 %v1726
    %v1795 = vunpack.c.h.b16 %v1726
    %v1796 = vunpack.c.l.b16 %v1727
    %v1797 = vunpack.c.h.b16 %v1727
    %v1798 = vunpack.c.l.b16 %v1728
    %v1799 = vunpack.c.h.b16 %v1728
    %v1800 = vunpack.c.l.b16 %v1729
    %v1801 = vunpack.c.h.b16 %v1729
    %v1802 = vunpack.c.l.b16 %v1730
    %v1803 = vunpack.c.h.b16 %v1730
    %v1804 = vunpack.c.l.b16 %v1731
    %v1805 = vunpack.c.h.b16 %v1731
    %v1806 = vunpack.c.l.b16 %v1732
    %v1807 = vunpack.c.h.b16 %v1732
    %v1808 = vunpack.c.l.b16 %v1733
    %v1809 = vunpack.c.h.b16 %v1733
    %v1810 = vunpack.c.l.b16 %v1734
    %v1811 = vunpack.c.h.b16 %v1734
    %v1812 = vunpack.c.l.b16 %v1735
    %v1813 = vunpack.c.h.b16 %v1735
    %v1814 = vunpack.c.l.b16 %v1736
    %v1815 = vunpack.c.h.b16 %v1736
    %v1816 = vunpack.c.l.b16 %v1737
    %v1817 = vunpack.c.h.b16 %v1737
    %v1818 = vunpack.c.l.b16 %v1738
    %v1819 = vunpack.c.h.b16 %v1738
    %v1820 = vunpack.c.l.b16 %v1739
    %v1821 = vunpack.c.h.b16 %v1739
    %v1822 = vunpack.c.l.b16 %v1740
    %v1823 = vunpack.c.h.b16 %v1740
    %v1824 = vunpack.c.l.b16 %v1741
    %v1825 = vunpack.c.h.b16 %v1741
    %v1826 = vunpack.c.l.b16 %v1742
    %v1827 = vunpack.c.h.b16 %v1742
    %v1828 = vunpack.c.l.b16 %v1743
    %v1829 = vunpack.c.h.b16 %v1743
    %v1830 = vunpack.c.l.b16 %v1744
    %v1831 = vunpack.c.h.b16 %v1744
    %v1832 = vunpack.c.l.b16 %v1745
    %v1833 = vunpack.c.h.b16 %v1745
    %v1834 = vunpack.c.l.b16 %v1746
    %v1835 = vunpack.c.h.b16 %v1746
    %v1836 = vunpack.c.l.b16 %v1747
    %v1837 = vunpack.c.h.b16 %v1747
    %v1838 = vunpack.c.l.b16 %v1748
    %v1839 = vunpack.c.h.b16 %v1748
    %v1840 = vunpack.c.l.b16 %v1749
    %v1841 = vunpack.c.h.b16 %v1749
    %v1842 = vunpack.c.l.b16 %v1750
    %v1843 = vunpack.c.h.b16 %v1750
    %v1844 = vunpack.c.l.b16 %v1751
    %v1845 = vunpack.c.h.b16 %v1751
    %v1846 = vunpack.c.l.b16 %v1752
    %v1847 = vunpack.c.h.b16 %v1752
    %v1848 = vunpack.c.l.b16 %v1753
    %v1849 = vunpack.c.h.b16 %v1753
    %v1850 = vunpack.c.l.b16 %v1754
    %v1851 = vunpack.c.h.b16 %v1754
    %v1852 = vpack.c.b16 %v1792, %v1788
    %v1853 = vpack.c.b16 %v1793, %v1789
    %v1854 = vpack.c.b16 %v1794, %v1790
    %v1855 = vpack.c.b16 %v1795, %v1791
    %v1856 = vpack.c.b16 %v1800, %v1796
    %v1857 = vpack.c.b16 %v1801, %v1797
    %v1858 = vpack.c.b16 %v1802, %v1798
    %v1859 = vpack.c.b16 %v1803, %v1799
    %v1860 = vpack.c.b16 %v1808, %v1804
    %v1861 = vpack.c.b16 %v1809, %v1805
    %v1862 = vpack.c.b16 %v1810, %v1806
    %v1863 = vpack.c.b16 %v1811, %v1807
    %v1864 = vpack.c.b16 %v1816, %v1812
    %v1865 = vpack.c.b16 %v1817, %v1813
    %v1866 = vpack.c.b16 %v1818, %v1814
    %v1867 = vpack.c.b16 %v1819, %v1815
    %v1868 = vpack.c.b16 %v1824, %v1820
    %v1869 = vpack.c.b16 %v1825, %v1821
    %v1870 = vpack.c.b16 %v1826, %v1822
    %v1871 = vpack.c.b16 %v1827, %v1823
    %v1872 = vpack.c.b16 %v1832, %v1828
    %v1873 = vpack.c.b16 %v1833, %v1829
    %v1874 = vpack.c.b16 %v1834, %v1830
    %v1875 = vpack.c.b16 %v1835, %v1831
    %v1876 = vpack.c.b16 %v1840, %v1836
    %v1877 = vpack.c.b16 %v1841, %v1837
    %v1878 = vpack.c.b16 %v1842, %v1838
    %v1879 = vpack.c.b16 %v1843, %v1839
    %v1880 = vpack.c.b16 %v1848, %v1844
    %v1881 = vpack.c.b16 %v1849, %v1845
    %v1882 = vpack.c.b16 %v1850, %v1846
    %v1883 = vpack.c.b16 %v1851, %v1847
    %1916 = vmatpush.bf16.msra.mxu0 %v1880
    %1917 = vmatpush.bf16.msra.mxu0 %v1876
    %1918 = vmatpush.bf16.msra.mxu0 %v1872
    %1919 = vmatpush.bf16.msra.mxu0 %v1868
    %1920 = vmatpush.bf16.msra.mxu0 %v1864
    %1921 = vmatpush.bf16.msra.mxu0 %v1860
    %1922 = vmatpush.bf16.msra.mxu0 %v1856
    %1923 = vmatpush.bf16.msra.mxu0 %v1852
    %1924 = vmatmul.bf16.gmra.mxu0 %v1755
    %v1925 = vpop.f32.mrf.mxu0
    %v1926 = vadd.f32 0.0, %v1925
    %v1927 = vpop.f32.mrf.mxu0
    %1928 = vdwg.mxu0
    %1929 = vmatpush.bf16.msra.mxu0 %v1881
    %1930 = vmatpush.bf16.msra.mxu0 %v1877
    %1931 = vmatpush.bf16.msra.mxu0 %v1873
    %1932 = vmatpush.bf16.msra.mxu0 %v1869
    %1933 = vmatpush.bf16.msra.mxu0 %v1865
    %1934 = vmatpush.bf16.msra.mxu0 %v1861
    %1935 = vmatpush.bf16.msra.mxu0 %v1857
    %1936 = vmatpush.bf16.msra.mxu0 %v1853
    %1937 = vmatmul.bf16.gmra.mxu0 %v1755
    %v1938 = vpop.f32.mrf.mxu0
    %v1939 = vadd.f32 0.0, %v1938
    %v1940 = vpop.f32.mrf.mxu0
    %1941 = vdwg.mxu0
    %1942 = vmatpush.bf16.msra.mxu0 %v1882
    %1943 = vmatpush.bf16.msra.mxu0 %v1878
    %1944 = vmatpush.bf16.msra.mxu0 %v1874
    %1945 = vmatpush.bf16.msra.mxu0 %v1870
    %1946 = vmatpush.bf16.msra.mxu0 %v1866
    %1947 = vmatpush.bf16.msra.mxu0 %v1862
    %1948 = vmatpush.bf16.msra.mxu0 %v1858
    %1949 = vmatpush.bf16.msra.mxu0 %v1854
    %1950 = vmatmul.bf16.gmra.mxu0 %v1755
    %v1951 = vpop.f32.mrf.mxu0
    %v1952 = vadd.f32 0.0, %v1951
    %v1953 = vpop.f32.mrf.mxu0
    %1954 = vdwg.mxu0
    %1955 = vmatpush.bf16.msra.mxu0 %v1883
    %1956 = vmatpush.bf16.msra.mxu0 %v1879
    %1957 = vmatpush.bf16.msra.mxu0 %v1875
    %1958 = vmatpush.bf16.msra.mxu0 %v1871
    %1959 = vmatpush.bf16.msra.mxu0 %v1867
    %1960 = vmatpush.bf16.msra.mxu0 %v1863
    %1961 = vmatpush.bf16.msra.mxu0 %v1859
    %1962 = vmatpush.bf16.msra.mxu0 %v1855
    %1963 = vmatmul.bf16.gmra.mxu0 %v1755
    %v1964 = vpop.f32.mrf.mxu0
    %v1965 = vadd.f32 0.0, %v1964
    %v1966 = vpop.f32.mrf.mxu0
    %1967 = vdwg.mxu0
    %v1968 = vmax.f32 %v1926, 0.0
    %v1969 = vmax.f32 %v1939, 0.0
    %v1970 = vld [vmem:[#allocation6] sm:$0xff]
    %v1971 = vld [vmem:[#allocation6 + $0x8] sm:$0xff]
    %v1972 = vld [vmem:[#allocation6 + $0x10] sm:$0xff]
    %v1973 = vld [vmem:[#allocation6 + $0x18] sm:$0xff]
    %v1974 = vld [vmem:[#allocation6 + $0x20] sm:$0xff]
    %v1975 = vld [vmem:[#allocation6 + $0x28] sm:$0xff]
    %v1976 = vld [vmem:[#allocation6 + $0x30] sm:$0xff]
    %v1977 = vld [vmem:[#allocation6 + $0x38] sm:$0xff]
    %v1978 = vld [vmem:[#allocation6 + $0x40] sm:$0xff]
    %v1979 = vld [vmem:[#allocation6 + $0x48] sm:$0xff]
    %v1980 = vld [vmem:[#allocation6 + $0x50] sm:$0xff]
    %v1981 = vld [vmem:[#allocation6 + $0x58] sm:$0xff]
    %v1982 = vld [vmem:[#allocation6 + $0x60] sm:$0xff]
    %v1983 = vld [vmem:[#allocation6 + $0x68] sm:$0xff]
    %v1984 = vld [vmem:[#allocation6 + $0x70] sm:$0xff]
    %v1985 = vld [vmem:[#allocation6 + $0x78] sm:$0xff]
    %v1986 = vld [vmem:[#allocation6 + $0x80] sm:$0xff]
    %v1987 = vld [vmem:[#allocation6 + $0x88] sm:$0xff]
    %v1988 = vld [vmem:[#allocation6 + $0x90] sm:$0xff]
    %v1989 = vld [vmem:[#allocation6 + $0x98] sm:$0xff]
    %v1990 = vld [vmem:[#allocation6 + $0xa0] sm:$0xff]
    %v1991 = vld [vmem:[#allocation6 + $0xa8] sm:$0xff]
    %v1992 = vld [vmem:[#allocation6 + $0xb0] sm:$0xff]
    %v1993 = vld [vmem:[#allocation6 + $0xb8] sm:$0xff]
    %v1994 = vld [vmem:[#allocation6 + $0xc0] sm:$0xff]
    %v1995 = vld [vmem:[#allocation6 + $0xc8] sm:$0xff]
    %v1996 = vld [vmem:[#allocation6 + $0xd0] sm:$0xff]
    %v1997 = vld [vmem:[#allocation6 + $0xd8] sm:$0xff]
    %v1998 = vld [vmem:[#allocation6 + $0xe0] sm:$0xff]
    %v1999 = vld [vmem:[#allocation6 + $0xe8] sm:$0xff]
    %v2000 = vld [vmem:[#allocation6 + $0xf0] sm:$0xff]
    %v2001 = vld [vmem:[#allocation6 + $0xf8] sm:$0xff]
    %v2002 = vpack.c.bf16 %v1968, %v1968
    %v2003 = vpack.c.bf16 %v1969, %v1969
    %v2036 = vunpack.c.l.b16 %v1970
    %v2037 = vunpack.c.h.b16 %v1970
    %v2038 = vunpack.c.l.b16 %v1971
    %v2039 = vunpack.c.h.b16 %v1971
    %v2040 = vunpack.c.l.b16 %v1972
    %v2041 = vunpack.c.h.b16 %v1972
    %v2042 = vunpack.c.l.b16 %v1973
    %v2043 = vunpack.c.h.b16 %v1973
    %v2044 = vunpack.c.l.b16 %v1974
    %v2045 = vunpack.c.h.b16 %v1974
    %v2046 = vunpack.c.l.b16 %v1975
    %v2047 = vunpack.c.h.b16 %v1975
    %v2048 = vunpack.c.l.b16 %v1976
    %v2049 = vunpack.c.h.b16 %v1976
    %v2050 = vunpack.c.l.b16 %v1977
    %v2051 = vunpack.c.h.b16 %v1977
    %v2052 = vunpack.c.l.b16 %v1978
    %v2053 = vunpack.c.h.b16 %v1978
    %v2054 = vunpack.c.l.b16 %v1979
    %v2055 = vunpack.c.h.b16 %v1979
    %v2056 = vunpack.c.l.b16 %v1980
    %v2057 = vunpack.c.h.b16 %v1980
    %v2058 = vunpack.c.l.b16 %v1981
    %v2059 = vunpack.c.h.b16 %v1981
    %v2060 = vunpack.c.l.b16 %v1982
    %v2061 = vunpack.c.h.b16 %v1982
    %v2062 = vunpack.c.l.b16 %v1983
    %v2063 = vunpack.c.h.b16 %v1983
    %v2064 = vunpack.c.l.b16 %v1984
    %v2065 = vunpack.c.h.b16 %v1984
    %v2066 = vunpack.c.l.b16 %v1985
    %v2067 = vunpack.c.h.b16 %v1985
    %v2068 = vunpack.c.l.b16 %v1986
    %v2069 = vunpack.c.h.b16 %v1986
    %v2070 = vunpack.c.l.b16 %v1987
    %v2071 = vunpack.c.h.b16 %v1987
    %v2072 = vunpack.c.l.b16 %v1988
    %v2073 = vunpack.c.h.b16 %v1988
    %v2074 = vunpack.c.l.b16 %v1989
    %v2075 = vunpack.c.h.b16 %v1989
    %v2076 = vunpack.c.l.b16 %v1990
    %v2077 = vunpack.c.h.b16 %v1990
    %v2078 = vunpack.c.l.b16 %v1991
    %v2079 = vunpack.c.h.b16 %v1991
    %v2080 = vunpack.c.l.b16 %v1992
    %v2081 = vunpack.c.h.b16 %v1992
    %v2082 = vunpack.c.l.b16 %v1993
    %v2083 = vunpack.c.h.b16 %v1993
    %v2084 = vunpack.c.l.b16 %v1994
    %v2085 = vunpack.c.h.b16 %v1994
    %v2086 = vunpack.c.l.b16 %v1995
    %v2087 = vunpack.c.h.b16 %v1995
    %v2088 = vunpack.c.l.b16 %v1996
    %v2089 = vunpack.c.h.b16 %v1996
    %v2090 = vunpack.c.l.b16 %v1997
    %v2091 = vunpack.c.h.b16 %v1997
    %v2092 = vunpack.c.l.b16 %v1998
    %v2093 = vunpack.c.h.b16 %v1998
    %v2094 = vunpack.c.l.b16 %v1999
    %v2095 = vunpack.c.h.b16 %v1999
    %v2096 = vunpack.c.l.b16 %v2000
    %v2097 = vunpack.c.h.b16 %v2000
    %v2098 = vunpack.c.l.b16 %v2001
    %v2099 = vunpack.c.h.b16 %v2001
    %v2100 = vpack.c.b16 %v2038, %v2036
    %v2101 = vpack.c.b16 %v2039, %v2037
    %v2102 = vpack.c.b16 %v2042, %v2040
    %v2103 = vpack.c.b16 %v2043, %v2041
    %v2104 = vpack.c.b16 %v2046, %v2044
    %v2105 = vpack.c.b16 %v2047, %v2045
    %v2106 = vpack.c.b16 %v2050, %v2048
    %v2107 = vpack.c.b16 %v2051, %v2049
    %v2108 = vpack.c.b16 %v2054, %v2052
    %v2109 = vpack.c.b16 %v2055, %v2053
    %v2110 = vpack.c.b16 %v2058, %v2056
    %v2111 = vpack.c.b16 %v2059, %v2057
    %v2112 = vpack.c.b16 %v2062, %v2060
    %v2113 = vpack.c.b16 %v2063, %v2061
    %v2114 = vpack.c.b16 %v2066, %v2064
    %v2115 = vpack.c.b16 %v2067, %v2065
    %v2116 = vpack.c.b16 %v2070, %v2068
    %v2117 = vpack.c.b16 %v2071, %v2069
    %v2118 = vpack.c.b16 %v2074, %v2072
    %v2119 = vpack.c.b16 %v2075, %v2073
    %v2120 = vpack.c.b16 %v2078, %v2076
    %v2121 = vpack.c.b16 %v2079, %v2077
    %v2122 = vpack.c.b16 %v2082, %v2080
    %v2123 = vpack.c.b16 %v2083, %v2081
    %v2124 = vpack.c.b16 %v2086, %v2084
    %v2125 = vpack.c.b16 %v2087, %v2085
    %v2126 = vpack.c.b16 %v2090, %v2088
    %v2127 = vpack.c.b16 %v2091, %v2089
    %v2128 = vpack.c.b16 %v2094, %v2092
    %v2129 = vpack.c.b16 %v2095, %v2093
    %v2130 = vpack.c.b16 %v2098, %v2096
    %v2131 = vpack.c.b16 %v2099, %v2097
    %2164 = vmatpush.bf16.msra.mxu0 %v2114
    %2165 = vmatpush.bf16.msra.mxu0 %v2112
    %2166 = vmatpush.bf16.msra.mxu0 %v2110
    %2167 = vmatpush.bf16.msra.mxu0 %v2108
    %2168 = vmatpush.bf16.msra.mxu0 %v2106
    %2169 = vmatpush.bf16.msra.mxu0 %v2104
    %2170 = vmatpush.bf16.msra.mxu0 %v2102
    %2171 = vmatpush.bf16.msra.mxu0 %v2100
    %2172 = vmatmul.bf16.gmra.mxu0 %v2002
    %v2173 = vpop.f32.mrf.mxu0
    %v2174 = vadd.f32 %v1952, %v2173
    %v2175 = vpop.f32.mrf.mxu0
    %2176 = vdwg.mxu0
    %2177 = vmatpush.bf16.msra.mxu0 %v2130
    %2178 = vmatpush.bf16.msra.mxu0 %v2128
    %2179 = vmatpush.bf16.msra.mxu0 %v2126
    %2180 = vmatpush.bf16.msra.mxu0 %v2124
    %2181 = vmatpush.bf16.msra.mxu0 %v2122
    %2182 = vmatpush.bf16.msra.mxu0 %v2120
    %2183 = vmatpush.bf16.msra.mxu0 %v2118
    %2184 = vmatpush.bf16.msra.mxu0 %v2116
    %2185 = vmatmul.bf16.gmra.mxu0 %v2003
    %v2186 = vpop.f32.mrf.mxu0
    %v2187 = vadd.f32 %v2174, %v2186
    %v2188 = vpop.f32.mrf.mxu0
    %2189 = vdwg.mxu0
    %2190 = vmatpush.bf16.msra.mxu0 %v2115
    %2191 = vmatpush.bf16.msra.mxu0 %v2113
    %2192 = vmatpush.bf16.msra.mxu0 %v2111
    %2193 = vmatpush.bf16.msra.mxu0 %v2109
    %2194 = vmatpush.bf16.msra.mxu0 %v2107
    %2195 = vmatpush.bf16.msra.mxu0 %v2105
    %2196 = vmatpush.bf16.msra.mxu0 %v2103
    %2197 = vmatpush.bf16.msra.mxu0 %v2101
    %2198 = vmatmul.bf16.gmra.mxu0 %v2002
    %v2199 = vpop.f32.mrf.mxu0
    %v2200 = vadd.f32 %v1965, %v2199
    %v2201 = vpop.f32.mrf.mxu0
    %2202 = vdwg.mxu0
    %2203 = vmatpush.bf16.msra.mxu0 %v2131
    %2204 = vmatpush.bf16.msra.mxu0 %v2129
    %2205 = vmatpush.bf16.msra.mxu0 %v2127
    %2206 = vmatpush.bf16.msra.mxu0 %v2125
    %2207 = vmatpush.bf16.msra.mxu0 %v2123
    %2208 = vmatpush.bf16.msra.mxu0 %v2121
    %2209 = vmatpush.bf16.msra.mxu0 %v2119
    %2210 = vmatpush.bf16.msra.mxu0 %v2117
    %2211 = vmatmul.bf16.gmra.mxu0 %v2003
    %v2212 = vpop.f32.mrf.mxu0
    %v2213 = vadd.f32 %v2200, %v2212
    %v2214 = vpop.f32.mrf.mxu0
    %2215 = vdwg.mxu0
    %v2216 = vmax.f32 %v2187, 0.0
    %v2217 = vmax.f32 %v2213, 0.0
    %s2218 = scalar_lea.vmem [#allocation6], 256
    %v2219 = vld [vmem:[%s2218] sm:$0xff]
    %v2220 = vld [vmem:[%s2218 + $0x8] sm:$0xff]
    %v2221 = vld [vmem:[%s2218 + $0x10] sm:$0xff]
    %v2222 = vld [vmem:[%s2218 + $0x18] sm:$0xff]
    %v2223 = vld [vmem:[%s2218 + $0x20] sm:$0xff]
    %v2224 = vld [vmem:[%s2218 + $0x28] sm:$0xff]
    %v2225 = vld [vmem:[%s2218 + $0x30] sm:$0xff]
    %v2226 = vld [vmem:[%s2218 + $0x38] sm:$0xff]
    %v2227 = vld [vmem:[%s2218 + $0x40] sm:$0xff]
    %v2228 = vld [vmem:[%s2218 + $0x48] sm:$0xff]
    %v2229 = vld [vmem:[%s2218 + $0x50] sm:$0xff]
    %v2230 = vld [vmem:[%s2218 + $0x58] sm:$0xff]
    %v2231 = vld [vmem:[%s2218 + $0x60] sm:$0xff]
    %v2232 = vld [vmem:[%s2218 + $0x68] sm:$0xff]
    %v2233 = vld [vmem:[%s2218 + $0x70] sm:$0xff]
    %v2234 = vld [vmem:[%s2218 + $0x78] sm:$0xff]
    %v2235 = vld [vmem:[%s2218 + $0x80] sm:$0xff]
    %v2236 = vld [vmem:[%s2218 + $0x88] sm:$0xff]
    %v2237 = vld [vmem:[%s2218 + $0x90] sm:$0xff]
    %v2238 = vld [vmem:[%s2218 + $0x98] sm:$0xff]
    %v2239 = vld [vmem:[%s2218 + $0xa0] sm:$0xff]
    %v2240 = vld [vmem:[%s2218 + $0xa8] sm:$0xff]
    %v2241 = vld [vmem:[%s2218 + $0xb0] sm:$0xff]
    %v2242 = vld [vmem:[%s2218 + $0xb8] sm:$0xff]
    %v2243 = vld [vmem:[%s2218 + $0xc0] sm:$0xff]
    %v2244 = vld [vmem:[%s2218 + $0xc8] sm:$0xff]
    %v2245 = vld [vmem:[%s2218 + $0xd0] sm:$0xff]
    %v2246 = vld [vmem:[%s2218 + $0xd8] sm:$0xff]
    %v2247 = vld [vmem:[%s2218 + $0xe0] sm:$0xff]
    %v2248 = vld [vmem:[%s2218 + $0xe8] sm:$0xff]
    %v2249 = vld [vmem:[%s2218 + $0xf0] sm:$0xff]
    %v2250 = vld [vmem:[%s2218 + $0xf8] sm:$0xff]
    %v2251 = vpack.c.bf16 %v2216, %v2216
    %v2252 = vpack.c.bf16 %v2217, %v2217
    %v2285 = vunpack.c.l.b16 %v2219
    %v2286 = vunpack.c.h.b16 %v2219
    %v2287 = vunpack.c.l.b16 %v2220
    %v2288 = vunpack.c.h.b16 %v2220
    %v2289 = vunpack.c.l.b16 %v2221
    %v2290 = vunpack.c.h.b16 %v2221
    %v2291 = vunpack.c.l.b16 %v2222
    %v2292 = vunpack.c.h.b16 %v2222
    %v2293 = vunpack.c.l.b16 %v2223
    %v2294 = vunpack.c.h.b16 %v2223
    %v2295 = vunpack.c.l.b16 %v2224
    %v2296 = vunpack.c.h.b16 %v2224
    %v2297 = vunpack.c.l.b16 %v2225
    %v2298 = vunpack.c.h.b16 %v2225
    %v2299 = vunpack.c.l.b16 %v2226
    %v2300 = vunpack.c.h.b16 %v2226
    %v2301 = vunpack.c.l.b16 %v2227
    %v2302 = vunpack.c.h.b16 %v2227
    %v2303 = vunpack.c.l.b16 %v2228
    %v2304 = vunpack.c.h.b16 %v2228
    %v2305 = vunpack.c.l.b16 %v2229
    %v2306 = vunpack.c.h.b16 %v2229
    %v2307 = vunpack.c.l.b16 %v2230
    %v2308 = vunpack.c.h.b16 %v2230
    %v2309 = vunpack.c.l.b16 %v2231
    %v2310 = vunpack.c.h.b16 %v2231
    %v2311 = vunpack.c.l.b16 %v2232
    %v2312 = vunpack.c.h.b16 %v2232
    %v2313 = vunpack.c.l.b16 %v2233
    %v2314 = vunpack.c.h.b16 %v2233
    %v2315 = vunpack.c.l.b16 %v2234
    %v2316 = vunpack.c.h.b16 %v2234
    %v2317 = vunpack.c.l.b16 %v2235
    %v2318 = vunpack.c.h.b16 %v2235
    %v2319 = vunpack.c.l.b16 %v2236
    %v2320 = vunpack.c.h.b16 %v2236
    %v2321 = vunpack.c.l.b16 %v2237
    %v2322 = vunpack.c.h.b16 %v2237
    %v2323 = vunpack.c.l.b16 %v2238
    %v2324 = vunpack.c.h.b16 %v2238
    %v2325 = vunpack.c.l.b16 %v2239
    %v2326 = vunpack.c.h.b16 %v2239
    %v2327 = vunpack.c.l.b16 %v2240
    %v2328 = vunpack.c.h.b16 %v2240
    %v2329 = vunpack.c.l.b16 %v2241
    %v2330 = vunpack.c.h.b16 %v2241
    %v2331 = vunpack.c.l.b16 %v2242
    %v2332 = vunpack.c.h.b16 %v2242
    %v2333 = vunpack.c.l.b16 %v2243
    %v2334 = vunpack.c.h.b16 %v2243
    %v2335 = vunpack.c.l.b16 %v2244
    %v2336 = vunpack.c.h.b16 %v2244
    %v2337 = vunpack.c.l.b16 %v2245
    %v2338 = vunpack.c.h.b16 %v2245
    %v2339 = vunpack.c.l.b16 %v2246
    %v2340 = vunpack.c.h.b16 %v2246
    %v2341 = vunpack.c.l.b16 %v2247
    %v2342 = vunpack.c.h.b16 %v2247
    %v2343 = vunpack.c.l.b16 %v2248
    %v2344 = vunpack.c.h.b16 %v2248
    %v2345 = vunpack.c.l.b16 %v2249
    %v2346 = vunpack.c.h.b16 %v2249
    %v2347 = vunpack.c.l.b16 %v2250
    %v2348 = vunpack.c.h.b16 %v2250
    %v2349 = vpack.c.b16 %v2287, %v2285
    %v2350 = vpack.c.b16 %v2288, %v2286
    %v2351 = vpack.c.b16 %v2291, %v2289
    %v2352 = vpack.c.b16 %v2292, %v2290
    %v2353 = vpack.c.b16 %v2295, %v2293
    %v2354 = vpack.c.b16 %v2296, %v2294
    %v2355 = vpack.c.b16 %v2299, %v2297
    %v2356 = vpack.c.b16 %v2300, %v2298
    %v2357 = vpack.c.b16 %v2303, %v2301
    %v2358 = vpack.c.b16 %v2304, %v2302
    %v2359 = vpack.c.b16 %v2307, %v2305
    %v2360 = vpack.c.b16 %v2308, %v2306
    %v2361 = vpack.c.b16 %v2311, %v2309
    %v2362 = vpack.c.b16 %v2312, %v2310
    %v2363 = vpack.c.b16 %v2315, %v2313
    %v2364 = vpack.c.b16 %v2316, %v2314
    %v2365 = vpack.c.b16 %v2319, %v2317
    %v2366 = vpack.c.b16 %v2320, %v2318
    %v2367 = vpack.c.b16 %v2323, %v2321
    %v2368 = vpack.c.b16 %v2324, %v2322
    %v2369 = vpack.c.b16 %v2327, %v2325
    %v2370 = vpack.c.b16 %v2328, %v2326
    %v2371 = vpack.c.b16 %v2331, %v2329
    %v2372 = vpack.c.b16 %v2332, %v2330
    %v2373 = vpack.c.b16 %v2335, %v2333
    %v2374 = vpack.c.b16 %v2336, %v2334
    %v2375 = vpack.c.b16 %v2339, %v2337
    %v2376 = vpack.c.b16 %v2340, %v2338
    %v2377 = vpack.c.b16 %v2343, %v2341
    %v2378 = vpack.c.b16 %v2344, %v2342
    %v2379 = vpack.c.b16 %v2347, %v2345
    %v2380 = vpack.c.b16 %v2348, %v2346
    %2413 = vmatpush.bf16.msra.mxu0 %v2363
    %2414 = vmatpush.bf16.msra.mxu0 %v2361
    %2415 = vmatpush.bf16.msra.mxu0 %v2359
    %2416 = vmatpush.bf16.msra.mxu0 %v2357
    %2417 = vmatpush.bf16.msra.mxu0 %v2355
    %2418 = vmatpush.bf16.msra.mxu0 %v2353
    %2419 = vmatpush.bf16.msra.mxu0 %v2351
    %2420 = vmatpush.bf16.msra.mxu0 %v2349
    %2421 = vmatmul.bf16.gmra.mxu0 %v2251
    %v2422 = vpop.f32.mrf.mxu0
    %v2423 = vadd.f32 0.0, %v2422
    %v2424 = vpop.f32.mrf.mxu0
    %2425 = vdwg.mxu0
    %2426 = vmatpush.bf16.msra.mxu0 %v2379
    %2427 = vmatpush.bf16.msra.mxu0 %v2377
    %2428 = vmatpush.bf16.msra.mxu0 %v2375
    %2429 = vmatpush.bf16.msra.mxu0 %v2373
    %2430 = vmatpush.bf16.msra.mxu0 %v2371
    %2431 = vmatpush.bf16.msra.mxu0 %v2369
    %2432 = vmatpush.bf16.msra.mxu0 %v2367
    %2433 = vmatpush.bf16.msra.mxu0 %v2365
    %2434 = vmatmul.bf16.gmra.mxu0 %v2252
    %v2435 = vpop.f32.mrf.mxu0
    %v2436 = vadd.f32 %v2423, %v2435
    %v2437 = vpop.f32.mrf.mxu0
    %2438 = vdwg.mxu0
    %2439 = vmatpush.bf16.msra.mxu0 %v2364
    %2440 = vmatpush.bf16.msra.mxu0 %v2362
    %2441 = vmatpush.bf16.msra.mxu0 %v2360
    %2442 = vmatpush.bf16.msra.mxu0 %v2358
    %2443 = vmatpush.bf16.msra.mxu0 %v2356
    %2444 = vmatpush.bf16.msra.mxu0 %v2354
    %2445 = vmatpush.bf16.msra.mxu0 %v2352
    %2446 = vmatpush.bf16.msra.mxu0 %v2350
    %2447 = vmatmul.bf16.gmra.mxu0 %v2251
    %v2448 = vpop.f32.mrf.mxu0
    %v2449 = vadd.f32 0.0, %v2448
    %v2450 = vpop.f32.mrf.mxu0
    %2451 = vdwg.mxu0
    %2452 = vmatpush.bf16.msra.mxu0 %v2380
    %2453 = vmatpush.bf16.msra.mxu0 %v2378
    %2454 = vmatpush.bf16.msra.mxu0 %v2376
    %2455 = vmatpush.bf16.msra.mxu0 %v2374
    %2456 = vmatpush.bf16.msra.mxu0 %v2372
    %2457 = vmatpush.bf16.msra.mxu0 %v2370
    %2458 = vmatpush.bf16.msra.mxu0 %v2368
    %2459 = vmatpush.bf16.msra.mxu0 %v2366
    %2460 = vmatmul.bf16.gmra.mxu0 %v2252
    %v2461 = vpop.f32.mrf.mxu0
    %v2462 = vadd.f32 %v2449, %v2461
    %v2463 = vpop.f32.mrf.mxu0
    %2464 = vdwg.mxu0
    %v2465 = vmax.f32 %v2436, 0.0
    %v2466 = vmax.f32 %v2462, 0.0
    %s2467 = scalar_lea.vmem [#allocation6], 512
    %v2468 = vld [vmem:[%s2467] sm:$0xff]
    %v2469 = vld [vmem:[%s2467 + $0x8] sm:$0xff]
    %v2470 = vld [vmem:[%s2467 + $0x10] sm:$0xff]
    %v2471 = vld [vmem:[%s2467 + $0x18] sm:$0xff]
    %v2472 = vld [vmem:[%s2467 + $0x20] sm:$0xff]
    %v2473 = vld [vmem:[%s2467 + $0x28] sm:$0xff]
    %v2474 = vld [vmem:[%s2467 + $0x30] sm:$0xff]
    %v2475 = vld [vmem:[%s2467 + $0x38] sm:$0xff]
    %v2476 = vld [vmem:[%s2467 + $0x40] sm:$0xff]
    %v2477 = vld [vmem:[%s2467 + $0x48] sm:$0xff]
    %v2478 = vld [vmem:[%s2467 + $0x50] sm:$0xff]
    %v2479 = vld [vmem:[%s2467 + $0x58] sm:$0xff]
    %v2480 = vld [vmem:[%s2467 + $0x60] sm:$0xff]
    %v2481 = vld [vmem:[%s2467 + $0x68] sm:$0xff]
    %v2482 = vld [vmem:[%s2467 + $0x70] sm:$0xff]
    %v2483 = vld [vmem:[%s2467 + $0x78] sm:$0xff]
    %v2484 = vld [vmem:[%s2467 + $0x80] sm:$0xff]
    %v2485 = vld [vmem:[%s2467 + $0x88] sm:$0xff]
    %v2486 = vld [vmem:[%s2467 + $0x90] sm:$0xff]
    %v2487 = vld [vmem:[%s2467 + $0x98] sm:$0xff]
    %v2488 = vld [vmem:[%s2467 + $0xa0] sm:$0xff]
    %v2489 = vld [vmem:[%s2467 + $0xa8] sm:$0xff]
    %v2490 = vld [vmem:[%s2467 + $0xb0] sm:$0xff]
    %v2491 = vld [vmem:[%s2467 + $0xb8] sm:$0xff]
    %v2492 = vld [vmem:[%s2467 + $0xc0] sm:$0xff]
    %v2493 = vld [vmem:[%s2467 + $0xc8] sm:$0xff]
    %v2494 = vld [vmem:[%s2467 + $0xd0] sm:$0xff]
    %v2495 = vld [vmem:[%s2467 + $0xd8] sm:$0xff]
    %v2496 = vld [vmem:[%s2467 + $0xe0] sm:$0xff]
    %v2497 = vld [vmem:[%s2467 + $0xe8] sm:$0xff]
    %v2498 = vld [vmem:[%s2467 + $0xf0] sm:$0xff]
    %v2499 = vld [vmem:[%s2467 + $0xf8] sm:$0xff]
    %v2500 = vpack.c.bf16 %v2465, %v2465
    %v2501 = vpack.c.bf16 %v2466, %v2466
    %v2534 = vunpack.c.l.b16 %v2468
    %v2535 = vunpack.c.h.b16 %v2468
    %v2536 = vunpack.c.l.b16 %v2469
    %v2537 = vunpack.c.h.b16 %v2469
    %v2538 = vunpack.c.l.b16 %v2470
    %v2539 = vunpack.c.h.b16 %v2470
    %v2540 = vunpack.c.l.b16 %v2471
    %v2541 = vunpack.c.h.b16 %v2471
    %v2542 = vunpack.c.l.b16 %v2472
    %v2543 = vunpack.c.h.b16 %v2472
    %v2544 = vunpack.c.l.b16 %v2473
    %v2545 = vunpack.c.h.b16 %v2473
    %v2546 = vunpack.c.l.b16 %v2474
    %v2547 = vunpack.c.h.b16 %v2474
    %v2548 = vunpack.c.l.b16 %v2475
    %v2549 = vunpack.c.h.b16 %v2475
    %v2550 = vunpack.c.l.b16 %v2476
    %v2551 = vunpack.c.h.b16 %v2476
    %v2552 = vunpack.c.l.b16 %v2477
    %v2553 = vunpack.c.h.b16 %v2477
    %v2554 = vunpack.c.l.b16 %v2478
    %v2555 = vunpack.c.h.b16 %v2478
    %v2556 = vunpack.c.l.b16 %v2479
    %v2557 = vunpack.c.h.b16 %v2479
    %v2558 = vunpack.c.l.b16 %v2480
    %v2559 = vunpack.c.h.b16 %v2480
    %v2560 = vunpack.c.l.b16 %v2481
    %v2561 = vunpack.c.h.b16 %v2481
    %v2562 = vunpack.c.l.b16 %v2482
    %v2563 = vunpack.c.h.b16 %v2482
    %v2564 = vunpack.c.l.b16 %v2483
    %v2565 = vunpack.c.h.b16 %v2483
    %v2566 = vunpack.c.l.b16 %v2484
    %v2567 = vunpack.c.h.b16 %v2484
    %v2568 = vunpack.c.l.b16 %v2485
    %v2569 = vunpack.c.h.b16 %v2485
    %v2570 = vunpack.c.l.b16 %v2486
    %v2571 = vunpack.c.h.b16 %v2486
    %v2572 = vunpack.c.l.b16 %v2487
    %v2573 = vunpack.c.h.b16 %v2487
    %v2574 = vunpack.c.l.b16 %v2488
    %v2575 = vunpack.c.h.b16 %v2488
    %v2576 = vunpack.c.l.b16 %v2489
    %v2577 = vunpack.c.h.b16 %v2489
    %v2578 = vunpack.c.l.b16 %v2490
    %v2579 = vunpack.c.h.b16 %v2490
    %v2580 = vunpack.c.l.b16 %v2491
    %v2581 = vunpack.c.h.b16 %v2491
    %v2582 = vunpack.c.l.b16 %v2492
    %v2583 = vunpack.c.h.b16 %v2492
    %v2584 = vunpack.c.l.b16 %v2493
    %v2585 = vunpack.c.h.b16 %v2493
    %v2586 = vunpack.c.l.b16 %v2494
    %v2587 = vunpack.c.h.b16 %v2494
    %v2588 = vunpack.c.l.b16 %v2495
    %v2589 = vunpack.c.h.b16 %v2495
    %v2590 = vunpack.c.l.b16 %v2496
    %v2591 = vunpack.c.h.b16 %v2496
    %v2592 = vunpack.c.l.b16 %v2497
    %v2593 = vunpack.c.h.b16 %v2497
    %v2594 = vunpack.c.l.b16 %v2498
    %v2595 = vunpack.c.h.b16 %v2498
    %v2596 = vunpack.c.l.b16 %v2499
    %v2597 = vunpack.c.h.b16 %v2499
    %v2598 = vpack.c.b16 %v2536, %v2534
    %v2599 = vpack.c.b16 %v2537, %v2535
    %v2600 = vpack.c.b16 %v2540, %v2538
    %v2601 = vpack.c.b16 %v2541, %v2539
    %v2602 = vpack.c.b16 %v2544, %v2542
    %v2603 = vpack.c.b16 %v2545, %v2543
    %v2604 = vpack.c.b16 %v2548, %v2546
    %v2605 = vpack.c.b16 %v2549, %v2547
    %v2606 = vpack.c.b16 %v2552, %v2550
    %v2607 = vpack.c.b16 %v2553, %v2551
    %v2608 = vpack.c.b16 %v2556, %v2554
    %v2609 = vpack.c.b16 %v2557, %v2555
    %v2610 = vpack.c.b16 %v2560, %v2558
    %v2611 = vpack.c.b16 %v2561, %v2559
    %v2612 = vpack.c.b16 %v2564, %v2562
    %v2613 = vpack.c.b16 %v2565, %v2563
    %v2614 = vpack.c.b16 %v2568, %v2566
    %v2615 = vpack.c.b16 %v2569, %v2567
    %v2616 = vpack.c.b16 %v2572, %v2570
    %v2617 = vpack.c.b16 %v2573, %v2571
    %v2618 = vpack.c.b16 %v2576, %v2574
    %v2619 = vpack.c.b16 %v2577, %v2575
    %v2620 = vpack.c.b16 %v2580, %v2578
    %v2621 = vpack.c.b16 %v2581, %v2579
    %v2622 = vpack.c.b16 %v2584, %v2582
    %v2623 = vpack.c.b16 %v2585, %v2583
    %v2624 = vpack.c.b16 %v2588, %v2586
    %v2625 = vpack.c.b16 %v2589, %v2587
    %v2626 = vpack.c.b16 %v2592, %v2590
    %v2627 = vpack.c.b16 %v2593, %v2591
    %v2628 = vpack.c.b16 %v2596, %v2594
    %v2629 = vpack.c.b16 %v2597, %v2595
    %2662 = vmatpush.bf16.msra.mxu0 %v2612
    %2663 = vmatpush.bf16.msra.mxu0 %v2610
    %2664 = vmatpush.bf16.msra.mxu0 %v2608
    %2665 = vmatpush.bf16.msra.mxu0 %v2606
    %2666 = vmatpush.bf16.msra.mxu0 %v2604
    %2667 = vmatpush.bf16.msra.mxu0 %v2602
    %2668 = vmatpush.bf16.msra.mxu0 %v2600
    %2669 = vmatpush.bf16.msra.mxu0 %v2598
    %2670 = vmatmul.bf16.gmra.mxu0 %v2500
    %v2671 = vpop.f32.mrf.mxu0
    %v2672 = vadd.f32 %v2216, %v2671
    %v2673 = vpop.f32.mrf.mxu0
    %2674 = vdwg.mxu0
    %2675 = vmatpush.bf16.msra.mxu0 %v2628
    %2676 = vmatpush.bf16.msra.mxu0 %v2626
    %2677 = vmatpush.bf16.msra.mxu0 %v2624
    %2678 = vmatpush.bf16.msra.mxu0 %v2622
    %2679 = vmatpush.bf16.msra.mxu0 %v2620
    %2680 = vmatpush.bf16.msra.mxu0 %v2618
    %2681 = vmatpush.bf16.msra.mxu0 %v2616
    %2682 = vmatpush.bf16.msra.mxu0 %v2614
    %2683 = vmatmul.bf16.gmra.mxu0 %v2501
    %v2684 = vpop.f32.mrf.mxu0
    %v2685 = vadd.f32 %v2672, %v2684
    %v2686 = vpop.f32.mrf.mxu0
    %2687 = vdwg.mxu0
    %2688 = vmatpush.bf16.msra.mxu0 %v2613
    %2689 = vmatpush.bf16.msra.mxu0 %v2611
    %2690 = vmatpush.bf16.msra.mxu0 %v2609
    %2691 = vmatpush.bf16.msra.mxu0 %v2607
    %2692 = vmatpush.bf16.msra.mxu0 %v2605
    %2693 = vmatpush.bf16.msra.mxu0 %v2603
    %2694 = vmatpush.bf16.msra.mxu0 %v2601
    %2695 = vmatpush.bf16.msra.mxu0 %v2599
    %2696 = vmatmul.bf16.gmra.mxu0 %v2500
    %v2697 = vpop.f32.mrf.mxu0
    %v2698 = vadd.f32 %v2217, %v2697
    %v2699 = vpop.f32.mrf.mxu0
    %2700 = vdwg.mxu0
    %2701 = vmatpush.bf16.msra.mxu0 %v2629
    %2702 = vmatpush.bf16.msra.mxu0 %v2627
    %2703 = vmatpush.bf16.msra.mxu0 %v2625
    %2704 = vmatpush.bf16.msra.mxu0 %v2623
    %2705 = vmatpush.bf16.msra.mxu0 %v2621
    %2706 = vmatpush.bf16.msra.mxu0 %v2619
    %2707 = vmatpush.bf16.msra.mxu0 %v2617
    %2708 = vmatpush.bf16.msra.mxu0 %v2615
    %2709 = vmatmul.bf16.gmra.mxu0 %v2501
    %v2710 = vpop.f32.mrf.mxu0
    %v2711 = vadd.f32 %v2698, %v2710
    %v2712 = vpop.f32.mrf.mxu0
    %2713 = vdwg.mxu0
    %v2714 = vmax.f32 %v2685, 0.0
    %v2715 = vmax.f32 %v2711, 0.0
    %v2716 = vld [vmem:[#allocation7] sm:$0xff]
    %v2717 = vld [vmem:[#allocation7 + $0x8] sm:$0xff]
    %v2718 = vld [vmem:[#allocation7 + $0x10] sm:$0xff]
    %v2719 = vld [vmem:[#allocation7 + $0x18] sm:$0xff]
    %v2720 = vld [vmem:[#allocation7 + $0x20] sm:$0xff]
    %v2721 = vld [vmem:[#allocation7 + $0x28] sm:$0xff]
    %v2722 = vld [vmem:[#allocation7 + $0x30] sm:$0xff]
    %v2723 = vld [vmem:[#allocation7 + $0x38] sm:$0xff]
    %v2724 = vld [vmem:[#allocation7 + $0x40] sm:$0xff]
    %v2725 = vld [vmem:[#allocation7 + $0x48] sm:$0xff]
    %v2726 = vld [vmem:[#allocation7 + $0x50] sm:$0xff]
    %v2727 = vld [vmem:[#allocation7 + $0x58] sm:$0xff]
    %v2728 = vld [vmem:[#allocation7 + $0x60] sm:$0xff]
    %v2729 = vld [vmem:[#allocation7 + $0x68] sm:$0xff]
    %v2730 = vld [vmem:[#allocation7 + $0x70] sm:$0xff]
    %v2731 = vld [vmem:[#allocation7 + $0x78] sm:$0xff]
    %v2732 = vld [vmem:[#allocation7 + $0x80] sm:$0xff]
    %v2733 = vld [vmem:[#allocation7 + $0x88] sm:$0xff]
    %v2734 = vld [vmem:[#allocation7 + $0x90] sm:$0xff]
    %v2735 = vld [vmem:[#allocation7 + $0x98] sm:$0xff]
    %v2736 = vld [vmem:[#allocation7 + $0xa0] sm:$0xff]
    %v2737 = vld [vmem:[#allocation7 + $0xa8] sm:$0xff]
    %v2738 = vld [vmem:[#allocation7 + $0xb0] sm:$0xff]
    %v2739 = vld [vmem:[#allocation7 + $0xb8] sm:$0xff]
    %v2740 = vld [vmem:[#allocation7 + $0xc0] sm:$0xff]
    %v2741 = vld [vmem:[#allocation7 + $0xc8] sm:$0xff]
    %v2742 = vld [vmem:[#allocation7 + $0xd0] sm:$0xff]
    %v2743 = vld [vmem:[#allocation7 + $0xd8] sm:$0xff]
    %v2744 = vld [vmem:[#allocation7 + $0xe0] sm:$0xff]
    %v2745 = vld [vmem:[#allocation7 + $0xe8] sm:$0xff]
    %v2746 = vld [vmem:[#allocation7 + $0xf0] sm:$0xff]
    %v2747 = vld [vmem:[#allocation7 + $0xf8] sm:$0xff]
    %v2748 = vld [vmem:[#allocation7 + $0x100] sm:$0xff]
    %v2749 = vld [vmem:[#allocation7 + $0x108] sm:$0xff]
    %v2750 = vld [vmem:[#allocation7 + $0x110] sm:$0xff]
    %v2751 = vld [vmem:[#allocation7 + $0x118] sm:$0xff]
    %v2752 = vld [vmem:[#allocation7 + $0x120] sm:$0xff]
    %v2753 = vld [vmem:[#allocation7 + $0x128] sm:$0xff]
    %v2754 = vld [vmem:[#allocation7 + $0x130] sm:$0xff]
    %v2755 = vld [vmem:[#allocation7 + $0x138] sm:$0xff]
    %v2756 = vld [vmem:[#allocation7 + $0x140] sm:$0xff]
    %v2757 = vld [vmem:[#allocation7 + $0x148] sm:$0xff]
    %v2758 = vld [vmem:[#allocation7 + $0x150] sm:$0xff]
    %v2759 = vld [vmem:[#allocation7 + $0x158] sm:$0xff]
    %v2760 = vld [vmem:[#allocation7 + $0x160] sm:$0xff]
    %v2761 = vld [vmem:[#allocation7 + $0x168] sm:$0xff]
    %v2762 = vld [vmem:[#allocation7 + $0x170] sm:$0xff]
    %v2763 = vld [vmem:[#allocation7 + $0x178] sm:$0xff]
    %v2764 = vld [vmem:[#allocation7 + $0x180] sm:$0xff]
    %v2765 = vld [vmem:[#allocation7 + $0x188] sm:$0xff]
    %v2766 = vld [vmem:[#allocation7 + $0x190] sm:$0xff]
    %v2767 = vld [vmem:[#allocation7 + $0x198] sm:$0xff]
    %v2768 = vld [vmem:[#allocation7 + $0x1a0] sm:$0xff]
    %v2769 = vld [vmem:[#allocation7 + $0x1a8] sm:$0xff]
    %v2770 = vld [vmem:[#allocation7 + $0x1b0] sm:$0xff]
    %v2771 = vld [vmem:[#allocation7 + $0x1b8] sm:$0xff]
    %v2772 = vld [vmem:[#allocation7 + $0x1c0] sm:$0xff]
    %v2773 = vld [vmem:[#allocation7 + $0x1c8] sm:$0xff]
    %v2774 = vld [vmem:[#allocation7 + $0x1d0] sm:$0xff]
    %v2775 = vld [vmem:[#allocation7 + $0x1d8] sm:$0xff]
    %v2776 = vld [vmem:[#allocation7 + $0x1e0] sm:$0xff]
    %v2777 = vld [vmem:[#allocation7 + $0x1e8] sm:$0xff]
    %v2778 = vld [vmem:[#allocation7 + $0x1f0] sm:$0xff]
    %v2779 = vld [vmem:[#allocation7 + $0x1f8] sm:$0xff]
    %v2780 = vld [vmem:[#allocation7 + $0x200] sm:$0xff]
    %v2781 = vld [vmem:[#allocation7 + $0x208] sm:$0xff]
    %v2782 = vld [vmem:[#allocation7 + $0x210] sm:$0xff]
    %v2783 = vld [vmem:[#allocation7 + $0x218] sm:$0xff]
    %v2784 = vld [vmem:[#allocation7 + $0x220] sm:$0xff]
    %v2785 = vld [vmem:[#allocation7 + $0x228] sm:$0xff]
    %v2786 = vld [vmem:[#allocation7 + $0x230] sm:$0xff]
    %v2787 = vld [vmem:[#allocation7 + $0x238] sm:$0xff]
    %v2788 = vld [vmem:[#allocation7 + $0x240] sm:$0xff]
    %v2789 = vld [vmem:[#allocation7 + $0x248] sm:$0xff]
    %v2790 = vld [vmem:[#allocation7 + $0x250] sm:$0xff]
    %v2791 = vld [vmem:[#allocation7 + $0x258] sm:$0xff]
    %v2792 = vld [vmem:[#allocation7 + $0x260] sm:$0xff]
    %v2793 = vld [vmem:[#allocation7 + $0x268] sm:$0xff]
    %v2794 = vld [vmem:[#allocation7 + $0x270] sm:$0xff]
    %v2795 = vld [vmem:[#allocation7 + $0x278] sm:$0xff]
    %v2796 = vld [vmem:[#allocation7 + $0x280] sm:$0xff]
    %v2797 = vld [vmem:[#allocation7 + $0x288] sm:$0xff]
    %v2798 = vld [vmem:[#allocation7 + $0x290] sm:$0xff]
    %v2799 = vld [vmem:[#allocation7 + $0x298] sm:$0xff]
    %v2800 = vld [vmem:[#allocation7 + $0x2a0] sm:$0xff]
    %v2801 = vld [vmem:[#allocation7 + $0x2a8] sm:$0xff]
    %v2802 = vld [vmem:[#allocation7 + $0x2b0] sm:$0xff]
    %v2803 = vld [vmem:[#allocation7 + $0x2b8] sm:$0xff]
    %v2804 = vld [vmem:[#allocation7 + $0x2c0] sm:$0xff]
    %v2805 = vld [vmem:[#allocation7 + $0x2c8] sm:$0xff]
    %v2806 = vld [vmem:[#allocation7 + $0x2d0] sm:$0xff]
    %v2807 = vld [vmem:[#allocation7 + $0x2d8] sm:$0xff]
    %v2808 = vld [vmem:[#allocation7 + $0x2e0] sm:$0xff]
    %v2809 = vld [vmem:[#allocation7 + $0x2e8] sm:$0xff]
    %v2810 = vld [vmem:[#allocation7 + $0x2f0] sm:$0xff]
    %v2811 = vld [vmem:[#allocation7 + $0x2f8] sm:$0xff]
    %v2812 = vld [vmem:[#allocation7 + $0x300] sm:$0xff]
    %v2813 = vld [vmem:[#allocation7 + $0x308] sm:$0xff]
    %v2814 = vld [vmem:[#allocation7 + $0x310] sm:$0xff]
    %v2815 = vld [vmem:[#allocation7 + $0x318] sm:$0xff]
    %v2816 = vld [vmem:[#allocation7 + $0x320] sm:$0xff]
    %v2817 = vld [vmem:[#allocation7 + $0x328] sm:$0xff]
    %v2818 = vld [vmem:[#allocation7 + $0x330] sm:$0xff]
    %v2819 = vld [vmem:[#allocation7 + $0x338] sm:$0xff]
    %v2820 = vld [vmem:[#allocation7 + $0x340] sm:$0xff]
    %v2821 = vld [vmem:[#allocation7 + $0x348] sm:$0xff]
    %v2822 = vld [vmem:[#allocation7 + $0x350] sm:$0xff]
    %v2823 = vld [vmem:[#allocation7 + $0x358] sm:$0xff]
    %v2824 = vld [vmem:[#allocation7 + $0x360] sm:$0xff]
    %v2825 = vld [vmem:[#allocation7 + $0x368] sm:$0xff]
    %v2826 = vld [vmem:[#allocation7 + $0x370] sm:$0xff]
    %v2827 = vld [vmem:[#allocation7 + $0x378] sm:$0xff]
    %v2828 = vld [vmem:[#allocation7 + $0x380] sm:$0xff]
    %v2829 = vld [vmem:[#allocation7 + $0x388] sm:$0xff]
    %v2830 = vld [vmem:[#allocation7 + $0x390] sm:$0xff]
    %v2831 = vld [vmem:[#allocation7 + $0x398] sm:$0xff]
    %v2832 = vld [vmem:[#allocation7 + $0x3a0] sm:$0xff]
    %v2833 = vld [vmem:[#allocation7 + $0x3a8] sm:$0xff]
    %v2834 = vld [vmem:[#allocation7 + $0x3b0] sm:$0xff]
    %v2835 = vld [vmem:[#allocation7 + $0x3b8] sm:$0xff]
    %v2836 = vld [vmem:[#allocation7 + $0x3c0] sm:$0xff]
    %v2837 = vld [vmem:[#allocation7 + $0x3c8] sm:$0xff]
    %v2838 = vld [vmem:[#allocation7 + $0x3d0] sm:$0xff]
    %v2839 = vld [vmem:[#allocation7 + $0x3d8] sm:$0xff]
    %v2840 = vld [vmem:[#allocation7 + $0x3e0] sm:$0xff]
    %v2841 = vld [vmem:[#allocation7 + $0x3e8] sm:$0xff]
    %v2842 = vld [vmem:[#allocation7 + $0x3f0] sm:$0xff]
    %v2843 = vld [vmem:[#allocation7 + $0x3f8] sm:$0xff]
    %v2844 = vpack.c.bf16 %v2714, %v2714
    %v2845 = vpack.c.bf16 %v2715, %v2715
    %v2974 = vunpack.c.l.b16 %v2716
    %v2975 = vunpack.c.h.b16 %v2716
    %v2976 = vunpack.c.l.b16 %v2717
    %v2977 = vunpack.c.h.b16 %v2717
    %v2978 = vunpack.c.l.b16 %v2718
    %v2979 = vunpack.c.h.b16 %v2718
    %v2980 = vunpack.c.l.b16 %v2719
    %v2981 = vunpack.c.h.b16 %v2719
    %v2982 = vunpack.c.l.b16 %v2720
    %v2983 = vunpack.c.h.b16 %v2720
    %v2984 = vunpack.c.l.b16 %v2721
    %v2985 = vunpack.c.h.b16 %v2721
    %v2986 = vunpack.c.l.b16 %v2722
    %v2987 = vunpack.c.h.b16 %v2722
    %v2988 = vunpack.c.l.b16 %v2723
    %v2989 = vunpack.c.h.b16 %v2723
    %v2990 = vunpack.c.l.b16 %v2724
    %v2991 = vunpack.c.h.b16 %v2724
    %v2992 = vunpack.c.l.b16 %v2725
    %v2993 = vunpack.c.h.b16 %v2725
    %v2994 = vunpack.c.l.b16 %v2726
    %v2995 = vunpack.c.h.b16 %v2726
    %v2996 = vunpack.c.l.b16 %v2727
    %v2997 = vunpack.c.h.b16 %v2727
    %v2998 = vunpack.c.l.b16 %v2728
    %v2999 = vunpack.c.h.b16 %v2728
    %v3000 = vunpack.c.l.b16 %v2729
    %v3001 = vunpack.c.h.b16 %v2729
    %v3002 = vunpack.c.l.b16 %v2730
    %v3003 = vunpack.c.h.b16 %v2730
    %v3004 = vunpack.c.l.b16 %v2731
    %v3005 = vunpack.c.h.b16 %v2731
    %v3006 = vunpack.c.l.b16 %v2732
    %v3007 = vunpack.c.h.b16 %v2732
    %v3008 = vunpack.c.l.b16 %v2733
    %v3009 = vunpack.c.h.b16 %v2733
    %v3010 = vunpack.c.l.b16 %v2734
    %v3011 = vunpack.c.h.b16 %v2734
    %v3012 = vunpack.c.l.b16 %v2735
    %v3013 = vunpack.c.h.b16 %v2735
    %v3014 = vunpack.c.l.b16 %v2736
    %v3015 = vunpack.c.h.b16 %v2736
    %v3016 = vunpack.c.l.b16 %v2737
    %v3017 = vunpack.c.h.b16 %v2737
    %v3018 = vunpack.c.l.b16 %v2738
    %v3019 = vunpack.c.h.b16 %v2738
    %v3020 = vunpack.c.l.b16 %v2739
    %v3021 = vunpack.c.h.b16 %v2739
    %v3022 = vunpack.c.l.b16 %v2740
    %v3023 = vunpack.c.h.b16 %v2740
    %v3024 = vunpack.c.l.b16 %v2741
    %v3025 = vunpack.c.h.b16 %v2741
    %v3026 = vunpack.c.l.b16 %v2742
    %v3027 = vunpack.c.h.b16 %v2742
    %v3028 = vunpack.c.l.b16 %v2743
    %v3029 = vunpack.c.h.b16 %v2743
    %v3030 = vunpack.c.l.b16 %v2744
    %v3031 = vunpack.c.h.b16 %v2744
    %v3032 = vunpack.c.l.b16 %v2745
    %v3033 = vunpack.c.h.b16 %v2745
    %v3034 = vunpack.c.l.b16 %v2746
    %v3035 = vunpack.c.h.b16 %v2746
    %v3036 = vunpack.c.l.b16 %v2747
    %v3037 = vunpack.c.h.b16 %v2747
    %v3038 = vunpack.c.l.b16 %v2748
    %v3039 = vunpack.c.h.b16 %v2748
    %v3040 = vunpack.c.l.b16 %v2749
    %v3041 = vunpack.c.h.b16 %v2749
    %v3042 = vunpack.c.l.b16 %v2750
    %v3043 = vunpack.c.h.b16 %v2750
    %v3044 = vunpack.c.l.b16 %v2751
    %v3045 = vunpack.c.h.b16 %v2751
    %v3046 = vunpack.c.l.b16 %v2752
    %v3047 = vunpack.c.h.b16 %v2752
    %v3048 = vunpack.c.l.b16 %v2753
    %v3049 = vunpack.c.h.b16 %v2753
    %v3050 = vunpack.c.l.b16 %v2754
    %v3051 = vunpack.c.h.b16 %v2754
    %v3052 = vunpack.c.l.b16 %v2755
    %v3053 = vunpack.c.h.b16 %v2755
    %v3054 = vunpack.c.l.b16 %v2756
    %v3055 = vunpack.c.h.b16 %v2756
    %v3056 = vunpack.c.l.b16 %v2757
    %v3057 = vunpack.c.h.b16 %v2757
    %v3058 = vunpack.c.l.b16 %v2758
    %v3059 = vunpack.c.h.b16 %v2758
    %v3060 = vunpack.c.l.b16 %v2759
    %v3061 = vunpack.c.h.b16 %v2759
    %v3062 = vunpack.c.l.b16 %v2760
    %v3063 = vunpack.c.h.b16 %v2760
    %v3064 = vunpack.c.l.b16 %v2761
    %v3065 = vunpack.c.h.b16 %v2761
    %v3066 = vunpack.c.l.b16 %v2762
    %v3067 = vunpack.c.h.b16 %v2762
    %v3068 = vunpack.c.l.b16 %v2763
    %v3069 = vunpack.c.h.b16 %v2763
    %v3070 = vunpack.c.l.b16 %v2764
    %v3071 = vunpack.c.h.b16 %v2764
    %v3072 = vunpack.c.l.b16 %v2765
    %v3073 = vunpack.c.h.b16 %v2765
    %v3074 = vunpack.c.l.b16 %v2766
    %v3075 = vunpack.c.h.b16 %v2766
    %v3076 = vunpack.c.l.b16 %v2767
    %v3077 = vunpack.c.h.b16 %v2767
    %v3078 = vunpack.c.l.b16 %v2768
    %v3079 = vunpack.c.h.b16 %v2768
    %v3080 = vunpack.c.l.b16 %v2769
    %v3081 = vunpack.c.h.b16 %v2769
    %v3082 = vunpack.c.l.b16 %v2770
    %v3083 = vunpack.c.h.b16 %v2770
    %v3084 = vunpack.c.l.b16 %v2771
    %v3085 = vunpack.c.h.b16 %v2771
    %v3086 = vunpack.c.l.b16 %v2772
    %v3087 = vunpack.c.h.b16 %v2772
    %v3088 = vunpack.c.l.b16 %v2773
    %v3089 = vunpack.c.h.b16 %v2773
    %v3090 = vunpack.c.l.b16 %v2774
    %v3091 = vunpack.c.h.b16 %v2774
    %v3092 = vunpack.c.l.b16 %v2775
    %v3093 = vunpack.c.h.b16 %v2775
    %v3094 = vunpack.c.l.b16 %v2776
    %v3095 = vunpack.c.h.b16 %v2776
    %v3096 = vunpack.c.l.b16 %v2777
    %v3097 = vunpack.c.h.b16 %v2777
    %v3098 = vunpack.c.l.b16 %v2778
    %v3099 = vunpack.c.h.b16 %v2778
    %v3100 = vunpack.c.l.b16 %v2779
    %v3101 = vunpack.c.h.b16 %v2779
    %v3102 = vunpack.c.l.b16 %v2780
    %v3103 = vunpack.c.h.b16 %v2780
    %v3104 = vunpack.c.l.b16 %v2781
    %v3105 = vunpack.c.h.b16 %v2781
    %v3106 = vunpack.c.l.b16 %v2782
    %v3107 = vunpack.c.h.b16 %v2782
    %v3108 = vunpack.c.l.b16 %v2783
    %v3109 = vunpack.c.h.b16 %v2783
    %v3110 = vunpack.c.l.b16 %v2784
    %v3111 = vunpack.c.h.b16 %v2784
    %v3112 = vunpack.c.l.b16 %v2785
    %v3113 = vunpack.c.h.b16 %v2785
    %v3114 = vunpack.c.l.b16 %v2786
    %v3115 = vunpack.c.h.b16 %v2786
    %v3116 = vunpack.c.l.b16 %v2787
    %v3117 = vunpack.c.h.b16 %v2787
    %v3118 = vunpack.c.l.b16 %v2788
    %v3119 = vunpack.c.h.b16 %v2788
    %v3120 = vunpack.c.l.b16 %v2789
    %v3121 = vunpack.c.h.b16 %v2789
    %v3122 = vunpack.c.l.b16 %v2790
    %v3123 = vunpack.c.h.b16 %v2790
    %v3124 = vunpack.c.l.b16 %v2791
    %v3125 = vunpack.c.h.b16 %v2791
    %v3126 = vunpack.c.l.b16 %v2792
    %v3127 = vunpack.c.h.b16 %v2792
    %v3128 = vunpack.c.l.b16 %v2793
    %v3129 = vunpack.c.h.b16 %v2793
    %v3130 = vunpack.c.l.b16 %v2794
    %v3131 = vunpack.c.h.b16 %v2794
    %v3132 = vunpack.c.l.b16 %v2795
    %v3133 = vunpack.c.h.b16 %v2795
    %v3134 = vunpack.c.l.b16 %v2796
    %v3135 = vunpack.c.h.b16 %v2796
    %v3136 = vunpack.c.l.b16 %v2797
    %v3137 = vunpack.c.h.b16 %v2797
    %v3138 = vunpack.c.l.b16 %v2798
    %v3139 = vunpack.c.h.b16 %v2798
    %v3140 = vunpack.c.l.b16 %v2799
    %v3141 = vunpack.c.h.b16 %v2799
    %v3142 = vunpack.c.l.b16 %v2800
    %v3143 = vunpack.c.h.b16 %v2800
    %v3144 = vunpack.c.l.b16 %v2801
    %v3145 = vunpack.c.h.b16 %v2801
    %v3146 = vunpack.c.l.b16 %v2802
    %v3147 = vunpack.c.h.b16 %v2802
    %v3148 = vunpack.c.l.b16 %v2803
    %v3149 = vunpack.c.h.b16 %v2803
    %v3150 = vunpack.c.l.b16 %v2804
    %v3151 = vunpack.c.h.b16 %v2804
    %v3152 = vunpack.c.l.b16 %v2805
    %v3153 = vunpack.c.h.b16 %v2805
    %v3154 = vunpack.c.l.b16 %v2806
    %v3155 = vunpack.c.h.b16 %v2806
    %v3156 = vunpack.c.l.b16 %v2807
    %v3157 = vunpack.c.h.b16 %v2807
    %v3158 = vunpack.c.l.b16 %v2808
    %v3159 = vunpack.c.h.b16 %v2808
    %v3160 = vunpack.c.l.b16 %v2809
    %v3161 = vunpack.c.h.b16 %v2809
    %v3162 = vunpack.c.l.b16 %v2810
    %v3163 = vunpack.c.h.b16 %v2810
    %v3164 = vunpack.c.l.b16 %v2811
    %v3165 = vunpack.c.h.b16 %v2811
    %v3166 = vunpack.c.l.b16 %v2812
    %v3167 = vunpack.c.h.b16 %v2812
    %v3168 = vunpack.c.l.b16 %v2813
    %v3169 = vunpack.c.h.b16 %v2813
    %v3170 = vunpack.c.l.b16 %v2814
    %v3171 = vunpack.c.h.b16 %v2814
    %v3172 = vunpack.c.l.b16 %v2815
    %v3173 = vunpack.c.h.b16 %v2815
    %v3174 = vunpack.c.l.b16 %v2816
    %v3175 = vunpack.c.h.b16 %v2816
    %v3176 = vunpack.c.l.b16 %v2817
    %v3177 = vunpack.c.h.b16 %v2817
    %v3178 = vunpack.c.l.b16 %v2818
    %v3179 = vunpack.c.h.b16 %v2818
    %v3180 = vunpack.c.l.b16 %v2819
    %v3181 = vunpack.c.h.b16 %v2819
    %v3182 = vunpack.c.l.b16 %v2820
    %v3183 = vunpack.c.h.b16 %v2820
    %v3184 = vunpack.c.l.b16 %v2821
    %v3185 = vunpack.c.h.b16 %v2821
    %v3186 = vunpack.c.l.b16 %v2822
    %v3187 = vunpack.c.h.b16 %v2822
    %v3188 = vunpack.c.l.b16 %v2823
    %v3189 = vunpack.c.h.b16 %v2823
    %v3190 = vunpack.c.l.b16 %v2824
    %v3191 = vunpack.c.h.b16 %v2824
    %v3192 = vunpack.c.l.b16 %v2825
    %v3193 = vunpack.c.h.b16 %v2825
    %v3194 = vunpack.c.l.b16 %v2826
    %v3195 = vunpack.c.h.b16 %v2826
    %v3196 = vunpack.c.l.b16 %v2827
    %v3197 = vunpack.c.h.b16 %v2827
    %v3198 = vunpack.c.l.b16 %v2828
    %v3199 = vunpack.c.h.b16 %v2828
    %v3200 = vunpack.c.l.b16 %v2829
    %v3201 = vunpack.c.h.b16 %v2829
    %v3202 = vunpack.c.l.b16 %v2830
    %v3203 = vunpack.c.h.b16 %v2830
    %v3204 = vunpack.c.l.b16 %v2831
    %v3205 = vunpack.c.h.b16 %v2831
    %v3206 = vunpack.c.l.b16 %v2832
    %v3207 = vunpack.c.h.b16 %v2832
    %v3208 = vunpack.c.l.b16 %v2833
    %v3209 = vunpack.c.h.b16 %v2833
    %v3210 = vunpack.c.l.b16 %v2834
    %v3211 = vunpack.c.h.b16 %v2834
    %v3212 = vunpack.c.l.b16 %v2835
    %v3213 = vunpack.c.h.b16 %v2835
    %v3214 = vunpack.c.l.b16 %v2836
    %v3215 = vunpack.c.h.b16 %v2836
    %v3216 = vunpack.c.l.b16 %v2837
    %v3217 = vunpack.c.h.b16 %v2837
    %v3218 = vunpack.c.l.b16 %v2838
    %v3219 = vunpack.c.h.b16 %v2838
    %v3220 = vunpack.c.l.b16 %v2839
    %v3221 = vunpack.c.h.b16 %v2839
    %v3222 = vunpack.c.l.b16 %v2840
    %v3223 = vunpack.c.h.b16 %v2840
    %v3224 = vunpack.c.l.b16 %v2841
    %v3225 = vunpack.c.h.b16 %v2841
    %v3226 = vunpack.c.l.b16 %v2842
    %v3227 = vunpack.c.h.b16 %v2842
    %v3228 = vunpack.c.l.b16 %v2843
    %v3229 = vunpack.c.h.b16 %v2843
    %v3230 = vpack.c.b16 %v2982, %v2974
    %v3231 = vpack.c.b16 %v2983, %v2975
    %v3232 = vpack.c.b16 %v2984, %v2976
    %v3233 = vpack.c.b16 %v2985, %v2977
    %v3234 = vpack.c.b16 %v2986, %v2978
    %v3235 = vpack.c.b16 %v2987, %v2979
    %v3236 = vpack.c.b16 %v2988, %v2980
    %v3237 = vpack.c.b16 %v2989, %v2981
    %v3238 = vpack.c.b16 %v2998, %v2990
    %v3239 = vpack.c.b16 %v2999, %v2991
    %v3240 = vpack.c.b16 %v3000, %v2992
    %v3241 = vpack.c.b16 %v3001, %v2993
    %v3242 = vpack.c.b16 %v3002, %v2994
    %v3243 = vpack.c.b16 %v3003, %v2995
    %v3244 = vpack.c.b16 %v3004, %v2996
    %v3245 = vpack.c.b16 %v3005, %v2997
    %v3246 = vpack.c.b16 %v3014, %v3006
    %v3247 = vpack.c.b16 %v3015, %v3007
    %v3248 = vpack.c.b16 %v3016, %v3008
    %v3249 = vpack.c.b16 %v3017, %v3009
    %v3250 = vpack.c.b16 %v3018, %v3010
    %v3251 = vpack.c.b16 %v3019, %v3011
    %v3252 = vpack.c.b16 %v3020, %v3012
    %v3253 = vpack.c.b16 %v3021, %v3013
    %v3254 = vpack.c.b16 %v3030, %v3022
    %v3255 = vpack.c.b16 %v3031, %v3023
    %v3256 = vpack.c.b16 %v3032, %v3024
    %v3257 = vpack.c.b16 %v3033, %v3025
    %v3258 = vpack.c.b16 %v3034, %v3026
    %v3259 = vpack.c.b16 %v3035, %v3027
    %v3260 = vpack.c.b16 %v3036, %v3028
    %v3261 = vpack.c.b16 %v3037, %v3029
    %v3262 = vpack.c.b16 %v3046, %v3038
    %v3263 = vpack.c.b16 %v3047, %v3039
    %v3264 = vpack.c.b16 %v3048, %v3040
    %v3265 = vpack.c.b16 %v3049, %v3041
    %v3266 = vpack.c.b16 %v3050, %v3042
    %v3267 = vpack.c.b16 %v3051, %v3043
    %v3268 = vpack.c.b16 %v3052, %v3044
    %v3269 = vpack.c.b16 %v3053, %v3045
    %v3270 = vpack.c.b16 %v3062, %v3054
    %v3271 = vpack.c.b16 %v3063, %v3055
    %v3272 = vpack.c.b16 %v3064, %v3056
    %v3273 = vpack.c.b16 %v3065, %v3057
    %v3274 = vpack.c.b16 %v3066, %v3058
    %v3275 = vpack.c.b16 %v3067, %v3059
    %v3276 = vpack.c.b16 %v3068, %v3060
    %v3277 = vpack.c.b16 %v3069, %v3061
    %v3278 = vpack.c.b16 %v3078, %v3070
    %v3279 = vpack.c.b16 %v3079, %v3071
    %v3280 = vpack.c.b16 %v3080, %v3072
    %v3281 = vpack.c.b16 %v3081, %v3073
    %v3282 = vpack.c.b16 %v3082, %v3074
    %v3283 = vpack.c.b16 %v3083, %v3075
    %v3284 = vpack.c.b16 %v3084, %v3076
    %v3285 = vpack.c.b16 %v3085, %v3077
    %v3286 = vpack.c.b16 %v3094, %v3086
    %v3287 = vpack.c.b16 %v3095, %v3087
    %v3288 = vpack.c.b16 %v3096, %v3088
    %v3289 = vpack.c.b16 %v3097, %v3089
    %v3290 = vpack.c.b16 %v3098, %v3090
    %v3291 = vpack.c.b16 %v3099, %v3091
    %v3292 = vpack.c.b16 %v3100, %v3092
    %v3293 = vpack.c.b16 %v3101, %v3093
    %v3294 = vpack.c.b16 %v3110, %v3102
    %v3295 = vpack.c.b16 %v3111, %v3103
    %v3296 = vpack.c.b16 %v3112, %v3104
    %v3297 = vpack.c.b16 %v3113, %v3105
    %v3298 = vpack.c.b16 %v3114, %v3106
    %v3299 = vpack.c.b16 %v3115, %v3107
    %v3300 = vpack.c.b16 %v3116, %v3108
    %v3301 = vpack.c.b16 %v3117, %v3109
    %v3302 = vpack.c.b16 %v3126, %v3118
    %v3303 = vpack.c.b16 %v3127, %v3119
    %v3304 = vpack.c.b16 %v3128, %v3120
    %v3305 = vpack.c.b16 %v3129, %v3121
    %v3306 = vpack.c.b16 %v3130, %v3122
    %v3307 = vpack.c.b16 %v3131, %v3123
    %v3308 = vpack.c.b16 %v3132, %v3124
    %v3309 = vpack.c.b16 %v3133, %v3125
    %v3310 = vpack.c.b16 %v3142, %v3134
    %v3311 = vpack.c.b16 %v3143, %v3135
    %v3312 = vpack.c.b16 %v3144, %v3136
    %v3313 = vpack.c.b16 %v3145, %v3137
    %v3314 = vpack.c.b16 %v3146, %v3138
    %v3315 = vpack.c.b16 %v3147, %v3139
    %v3316 = vpack.c.b16 %v3148, %v3140
    %v3317 = vpack.c.b16 %v3149, %v3141
    %v3318 = vpack.c.b16 %v3158, %v3150
    %v3319 = vpack.c.b16 %v3159, %v3151
    %v3320 = vpack.c.b16 %v3160, %v3152
    %v3321 = vpack.c.b16 %v3161, %v3153
    %v3322 = vpack.c.b16 %v3162, %v3154
    %v3323 = vpack.c.b16 %v3163, %v3155
    %v3324 = vpack.c.b16 %v3164, %v3156
    %v3325 = vpack.c.b16 %v3165, %v3157
    %v3326 = vpack.c.b16 %v3174, %v3166
    %v3327 = vpack.c.b16 %v3175, %v3167
    %v3328 = vpack.c.b16 %v3176, %v3168
    %v3329 = vpack.c.b16 %v3177, %v3169
    %v3330 = vpack.c.b16 %v3178, %v3170
    %v3331 = vpack.c.b16 %v3179, %v3171
    %v3332 = vpack.c.b16 %v3180, %v3172
    %v3333 = vpack.c.b16 %v3181, %v3173
    %v3334 = vpack.c.b16 %v3190, %v3182
    %v3335 = vpack.c.b16 %v3191, %v3183
    %v3336 = vpack.c.b16 %v3192, %v3184
    %v3337 = vpack.c.b16 %v3193, %v3185
    %v3338 = vpack.c.b16 %v3194, %v3186
    %v3339 = vpack.c.b16 %v3195, %v3187
    %v3340 = vpack.c.b16 %v3196, %v3188
    %v3341 = vpack.c.b16 %v3197, %v3189
    %v3342 = vpack.c.b16 %v3206, %v3198
    %v3343 = vpack.c.b16 %v3207, %v3199
    %v3344 = vpack.c.b16 %v3208, %v3200
    %v3345 = vpack.c.b16 %v3209, %v3201
    %v3346 = vpack.c.b16 %v3210, %v3202
    %v3347 = vpack.c.b16 %v3211, %v3203
    %v3348 = vpack.c.b16 %v3212, %v3204
    %v3349 = vpack.c.b16 %v3213, %v3205
    %v3350 = vpack.c.b16 %v3222, %v3214
    %v3351 = vpack.c.b16 %v3223, %v3215
    %v3352 = vpack.c.b16 %v3224, %v3216
    %v3353 = vpack.c.b16 %v3225, %v3217
    %v3354 = vpack.c.b16 %v3226, %v3218
    %v3355 = vpack.c.b16 %v3227, %v3219
    %v3356 = vpack.c.b16 %v3228, %v3220
    %v3357 = vpack.c.b16 %v3229, %v3221
    %3486 = vmatpush.bf16.msra.mxu0 %v3286
    %3487 = vmatpush.bf16.msra.mxu0 %v3278
    %3488 = vmatpush.bf16.msra.mxu0 %v3270
    %3489 = vmatpush.bf16.msra.mxu0 %v3262
    %3490 = vmatpush.bf16.msra.mxu0 %v3254
    %3491 = vmatpush.bf16.msra.mxu0 %v3246
    %3492 = vmatpush.bf16.msra.mxu0 %v3238
    %3493 = vmatpush.bf16.msra.mxu0 %v3230
    %3494 = vmatmul.bf16.gmra.mxu0 %v2844
    %v3495 = vpop.f32.mrf.mxu0
    %v3496 = vadd.f32 0.0, %v3495
    %v3497 = vpop.f32.mrf.mxu0
    %3498 = vdwg.mxu0
    %3499 = vmatpush.bf16.msra.mxu0 %v3350
    %3500 = vmatpush.bf16.msra.mxu0 %v3342
    %3501 = vmatpush.bf16.msra.mxu0 %v3334
    %3502 = vmatpush.bf16.msra.mxu0 %v3326
    %3503 = vmatpush.bf16.msra.mxu0 %v3318
    %3504 = vmatpush.bf16.msra.mxu0 %v3310
    %3505 = vmatpush.bf16.msra.mxu0 %v3302
    %3506 = vmatpush.bf16.msra.mxu0 %v3294
    %3507 = vmatmul.bf16.gmra.mxu0 %v2845
    %v3508 = vpop.f32.mrf.mxu0
    %v3509 = vadd.f32 %v3496, %v3508
    %v3510 = vpop.f32.mrf.mxu0
    %3511 = vdwg.mxu0
    %3512 = vmatpush.bf16.msra.mxu0 %v3287
    %3513 = vmatpush.bf16.msra.mxu0 %v3279
    %3514 = vmatpush.bf16.msra.mxu0 %v3271
    %3515 = vmatpush.bf16.msra.mxu0 %v3263
    %3516 = vmatpush.bf16.msra.mxu0 %v3255
    %3517 = vmatpush.bf16.msra.mxu0 %v3247
    %3518 = vmatpush.bf16.msra.mxu0 %v3239
    %3519 = vmatpush.bf16.msra.mxu0 %v3231
    %3520 = vmatmul.bf16.gmra.mxu0 %v2844
    %v3521 = vpop.f32.mrf.mxu0
    %v3522 = vadd.f32 0.0, %v3521
    %v3523 = vpop.f32.mrf.mxu0
    %3524 = vdwg.mxu0
    %3525 = vmatpush.bf16.msra.mxu0 %v3351
    %3526 = vmatpush.bf16.msra.mxu0 %v3343
    %3527 = vmatpush.bf16.msra.mxu0 %v3335
    %3528 = vmatpush.bf16.msra.mxu0 %v3327
    %3529 = vmatpush.bf16.msra.mxu0 %v3319
    %3530 = vmatpush.bf16.msra.mxu0 %v3311
    %3531 = vmatpush.bf16.msra.mxu0 %v3303
    %3532 = vmatpush.bf16.msra.mxu0 %v3295
    %3533 = vmatmul.bf16.gmra.mxu0 %v2845
    %v3534 = vpop.f32.mrf.mxu0
    %v3535 = vadd.f32 %v3522, %v3534
    %v3536 = vpop.f32.mrf.mxu0
    %3537 = vdwg.mxu0
    %3538 = vmatpush.bf16.msra.mxu0 %v3288
    %3539 = vmatpush.bf16.msra.mxu0 %v3280
    %3540 = vmatpush.bf16.msra.mxu0 %v3272
    %3541 = vmatpush.bf16.msra.mxu0 %v3264
    %3542 = vmatpush.bf16.msra.mxu0 %v3256
    %3543 = vmatpush.bf16.msra.mxu0 %v3248
    %3544 = vmatpush.bf16.msra.mxu0 %v3240
    %3545 = vmatpush.bf16.msra.mxu0 %v3232
    %3546 = vmatmul.bf16.gmra.mxu0 %v2844
    %v3547 = vpop.f32.mrf.mxu0
    %v3548 = vadd.f32 0.0, %v3547
    %v3549 = vpop.f32.mrf.mxu0
    %3550 = vdwg.mxu0
    %3551 = vmatpush.bf16.msra.mxu0 %v3352
    %3552 = vmatpush.bf16.msra.mxu0 %v3344
    %3553 = vmatpush.bf16.msra.mxu0 %v3336
    %3554 = vmatpush.bf16.msra.mxu0 %v3328
    %3555 = vmatpush.bf16.msra.mxu0 %v3320
    %3556 = vmatpush.bf16.msra.mxu0 %v3312
    %3557 = vmatpush.bf16.msra.mxu0 %v3304
    %3558 = vmatpush.bf16.msra.mxu0 %v3296
    %3559 = vmatmul.bf16.gmra.mxu0 %v2845
    %v3560 = vpop.f32.mrf.mxu0
    %v3561 = vadd.f32 %v3548, %v3560
    %v3562 = vpop.f32.mrf.mxu0
    %3563 = vdwg.mxu0
    %3564 = vmatpush.bf16.msra.mxu0 %v3289
    %3565 = vmatpush.bf16.msra.mxu0 %v3281
    %3566 = vmatpush.bf16.msra.mxu0 %v3273
    %3567 = vmatpush.bf16.msra.mxu0 %v3265
    %3568 = vmatpush.bf16.msra.mxu0 %v3257
    %3569 = vmatpush.bf16.msra.mxu0 %v3249
    %3570 = vmatpush.bf16.msra.mxu0 %v3241
    %3571 = vmatpush.bf16.msra.mxu0 %v3233
    %3572 = vmatmul.bf16.gmra.mxu0 %v2844
    %v3573 = vpop.f32.mrf.mxu0
    %v3574 = vadd.f32 0.0, %v3573
    %v3575 = vpop.f32.mrf.mxu0
    %3576 = vdwg.mxu0
    %3577 = vmatpush.bf16.msra.mxu0 %v3353
    %3578 = vmatpush.bf16.msra.mxu0 %v3345
    %3579 = vmatpush.bf16.msra.mxu0 %v3337
    %3580 = vmatpush.bf16.msra.mxu0 %v3329
    %3581 = vmatpush.bf16.msra.mxu0 %v3321
    %3582 = vmatpush.bf16.msra.mxu0 %v3313
    %3583 = vmatpush.bf16.msra.mxu0 %v3305
    %3584 = vmatpush.bf16.msra.mxu0 %v3297
    %3585 = vmatmul.bf16.gmra.mxu0 %v2845
    %v3586 = vpop.f32.mrf.mxu0
    %v3587 = vadd.f32 %v3574, %v3586
    %v3588 = vpop.f32.mrf.mxu0
    %3589 = vdwg.mxu0
    %3590 = vmatpush.bf16.msra.mxu0 %v3290
    %3591 = vmatpush.bf16.msra.mxu0 %v3282
    %3592 = vmatpush.bf16.msra.mxu0 %v3274
    %3593 = vmatpush.bf16.msra.mxu0 %v3266
    %3594 = vmatpush.bf16.msra.mxu0 %v3258
    %3595 = vmatpush.bf16.msra.mxu0 %v3250
    %3596 = vmatpush.bf16.msra.mxu0 %v3242
    %3597 = vmatpush.bf16.msra.mxu0 %v3234
    %3598 = vmatmul.bf16.gmra.mxu0 %v2844
    %v3599 = vpop.f32.mrf.mxu0
    %v3600 = vadd.f32 0.0, %v3599
    %v3601 = vpop.f32.mrf.mxu0
    %3602 = vdwg.mxu0
    %3603 = vmatpush.bf16.msra.mxu0 %v3354
    %3604 = vmatpush.bf16.msra.mxu0 %v3346
    %3605 = vmatpush.bf16.msra.mxu0 %v3338
    %3606 = vmatpush.bf16.msra.mxu0 %v3330
    %3607 = vmatpush.bf16.msra.mxu0 %v3322
    %3608 = vmatpush.bf16.msra.mxu0 %v3314
    %3609 = vmatpush.bf16.msra.mxu0 %v3306
    %3610 = vmatpush.bf16.msra.mxu0 %v3298
    %3611 = vmatmul.bf16.gmra.mxu0 %v2845
    %v3612 = vpop.f32.mrf.mxu0
    %v3613 = vadd.f32 %v3600, %v3612
    %v3614 = vpop.f32.mrf.mxu0
    %3615 = vdwg.mxu0
    %3616 = vmatpush.bf16.msra.mxu0 %v3291
    %3617 = vmatpush.bf16.msra.mxu0 %v3283
    %3618 = vmatpush.bf16.msra.mxu0 %v3275
    %3619 = vmatpush.bf16.msra.mxu0 %v3267
    %3620 = vmatpush.bf16.msra.mxu0 %v3259
    %3621 = vmatpush.bf16.msra.mxu0 %v3251
    %3622 = vmatpush.bf16.msra.mxu0 %v3243
    %3623 = vmatpush.bf16.msra.mxu0 %v3235
    %3624 = vmatmul.bf16.gmra.mxu0 %v2844
    %v3625 = vpop.f32.mrf.mxu0
    %v3626 = vadd.f32 0.0, %v3625
    %v3627 = vpop.f32.mrf.mxu0
    %3628 = vdwg.mxu0
    %3629 = vmatpush.bf16.msra.mxu0 %v3355
    %3630 = vmatpush.bf16.msra.mxu0 %v3347
    %3631 = vmatpush.bf16.msra.mxu0 %v3339
    %3632 = vmatpush.bf16.msra.mxu0 %v3331
    %3633 = vmatpush.bf16.msra.mxu0 %v3323
    %3634 = vmatpush.bf16.msra.mxu0 %v3315
    %3635 = vmatpush.bf16.msra.mxu0 %v3307
    %3636 = vmatpush.bf16.msra.mxu0 %v3299
    %3637 = vmatmul.bf16.gmra.mxu0 %v2845
    %v3638 = vpop.f32.mrf.mxu0
    %v3639 = vadd.f32 %v3626, %v3638
    %v3640 = vpop.f32.mrf.mxu0
    %3641 = vdwg.mxu0
    %3642 = vmatpush.bf16.msra.mxu0 %v3292
    %3643 = vmatpush.bf16.msra.mxu0 %v3284
    %3644 = vmatpush.bf16.msra.mxu0 %v3276
    %3645 = vmatpush.bf16.msra.mxu0 %v3268
    %3646 = vmatpush.bf16.msra.mxu0 %v3260
    %3647 = vmatpush.bf16.msra.mxu0 %v3252
    %3648 = vmatpush.bf16.msra.mxu0 %v3244
    %3649 = vmatpush.bf16.msra.mxu0 %v3236
    %3650 = vmatmul.bf16.gmra.mxu0 %v2844
    %v3651 = vpop.f32.mrf.mxu0
    %v3652 = vadd.f32 0.0, %v3651
    %v3653 = vpop.f32.mrf.mxu0
    %3654 = vdwg.mxu0
    %3655 = vmatpush.bf16.msra.mxu0 %v3356
    %3656 = vmatpush.bf16.msra.mxu0 %v3348
    %3657 = vmatpush.bf16.msra.mxu0 %v3340
    %3658 = vmatpush.bf16.msra.mxu0 %v3332
    %3659 = vmatpush.bf16.msra.mxu0 %v3324
    %3660 = vmatpush.bf16.msra.mxu0 %v3316
    %3661 = vmatpush.bf16.msra.mxu0 %v3308
    %3662 = vmatpush.bf16.msra.mxu0 %v3300
    %3663 = vmatmul.bf16.gmra.mxu0 %v2845
    %v3664 = vpop.f32.mrf.mxu0
    %v3665 = vadd.f32 %v3652, %v3664
    %v3666 = vpop.f32.mrf.mxu0
    %3667 = vdwg.mxu0
    %3668 = vmatpush.bf16.msra.mxu0 %v3293
    %3669 = vmatpush.bf16.msra.mxu0 %v3285
    %3670 = vmatpush.bf16.msra.mxu0 %v3277
    %3671 = vmatpush.bf16.msra.mxu0 %v3269
    %3672 = vmatpush.bf16.msra.mxu0 %v3261
    %3673 = vmatpush.bf16.msra.mxu0 %v3253
    %3674 = vmatpush.bf16.msra.mxu0 %v3245
    %3675 = vmatpush.bf16.msra.mxu0 %v3237
    %3676 = vmatmul.bf16.gmra.mxu0 %v2844
    %v3677 = vpop.f32.mrf.mxu0
    %v3678 = vadd.f32 0.0, %v3677
    %v3679 = vpop.f32.mrf.mxu0
    %3680 = vdwg.mxu0
    %3681 = vmatpush.bf16.msra.mxu0 %v3357
    %3682 = vmatpush.bf16.msra.mxu0 %v3349
    %3683 = vmatpush.bf16.msra.mxu0 %v3341
    %3684 = vmatpush.bf16.msra.mxu0 %v3333
    %3685 = vmatpush.bf16.msra.mxu0 %v3325
    %3686 = vmatpush.bf16.msra.mxu0 %v3317
    %3687 = vmatpush.bf16.msra.mxu0 %v3309
    %3688 = vmatpush.bf16.msra.mxu0 %v3301
    %3689 = vmatmul.bf16.gmra.mxu0 %v2845
    %v3690 = vpop.f32.mrf.mxu0
    %v3691 = vadd.f32 %v3678, %v3690
    %v3692 = vpop.f32.mrf.mxu0
    %3693 = vdwg.mxu0
    %v3694 = vmax.f32 %v3509, 0.0
    %v3695 = vmax.f32 %v3535, 0.0
    %v3696 = vmax.f32 %v3561, 0.0
    %v3697 = vmax.f32 %v3587, 0.0
    %v3698 = vld [vmem:[#allocation8] sm:$0xff]
    %v3699 = vld [vmem:[#allocation8 + $0x8] sm:$0xff]
    %v3700 = vld [vmem:[#allocation8 + $0x10] sm:$0xff]
    %v3701 = vld [vmem:[#allocation8 + $0x18] sm:$0xff]
    %v3702 = vld [vmem:[#allocation8 + $0x20] sm:$0xff]
    %v3703 = vld [vmem:[#allocation8 + $0x28] sm:$0xff]
    %v3704 = vld [vmem:[#allocation8 + $0x30] sm:$0xff]
    %v3705 = vld [vmem:[#allocation8 + $0x38] sm:$0xff]
    %v3706 = vld [vmem:[#allocation8 + $0x40] sm:$0xff]
    %v3707 = vld [vmem:[#allocation8 + $0x48] sm:$0xff]
    %v3708 = vld [vmem:[#allocation8 + $0x50] sm:$0xff]
    %v3709 = vld [vmem:[#allocation8 + $0x58] sm:$0xff]
    %v3710 = vld [vmem:[#allocation8 + $0x60] sm:$0xff]
    %v3711 = vld [vmem:[#allocation8 + $0x68] sm:$0xff]
    %v3712 = vld [vmem:[#allocation8 + $0x70] sm:$0xff]
    %v3713 = vld [vmem:[#allocation8 + $0x78] sm:$0xff]
    %v3714 = vld [vmem:[#allocation8 + $0x80] sm:$0xff]
    %v3715 = vld [vmem:[#allocation8 + $0x88] sm:$0xff]
    %v3716 = vld [vmem:[#allocation8 + $0x90] sm:$0xff]
    %v3717 = vld [vmem:[#allocation8 + $0x98] sm:$0xff]
    %v3718 = vld [vmem:[#allocation8 + $0xa0] sm:$0xff]
    %v3719 = vld [vmem:[#allocation8 + $0xa8] sm:$0xff]
    %v3720 = vld [vmem:[#allocation8 + $0xb0] sm:$0xff]
    %v3721 = vld [vmem:[#allocation8 + $0xb8] sm:$0xff]
    %v3722 = vld [vmem:[#allocation8 + $0xc0] sm:$0xff]
    %v3723 = vld [vmem:[#allocation8 + $0xc8] sm:$0xff]
    %v3724 = vld [vmem:[#allocation8 + $0xd0] sm:$0xff]
    %v3725 = vld [vmem:[#allocation8 + $0xd8] sm:$0xff]
    %v3726 = vld [vmem:[#allocation8 + $0xe0] sm:$0xff]
    %v3727 = vld [vmem:[#allocation8 + $0xe8] sm:$0xff]
    %v3728 = vld [vmem:[#allocation8 + $0xf0] sm:$0xff]
    %v3729 = vld [vmem:[#allocation8 + $0xf8] sm:$0xff]
    %v3730 = vld [vmem:[#allocation8 + $0x100] sm:$0xff]
    %v3731 = vld [vmem:[#allocation8 + $0x108] sm:$0xff]
    %v3732 = vld [vmem:[#allocation8 + $0x110] sm:$0xff]
    %v3733 = vld [vmem:[#allocation8 + $0x118] sm:$0xff]
    %v3734 = vld [vmem:[#allocation8 + $0x120] sm:$0xff]
    %v3735 = vld [vmem:[#allocation8 + $0x128] sm:$0xff]
    %v3736 = vld [vmem:[#allocation8 + $0x130] sm:$0xff]
    %v3737 = vld [vmem:[#allocation8 + $0x138] sm:$0xff]
    %v3738 = vld [vmem:[#allocation8 + $0x140] sm:$0xff]
    %v3739 = vld [vmem:[#allocation8 + $0x148] sm:$0xff]
    %v3740 = vld [vmem:[#allocation8 + $0x150] sm:$0xff]
    %v3741 = vld [vmem:[#allocation8 + $0x158] sm:$0xff]
    %v3742 = vld [vmem:[#allocation8 + $0x160] sm:$0xff]
    %v3743 = vld [vmem:[#allocation8 + $0x168] sm:$0xff]
    %v3744 = vld [vmem:[#allocation8 + $0x170] sm:$0xff]
    %v3745 = vld [vmem:[#allocation8 + $0x178] sm:$0xff]
    %v3746 = vld [vmem:[#allocation8 + $0x180] sm:$0xff]
    %v3747 = vld [vmem:[#allocation8 + $0x188] sm:$0xff]
    %v3748 = vld [vmem:[#allocation8 + $0x190] sm:$0xff]
    %v3749 = vld [vmem:[#allocation8 + $0x198] sm:$0xff]
    %v3750 = vld [vmem:[#allocation8 + $0x1a0] sm:$0xff]
    %v3751 = vld [vmem:[#allocation8 + $0x1a8] sm:$0xff]
    %v3752 = vld [vmem:[#allocation8 + $0x1b0] sm:$0xff]
    %v3753 = vld [vmem:[#allocation8 + $0x1b8] sm:$0xff]
    %v3754 = vld [vmem:[#allocation8 + $0x1c0] sm:$0xff]
    %v3755 = vld [vmem:[#allocation8 + $0x1c8] sm:$0xff]
    %v3756 = vld [vmem:[#allocation8 + $0x1d0] sm:$0xff]
    %v3757 = vld [vmem:[#allocation8 + $0x1d8] sm:$0xff]
    %v3758 = vld [vmem:[#allocation8 + $0x1e0] sm:$0xff]
    %v3759 = vld [vmem:[#allocation8 + $0x1e8] sm:$0xff]
    %v3760 = vld [vmem:[#allocation8 + $0x1f0] sm:$0xff]
    %v3761 = vld [vmem:[#allocation8 + $0x1f8] sm:$0xff]
    %v3762 = vld [vmem:[#allocation8 + $0x200] sm:$0xff]
    %v3763 = vld [vmem:[#allocation8 + $0x208] sm:$0xff]
    %v3764 = vld [vmem:[#allocation8 + $0x210] sm:$0xff]
    %v3765 = vld [vmem:[#allocation8 + $0x218] sm:$0xff]
    %v3766 = vld [vmem:[#allocation8 + $0x220] sm:$0xff]
    %v3767 = vld [vmem:[#allocation8 + $0x228] sm:$0xff]
    %v3768 = vld [vmem:[#allocation8 + $0x230] sm:$0xff]
    %v3769 = vld [vmem:[#allocation8 + $0x238] sm:$0xff]
    %v3770 = vld [vmem:[#allocation8 + $0x240] sm:$0xff]
    %v3771 = vld [vmem:[#allocation8 + $0x248] sm:$0xff]
    %v3772 = vld [vmem:[#allocation8 + $0x250] sm:$0xff]
    %v3773 = vld [vmem:[#allocation8 + $0x258] sm:$0xff]
    %v3774 = vld [vmem:[#allocation8 + $0x260] sm:$0xff]
    %v3775 = vld [vmem:[#allocation8 + $0x268] sm:$0xff]
    %v3776 = vld [vmem:[#allocation8 + $0x270] sm:$0xff]
    %v3777 = vld [vmem:[#allocation8 + $0x278] sm:$0xff]
    %v3778 = vld [vmem:[#allocation8 + $0x280] sm:$0xff]
    %v3779 = vld [vmem:[#allocation8 + $0x288] sm:$0xff]
    %v3780 = vld [vmem:[#allocation8 + $0x290] sm:$0xff]
    %v3781 = vld [vmem:[#allocation8 + $0x298] sm:$0xff]
    %v3782 = vld [vmem:[#allocation8 + $0x2a0] sm:$0xff]
    %v3783 = vld [vmem:[#allocation8 + $0x2a8] sm:$0xff]
    %v3784 = vld [vmem:[#allocation8 + $0x2b0] sm:$0xff]
    %v3785 = vld [vmem:[#allocation8 + $0x2b8] sm:$0xff]
    %v3786 = vld [vmem:[#allocation8 + $0x2c0] sm:$0xff]
    %v3787 = vld [vmem:[#allocation8 + $0x2c8] sm:$0xff]
    %v3788 = vld [vmem:[#allocation8 + $0x2d0] sm:$0xff]
    %v3789 = vld [vmem:[#allocation8 + $0x2d8] sm:$0xff]
    %v3790 = vld [vmem:[#allocation8 + $0x2e0] sm:$0xff]
    %v3791 = vld [vmem:[#allocation8 + $0x2e8] sm:$0xff]
    %v3792 = vld [vmem:[#allocation8 + $0x2f0] sm:$0xff]
    %v3793 = vld [vmem:[#allocation8 + $0x2f8] sm:$0xff]
    %v3794 = vld [vmem:[#allocation8 + $0x300] sm:$0xff]
    %v3795 = vld [vmem:[#allocation8 + $0x308] sm:$0xff]
    %v3796 = vld [vmem:[#allocation8 + $0x310] sm:$0xff]
    %v3797 = vld [vmem:[#allocation8 + $0x318] sm:$0xff]
    %v3798 = vld [vmem:[#allocation8 + $0x320] sm:$0xff]
    %v3799 = vld [vmem:[#allocation8 + $0x328] sm:$0xff]
    %v3800 = vld [vmem:[#allocation8 + $0x330] sm:$0xff]
    %v3801 = vld [vmem:[#allocation8 + $0x338] sm:$0xff]
    %v3802 = vld [vmem:[#allocation8 + $0x340] sm:$0xff]
    %v3803 = vld [vmem:[#allocation8 + $0x348] sm:$0xff]
    %v3804 = vld [vmem:[#allocation8 + $0x350] sm:$0xff]
    %v3805 = vld [vmem:[#allocation8 + $0x358] sm:$0xff]
    %v3806 = vld [vmem:[#allocation8 + $0x360] sm:$0xff]
    %v3807 = vld [vmem:[#allocation8 + $0x368] sm:$0xff]
    %v3808 = vld [vmem:[#allocation8 + $0x370] sm:$0xff]
    %v3809 = vld [vmem:[#allocation8 + $0x378] sm:$0xff]
    %v3810 = vld [vmem:[#allocation8 + $0x380] sm:$0xff]
    %v3811 = vld [vmem:[#allocation8 + $0x388] sm:$0xff]
    %v3812 = vld [vmem:[#allocation8 + $0x390] sm:$0xff]
    %v3813 = vld [vmem:[#allocation8 + $0x398] sm:$0xff]
    %v3814 = vld [vmem:[#allocation8 + $0x3a0] sm:$0xff]
    %v3815 = vld [vmem:[#allocation8 + $0x3a8] sm:$0xff]
    %v3816 = vld [vmem:[#allocation8 + $0x3b0] sm:$0xff]
    %v3817 = vld [vmem:[#allocation8 + $0x3b8] sm:$0xff]
    %v3818 = vld [vmem:[#allocation8 + $0x3c0] sm:$0xff]
    %v3819 = vld [vmem:[#allocation8 + $0x3c8] sm:$0xff]
    %v3820 = vld [vmem:[#allocation8 + $0x3d0] sm:$0xff]
    %v3821 = vld [vmem:[#allocation8 + $0x3d8] sm:$0xff]
    %v3822 = vld [vmem:[#allocation8 + $0x3e0] sm:$0xff]
    %v3823 = vld [vmem:[#allocation8 + $0x3e8] sm:$0xff]
    %v3824 = vld [vmem:[#allocation8 + $0x3f0] sm:$0xff]
    %v3825 = vld [vmem:[#allocation8 + $0x3f8] sm:$0xff]
    %v3826 = vpack.c.bf16 %v3694, %v3694
    %v3827 = vpack.c.bf16 %v3695, %v3695
    %v3828 = vpack.c.bf16 %v3696, %v3696
    %v3829 = vpack.c.bf16 %v3697, %v3697
    %v3958 = vunpack.c.l.b16 %v3698
    %v3959 = vunpack.c.h.b16 %v3698
    %v3960 = vunpack.c.l.b16 %v3699
    %v3961 = vunpack.c.h.b16 %v3699
    %v3962 = vunpack.c.l.b16 %v3700
    %v3963 = vunpack.c.h.b16 %v3700
    %v3964 = vunpack.c.l.b16 %v3701
    %v3965 = vunpack.c.h.b16 %v3701
    %v3966 = vunpack.c.l.b16 %v3702
    %v3967 = vunpack.c.h.b16 %v3702
    %v3968 = vunpack.c.l.b16 %v3703
    %v3969 = vunpack.c.h.b16 %v3703
    %v3970 = vunpack.c.l.b16 %v3704
    %v3971 = vunpack.c.h.b16 %v3704
    %v3972 = vunpack.c.l.b16 %v3705
    %v3973 = vunpack.c.h.b16 %v3705
    %v3974 = vunpack.c.l.b16 %v3706
    %v3975 = vunpack.c.h.b16 %v3706
    %v3976 = vunpack.c.l.b16 %v3707
    %v3977 = vunpack.c.h.b16 %v3707
    %v3978 = vunpack.c.l.b16 %v3708
    %v3979 = vunpack.c.h.b16 %v3708
    %v3980 = vunpack.c.l.b16 %v3709
    %v3981 = vunpack.c.h.b16 %v3709
    %v3982 = vunpack.c.l.b16 %v3710
    %v3983 = vunpack.c.h.b16 %v3710
    %v3984 = vunpack.c.l.b16 %v3711
    %v3985 = vunpack.c.h.b16 %v3711
    %v3986 = vunpack.c.l.b16 %v3712
    %v3987 = vunpack.c.h.b16 %v3712
    %v3988 = vunpack.c.l.b16 %v3713
    %v3989 = vunpack.c.h.b16 %v3713
    %v3990 = vunpack.c.l.b16 %v3714
    %v3991 = vunpack.c.h.b16 %v3714
    %v3992 = vunpack.c.l.b16 %v3715
    %v3993 = vunpack.c.h.b16 %v3715
    %v3994 = vunpack.c.l.b16 %v3716
    %v3995 = vunpack.c.h.b16 %v3716
    %v3996 = vunpack.c.l.b16 %v3717
    %v3997 = vunpack.c.h.b16 %v3717
    %v3998 = vunpack.c.l.b16 %v3718
    %v3999 = vunpack.c.h.b16 %v3718
    %v4000 = vunpack.c.l.b16 %v3719
    %v4001 = vunpack.c.h.b16 %v3719
    %v4002 = vunpack.c.l.b16 %v3720
    %v4003 = vunpack.c.h.b16 %v3720
    %v4004 = vunpack.c.l.b16 %v3721
    %v4005 = vunpack.c.h.b16 %v3721
    %v4006 = vunpack.c.l.b16 %v3722
    %v4007 = vunpack.c.h.b16 %v3722
    %v4008 = vunpack.c.l.b16 %v3723
    %v4009 = vunpack.c.h.b16 %v3723
    %v4010 = vunpack.c.l.b16 %v3724
    %v4011 = vunpack.c.h.b16 %v3724
    %v4012 = vunpack.c.l.b16 %v3725
    %v4013 = vunpack.c.h.b16 %v3725
    %v4014 = vunpack.c.l.b16 %v3726
    %v4015 = vunpack.c.h.b16 %v3726
    %v4016 = vunpack.c.l.b16 %v3727
    %v4017 = vunpack.c.h.b16 %v3727
    %v4018 = vunpack.c.l.b16 %v3728
    %v4019 = vunpack.c.h.b16 %v3728
    %v4020 = vunpack.c.l.b16 %v3729
    %v4021 = vunpack.c.h.b16 %v3729
    %v4022 = vunpack.c.l.b16 %v3730
    %v4023 = vunpack.c.h.b16 %v3730
    %v4024 = vunpack.c.l.b16 %v3731
    %v4025 = vunpack.c.h.b16 %v3731
    %v4026 = vunpack.c.l.b16 %v3732
    %v4027 = vunpack.c.h.b16 %v3732
    %v4028 = vunpack.c.l.b16 %v3733
    %v4029 = vunpack.c.h.b16 %v3733
    %v4030 = vunpack.c.l.b16 %v3734
    %v4031 = vunpack.c.h.b16 %v3734
    %v4032 = vunpack.c.l.b16 %v3735
    %v4033 = vunpack.c.h.b16 %v3735
    %v4034 = vunpack.c.l.b16 %v3736
    %v4035 = vunpack.c.h.b16 %v3736
    %v4036 = vunpack.c.l.b16 %v3737
    %v4037 = vunpack.c.h.b16 %v3737
    %v4038 = vunpack.c.l.b16 %v3738
    %v4039 = vunpack.c.h.b16 %v3738
    %v4040 = vunpack.c.l.b16 %v3739
    %v4041 = vunpack.c.h.b16 %v3739
    %v4042 = vunpack.c.l.b16 %v3740
    %v4043 = vunpack.c.h.b16 %v3740
    %v4044 = vunpack.c.l.b16 %v3741
    %v4045 = vunpack.c.h.b16 %v3741
    %v4046 = vunpack.c.l.b16 %v3742
    %v4047 = vunpack.c.h.b16 %v3742
    %v4048 = vunpack.c.l.b16 %v3743
    %v4049 = vunpack.c.h.b16 %v3743
    %v4050 = vunpack.c.l.b16 %v3744
    %v4051 = vunpack.c.h.b16 %v3744
    %v4052 = vunpack.c.l.b16 %v3745
    %v4053 = vunpack.c.h.b16 %v3745
    %v4054 = vunpack.c.l.b16 %v3746
    %v4055 = vunpack.c.h.b16 %v3746
    %v4056 = vunpack.c.l.b16 %v3747
    %v4057 = vunpack.c.h.b16 %v3747
    %v4058 = vunpack.c.l.b16 %v3748
    %v4059 = vunpack.c.h.b16 %v3748
    %v4060 = vunpack.c.l.b16 %v3749
    %v4061 = vunpack.c.h.b16 %v3749
    %v4062 = vunpack.c.l.b16 %v3750
    %v4063 = vunpack.c.h.b16 %v3750
    %v4064 = vunpack.c.l.b16 %v3751
    %v4065 = vunpack.c.h.b16 %v3751
    %v4066 = vunpack.c.l.b16 %v3752
    %v4067 = vunpack.c.h.b16 %v3752
    %v4068 = vunpack.c.l.b16 %v3753
    %v4069 = vunpack.c.h.b16 %v3753
    %v4070 = vunpack.c.l.b16 %v3754
    %v4071 = vunpack.c.h.b16 %v3754
    %v4072 = vunpack.c.l.b16 %v3755
    %v4073 = vunpack.c.h.b16 %v3755
    %v4074 = vunpack.c.l.b16 %v3756
    %v4075 = vunpack.c.h.b16 %v3756
    %v4076 = vunpack.c.l.b16 %v3757
    %v4077 = vunpack.c.h.b16 %v3757
    %v4078 = vunpack.c.l.b16 %v3758
    %v4079 = vunpack.c.h.b16 %v3758
    %v4080 = vunpack.c.l.b16 %v3759
    %v4081 = vunpack.c.h.b16 %v3759
    %v4082 = vunpack.c.l.b16 %v3760
    %v4083 = vunpack.c.h.b16 %v3760
    %v4084 = vunpack.c.l.b16 %v3761
    %v4085 = vunpack.c.h.b16 %v3761
    %v4086 = vunpack.c.l.b16 %v3762
    %v4087 = vunpack.c.h.b16 %v3762
    %v4088 = vunpack.c.l.b16 %v3763
    %v4089 = vunpack.c.h.b16 %v3763
    %v4090 = vunpack.c.l.b16 %v3764
    %v4091 = vunpack.c.h.b16 %v3764
    %v4092 = vunpack.c.l.b16 %v3765
    %v4093 = vunpack.c.h.b16 %v3765
    %v4094 = vunpack.c.l.b16 %v3766
    %v4095 = vunpack.c.h.b16 %v3766
    %v4096 = vunpack.c.l.b16 %v3767
    %v4097 = vunpack.c.h.b16 %v3767
    %v4098 = vunpack.c.l.b16 %v3768
    %v4099 = vunpack.c.h.b16 %v3768
    %v4100 = vunpack.c.l.b16 %v3769
    %v4101 = vunpack.c.h.b16 %v3769
    %v4102 = vunpack.c.l.b16 %v3770
    %v4103 = vunpack.c.h.b16 %v3770
    %v4104 = vunpack.c.l.b16 %v3771
    %v4105 = vunpack.c.h.b16 %v3771
    %v4106 = vunpack.c.l.b16 %v3772
    %v4107 = vunpack.c.h.b16 %v3772
    %v4108 = vunpack.c.l.b16 %v3773
    %v4109 = vunpack.c.h.b16 %v3773
    %v4110 = vunpack.c.l.b16 %v3774
    %v4111 = vunpack.c.h.b16 %v3774
    %v4112 = vunpack.c.l.b16 %v3775
    %v4113 = vunpack.c.h.b16 %v3775
    %v4114 = vunpack.c.l.b16 %v3776
    %v4115 = vunpack.c.h.b16 %v3776
    %v4116 = vunpack.c.l.b16 %v3777
    %v4117 = vunpack.c.h.b16 %v3777
    %v4118 = vunpack.c.l.b16 %v3778
    %v4119 = vunpack.c.h.b16 %v3778
    %v4120 = vunpack.c.l.b16 %v3779
    %v4121 = vunpack.c.h.b16 %v3779
    %v4122 = vunpack.c.l.b16 %v3780
    %v4123 = vunpack.c.h.b16 %v3780
    %v4124 = vunpack.c.l.b16 %v3781
    %v4125 = vunpack.c.h.b16 %v3781
    %v4126 = vunpack.c.l.b16 %v3782
    %v4127 = vunpack.c.h.b16 %v3782
    %v4128 = vunpack.c.l.b16 %v3783
    %v4129 = vunpack.c.h.b16 %v3783
    %v4130 = vunpack.c.l.b16 %v3784
    %v4131 = vunpack.c.h.b16 %v3784
    %v4132 = vunpack.c.l.b16 %v3785
    %v4133 = vunpack.c.h.b16 %v3785
    %v4134 = vunpack.c.l.b16 %v3786
    %v4135 = vunpack.c.h.b16 %v3786
    %v4136 = vunpack.c.l.b16 %v3787
    %v4137 = vunpack.c.h.b16 %v3787
    %v4138 = vunpack.c.l.b16 %v3788
    %v4139 = vunpack.c.h.b16 %v3788
    %v4140 = vunpack.c.l.b16 %v3789
    %v4141 = vunpack.c.h.b16 %v3789
    %v4142 = vunpack.c.l.b16 %v3790
    %v4143 = vunpack.c.h.b16 %v3790
    %v4144 = vunpack.c.l.b16 %v3791
    %v4145 = vunpack.c.h.b16 %v3791
    %v4146 = vunpack.c.l.b16 %v3792
    %v4147 = vunpack.c.h.b16 %v3792
    %v4148 = vunpack.c.l.b16 %v3793
    %v4149 = vunpack.c.h.b16 %v3793
    %v4150 = vunpack.c.l.b16 %v3794
    %v4151 = vunpack.c.h.b16 %v3794
    %v4152 = vunpack.c.l.b16 %v3795
    %v4153 = vunpack.c.h.b16 %v3795
    %v4154 = vunpack.c.l.b16 %v3796
    %v4155 = vunpack.c.h.b16 %v3796
    %v4156 = vunpack.c.l.b16 %v3797
    %v4157 = vunpack.c.h.b16 %v3797
    %v4158 = vunpack.c.l.b16 %v3798
    %v4159 = vunpack.c.h.b16 %v3798
    %v4160 = vunpack.c.l.b16 %v3799
    %v4161 = vunpack.c.h.b16 %v3799
    %v4162 = vunpack.c.l.b16 %v3800
    %v4163 = vunpack.c.h.b16 %v3800
    %v4164 = vunpack.c.l.b16 %v3801
    %v4165 = vunpack.c.h.b16 %v3801
    %v4166 = vunpack.c.l.b16 %v3802
    %v4167 = vunpack.c.h.b16 %v3802
    %v4168 = vunpack.c.l.b16 %v3803
    %v4169 = vunpack.c.h.b16 %v3803
    %v4170 = vunpack.c.l.b16 %v3804
    %v4171 = vunpack.c.h.b16 %v3804
    %v4172 = vunpack.c.l.b16 %v3805
    %v4173 = vunpack.c.h.b16 %v3805
    %v4174 = vunpack.c.l.b16 %v3806
    %v4175 = vunpack.c.h.b16 %v3806
    %v4176 = vunpack.c.l.b16 %v3807
    %v4177 = vunpack.c.h.b16 %v3807
    %v4178 = vunpack.c.l.b16 %v3808
    %v4179 = vunpack.c.h.b16 %v3808
    %v4180 = vunpack.c.l.b16 %v3809
    %v4181 = vunpack.c.h.b16 %v3809
    %v4182 = vunpack.c.l.b16 %v3810
    %v4183 = vunpack.c.h.b16 %v3810
    %v4184 = vunpack.c.l.b16 %v3811
    %v4185 = vunpack.c.h.b16 %v3811
    %v4186 = vunpack.c.l.b16 %v3812
    %v4187 = vunpack.c.h.b16 %v3812
    %v4188 = vunpack.c.l.b16 %v3813
    %v4189 = vunpack.c.h.b16 %v3813
    %v4190 = vunpack.c.l.b16 %v3814
    %v4191 = vunpack.c.h.b16 %v3814
    %v4192 = vunpack.c.l.b16 %v3815
    %v4193 = vunpack.c.h.b16 %v3815
    %v4194 = vunpack.c.l.b16 %v3816
    %v4195 = vunpack.c.h.b16 %v3816
    %v4196 = vunpack.c.l.b16 %v3817
    %v4197 = vunpack.c.h.b16 %v3817
    %v4198 = vunpack.c.l.b16 %v3818
    %v4199 = vunpack.c.h.b16 %v3818
    %v4200 = vunpack.c.l.b16 %v3819
    %v4201 = vunpack.c.h.b16 %v3819
    %v4202 = vunpack.c.l.b16 %v3820
    %v4203 = vunpack.c.h.b16 %v3820
    %v4204 = vunpack.c.l.b16 %v3821
    %v4205 = vunpack.c.h.b16 %v3821
    %v4206 = vunpack.c.l.b16 %v3822
    %v4207 = vunpack.c.h.b16 %v3822
    %v4208 = vunpack.c.l.b16 %v3823
    %v4209 = vunpack.c.h.b16 %v3823
    %v4210 = vunpack.c.l.b16 %v3824
    %v4211 = vunpack.c.h.b16 %v3824
    %v4212 = vunpack.c.l.b16 %v3825
    %v4213 = vunpack.c.h.b16 %v3825
    %v4214 = vpack.c.b16 %v3962, %v3958
    %v4215 = vpack.c.b16 %v3963, %v3959
    %v4216 = vpack.c.b16 %v3964, %v3960
    %v4217 = vpack.c.b16 %v3965, %v3961
    %v4218 = vpack.c.b16 %v3970, %v3966
    %v4219 = vpack.c.b16 %v3971, %v3967
    %v4220 = vpack.c.b16 %v3972, %v3968
    %v4221 = vpack.c.b16 %v3973, %v3969
    %v4222 = vpack.c.b16 %v3978, %v3974
    %v4223 = vpack.c.b16 %v3979, %v3975
    %v4224 = vpack.c.b16 %v3980, %v3976
    %v4225 = vpack.c.b16 %v3981, %v3977
    %v4226 = vpack.c.b16 %v3986, %v3982
    %v4227 = vpack.c.b16 %v3987, %v3983
    %v4228 = vpack.c.b16 %v3988, %v3984
    %v4229 = vpack.c.b16 %v3989, %v3985
    %v4230 = vpack.c.b16 %v3994, %v3990
    %v4231 = vpack.c.b16 %v3995, %v3991
    %v4232 = vpack.c.b16 %v3996, %v3992
    %v4233 = vpack.c.b16 %v3997, %v3993
    %v4234 = vpack.c.b16 %v4002, %v3998
    %v4235 = vpack.c.b16 %v4003, %v3999
    %v4236 = vpack.c.b16 %v4004, %v4000
    %v4237 = vpack.c.b16 %v4005, %v4001
    %v4238 = vpack.c.b16 %v4010, %v4006
    %v4239 = vpack.c.b16 %v4011, %v4007
    %v4240 = vpack.c.b16 %v4012, %v4008
    %v4241 = vpack.c.b16 %v4013, %v4009
    %v4242 = vpack.c.b16 %v4018, %v4014
    %v4243 = vpack.c.b16 %v4019, %v4015
    %v4244 = vpack.c.b16 %v4020, %v4016
    %v4245 = vpack.c.b16 %v4021, %v4017
    %v4246 = vpack.c.b16 %v4026, %v4022
    %v4247 = vpack.c.b16 %v4027, %v4023
    %v4248 = vpack.c.b16 %v4028, %v4024
    %v4249 = vpack.c.b16 %v4029, %v4025
    %v4250 = vpack.c.b16 %v4034, %v4030
    %v4251 = vpack.c.b16 %v4035, %v4031
    %v4252 = vpack.c.b16 %v4036, %v4032
    %v4253 = vpack.c.b16 %v4037, %v4033
    %v4254 = vpack.c.b16 %v4042, %v4038
    %v4255 = vpack.c.b16 %v4043, %v4039
    %v4256 = vpack.c.b16 %v4044, %v4040
    %v4257 = vpack.c.b16 %v4045, %v4041
    %v4258 = vpack.c.b16 %v4050, %v4046
    %v4259 = vpack.c.b16 %v4051, %v4047
    %v4260 = vpack.c.b16 %v4052, %v4048
    %v4261 = vpack.c.b16 %v4053, %v4049
    %v4262 = vpack.c.b16 %v4058, %v4054
    %v4263 = vpack.c.b16 %v4059, %v4055
    %v4264 = vpack.c.b16 %v4060, %v4056
    %v4265 = vpack.c.b16 %v4061, %v4057
    %v4266 = vpack.c.b16 %v4066, %v4062
    %v4267 = vpack.c.b16 %v4067, %v4063
    %v4268 = vpack.c.b16 %v4068, %v4064
    %v4269 = vpack.c.b16 %v4069, %v4065
    %v4270 = vpack.c.b16 %v4074, %v4070
    %v4271 = vpack.c.b16 %v4075, %v4071
    %v4272 = vpack.c.b16 %v4076, %v4072
    %v4273 = vpack.c.b16 %v4077, %v4073
    %v4274 = vpack.c.b16 %v4082, %v4078
    %v4275 = vpack.c.b16 %v4083, %v4079
    %v4276 = vpack.c.b16 %v4084, %v4080
    %v4277 = vpack.c.b16 %v4085, %v4081
    %v4278 = vpack.c.b16 %v4090, %v4086
    %v4279 = vpack.c.b16 %v4091, %v4087
    %v4280 = vpack.c.b16 %v4092, %v4088
    %v4281 = vpack.c.b16 %v4093, %v4089
    %v4282 = vpack.c.b16 %v4098, %v4094
    %v4283 = vpack.c.b16 %v4099, %v4095
    %v4284 = vpack.c.b16 %v4100, %v4096
    %v4285 = vpack.c.b16 %v4101, %v4097
    %v4286 = vpack.c.b16 %v4106, %v4102
    %v4287 = vpack.c.b16 %v4107, %v4103
    %v4288 = vpack.c.b16 %v4108, %v4104
    %v4289 = vpack.c.b16 %v4109, %v4105
    %v4290 = vpack.c.b16 %v4114, %v4110
    %v4291 = vpack.c.b16 %v4115, %v4111
    %v4292 = vpack.c.b16 %v4116, %v4112
    %v4293 = vpack.c.b16 %v4117, %v4113
    %v4294 = vpack.c.b16 %v4122, %v4118
    %v4295 = vpack.c.b16 %v4123, %v4119
    %v4296 = vpack.c.b16 %v4124, %v4120
    %v4297 = vpack.c.b16 %v4125, %v4121
    %v4298 = vpack.c.b16 %v4130, %v4126
    %v4299 = vpack.c.b16 %v4131, %v4127
    %v4300 = vpack.c.b16 %v4132, %v4128
    %v4301 = vpack.c.b16 %v4133, %v4129
    %v4302 = vpack.c.b16 %v4138, %v4134
    %v4303 = vpack.c.b16 %v4139, %v4135
    %v4304 = vpack.c.b16 %v4140, %v4136
    %v4305 = vpack.c.b16 %v4141, %v4137
    %v4306 = vpack.c.b16 %v4146, %v4142
    %v4307 = vpack.c.b16 %v4147, %v4143
    %v4308 = vpack.c.b16 %v4148, %v4144
    %v4309 = vpack.c.b16 %v4149, %v4145
    %v4310 = vpack.c.b16 %v4154, %v4150
    %v4311 = vpack.c.b16 %v4155, %v4151
    %v4312 = vpack.c.b16 %v4156, %v4152
    %v4313 = vpack.c.b16 %v4157, %v4153
    %v4314 = vpack.c.b16 %v4162, %v4158
    %v4315 = vpack.c.b16 %v4163, %v4159
    %v4316 = vpack.c.b16 %v4164, %v4160
    %v4317 = vpack.c.b16 %v4165, %v4161
    %v4318 = vpack.c.b16 %v4170, %v4166
    %v4319 = vpack.c.b16 %v4171, %v4167
    %v4320 = vpack.c.b16 %v4172, %v4168
    %v4321 = vpack.c.b16 %v4173, %v4169
    %v4322 = vpack.c.b16 %v4178, %v4174
    %v4323 = vpack.c.b16 %v4179, %v4175
    %v4324 = vpack.c.b16 %v4180, %v4176
    %v4325 = vpack.c.b16 %v4181, %v4177
    %v4326 = vpack.c.b16 %v4186, %v4182
    %v4327 = vpack.c.b16 %v4187, %v4183
    %v4328 = vpack.c.b16 %v4188, %v4184
    %v4329 = vpack.c.b16 %v4189, %v4185
    %v4330 = vpack.c.b16 %v4194, %v4190
    %v4331 = vpack.c.b16 %v4195, %v4191
    %v4332 = vpack.c.b16 %v4196, %v4192
    %v4333 = vpack.c.b16 %v4197, %v4193
    %v4334 = vpack.c.b16 %v4202, %v4198
    %v4335 = vpack.c.b16 %v4203, %v4199
    %v4336 = vpack.c.b16 %v4204, %v4200
    %v4337 = vpack.c.b16 %v4205, %v4201
    %v4338 = vpack.c.b16 %v4210, %v4206
    %v4339 = vpack.c.b16 %v4211, %v4207
    %v4340 = vpack.c.b16 %v4212, %v4208
    %v4341 = vpack.c.b16 %v4213, %v4209
    %4470 = vmatpush.bf16.msra.mxu0 %v4242
    %4471 = vmatpush.bf16.msra.mxu0 %v4238
    %4472 = vmatpush.bf16.msra.mxu0 %v4234
    %4473 = vmatpush.bf16.msra.mxu0 %v4230
    %4474 = vmatpush.bf16.msra.mxu0 %v4226
    %4475 = vmatpush.bf16.msra.mxu0 %v4222
    %4476 = vmatpush.bf16.msra.mxu0 %v4218
    %4477 = vmatpush.bf16.msra.mxu0 %v4214
    %4478 = vmatmul.bf16.gmra.mxu0 %v3826
    %v4479 = vpop.f32.mrf.mxu0
    %v4480 = vadd.f32 %v3613, %v4479
    %v4481 = vpop.f32.mrf.mxu0
    %4482 = vdwg.mxu0
    %4483 = vmatpush.bf16.msra.mxu0 %v4274
    %4484 = vmatpush.bf16.msra.mxu0 %v4270
    %4485 = vmatpush.bf16.msra.mxu0 %v4266
    %4486 = vmatpush.bf16.msra.mxu0 %v4262
    %4487 = vmatpush.bf16.msra.mxu0 %v4258
    %4488 = vmatpush.bf16.msra.mxu0 %v4254
    %4489 = vmatpush.bf16.msra.mxu0 %v4250
    %4490 = vmatpush.bf16.msra.mxu0 %v4246
    %4491 = vmatmul.bf16.gmra.mxu0 %v3827
    %v4492 = vpop.f32.mrf.mxu0
    %v4493 = vadd.f32 %v4480, %v4492
    %v4494 = vpop.f32.mrf.mxu0
    %4495 = vdwg.mxu0
    %4496 = vmatpush.bf16.msra.mxu0 %v4306
    %4497 = vmatpush.bf16.msra.mxu0 %v4302
    %4498 = vmatpush.bf16.msra.mxu0 %v4298
    %4499 = vmatpush.bf16.msra.mxu0 %v4294
    %4500 = vmatpush.bf16.msra.mxu0 %v4290
    %4501 = vmatpush.bf16.msra.mxu0 %v4286
    %4502 = vmatpush.bf16.msra.mxu0 %v4282
    %4503 = vmatpush.bf16.msra.mxu0 %v4278
    %4504 = vmatmul.bf16.gmra.mxu0 %v3828
    %v4505 = vpop.f32.mrf.mxu0
    %v4506 = vadd.f32 %v4493, %v4505
    %v4507 = vpop.f32.mrf.mxu0
    %4508 = vdwg.mxu0
    %4509 = vmatpush.bf16.msra.mxu0 %v4338
    %4510 = vmatpush.bf16.msra.mxu0 %v4334
    %4511 = vmatpush.bf16.msra.mxu0 %v4330
    %4512 = vmatpush.bf16.msra.mxu0 %v4326
    %4513 = vmatpush.bf16.msra.mxu0 %v4322
    %4514 = vmatpush.bf16.msra.mxu0 %v4318
    %4515 = vmatpush.bf16.msra.mxu0 %v4314
    %4516 = vmatpush.bf16.msra.mxu0 %v4310
    %4517 = vmatmul.bf16.gmra.mxu0 %v3829
    %v4518 = vpop.f32.mrf.mxu0
    %v4519 = vadd.f32 %v4506, %v4518
    %v4520 = vpop.f32.mrf.mxu0
    %4521 = vdwg.mxu0
    %4522 = vmatpush.bf16.msra.mxu0 %v4243
    %4523 = vmatpush.bf16.msra.mxu0 %v4239
    %4524 = vmatpush.bf16.msra.mxu0 %v4235
    %4525 = vmatpush.bf16.msra.mxu0 %v4231
    %4526 = vmatpush.bf16.msra.mxu0 %v4227
    %4527 = vmatpush.bf16.msra.mxu0 %v4223
    %4528 = vmatpush.bf16.msra.mxu0 %v4219
    %4529 = vmatpush.bf16.msra.mxu0 %v4215
    %4530 = vmatmul.bf16.gmra.mxu0 %v3826
    %v4531 = vpop.f32.mrf.mxu0
    %v4532 = vadd.f32 %v3639, %v4531
    %v4533 = vpop.f32.mrf.mxu0
    %4534 = vdwg.mxu0
    %4535 = vmatpush.bf16.msra.mxu0 %v4275
    %4536 = vmatpush.bf16.msra.mxu0 %v4271
    %4537 = vmatpush.bf16.msra.mxu0 %v4267
    %4538 = vmatpush.bf16.msra.mxu0 %v4263
    %4539 = vmatpush.bf16.msra.mxu0 %v4259
    %4540 = vmatpush.bf16.msra.mxu0 %v4255
    %4541 = vmatpush.bf16.msra.mxu0 %v4251
    %4542 = vmatpush.bf16.msra.mxu0 %v4247
    %4543 = vmatmul.bf16.gmra.mxu0 %v3827
    %v4544 = vpop.f32.mrf.mxu0
    %v4545 = vadd.f32 %v4532, %v4544
    %v4546 = vpop.f32.mrf.mxu0
    %4547 = vdwg.mxu0
    %4548 = vmatpush.bf16.msra.mxu0 %v4307
    %4549 = vmatpush.bf16.msra.mxu0 %v4303
    %4550 = vmatpush.bf16.msra.mxu0 %v4299
    %4551 = vmatpush.bf16.msra.mxu0 %v4295
    %4552 = vmatpush.bf16.msra.mxu0 %v4291
    %4553 = vmatpush.bf16.msra.mxu0 %v4287
    %4554 = vmatpush.bf16.msra.mxu0 %v4283
    %4555 = vmatpush.bf16.msra.mxu0 %v4279
    %4556 = vmatmul.bf16.gmra.mxu0 %v3828
    %v4557 = vpop.f32.mrf.mxu0
    %v4558 = vadd.f32 %v4545, %v4557
    %v4559 = vpop.f32.mrf.mxu0
    %4560 = vdwg.mxu0
    %4561 = vmatpush.bf16.msra.mxu0 %v4339
    %4562 = vmatpush.bf16.msra.mxu0 %v4335
    %4563 = vmatpush.bf16.msra.mxu0 %v4331
    %4564 = vmatpush.bf16.msra.mxu0 %v4327
    %4565 = vmatpush.bf16.msra.mxu0 %v4323
    %4566 = vmatpush.bf16.msra.mxu0 %v4319
    %4567 = vmatpush.bf16.msra.mxu0 %v4315
    %4568 = vmatpush.bf16.msra.mxu0 %v4311
    %4569 = vmatmul.bf16.gmra.mxu0 %v3829
    %v4570 = vpop.f32.mrf.mxu0
    %v4571 = vadd.f32 %v4558, %v4570
    %v4572 = vpop.f32.mrf.mxu0
    %4573 = vdwg.mxu0
    %4574 = vmatpush.bf16.msra.mxu0 %v4244
    %4575 = vmatpush.bf16.msra.mxu0 %v4240
    %4576 = vmatpush.bf16.msra.mxu0 %v4236
    %4577 = vmatpush.bf16.msra.mxu0 %v4232
    %4578 = vmatpush.bf16.msra.mxu0 %v4228
    %4579 = vmatpush.bf16.msra.mxu0 %v4224
    %4580 = vmatpush.bf16.msra.mxu0 %v4220
    %4581 = vmatpush.bf16.msra.mxu0 %v4216
    %4582 = vmatmul.bf16.gmra.mxu0 %v3826
    %v4583 = vpop.f32.mrf.mxu0
    %v4584 = vadd.f32 %v3665, %v4583
    %v4585 = vpop.f32.mrf.mxu0
    %4586 = vdwg.mxu0
    %4587 = vmatpush.bf16.msra.mxu0 %v4276
    %4588 = vmatpush.bf16.msra.mxu0 %v4272
    %4589 = vmatpush.bf16.msra.mxu0 %v4268
    %4590 = vmatpush.bf16.msra.mxu0 %v4264
    %4591 = vmatpush.bf16.msra.mxu0 %v4260
    %4592 = vmatpush.bf16.msra.mxu0 %v4256
    %4593 = vmatpush.bf16.msra.mxu0 %v4252
    %4594 = vmatpush.bf16.msra.mxu0 %v4248
    %4595 = vmatmul.bf16.gmra.mxu0 %v3827
    %v4596 = vpop.f32.mrf.mxu0
    %v4597 = vadd.f32 %v4584, %v4596
    %v4598 = vpop.f32.mrf.mxu0
    %4599 = vdwg.mxu0
    %4600 = vmatpush.bf16.msra.mxu0 %v4308
    %4601 = vmatpush.bf16.msra.mxu0 %v4304
    %4602 = vmatpush.bf16.msra.mxu0 %v4300
    %4603 = vmatpush.bf16.msra.mxu0 %v4296
    %4604 = vmatpush.bf16.msra.mxu0 %v4292
    %4605 = vmatpush.bf16.msra.mxu0 %v4288
    %4606 = vmatpush.bf16.msra.mxu0 %v4284
    %4607 = vmatpush.bf16.msra.mxu0 %v4280
    %4608 = vmatmul.bf16.gmra.mxu0 %v3828
    %v4609 = vpop.f32.mrf.mxu0
    %v4610 = vadd.f32 %v4597, %v4609
    %v4611 = vpop.f32.mrf.mxu0
    %4612 = vdwg.mxu0
    %4613 = vmatpush.bf16.msra.mxu0 %v4340
    %4614 = vmatpush.bf16.msra.mxu0 %v4336
    %4615 = vmatpush.bf16.msra.mxu0 %v4332
    %4616 = vmatpush.bf16.msra.mxu0 %v4328
    %4617 = vmatpush.bf16.msra.mxu0 %v4324
    %4618 = vmatpush.bf16.msra.mxu0 %v4320
    %4619 = vmatpush.bf16.msra.mxu0 %v4316
    %4620 = vmatpush.bf16.msra.mxu0 %v4312
    %4621 = vmatmul.bf16.gmra.mxu0 %v3829
    %v4622 = vpop.f32.mrf.mxu0
    %v4623 = vadd.f32 %v4610, %v4622
    %v4624 = vpop.f32.mrf.mxu0
    %4625 = vdwg.mxu0
    %4626 = vmatpush.bf16.msra.mxu0 %v4245
    %4627 = vmatpush.bf16.msra.mxu0 %v4241
    %4628 = vmatpush.bf16.msra.mxu0 %v4237
    %4629 = vmatpush.bf16.msra.mxu0 %v4233
    %4630 = vmatpush.bf16.msra.mxu0 %v4229
    %4631 = vmatpush.bf16.msra.mxu0 %v4225
    %4632 = vmatpush.bf16.msra.mxu0 %v4221
    %4633 = vmatpush.bf16.msra.mxu0 %v4217
    %4634 = vmatmul.bf16.gmra.mxu0 %v3826
    %v4635 = vpop.f32.mrf.mxu0
    %v4636 = vadd.f32 %v3691, %v4635
    %v4637 = vpop.f32.mrf.mxu0
    %4638 = vdwg.mxu0
    %4639 = vmatpush.bf16.msra.mxu0 %v4277
    %4640 = vmatpush.bf16.msra.mxu0 %v4273
    %4641 = vmatpush.bf16.msra.mxu0 %v4269
    %4642 = vmatpush.bf16.msra.mxu0 %v4265
    %4643 = vmatpush.bf16.msra.mxu0 %v4261
    %4644 = vmatpush.bf16.msra.mxu0 %v4257
    %4645 = vmatpush.bf16.msra.mxu0 %v4253
    %4646 = vmatpush.bf16.msra.mxu0 %v4249
    %4647 = vmatmul.bf16.gmra.mxu0 %v3827
    %v4648 = vpop.f32.mrf.mxu0
    %v4649 = vadd.f32 %v4636, %v4648
    %v4650 = vpop.f32.mrf.mxu0
    %4651 = vdwg.mxu0
    %4652 = vmatpush.bf16.msra.mxu0 %v4309
    %4653 = vmatpush.bf16.msra.mxu0 %v4305
    %4654 = vmatpush.bf16.msra.mxu0 %v4301
    %4655 = vmatpush.bf16.msra.mxu0 %v4297
    %4656 = vmatpush.bf16.msra.mxu0 %v4293
    %4657 = vmatpush.bf16.msra.mxu0 %v4289
    %4658 = vmatpush.bf16.msra.mxu0 %v4285
    %4659 = vmatpush.bf16.msra.mxu0 %v4281
    %4660 = vmatmul.bf16.gmra.mxu0 %v3828
    %v4661 = vpop.f32.mrf.mxu0
    %v4662 = vadd.f32 %v4649, %v4661
    %v4663 = vpop.f32.mrf.mxu0
    %4664 = vdwg.mxu0
    %4665 = vmatpush.bf16.msra.mxu0 %v4341
    %4666 = vmatpush.bf16.msra.mxu0 %v4337
    %4667 = vmatpush.bf16.msra.mxu0 %v4333
    %4668 = vmatpush.bf16.msra.mxu0 %v4329
    %4669 = vmatpush.bf16.msra.mxu0 %v4325
    %4670 = vmatpush.bf16.msra.mxu0 %v4321
    %4671 = vmatpush.bf16.msra.mxu0 %v4317
    %4672 = vmatpush.bf16.msra.mxu0 %v4313
    %4673 = vmatmul.bf16.gmra.mxu0 %v3829
    %v4674 = vpop.f32.mrf.mxu0
    %v4675 = vadd.f32 %v4662, %v4674
    %v4676 = vpop.f32.mrf.mxu0
    %4677 = vdwg.mxu0
    %v4678 = vmax.f32 %v4519, 0.0
    %v4679 = vmax.f32 %v4571, 0.0
    %v4680 = vmax.f32 %v4623, 0.0
    %v4681 = vmax.f32 %v4675, 0.0
    %s4682 = scalar_lea.vmem [#allocation8], 1024
    %v4683 = vld [vmem:[%s4682] sm:$0xff]
    %v4684 = vld [vmem:[%s4682 + $0x8] sm:$0xff]
    %v4685 = vld [vmem:[%s4682 + $0x10] sm:$0xff]
    %v4686 = vld [vmem:[%s4682 + $0x18] sm:$0xff]
    %v4687 = vld [vmem:[%s4682 + $0x20] sm:$0xff]
    %v4688 = vld [vmem:[%s4682 + $0x28] sm:$0xff]
    %v4689 = vld [vmem:[%s4682 + $0x30] sm:$0xff]
    %v4690 = vld [vmem:[%s4682 + $0x38] sm:$0xff]
    %v4691 = vld [vmem:[%s4682 + $0x40] sm:$0xff]
    %v4692 = vld [vmem:[%s4682 + $0x48] sm:$0xff]
    %v4693 = vld [vmem:[%s4682 + $0x50] sm:$0xff]
    %v4694 = vld [vmem:[%s4682 + $0x58] sm:$0xff]
    %v4695 = vld [vmem:[%s4682 + $0x60] sm:$0xff]
    %v4696 = vld [vmem:[%s4682 + $0x68] sm:$0xff]
    %v4697 = vld [vmem:[%s4682 + $0x70] sm:$0xff]
    %v4698 = vld [vmem:[%s4682 + $0x78] sm:$0xff]
    %v4699 = vld [vmem:[%s4682 + $0x80] sm:$0xff]
    %v4700 = vld [vmem:[%s4682 + $0x88] sm:$0xff]
    %v4701 = vld [vmem:[%s4682 + $0x90] sm:$0xff]
    %v4702 = vld [vmem:[%s4682 + $0x98] sm:$0xff]
    %v4703 = vld [vmem:[%s4682 + $0xa0] sm:$0xff]
    %v4704 = vld [vmem:[%s4682 + $0xa8] sm:$0xff]
    %v4705 = vld [vmem:[%s4682 + $0xb0] sm:$0xff]
    %v4706 = vld [vmem:[%s4682 + $0xb8] sm:$0xff]
    %v4707 = vld [vmem:[%s4682 + $0xc0] sm:$0xff]
    %v4708 = vld [vmem:[%s4682 + $0xc8] sm:$0xff]
    %v4709 = vld [vmem:[%s4682 + $0xd0] sm:$0xff]
    %v4710 = vld [vmem:[%s4682 + $0xd8] sm:$0xff]
    %v4711 = vld [vmem:[%s4682 + $0xe0] sm:$0xff]
    %v4712 = vld [vmem:[%s4682 + $0xe8] sm:$0xff]
    %v4713 = vld [vmem:[%s4682 + $0xf0] sm:$0xff]
    %v4714 = vld [vmem:[%s4682 + $0xf8] sm:$0xff]
    %v4715 = vld [vmem:[%s4682 + $0x100] sm:$0xff]
    %v4716 = vld [vmem:[%s4682 + $0x108] sm:$0xff]
    %v4717 = vld [vmem:[%s4682 + $0x110] sm:$0xff]
    %v4718 = vld [vmem:[%s4682 + $0x118] sm:$0xff]
    %v4719 = vld [vmem:[%s4682 + $0x120] sm:$0xff]
    %v4720 = vld [vmem:[%s4682 + $0x128] sm:$0xff]
    %v4721 = vld [vmem:[%s4682 + $0x130] sm:$0xff]
    %v4722 = vld [vmem:[%s4682 + $0x138] sm:$0xff]
    %v4723 = vld [vmem:[%s4682 + $0x140] sm:$0xff]
    %v4724 = vld [vmem:[%s4682 + $0x148] sm:$0xff]
    %v4725 = vld [vmem:[%s4682 + $0x150] sm:$0xff]
    %v4726 = vld [vmem:[%s4682 + $0x158] sm:$0xff]
    %v4727 = vld [vmem:[%s4682 + $0x160] sm:$0xff]
    %v4728 = vld [vmem:[%s4682 + $0x168] sm:$0xff]
    %v4729 = vld [vmem:[%s4682 + $0x170] sm:$0xff]
    %v4730 = vld [vmem:[%s4682 + $0x178] sm:$0xff]
    %v4731 = vld [vmem:[%s4682 + $0x180] sm:$0xff]
    %v4732 = vld [vmem:[%s4682 + $0x188] sm:$0xff]
    %v4733 = vld [vmem:[%s4682 + $0x190] sm:$0xff]
    %v4734 = vld [vmem:[%s4682 + $0x198] sm:$0xff]
    %v4735 = vld [vmem:[%s4682 + $0x1a0] sm:$0xff]
    %v4736 = vld [vmem:[%s4682 + $0x1a8] sm:$0xff]
    %v4737 = vld [vmem:[%s4682 + $0x1b0] sm:$0xff]
    %v4738 = vld [vmem:[%s4682 + $0x1b8] sm:$0xff]
    %v4739 = vld [vmem:[%s4682 + $0x1c0] sm:$0xff]
    %v4740 = vld [vmem:[%s4682 + $0x1c8] sm:$0xff]
    %v4741 = vld [vmem:[%s4682 + $0x1d0] sm:$0xff]
    %v4742 = vld [vmem:[%s4682 + $0x1d8] sm:$0xff]
    %v4743 = vld [vmem:[%s4682 + $0x1e0] sm:$0xff]
    %v4744 = vld [vmem:[%s4682 + $0x1e8] sm:$0xff]
    %v4745 = vld [vmem:[%s4682 + $0x1f0] sm:$0xff]
    %v4746 = vld [vmem:[%s4682 + $0x1f8] sm:$0xff]
    %v4747 = vld [vmem:[%s4682 + $0x200] sm:$0xff]
    %v4748 = vld [vmem:[%s4682 + $0x208] sm:$0xff]
    %v4749 = vld [vmem:[%s4682 + $0x210] sm:$0xff]
    %v4750 = vld [vmem:[%s4682 + $0x218] sm:$0xff]
    %v4751 = vld [vmem:[%s4682 + $0x220] sm:$0xff]
    %v4752 = vld [vmem:[%s4682 + $0x228] sm:$0xff]
    %v4753 = vld [vmem:[%s4682 + $0x230] sm:$0xff]
    %v4754 = vld [vmem:[%s4682 + $0x238] sm:$0xff]
    %v4755 = vld [vmem:[%s4682 + $0x240] sm:$0xff]
    %v4756 = vld [vmem:[%s4682 + $0x248] sm:$0xff]
    %v4757 = vld [vmem:[%s4682 + $0x250] sm:$0xff]
    %v4758 = vld [vmem:[%s4682 + $0x258] sm:$0xff]
    %v4759 = vld [vmem:[%s4682 + $0x260] sm:$0xff]
    %v4760 = vld [vmem:[%s4682 + $0x268] sm:$0xff]
    %v4761 = vld [vmem:[%s4682 + $0x270] sm:$0xff]
    %v4762 = vld [vmem:[%s4682 + $0x278] sm:$0xff]
    %v4763 = vld [vmem:[%s4682 + $0x280] sm:$0xff]
    %v4764 = vld [vmem:[%s4682 + $0x288] sm:$0xff]
    %v4765 = vld [vmem:[%s4682 + $0x290] sm:$0xff]
    %v4766 = vld [vmem:[%s4682 + $0x298] sm:$0xff]
    %v4767 = vld [vmem:[%s4682 + $0x2a0] sm:$0xff]
    %v4768 = vld [vmem:[%s4682 + $0x2a8] sm:$0xff]
    %v4769 = vld [vmem:[%s4682 + $0x2b0] sm:$0xff]
    %v4770 = vld [vmem:[%s4682 + $0x2b8] sm:$0xff]
    %v4771 = vld [vmem:[%s4682 + $0x2c0] sm:$0xff]
    %v4772 = vld [vmem:[%s4682 + $0x2c8] sm:$0xff]
    %v4773 = vld [vmem:[%s4682 + $0x2d0] sm:$0xff]
    %v4774 = vld [vmem:[%s4682 + $0x2d8] sm:$0xff]
    %v4775 = vld [vmem:[%s4682 + $0x2e0] sm:$0xff]
    %v4776 = vld [vmem:[%s4682 + $0x2e8] sm:$0xff]
    %v4777 = vld [vmem:[%s4682 + $0x2f0] sm:$0xff]
    %v4778 = vld [vmem:[%s4682 + $0x2f8] sm:$0xff]
    %v4779 = vld [vmem:[%s4682 + $0x300] sm:$0xff]
    %v4780 = vld [vmem:[%s4682 + $0x308] sm:$0xff]
    %v4781 = vld [vmem:[%s4682 + $0x310] sm:$0xff]
    %v4782 = vld [vmem:[%s4682 + $0x318] sm:$0xff]
    %v4783 = vld [vmem:[%s4682 + $0x320] sm:$0xff]
    %v4784 = vld [vmem:[%s4682 + $0x328] sm:$0xff]
    %v4785 = vld [vmem:[%s4682 + $0x330] sm:$0xff]
    %v4786 = vld [vmem:[%s4682 + $0x338] sm:$0xff]
    %v4787 = vld [vmem:[%s4682 + $0x340] sm:$0xff]
    %v4788 = vld [vmem:[%s4682 + $0x348] sm:$0xff]
    %v4789 = vld [vmem:[%s4682 + $0x350] sm:$0xff]
    %v4790 = vld [vmem:[%s4682 + $0x358] sm:$0xff]
    %v4791 = vld [vmem:[%s4682 + $0x360] sm:$0xff]
    %v4792 = vld [vmem:[%s4682 + $0x368] sm:$0xff]
    %v4793 = vld [vmem:[%s4682 + $0x370] sm:$0xff]
    %v4794 = vld [vmem:[%s4682 + $0x378] sm:$0xff]
    %v4795 = vld [vmem:[%s4682 + $0x380] sm:$0xff]
    %v4796 = vld [vmem:[%s4682 + $0x388] sm:$0xff]
    %v4797 = vld [vmem:[%s4682 + $0x390] sm:$0xff]
    %v4798 = vld [vmem:[%s4682 + $0x398] sm:$0xff]
    %v4799 = vld [vmem:[%s4682 + $0x3a0] sm:$0xff]
    %v4800 = vld [vmem:[%s4682 + $0x3a8] sm:$0xff]
    %v4801 = vld [vmem:[%s4682 + $0x3b0] sm:$0xff]
    %v4802 = vld [vmem:[%s4682 + $0x3b8] sm:$0xff]
    %v4803 = vld [vmem:[%s4682 + $0x3c0] sm:$0xff]
    %v4804 = vld [vmem:[%s4682 + $0x3c8] sm:$0xff]
    %v4805 = vld [vmem:[%s4682 + $0x3d0] sm:$0xff]
    %v4806 = vld [vmem:[%s4682 + $0x3d8] sm:$0xff]
    %v4807 = vld [vmem:[%s4682 + $0x3e0] sm:$0xff]
    %v4808 = vld [vmem:[%s4682 + $0x3e8] sm:$0xff]
    %v4809 = vld [vmem:[%s4682 + $0x3f0] sm:$0xff]
    %v4810 = vld [vmem:[%s4682 + $0x3f8] sm:$0xff]
    %v4811 = vpack.c.bf16 %v4678, %v4678
    %v4812 = vpack.c.bf16 %v4679, %v4679
    %v4813 = vpack.c.bf16 %v4680, %v4680
    %v4814 = vpack.c.bf16 %v4681, %v4681
    %v4943 = vunpack.c.l.b16 %v4683
    %v4944 = vunpack.c.h.b16 %v4683
    %v4945 = vunpack.c.l.b16 %v4684
    %v4946 = vunpack.c.h.b16 %v4684
    %v4947 = vunpack.c.l.b16 %v4685
    %v4948 = vunpack.c.h.b16 %v4685
    %v4949 = vunpack.c.l.b16 %v4686
    %v4950 = vunpack.c.h.b16 %v4686
    %v4951 = vunpack.c.l.b16 %v4687
    %v4952 = vunpack.c.h.b16 %v4687
    %v4953 = vunpack.c.l.b16 %v4688
    %v4954 = vunpack.c.h.b16 %v4688
    %v4955 = vunpack.c.l.b16 %v4689
    %v4956 = vunpack.c.h.b16 %v4689
    %v4957 = vunpack.c.l.b16 %v4690
    %v4958 = vunpack.c.h.b16 %v4690
    %v4959 = vunpack.c.l.b16 %v4691
    %v4960 = vunpack.c.h.b16 %v4691
    %v4961 = vunpack.c.l.b16 %v4692
    %v4962 = vunpack.c.h.b16 %v4692
    %v4963 = vunpack.c.l.b16 %v4693
    %v4964 = vunpack.c.h.b16 %v4693
    %v4965 = vunpack.c.l.b16 %v4694
    %v4966 = vunpack.c.h.b16 %v4694
    %v4967 = vunpack.c.l.b16 %v4695
    %v4968 = vunpack.c.h.b16 %v4695
    %v4969 = vunpack.c.l.b16 %v4696
    %v4970 = vunpack.c.h.b16 %v4696
    %v4971 = vunpack.c.l.b16 %v4697
    %v4972 = vunpack.c.h.b16 %v4697
    %v4973 = vunpack.c.l.b16 %v4698
    %v4974 = vunpack.c.h.b16 %v4698
    %v4975 = vunpack.c.l.b16 %v4699
    %v4976 = vunpack.c.h.b16 %v4699
    %v4977 = vunpack.c.l.b16 %v4700
    %v4978 = vunpack.c.h.b16 %v4700
    %v4979 = vunpack.c.l.b16 %v4701
    %v4980 = vunpack.c.h.b16 %v4701
    %v4981 = vunpack.c.l.b16 %v4702
    %v4982 = vunpack.c.h.b16 %v4702
    %v4983 = vunpack.c.l.b16 %v4703
    %v4984 = vunpack.c.h.b16 %v4703
    %v4985 = vunpack.c.l.b16 %v4704
    %v4986 = vunpack.c.h.b16 %v4704
    %v4987 = vunpack.c.l.b16 %v4705
    %v4988 = vunpack.c.h.b16 %v4705
    %v4989 = vunpack.c.l.b16 %v4706
    %v4990 = vunpack.c.h.b16 %v4706
    %v4991 = vunpack.c.l.b16 %v4707
    %v4992 = vunpack.c.h.b16 %v4707
    %v4993 = vunpack.c.l.b16 %v4708
    %v4994 = vunpack.c.h.b16 %v4708
    %v4995 = vunpack.c.l.b16 %v4709
    %v4996 = vunpack.c.h.b16 %v4709
    %v4997 = vunpack.c.l.b16 %v4710
    %v4998 = vunpack.c.h.b16 %v4710
    %v4999 = vunpack.c.l.b16 %v4711
    %v5000 = vunpack.c.h.b16 %v4711
    %v5001 = vunpack.c.l.b16 %v4712
    %v5002 = vunpack.c.h.b16 %v4712
    %v5003 = vunpack.c.l.b16 %v4713
    %v5004 = vunpack.c.h.b16 %v4713
    %v5005 = vunpack.c.l.b16 %v4714
    %v5006 = vunpack.c.h.b16 %v4714
    %v5007 = vunpack.c.l.b16 %v4715
    %v5008 = vunpack.c.h.b16 %v4715
    %v5009 = vunpack.c.l.b16 %v4716
    %v5010 = vunpack.c.h.b16 %v4716
    %v5011 = vunpack.c.l.b16 %v4717
    %v5012 = vunpack.c.h.b16 %v4717
    %v5013 = vunpack.c.l.b16 %v4718
    %v5014 = vunpack.c.h.b16 %v4718
    %v5015 = vunpack.c.l.b16 %v4719
    %v5016 = vunpack.c.h.b16 %v4719
    %v5017 = vunpack.c.l.b16 %v4720
    %v5018 = vunpack.c.h.b16 %v4720
    %v5019 = vunpack.c.l.b16 %v4721
    %v5020 = vunpack.c.h.b16 %v4721
    %v5021 = vunpack.c.l.b16 %v4722
    %v5022 = vunpack.c.h.b16 %v4722
    %v5023 = vunpack.c.l.b16 %v4723
    %v5024 = vunpack.c.h.b16 %v4723
    %v5025 = vunpack.c.l.b16 %v4724
    %v5026 = vunpack.c.h.b16 %v4724
    %v5027 = vunpack.c.l.b16 %v4725
    %v5028 = vunpack.c.h.b16 %v4725
    %v5029 = vunpack.c.l.b16 %v4726
    %v5030 = vunpack.c.h.b16 %v4726
    %v5031 = vunpack.c.l.b16 %v4727
    %v5032 = vunpack.c.h.b16 %v4727
    %v5033 = vunpack.c.l.b16 %v4728
    %v5034 = vunpack.c.h.b16 %v4728
    %v5035 = vunpack.c.l.b16 %v4729
    %v5036 = vunpack.c.h.b16 %v4729
    %v5037 = vunpack.c.l.b16 %v4730
    %v5038 = vunpack.c.h.b16 %v4730
    %v5039 = vunpack.c.l.b16 %v4731
    %v5040 = vunpack.c.h.b16 %v4731
    %v5041 = vunpack.c.l.b16 %v4732
    %v5042 = vunpack.c.h.b16 %v4732
    %v5043 = vunpack.c.l.b16 %v4733
    %v5044 = vunpack.c.h.b16 %v4733
    %v5045 = vunpack.c.l.b16 %v4734
    %v5046 = vunpack.c.h.b16 %v4734
    %v5047 = vunpack.c.l.b16 %v4735
    %v5048 = vunpack.c.h.b16 %v4735
    %v5049 = vunpack.c.l.b16 %v4736
    %v5050 = vunpack.c.h.b16 %v4736
    %v5051 = vunpack.c.l.b16 %v4737
    %v5052 = vunpack.c.h.b16 %v4737
    %v5053 = vunpack.c.l.b16 %v4738
    %v5054 = vunpack.c.h.b16 %v4738
    %v5055 = vunpack.c.l.b16 %v4739
    %v5056 = vunpack.c.h.b16 %v4739
    %v5057 = vunpack.c.l.b16 %v4740
    %v5058 = vunpack.c.h.b16 %v4740
    %v5059 = vunpack.c.l.b16 %v4741
    %v5060 = vunpack.c.h.b16 %v4741
    %v5061 = vunpack.c.l.b16 %v4742
    %v5062 = vunpack.c.h.b16 %v4742
    %v5063 = vunpack.c.l.b16 %v4743
    %v5064 = vunpack.c.h.b16 %v4743
    %v5065 = vunpack.c.l.b16 %v4744
    %v5066 = vunpack.c.h.b16 %v4744
    %v5067 = vunpack.c.l.b16 %v4745
    %v5068 = vunpack.c.h.b16 %v4745
    %v5069 = vunpack.c.l.b16 %v4746
    %v5070 = vunpack.c.h.b16 %v4746
    %v5071 = vunpack.c.l.b16 %v4747
    %v5072 = vunpack.c.h.b16 %v4747
    %v5073 = vunpack.c.l.b16 %v4748
    %v5074 = vunpack.c.h.b16 %v4748
    %v5075 = vunpack.c.l.b16 %v4749
    %v5076 = vunpack.c.h.b16 %v4749
    %v5077 = vunpack.c.l.b16 %v4750
    %v5078 = vunpack.c.h.b16 %v4750
    %v5079 = vunpack.c.l.b16 %v4751
    %v5080 = vunpack.c.h.b16 %v4751
    %v5081 = vunpack.c.l.b16 %v4752
    %v5082 = vunpack.c.h.b16 %v4752
    %v5083 = vunpack.c.l.b16 %v4753
    %v5084 = vunpack.c.h.b16 %v4753
    %v5085 = vunpack.c.l.b16 %v4754
    %v5086 = vunpack.c.h.b16 %v4754
    %v5087 = vunpack.c.l.b16 %v4755
    %v5088 = vunpack.c.h.b16 %v4755
    %v5089 = vunpack.c.l.b16 %v4756
    %v5090 = vunpack.c.h.b16 %v4756
    %v5091 = vunpack.c.l.b16 %v4757
    %v5092 = vunpack.c.h.b16 %v4757
    %v5093 = vunpack.c.l.b16 %v4758
    %v5094 = vunpack.c.h.b16 %v4758
    %v5095 = vunpack.c.l.b16 %v4759
    %v5096 = vunpack.c.h.b16 %v4759
    %v5097 = vunpack.c.l.b16 %v4760
    %v5098 = vunpack.c.h.b16 %v4760
    %v5099 = vunpack.c.l.b16 %v4761
    %v5100 = vunpack.c.h.b16 %v4761
    %v5101 = vunpack.c.l.b16 %v4762
    %v5102 = vunpack.c.h.b16 %v4762
    %v5103 = vunpack.c.l.b16 %v4763
    %v5104 = vunpack.c.h.b16 %v4763
    %v5105 = vunpack.c.l.b16 %v4764
    %v5106 = vunpack.c.h.b16 %v4764
    %v5107 = vunpack.c.l.b16 %v4765
    %v5108 = vunpack.c.h.b16 %v4765
    %v5109 = vunpack.c.l.b16 %v4766
    %v5110 = vunpack.c.h.b16 %v4766
    %v5111 = vunpack.c.l.b16 %v4767
    %v5112 = vunpack.c.h.b16 %v4767
    %v5113 = vunpack.c.l.b16 %v4768
    %v5114 = vunpack.c.h.b16 %v4768
    %v5115 = vunpack.c.l.b16 %v4769
    %v5116 = vunpack.c.h.b16 %v4769
    %v5117 = vunpack.c.l.b16 %v4770
    %v5118 = vunpack.c.h.b16 %v4770
    %v5119 = vunpack.c.l.b16 %v4771
    %v5120 = vunpack.c.h.b16 %v4771
    %v5121 = vunpack.c.l.b16 %v4772
    %v5122 = vunpack.c.h.b16 %v4772
    %v5123 = vunpack.c.l.b16 %v4773
    %v5124 = vunpack.c.h.b16 %v4773
    %v5125 = vunpack.c.l.b16 %v4774
    %v5126 = vunpack.c.h.b16 %v4774
    %v5127 = vunpack.c.l.b16 %v4775
    %v5128 = vunpack.c.h.b16 %v4775
    %v5129 = vunpack.c.l.b16 %v4776
    %v5130 = vunpack.c.h.b16 %v4776
    %v5131 = vunpack.c.l.b16 %v4777
    %v5132 = vunpack.c.h.b16 %v4777
    %v5133 = vunpack.c.l.b16 %v4778
    %v5134 = vunpack.c.h.b16 %v4778
    %v5135 = vunpack.c.l.b16 %v4779
    %v5136 = vunpack.c.h.b16 %v4779
    %v5137 = vunpack.c.l.b16 %v4780
    %v5138 = vunpack.c.h.b16 %v4780
    %v5139 = vunpack.c.l.b16 %v4781
    %v5140 = vunpack.c.h.b16 %v4781
    %v5141 = vunpack.c.l.b16 %v4782
    %v5142 = vunpack.c.h.b16 %v4782
    %v5143 = vunpack.c.l.b16 %v4783
    %v5144 = vunpack.c.h.b16 %v4783
    %v5145 = vunpack.c.l.b16 %v4784
    %v5146 = vunpack.c.h.b16 %v4784
    %v5147 = vunpack.c.l.b16 %v4785
    %v5148 = vunpack.c.h.b16 %v4785
    %v5149 = vunpack.c.l.b16 %v4786
    %v5150 = vunpack.c.h.b16 %v4786
    %v5151 = vunpack.c.l.b16 %v4787
    %v5152 = vunpack.c.h.b16 %v4787
    %v5153 = vunpack.c.l.b16 %v4788
    %v5154 = vunpack.c.h.b16 %v4788
    %v5155 = vunpack.c.l.b16 %v4789
    %v5156 = vunpack.c.h.b16 %v4789
    %v5157 = vunpack.c.l.b16 %v4790
    %v5158 = vunpack.c.h.b16 %v4790
    %v5159 = vunpack.c.l.b16 %v4791
    %v5160 = vunpack.c.h.b16 %v4791
    %v5161 = vunpack.c.l.b16 %v4792
    %v5162 = vunpack.c.h.b16 %v4792
    %v5163 = vunpack.c.l.b16 %v4793
    %v5164 = vunpack.c.h.b16 %v4793
    %v5165 = vunpack.c.l.b16 %v4794
    %v5166 = vunpack.c.h.b16 %v4794
    %v5167 = vunpack.c.l.b16 %v4795
    %v5168 = vunpack.c.h.b16 %v4795
    %v5169 = vunpack.c.l.b16 %v4796
    %v5170 = vunpack.c.h.b16 %v4796
    %v5171 = vunpack.c.l.b16 %v4797
    %v5172 = vunpack.c.h.b16 %v4797
    %v5173 = vunpack.c.l.b16 %v4798
    %v5174 = vunpack.c.h.b16 %v4798
    %v5175 = vunpack.c.l.b16 %v4799
    %v5176 = vunpack.c.h.b16 %v4799
    %v5177 = vunpack.c.l.b16 %v4800
    %v5178 = vunpack.c.h.b16 %v4800
    %v5179 = vunpack.c.l.b16 %v4801
    %v5180 = vunpack.c.h.b16 %v4801
    %v5181 = vunpack.c.l.b16 %v4802
    %v5182 = vunpack.c.h.b16 %v4802
    %v5183 = vunpack.c.l.b16 %v4803
    %v5184 = vunpack.c.h.b16 %v4803
    %v5185 = vunpack.c.l.b16 %v4804
    %v5186 = vunpack.c.h.b16 %v4804
    %v5187 = vunpack.c.l.b16 %v4805
    %v5188 = vunpack.c.h.b16 %v4805
    %v5189 = vunpack.c.l.b16 %v4806
    %v5190 = vunpack.c.h.b16 %v4806
    %v5191 = vunpack.c.l.b16 %v4807
    %v5192 = vunpack.c.h.b16 %v4807
    %v5193 = vunpack.c.l.b16 %v4808
    %v5194 = vunpack.c.h.b16 %v4808
    %v5195 = vunpack.c.l.b16 %v4809
    %v5196 = vunpack.c.h.b16 %v4809
    %v5197 = vunpack.c.l.b16 %v4810
    %v5198 = vunpack.c.h.b16 %v4810
    %v5199 = vpack.c.b16 %v4947, %v4943
    %v5200 = vpack.c.b16 %v4948, %v4944
    %v5201 = vpack.c.b16 %v4949, %v4945
    %v5202 = vpack.c.b16 %v4950, %v4946
    %v5203 = vpack.c.b16 %v4955, %v4951
    %v5204 = vpack.c.b16 %v4956, %v4952
    %v5205 = vpack.c.b16 %v4957, %v4953
    %v5206 = vpack.c.b16 %v4958, %v4954
    %v5207 = vpack.c.b16 %v4963, %v4959
    %v5208 = vpack.c.b16 %v4964, %v4960
    %v5209 = vpack.c.b16 %v4965, %v4961
    %v5210 = vpack.c.b16 %v4966, %v4962
    %v5211 = vpack.c.b16 %v4971, %v4967
    %v5212 = vpack.c.b16 %v4972, %v4968
    %v5213 = vpack.c.b16 %v4973, %v4969
    %v5214 = vpack.c.b16 %v4974, %v4970
    %v5215 = vpack.c.b16 %v4979, %v4975
    %v5216 = vpack.c.b16 %v4980, %v4976
    %v5217 = vpack.c.b16 %v4981, %v4977
    %v5218 = vpack.c.b16 %v4982, %v4978
    %v5219 = vpack.c.b16 %v4987, %v4983
    %v5220 = vpack.c.b16 %v4988, %v4984
    %v5221 = vpack.c.b16 %v4989, %v4985
    %v5222 = vpack.c.b16 %v4990, %v4986
    %v5223 = vpack.c.b16 %v4995, %v4991
    %v5224 = vpack.c.b16 %v4996, %v4992
    %v5225 = vpack.c.b16 %v4997, %v4993
    %v5226 = vpack.c.b16 %v4998, %v4994
    %v5227 = vpack.c.b16 %v5003, %v4999
    %v5228 = vpack.c.b16 %v5004, %v5000
    %v5229 = vpack.c.b16 %v5005, %v5001
    %v5230 = vpack.c.b16 %v5006, %v5002
    %v5231 = vpack.c.b16 %v5011, %v5007
    %v5232 = vpack.c.b16 %v5012, %v5008
    %v5233 = vpack.c.b16 %v5013, %v5009
    %v5234 = vpack.c.b16 %v5014, %v5010
    %v5235 = vpack.c.b16 %v5019, %v5015
    %v5236 = vpack.c.b16 %v5020, %v5016
    %v5237 = vpack.c.b16 %v5021, %v5017
    %v5238 = vpack.c.b16 %v5022, %v5018
    %v5239 = vpack.c.b16 %v5027, %v5023
    %v5240 = vpack.c.b16 %v5028, %v5024
    %v5241 = vpack.c.b16 %v5029, %v5025
    %v5242 = vpack.c.b16 %v5030, %v5026
    %v5243 = vpack.c.b16 %v5035, %v5031
    %v5244 = vpack.c.b16 %v5036, %v5032
    %v5245 = vpack.c.b16 %v5037, %v5033
    %v5246 = vpack.c.b16 %v5038, %v5034
    %v5247 = vpack.c.b16 %v5043, %v5039
    %v5248 = vpack.c.b16 %v5044, %v5040
    %v5249 = vpack.c.b16 %v5045, %v5041
    %v5250 = vpack.c.b16 %v5046, %v5042
    %v5251 = vpack.c.b16 %v5051, %v5047
    %v5252 = vpack.c.b16 %v5052, %v5048
    %v5253 = vpack.c.b16 %v5053, %v5049
    %v5254 = vpack.c.b16 %v5054, %v5050
    %v5255 = vpack.c.b16 %v5059, %v5055
    %v5256 = vpack.c.b16 %v5060, %v5056
    %v5257 = vpack.c.b16 %v5061, %v5057
    %v5258 = vpack.c.b16 %v5062, %v5058
    %v5259 = vpack.c.b16 %v5067, %v5063
    %v5260 = vpack.c.b16 %v5068, %v5064
    %v5261 = vpack.c.b16 %v5069, %v5065
    %v5262 = vpack.c.b16 %v5070, %v5066
    %v5263 = vpack.c.b16 %v5075, %v5071
    %v5264 = vpack.c.b16 %v5076, %v5072
    %v5265 = vpack.c.b16 %v5077, %v5073
    %v5266 = vpack.c.b16 %v5078, %v5074
    %v5267 = vpack.c.b16 %v5083, %v5079
    %v5268 = vpack.c.b16 %v5084, %v5080
    %v5269 = vpack.c.b16 %v5085, %v5081
    %v5270 = vpack.c.b16 %v5086, %v5082
    %v5271 = vpack.c.b16 %v5091, %v5087
    %v5272 = vpack.c.b16 %v5092, %v5088
    %v5273 = vpack.c.b16 %v5093, %v5089
    %v5274 = vpack.c.b16 %v5094, %v5090
    %v5275 = vpack.c.b16 %v5099, %v5095
    %v5276 = vpack.c.b16 %v5100, %v5096
    %v5277 = vpack.c.b16 %v5101, %v5097
    %v5278 = vpack.c.b16 %v5102, %v5098
    %v5279 = vpack.c.b16 %v5107, %v5103
    %v5280 = vpack.c.b16 %v5108, %v5104
    %v5281 = vpack.c.b16 %v5109, %v5105
    %v5282 = vpack.c.b16 %v5110, %v5106
    %v5283 = vpack.c.b16 %v5115, %v5111
    %v5284 = vpack.c.b16 %v5116, %v5112
    %v5285 = vpack.c.b16 %v5117, %v5113
    %v5286 = vpack.c.b16 %v5118, %v5114
    %v5287 = vpack.c.b16 %v5123, %v5119
    %v5288 = vpack.c.b16 %v5124, %v5120
    %v5289 = vpack.c.b16 %v5125, %v5121
    %v5290 = vpack.c.b16 %v5126, %v5122
    %v5291 = vpack.c.b16 %v5131, %v5127
    %v5292 = vpack.c.b16 %v5132, %v5128
    %v5293 = vpack.c.b16 %v5133, %v5129
    %v5294 = vpack.c.b16 %v5134, %v5130
    %v5295 = vpack.c.b16 %v5139, %v5135
    %v5296 = vpack.c.b16 %v5140, %v5136
    %v5297 = vpack.c.b16 %v5141, %v5137
    %v5298 = vpack.c.b16 %v5142, %v5138
    %v5299 = vpack.c.b16 %v5147, %v5143
    %v5300 = vpack.c.b16 %v5148, %v5144
    %v5301 = vpack.c.b16 %v5149, %v5145
    %v5302 = vpack.c.b16 %v5150, %v5146
    %v5303 = vpack.c.b16 %v5155, %v5151
    %v5304 = vpack.c.b16 %v5156, %v5152
    %v5305 = vpack.c.b16 %v5157, %v5153
    %v5306 = vpack.c.b16 %v5158, %v5154
    %v5307 = vpack.c.b16 %v5163, %v5159
    %v5308 = vpack.c.b16 %v5164, %v5160
    %v5309 = vpack.c.b16 %v5165, %v5161
    %v5310 = vpack.c.b16 %v5166, %v5162
    %v5311 = vpack.c.b16 %v5171, %v5167
    %v5312 = vpack.c.b16 %v5172, %v5168
    %v5313 = vpack.c.b16 %v5173, %v5169
    %v5314 = vpack.c.b16 %v5174, %v5170
    %v5315 = vpack.c.b16 %v5179, %v5175
    %v5316 = vpack.c.b16 %v5180, %v5176
    %v5317 = vpack.c.b16 %v5181, %v5177
    %v5318 = vpack.c.b16 %v5182, %v5178
    %v5319 = vpack.c.b16 %v5187, %v5183
    %v5320 = vpack.c.b16 %v5188, %v5184
    %v5321 = vpack.c.b16 %v5189, %v5185
    %v5322 = vpack.c.b16 %v5190, %v5186
    %v5323 = vpack.c.b16 %v5195, %v5191
    %v5324 = vpack.c.b16 %v5196, %v5192
    %v5325 = vpack.c.b16 %v5197, %v5193
    %v5326 = vpack.c.b16 %v5198, %v5194
    %5455 = vmatpush.bf16.msra.mxu0 %v5227
    %5456 = vmatpush.bf16.msra.mxu0 %v5223
    %5457 = vmatpush.bf16.msra.mxu0 %v5219
    %5458 = vmatpush.bf16.msra.mxu0 %v5215
    %5459 = vmatpush.bf16.msra.mxu0 %v5211
    %5460 = vmatpush.bf16.msra.mxu0 %v5207
    %5461 = vmatpush.bf16.msra.mxu0 %v5203
    %5462 = vmatpush.bf16.msra.mxu0 %v5199
    %5463 = vmatmul.bf16.gmra.mxu0 %v4811
    %v5464 = vpop.f32.mrf.mxu0
    %v5465 = vadd.f32 0.0, %v5464
    %v5466 = vpop.f32.mrf.mxu0
    %5467 = vdwg.mxu0
    %5468 = vmatpush.bf16.msra.mxu0 %v5259
    %5469 = vmatpush.bf16.msra.mxu0 %v5255
    %5470 = vmatpush.bf16.msra.mxu0 %v5251
    %5471 = vmatpush.bf16.msra.mxu0 %v5247
    %5472 = vmatpush.bf16.msra.mxu0 %v5243
    %5473 = vmatpush.bf16.msra.mxu0 %v5239
    %5474 = vmatpush.bf16.msra.mxu0 %v5235
    %5475 = vmatpush.bf16.msra.mxu0 %v5231
    %5476 = vmatmul.bf16.gmra.mxu0 %v4812
    %v5477 = vpop.f32.mrf.mxu0
    %v5478 = vadd.f32 %v5465, %v5477
    %v5479 = vpop.f32.mrf.mxu0
    %5480 = vdwg.mxu0
    %5481 = vmatpush.bf16.msra.mxu0 %v5291
    %5482 = vmatpush.bf16.msra.mxu0 %v5287
    %5483 = vmatpush.bf16.msra.mxu0 %v5283
    %5484 = vmatpush.bf16.msra.mxu0 %v5279
    %5485 = vmatpush.bf16.msra.mxu0 %v5275
    %5486 = vmatpush.bf16.msra.mxu0 %v5271
    %5487 = vmatpush.bf16.msra.mxu0 %v5267
    %5488 = vmatpush.bf16.msra.mxu0 %v5263
    %5489 = vmatmul.bf16.gmra.mxu0 %v4813
    %v5490 = vpop.f32.mrf.mxu0
    %v5491 = vadd.f32 %v5478, %v5490
    %v5492 = vpop.f32.mrf.mxu0
    %5493 = vdwg.mxu0
    %5494 = vmatpush.bf16.msra.mxu0 %v5323
    %5495 = vmatpush.bf16.msra.mxu0 %v5319
    %5496 = vmatpush.bf16.msra.mxu0 %v5315
    %5497 = vmatpush.bf16.msra.mxu0 %v5311
    %5498 = vmatpush.bf16.msra.mxu0 %v5307
    %5499 = vmatpush.bf16.msra.mxu0 %v5303
    %5500 = vmatpush.bf16.msra.mxu0 %v5299
    %5501 = vmatpush.bf16.msra.mxu0 %v5295
    %5502 = vmatmul.bf16.gmra.mxu0 %v4814
    %v5503 = vpop.f32.mrf.mxu0
    %v5504 = vadd.f32 %v5491, %v5503
    %v5505 = vpop.f32.mrf.mxu0
    %5506 = vdwg.mxu0
    %5507 = vmatpush.bf16.msra.mxu0 %v5228
    %5508 = vmatpush.bf16.msra.mxu0 %v5224
    %5509 = vmatpush.bf16.msra.mxu0 %v5220
    %5510 = vmatpush.bf16.msra.mxu0 %v5216
    %5511 = vmatpush.bf16.msra.mxu0 %v5212
    %5512 = vmatpush.bf16.msra.mxu0 %v5208
    %5513 = vmatpush.bf16.msra.mxu0 %v5204
    %5514 = vmatpush.bf16.msra.mxu0 %v5200
    %5515 = vmatmul.bf16.gmra.mxu0 %v4811
    %v5516 = vpop.f32.mrf.mxu0
    %v5517 = vadd.f32 0.0, %v5516
    %v5518 = vpop.f32.mrf.mxu0
    %5519 = vdwg.mxu0
    %5520 = vmatpush.bf16.msra.mxu0 %v5260
    %5521 = vmatpush.bf16.msra.mxu0 %v5256
    %5522 = vmatpush.bf16.msra.mxu0 %v5252
    %5523 = vmatpush.bf16.msra.mxu0 %v5248
    %5524 = vmatpush.bf16.msra.mxu0 %v5244
    %5525 = vmatpush.bf16.msra.mxu0 %v5240
    %5526 = vmatpush.bf16.msra.mxu0 %v5236
    %5527 = vmatpush.bf16.msra.mxu0 %v5232
    %5528 = vmatmul.bf16.gmra.mxu0 %v4812
    %v5529 = vpop.f32.mrf.mxu0
    %v5530 = vadd.f32 %v5517, %v5529
    %v5531 = vpop.f32.mrf.mxu0
    %5532 = vdwg.mxu0
    %5533 = vmatpush.bf16.msra.mxu0 %v5292
    %5534 = vmatpush.bf16.msra.mxu0 %v5288
    %5535 = vmatpush.bf16.msra.mxu0 %v5284
    %5536 = vmatpush.bf16.msra.mxu0 %v5280
    %5537 = vmatpush.bf16.msra.mxu0 %v5276
    %5538 = vmatpush.bf16.msra.mxu0 %v5272
    %5539 = vmatpush.bf16.msra.mxu0 %v5268
    %5540 = vmatpush.bf16.msra.mxu0 %v5264
    %5541 = vmatmul.bf16.gmra.mxu0 %v4813
    %v5542 = vpop.f32.mrf.mxu0
    %v5543 = vadd.f32 %v5530, %v5542
    %v5544 = vpop.f32.mrf.mxu0
    %5545 = vdwg.mxu0
    %5546 = vmatpush.bf16.msra.mxu0 %v5324
    %5547 = vmatpush.bf16.msra.mxu0 %v5320
    %5548 = vmatpush.bf16.msra.mxu0 %v5316
    %5549 = vmatpush.bf16.msra.mxu0 %v5312
    %5550 = vmatpush.bf16.msra.mxu0 %v5308
    %5551 = vmatpush.bf16.msra.mxu0 %v5304
    %5552 = vmatpush.bf16.msra.mxu0 %v5300
    %5553 = vmatpush.bf16.msra.mxu0 %v5296
    %5554 = vmatmul.bf16.gmra.mxu0 %v4814
    %v5555 = vpop.f32.mrf.mxu0
    %v5556 = vadd.f32 %v5543, %v5555
    %v5557 = vpop.f32.mrf.mxu0
    %5558 = vdwg.mxu0
    %5559 = vmatpush.bf16.msra.mxu0 %v5229
    %5560 = vmatpush.bf16.msra.mxu0 %v5225
    %5561 = vmatpush.bf16.msra.mxu0 %v5221
    %5562 = vmatpush.bf16.msra.mxu0 %v5217
    %5563 = vmatpush.bf16.msra.mxu0 %v5213
    %5564 = vmatpush.bf16.msra.mxu0 %v5209
    %5565 = vmatpush.bf16.msra.mxu0 %v5205
    %5566 = vmatpush.bf16.msra.mxu0 %v5201
    %5567 = vmatmul.bf16.gmra.mxu0 %v4811
    %v5568 = vpop.f32.mrf.mxu0
    %v5569 = vadd.f32 0.0, %v5568
    %v5570 = vpop.f32.mrf.mxu0
    %5571 = vdwg.mxu0
    %5572 = vmatpush.bf16.msra.mxu0 %v5261
    %5573 = vmatpush.bf16.msra.mxu0 %v5257
    %5574 = vmatpush.bf16.msra.mxu0 %v5253
    %5575 = vmatpush.bf16.msra.mxu0 %v5249
    %5576 = vmatpush.bf16.msra.mxu0 %v5245
    %5577 = vmatpush.bf16.msra.mxu0 %v5241
    %5578 = vmatpush.bf16.msra.mxu0 %v5237
    %5579 = vmatpush.bf16.msra.mxu0 %v5233
    %5580 = vmatmul.bf16.gmra.mxu0 %v4812
    %v5581 = vpop.f32.mrf.mxu0
    %v5582 = vadd.f32 %v5569, %v5581
    %v5583 = vpop.f32.mrf.mxu0
    %5584 = vdwg.mxu0
    %5585 = vmatpush.bf16.msra.mxu0 %v5293
    %5586 = vmatpush.bf16.msra.mxu0 %v5289
    %5587 = vmatpush.bf16.msra.mxu0 %v5285
    %5588 = vmatpush.bf16.msra.mxu0 %v5281
    %5589 = vmatpush.bf16.msra.mxu0 %v5277
    %5590 = vmatpush.bf16.msra.mxu0 %v5273
    %5591 = vmatpush.bf16.msra.mxu0 %v5269
    %5592 = vmatpush.bf16.msra.mxu0 %v5265
    %5593 = vmatmul.bf16.gmra.mxu0 %v4813
    %v5594 = vpop.f32.mrf.mxu0
    %v5595 = vadd.f32 %v5582, %v5594
    %v5596 = vpop.f32.mrf.mxu0
    %5597 = vdwg.mxu0
    %5598 = vmatpush.bf16.msra.mxu0 %v5325
    %5599 = vmatpush.bf16.msra.mxu0 %v5321
    %5600 = vmatpush.bf16.msra.mxu0 %v5317
    %5601 = vmatpush.bf16.msra.mxu0 %v5313
    %5602 = vmatpush.bf16.msra.mxu0 %v5309
    %5603 = vmatpush.bf16.msra.mxu0 %v5305
    %5604 = vmatpush.bf16.msra.mxu0 %v5301
    %5605 = vmatpush.bf16.msra.mxu0 %v5297
    %5606 = vmatmul.bf16.gmra.mxu0 %v4814
    %v5607 = vpop.f32.mrf.mxu0
    %v5608 = vadd.f32 %v5595, %v5607
    %v5609 = vpop.f32.mrf.mxu0
    %5610 = vdwg.mxu0
    %5611 = vmatpush.bf16.msra.mxu0 %v5230
    %5612 = vmatpush.bf16.msra.mxu0 %v5226
    %5613 = vmatpush.bf16.msra.mxu0 %v5222
    %5614 = vmatpush.bf16.msra.mxu0 %v5218
    %5615 = vmatpush.bf16.msra.mxu0 %v5214
    %5616 = vmatpush.bf16.msra.mxu0 %v5210
    %5617 = vmatpush.bf16.msra.mxu0 %v5206
    %5618 = vmatpush.bf16.msra.mxu0 %v5202
    %5619 = vmatmul.bf16.gmra.mxu0 %v4811
    %v5620 = vpop.f32.mrf.mxu0
    %v5621 = vadd.f32 0.0, %v5620
    %v5622 = vpop.f32.mrf.mxu0
    %5623 = vdwg.mxu0
    %5624 = vmatpush.bf16.msra.mxu0 %v5262
    %5625 = vmatpush.bf16.msra.mxu0 %v5258
    %5626 = vmatpush.bf16.msra.mxu0 %v5254
    %5627 = vmatpush.bf16.msra.mxu0 %v5250
    %5628 = vmatpush.bf16.msra.mxu0 %v5246
    %5629 = vmatpush.bf16.msra.mxu0 %v5242
    %5630 = vmatpush.bf16.msra.mxu0 %v5238
    %5631 = vmatpush.bf16.msra.mxu0 %v5234
    %5632 = vmatmul.bf16.gmra.mxu0 %v4812
    %v5633 = vpop.f32.mrf.mxu0
    %v5634 = vadd.f32 %v5621, %v5633
    %v5635 = vpop.f32.mrf.mxu0
    %5636 = vdwg.mxu0
    %5637 = vmatpush.bf16.msra.mxu0 %v5294
    %5638 = vmatpush.bf16.msra.mxu0 %v5290
    %5639 = vmatpush.bf16.msra.mxu0 %v5286
    %5640 = vmatpush.bf16.msra.mxu0 %v5282
    %5641 = vmatpush.bf16.msra.mxu0 %v5278
    %5642 = vmatpush.bf16.msra.mxu0 %v5274
    %5643 = vmatpush.bf16.msra.mxu0 %v5270
    %5644 = vmatpush.bf16.msra.mxu0 %v5266
    %5645 = vmatmul.bf16.gmra.mxu0 %v4813
    %v5646 = vpop.f32.mrf.mxu0
    %v5647 = vadd.f32 %v5634, %v5646
    %v5648 = vpop.f32.mrf.mxu0
    %5649 = vdwg.mxu0
    %5650 = vmatpush.bf16.msra.mxu0 %v5326
    %5651 = vmatpush.bf16.msra.mxu0 %v5322
    %5652 = vmatpush.bf16.msra.mxu0 %v5318
    %5653 = vmatpush.bf16.msra.mxu0 %v5314
    %5654 = vmatpush.bf16.msra.mxu0 %v5310
    %5655 = vmatpush.bf16.msra.mxu0 %v5306
    %5656 = vmatpush.bf16.msra.mxu0 %v5302
    %5657 = vmatpush.bf16.msra.mxu0 %v5298
    %5658 = vmatmul.bf16.gmra.mxu0 %v4814
    %v5659 = vpop.f32.mrf.mxu0
    %v5660 = vadd.f32 %v5647, %v5659
    %v5661 = vpop.f32.mrf.mxu0
    %5662 = vdwg.mxu0
    %v5663 = vmax.f32 %v5504, 0.0
    %v5664 = vmax.f32 %v5556, 0.0
    %v5665 = vmax.f32 %v5608, 0.0
    %v5666 = vmax.f32 %v5660, 0.0
    %s5667 = scalar_lea.vmem [#allocation8], 2048
    %v5668 = vld [vmem:[%s5667] sm:$0xff]
    %v5669 = vld [vmem:[%s5667 + $0x8] sm:$0xff]
    %v5670 = vld [vmem:[%s5667 + $0x10] sm:$0xff]
    %v5671 = vld [vmem:[%s5667 + $0x18] sm:$0xff]
    %v5672 = vld [vmem:[%s5667 + $0x20] sm:$0xff]
    %v5673 = vld [vmem:[%s5667 + $0x28] sm:$0xff]
    %v5674 = vld [vmem:[%s5667 + $0x30] sm:$0xff]
    %v5675 = vld [vmem:[%s5667 + $0x38] sm:$0xff]
    %v5676 = vld [vmem:[%s5667 + $0x40] sm:$0xff]
    %v5677 = vld [vmem:[%s5667 + $0x48] sm:$0xff]
    %v5678 = vld [vmem:[%s5667 + $0x50] sm:$0xff]
    %v5679 = vld [vmem:[%s5667 + $0x58] sm:$0xff]
    %v5680 = vld [vmem:[%s5667 + $0x60] sm:$0xff]
    %v5681 = vld [vmem:[%s5667 + $0x68] sm:$0xff]
    %v5682 = vld [vmem:[%s5667 + $0x70] sm:$0xff]
    %v5683 = vld [vmem:[%s5667 + $0x78] sm:$0xff]
    %v5684 = vld [vmem:[%s5667 + $0x80] sm:$0xff]
    %v5685 = vld [vmem:[%s5667 + $0x88] sm:$0xff]
    %v5686 = vld [vmem:[%s5667 + $0x90] sm:$0xff]
    %v5687 = vld [vmem:[%s5667 + $0x98] sm:$0xff]
    %v5688 = vld [vmem:[%s5667 + $0xa0] sm:$0xff]
    %v5689 = vld [vmem:[%s5667 + $0xa8] sm:$0xff]
    %v5690 = vld [vmem:[%s5667 + $0xb0] sm:$0xff]
    %v5691 = vld [vmem:[%s5667 + $0xb8] sm:$0xff]
    %v5692 = vld [vmem:[%s5667 + $0xc0] sm:$0xff]
    %v5693 = vld [vmem:[%s5667 + $0xc8] sm:$0xff]
    %v5694 = vld [vmem:[%s5667 + $0xd0] sm:$0xff]
    %v5695 = vld [vmem:[%s5667 + $0xd8] sm:$0xff]
    %v5696 = vld [vmem:[%s5667 + $0xe0] sm:$0xff]
    %v5697 = vld [vmem:[%s5667 + $0xe8] sm:$0xff]
    %v5698 = vld [vmem:[%s5667 + $0xf0] sm:$0xff]
    %v5699 = vld [vmem:[%s5667 + $0xf8] sm:$0xff]
    %v5700 = vld [vmem:[%s5667 + $0x100] sm:$0xff]
    %v5701 = vld [vmem:[%s5667 + $0x108] sm:$0xff]
    %v5702 = vld [vmem:[%s5667 + $0x110] sm:$0xff]
    %v5703 = vld [vmem:[%s5667 + $0x118] sm:$0xff]
    %v5704 = vld [vmem:[%s5667 + $0x120] sm:$0xff]
    %v5705 = vld [vmem:[%s5667 + $0x128] sm:$0xff]
    %v5706 = vld [vmem:[%s5667 + $0x130] sm:$0xff]
    %v5707 = vld [vmem:[%s5667 + $0x138] sm:$0xff]
    %v5708 = vld [vmem:[%s5667 + $0x140] sm:$0xff]
    %v5709 = vld [vmem:[%s5667 + $0x148] sm:$0xff]
    %v5710 = vld [vmem:[%s5667 + $0x150] sm:$0xff]
    %v5711 = vld [vmem:[%s5667 + $0x158] sm:$0xff]
    %v5712 = vld [vmem:[%s5667 + $0x160] sm:$0xff]
    %v5713 = vld [vmem:[%s5667 + $0x168] sm:$0xff]
    %v5714 = vld [vmem:[%s5667 + $0x170] sm:$0xff]
    %v5715 = vld [vmem:[%s5667 + $0x178] sm:$0xff]
    %v5716 = vld [vmem:[%s5667 + $0x180] sm:$0xff]
    %v5717 = vld [vmem:[%s5667 + $0x188] sm:$0xff]
    %v5718 = vld [vmem:[%s5667 + $0x190] sm:$0xff]
    %v5719 = vld [vmem:[%s5667 + $0x198] sm:$0xff]
    %v5720 = vld [vmem:[%s5667 + $0x1a0] sm:$0xff]
    %v5721 = vld [vmem:[%s5667 + $0x1a8] sm:$0xff]
    %v5722 = vld [vmem:[%s5667 + $0x1b0] sm:$0xff]
    %v5723 = vld [vmem:[%s5667 + $0x1b8] sm:$0xff]
    %v5724 = vld [vmem:[%s5667 + $0x1c0] sm:$0xff]
    %v5725 = vld [vmem:[%s5667 + $0x1c8] sm:$0xff]
    %v5726 = vld [vmem:[%s5667 + $0x1d0] sm:$0xff]
    %v5727 = vld [vmem:[%s5667 + $0x1d8] sm:$0xff]
    %v5728 = vld [vmem:[%s5667 + $0x1e0] sm:$0xff]
    %v5729 = vld [vmem:[%s5667 + $0x1e8] sm:$0xff]
    %v5730 = vld [vmem:[%s5667 + $0x1f0] sm:$0xff]
    %v5731 = vld [vmem:[%s5667 + $0x1f8] sm:$0xff]
    %v5732 = vld [vmem:[%s5667 + $0x200] sm:$0xff]
    %v5733 = vld [vmem:[%s5667 + $0x208] sm:$0xff]
    %v5734 = vld [vmem:[%s5667 + $0x210] sm:$0xff]
    %v5735 = vld [vmem:[%s5667 + $0x218] sm:$0xff]
    %v5736 = vld [vmem:[%s5667 + $0x220] sm:$0xff]
    %v5737 = vld [vmem:[%s5667 + $0x228] sm:$0xff]
    %v5738 = vld [vmem:[%s5667 + $0x230] sm:$0xff]
    %v5739 = vld [vmem:[%s5667 + $0x238] sm:$0xff]
    %v5740 = vld [vmem:[%s5667 + $0x240] sm:$0xff]
    %v5741 = vld [vmem:[%s5667 + $0x248] sm:$0xff]
    %v5742 = vld [vmem:[%s5667 + $0x250] sm:$0xff]
    %v5743 = vld [vmem:[%s5667 + $0x258] sm:$0xff]
    %v5744 = vld [vmem:[%s5667 + $0x260] sm:$0xff]
    %v5745 = vld [vmem:[%s5667 + $0x268] sm:$0xff]
    %v5746 = vld [vmem:[%s5667 + $0x270] sm:$0xff]
    %v5747 = vld [vmem:[%s5667 + $0x278] sm:$0xff]
    %v5748 = vld [vmem:[%s5667 + $0x280] sm:$0xff]
    %v5749 = vld [vmem:[%s5667 + $0x288] sm:$0xff]
    %v5750 = vld [vmem:[%s5667 + $0x290] sm:$0xff]
    %v5751 = vld [vmem:[%s5667 + $0x298] sm:$0xff]
    %v5752 = vld [vmem:[%s5667 + $0x2a0] sm:$0xff]
    %v5753 = vld [vmem:[%s5667 + $0x2a8] sm:$0xff]
    %v5754 = vld [vmem:[%s5667 + $0x2b0] sm:$0xff]
    %v5755 = vld [vmem:[%s5667 + $0x2b8] sm:$0xff]
    %v5756 = vld [vmem:[%s5667 + $0x2c0] sm:$0xff]
    %v5757 = vld [vmem:[%s5667 + $0x2c8] sm:$0xff]
    %v5758 = vld [vmem:[%s5667 + $0x2d0] sm:$0xff]
    %v5759 = vld [vmem:[%s5667 + $0x2d8] sm:$0xff]
    %v5760 = vld [vmem:[%s5667 + $0x2e0] sm:$0xff]
    %v5761 = vld [vmem:[%s5667 + $0x2e8] sm:$0xff]
    %v5762 = vld [vmem:[%s5667 + $0x2f0] sm:$0xff]
    %v5763 = vld [vmem:[%s5667 + $0x2f8] sm:$0xff]
    %v5764 = vld [vmem:[%s5667 + $0x300] sm:$0xff]
    %v5765 = vld [vmem:[%s5667 + $0x308] sm:$0xff]
    %v5766 = vld [vmem:[%s5667 + $0x310] sm:$0xff]
    %v5767 = vld [vmem:[%s5667 + $0x318] sm:$0xff]
    %v5768 = vld [vmem:[%s5667 + $0x320] sm:$0xff]
    %v5769 = vld [vmem:[%s5667 + $0x328] sm:$0xff]
    %v5770 = vld [vmem:[%s5667 + $0x330] sm:$0xff]
    %v5771 = vld [vmem:[%s5667 + $0x338] sm:$0xff]
    %v5772 = vld [vmem:[%s5667 + $0x340] sm:$0xff]
    %v5773 = vld [vmem:[%s5667 + $0x348] sm:$0xff]
    %v5774 = vld [vmem:[%s5667 + $0x350] sm:$0xff]
    %v5775 = vld [vmem:[%s5667 + $0x358] sm:$0xff]
    %v5776 = vld [vmem:[%s5667 + $0x360] sm:$0xff]
    %v5777 = vld [vmem:[%s5667 + $0x368] sm:$0xff]
    %v5778 = vld [vmem:[%s5667 + $0x370] sm:$0xff]
    %v5779 = vld [vmem:[%s5667 + $0x378] sm:$0xff]
    %v5780 = vld [vmem:[%s5667 + $0x380] sm:$0xff]
    %v5781 = vld [vmem:[%s5667 + $0x388] sm:$0xff]
    %v5782 = vld [vmem:[%s5667 + $0x390] sm:$0xff]
    %v5783 = vld [vmem:[%s5667 + $0x398] sm:$0xff]
    %v5784 = vld [vmem:[%s5667 + $0x3a0] sm:$0xff]
    %v5785 = vld [vmem:[%s5667 + $0x3a8] sm:$0xff]
    %v5786 = vld [vmem:[%s5667 + $0x3b0] sm:$0xff]
    %v5787 = vld [vmem:[%s5667 + $0x3b8] sm:$0xff]
    %v5788 = vld [vmem:[%s5667 + $0x3c0] sm:$0xff]
    %v5789 = vld [vmem:[%s5667 + $0x3c8] sm:$0xff]
    %v5790 = vld [vmem:[%s5667 + $0x3d0] sm:$0xff]
    %v5791 = vld [vmem:[%s5667 + $0x3d8] sm:$0xff]
    %v5792 = vld [vmem:[%s5667 + $0x3e0] sm:$0xff]
    %v5793 = vld [vmem:[%s5667 + $0x3e8] sm:$0xff]
    %v5794 = vld [vmem:[%s5667 + $0x3f0] sm:$0xff]
    %v5795 = vld [vmem:[%s5667 + $0x3f8] sm:$0xff]
    %v5796 = vpack.c.bf16 %v5663, %v5663
    %v5797 = vpack.c.bf16 %v5664, %v5664
    %v5798 = vpack.c.bf16 %v5665, %v5665
    %v5799 = vpack.c.bf16 %v5666, %v5666
    %v5928 = vunpack.c.l.b16 %v5668
    %v5929 = vunpack.c.h.b16 %v5668
    %v5930 = vunpack.c.l.b16 %v5669
    %v5931 = vunpack.c.h.b16 %v5669
    %v5932 = vunpack.c.l.b16 %v5670
    %v5933 = vunpack.c.h.b16 %v5670
    %v5934 = vunpack.c.l.b16 %v5671
    %v5935 = vunpack.c.h.b16 %v5671
    %v5936 = vunpack.c.l.b16 %v5672
    %v5937 = vunpack.c.h.b16 %v5672
    %v5938 = vunpack.c.l.b16 %v5673
    %v5939 = vunpack.c.h.b16 %v5673
    %v5940 = vunpack.c.l.b16 %v5674
    %v5941 = vunpack.c.h.b16 %v5674
    %v5942 = vunpack.c.l.b16 %v5675
    %v5943 = vunpack.c.h.b16 %v5675
    %v5944 = vunpack.c.l.b16 %v5676
    %v5945 = vunpack.c.h.b16 %v5676
    %v5946 = vunpack.c.l.b16 %v5677
    %v5947 = vunpack.c.h.b16 %v5677
    %v5948 = vunpack.c.l.b16 %v5678
    %v5949 = vunpack.c.h.b16 %v5678
    %v5950 = vunpack.c.l.b16 %v5679
    %v5951 = vunpack.c.h.b16 %v5679
    %v5952 = vunpack.c.l.b16 %v5680
    %v5953 = vunpack.c.h.b16 %v5680
    %v5954 = vunpack.c.l.b16 %v5681
    %v5955 = vunpack.c.h.b16 %v5681
    %v5956 = vunpack.c.l.b16 %v5682
    %v5957 = vunpack.c.h.b16 %v5682
    %v5958 = vunpack.c.l.b16 %v5683
    %v5959 = vunpack.c.h.b16 %v5683
    %v5960 = vunpack.c.l.b16 %v5684
    %v5961 = vunpack.c.h.b16 %v5684
    %v5962 = vunpack.c.l.b16 %v5685
    %v5963 = vunpack.c.h.b16 %v5685
    %v5964 = vunpack.c.l.b16 %v5686
    %v5965 = vunpack.c.h.b16 %v5686
    %v5966 = vunpack.c.l.b16 %v5687
    %v5967 = vunpack.c.h.b16 %v5687
    %v5968 = vunpack.c.l.b16 %v5688
    %v5969 = vunpack.c.h.b16 %v5688
    %v5970 = vunpack.c.l.b16 %v5689
    %v5971 = vunpack.c.h.b16 %v5689
    %v5972 = vunpack.c.l.b16 %v5690
    %v5973 = vunpack.c.h.b16 %v5690
    %v5974 = vunpack.c.l.b16 %v5691
    %v5975 = vunpack.c.h.b16 %v5691
    %v5976 = vunpack.c.l.b16 %v5692
    %v5977 = vunpack.c.h.b16 %v5692
    %v5978 = vunpack.c.l.b16 %v5693
    %v5979 = vunpack.c.h.b16 %v5693
    %v5980 = vunpack.c.l.b16 %v5694
    %v5981 = vunpack.c.h.b16 %v5694
    %v5982 = vunpack.c.l.b16 %v5695
    %v5983 = vunpack.c.h.b16 %v5695
    %v5984 = vunpack.c.l.b16 %v5696
    %v5985 = vunpack.c.h.b16 %v5696
    %v5986 = vunpack.c.l.b16 %v5697
    %v5987 = vunpack.c.h.b16 %v5697
    %v5988 = vunpack.c.l.b16 %v5698
    %v5989 = vunpack.c.h.b16 %v5698
    %v5990 = vunpack.c.l.b16 %v5699
    %v5991 = vunpack.c.h.b16 %v5699
    %v5992 = vunpack.c.l.b16 %v5700
    %v5993 = vunpack.c.h.b16 %v5700
    %v5994 = vunpack.c.l.b16 %v5701
    %v5995 = vunpack.c.h.b16 %v5701
    %v5996 = vunpack.c.l.b16 %v5702
    %v5997 = vunpack.c.h.b16 %v5702
    %v5998 = vunpack.c.l.b16 %v5703
    %v5999 = vunpack.c.h.b16 %v5703
    %v6000 = vunpack.c.l.b16 %v5704
    %v6001 = vunpack.c.h.b16 %v5704
    %v6002 = vunpack.c.l.b16 %v5705
    %v6003 = vunpack.c.h.b16 %v5705
    %v6004 = vunpack.c.l.b16 %v5706
    %v6005 = vunpack.c.h.b16 %v5706
    %v6006 = vunpack.c.l.b16 %v5707
    %v6007 = vunpack.c.h.b16 %v5707
    %v6008 = vunpack.c.l.b16 %v5708
    %v6009 = vunpack.c.h.b16 %v5708
    %v6010 = vunpack.c.l.b16 %v5709
    %v6011 = vunpack.c.h.b16 %v5709
    %v6012 = vunpack.c.l.b16 %v5710
    %v6013 = vunpack.c.h.b16 %v5710
    %v6014 = vunpack.c.l.b16 %v5711
    %v6015 = vunpack.c.h.b16 %v5711
    %v6016 = vunpack.c.l.b16 %v5712
    %v6017 = vunpack.c.h.b16 %v5712
    %v6018 = vunpack.c.l.b16 %v5713
    %v6019 = vunpack.c.h.b16 %v5713
    %v6020 = vunpack.c.l.b16 %v5714
    %v6021 = vunpack.c.h.b16 %v5714
    %v6022 = vunpack.c.l.b16 %v5715
    %v6023 = vunpack.c.h.b16 %v5715
    %v6024 = vunpack.c.l.b16 %v5716
    %v6025 = vunpack.c.h.b16 %v5716
    %v6026 = vunpack.c.l.b16 %v5717
    %v6027 = vunpack.c.h.b16 %v5717
    %v6028 = vunpack.c.l.b16 %v5718
    %v6029 = vunpack.c.h.b16 %v5718
    %v6030 = vunpack.c.l.b16 %v5719
    %v6031 = vunpack.c.h.b16 %v5719
    %v6032 = vunpack.c.l.b16 %v5720
    %v6033 = vunpack.c.h.b16 %v5720
    %v6034 = vunpack.c.l.b16 %v5721
    %v6035 = vunpack.c.h.b16 %v5721
    %v6036 = vunpack.c.l.b16 %v5722
    %v6037 = vunpack.c.h.b16 %v5722
    %v6038 = vunpack.c.l.b16 %v5723
    %v6039 = vunpack.c.h.b16 %v5723
    %v6040 = vunpack.c.l.b16 %v5724
    %v6041 = vunpack.c.h.b16 %v5724
    %v6042 = vunpack.c.l.b16 %v5725
    %v6043 = vunpack.c.h.b16 %v5725
    %v6044 = vunpack.c.l.b16 %v5726
    %v6045 = vunpack.c.h.b16 %v5726
    %v6046 = vunpack.c.l.b16 %v5727
    %v6047 = vunpack.c.h.b16 %v5727
    %v6048 = vunpack.c.l.b16 %v5728
    %v6049 = vunpack.c.h.b16 %v5728
    %v6050 = vunpack.c.l.b16 %v5729
    %v6051 = vunpack.c.h.b16 %v5729
    %v6052 = vunpack.c.l.b16 %v5730
    %v6053 = vunpack.c.h.b16 %v5730
    %v6054 = vunpack.c.l.b16 %v5731
    %v6055 = vunpack.c.h.b16 %v5731
    %v6056 = vunpack.c.l.b16 %v5732
    %v6057 = vunpack.c.h.b16 %v5732
    %v6058 = vunpack.c.l.b16 %v5733
    %v6059 = vunpack.c.h.b16 %v5733
    %v6060 = vunpack.c.l.b16 %v5734
    %v6061 = vunpack.c.h.b16 %v5734
    %v6062 = vunpack.c.l.b16 %v5735
    %v6063 = vunpack.c.h.b16 %v5735
    %v6064 = vunpack.c.l.b16 %v5736
    %v6065 = vunpack.c.h.b16 %v5736
    %v6066 = vunpack.c.l.b16 %v5737
    %v6067 = vunpack.c.h.b16 %v5737
    %v6068 = vunpack.c.l.b16 %v5738
    %v6069 = vunpack.c.h.b16 %v5738
    %v6070 = vunpack.c.l.b16 %v5739
    %v6071 = vunpack.c.h.b16 %v5739
    %v6072 = vunpack.c.l.b16 %v5740
    %v6073 = vunpack.c.h.b16 %v5740
    %v6074 = vunpack.c.l.b16 %v5741
    %v6075 = vunpack.c.h.b16 %v5741
    %v6076 = vunpack.c.l.b16 %v5742
    %v6077 = vunpack.c.h.b16 %v5742
    %v6078 = vunpack.c.l.b16 %v5743
    %v6079 = vunpack.c.h.b16 %v5743
    %v6080 = vunpack.c.l.b16 %v5744
    %v6081 = vunpack.c.h.b16 %v5744
    %v6082 = vunpack.c.l.b16 %v5745
    %v6083 = vunpack.c.h.b16 %v5745
    %v6084 = vunpack.c.l.b16 %v5746
    %v6085 = vunpack.c.h.b16 %v5746
    %v6086 = vunpack.c.l.b16 %v5747
    %v6087 = vunpack.c.h.b16 %v5747
    %v6088 = vunpack.c.l.b16 %v5748
    %v6089 = vunpack.c.h.b16 %v5748
    %v6090 = vunpack.c.l.b16 %v5749
    %v6091 = vunpack.c.h.b16 %v5749
    %v6092 = vunpack.c.l.b16 %v5750
    %v6093 = vunpack.c.h.b16 %v5750
    %v6094 = vunpack.c.l.b16 %v5751
    %v6095 = vunpack.c.h.b16 %v5751
    %v6096 = vunpack.c.l.b16 %v5752
    %v6097 = vunpack.c.h.b16 %v5752
    %v6098 = vunpack.c.l.b16 %v5753
    %v6099 = vunpack.c.h.b16 %v5753
    %v6100 = vunpack.c.l.b16 %v5754
    %v6101 = vunpack.c.h.b16 %v5754
    %v6102 = vunpack.c.l.b16 %v5755
    %v6103 = vunpack.c.h.b16 %v5755
    %v6104 = vunpack.c.l.b16 %v5756
    %v6105 = vunpack.c.h.b16 %v5756
    %v6106 = vunpack.c.l.b16 %v5757
    %v6107 = vunpack.c.h.b16 %v5757
    %v6108 = vunpack.c.l.b16 %v5758
    %v6109 = vunpack.c.h.b16 %v5758
    %v6110 = vunpack.c.l.b16 %v5759
    %v6111 = vunpack.c.h.b16 %v5759
    %v6112 = vunpack.c.l.b16 %v5760
    %v6113 = vunpack.c.h.b16 %v5760
    %v6114 = vunpack.c.l.b16 %v5761
    %v6115 = vunpack.c.h.b16 %v5761
    %v6116 = vunpack.c.l.b16 %v5762
    %v6117 = vunpack.c.h.b16 %v5762
    %v6118 = vunpack.c.l.b16 %v5763
    %v6119 = vunpack.c.h.b16 %v5763
    %v6120 = vunpack.c.l.b16 %v5764
    %v6121 = vunpack.c.h.b16 %v5764
    %v6122 = vunpack.c.l.b16 %v5765
    %v6123 = vunpack.c.h.b16 %v5765
    %v6124 = vunpack.c.l.b16 %v5766
    %v6125 = vunpack.c.h.b16 %v5766
    %v6126 = vunpack.c.l.b16 %v5767
    %v6127 = vunpack.c.h.b16 %v5767
    %v6128 = vunpack.c.l.b16 %v5768
    %v6129 = vunpack.c.h.b16 %v5768
    %v6130 = vunpack.c.l.b16 %v5769
    %v6131 = vunpack.c.h.b16 %v5769
    %v6132 = vunpack.c.l.b16 %v5770
    %v6133 = vunpack.c.h.b16 %v5770
    %v6134 = vunpack.c.l.b16 %v5771
    %v6135 = vunpack.c.h.b16 %v5771
    %v6136 = vunpack.c.l.b16 %v5772
    %v6137 = vunpack.c.h.b16 %v5772
    %v6138 = vunpack.c.l.b16 %v5773
    %v6139 = vunpack.c.h.b16 %v5773
    %v6140 = vunpack.c.l.b16 %v5774
    %v6141 = vunpack.c.h.b16 %v5774
    %v6142 = vunpack.c.l.b16 %v5775
    %v6143 = vunpack.c.h.b16 %v5775
    %v6144 = vunpack.c.l.b16 %v5776
    %v6145 = vunpack.c.h.b16 %v5776
    %v6146 = vunpack.c.l.b16 %v5777
    %v6147 = vunpack.c.h.b16 %v5777
    %v6148 = vunpack.c.l.b16 %v5778
    %v6149 = vunpack.c.h.b16 %v5778
    %v6150 = vunpack.c.l.b16 %v5779
    %v6151 = vunpack.c.h.b16 %v5779
    %v6152 = vunpack.c.l.b16 %v5780
    %v6153 = vunpack.c.h.b16 %v5780
    %v6154 = vunpack.c.l.b16 %v5781
    %v6155 = vunpack.c.h.b16 %v5781
    %v6156 = vunpack.c.l.b16 %v5782
    %v6157 = vunpack.c.h.b16 %v5782
    %v6158 = vunpack.c.l.b16 %v5783
    %v6159 = vunpack.c.h.b16 %v5783
    %v6160 = vunpack.c.l.b16 %v5784
    %v6161 = vunpack.c.h.b16 %v5784
    %v6162 = vunpack.c.l.b16 %v5785
    %v6163 = vunpack.c.h.b16 %v5785
    %v6164 = vunpack.c.l.b16 %v5786
    %v6165 = vunpack.c.h.b16 %v5786
    %v6166 = vunpack.c.l.b16 %v5787
    %v6167 = vunpack.c.h.b16 %v5787
    %v6168 = vunpack.c.l.b16 %v5788
    %v6169 = vunpack.c.h.b16 %v5788
    %v6170 = vunpack.c.l.b16 %v5789
    %v6171 = vunpack.c.h.b16 %v5789
    %v6172 = vunpack.c.l.b16 %v5790
    %v6173 = vunpack.c.h.b16 %v5790
    %v6174 = vunpack.c.l.b16 %v5791
    %v6175 = vunpack.c.h.b16 %v5791
    %v6176 = vunpack.c.l.b16 %v5792
    %v6177 = vunpack.c.h.b16 %v5792
    %v6178 = vunpack.c.l.b16 %v5793
    %v6179 = vunpack.c.h.b16 %v5793
    %v6180 = vunpack.c.l.b16 %v5794
    %v6181 = vunpack.c.h.b16 %v5794
    %v6182 = vunpack.c.l.b16 %v5795
    %v6183 = vunpack.c.h.b16 %v5795
    %v6184 = vpack.c.b16 %v5932, %v5928
    %v6185 = vpack.c.b16 %v5933, %v5929
    %v6186 = vpack.c.b16 %v5934, %v5930
    %v6187 = vpack.c.b16 %v5935, %v5931
    %v6188 = vpack.c.b16 %v5940, %v5936
    %v6189 = vpack.c.b16 %v5941, %v5937
    %v6190 = vpack.c.b16 %v5942, %v5938
    %v6191 = vpack.c.b16 %v5943, %v5939
    %v6192 = vpack.c.b16 %v5948, %v5944
    %v6193 = vpack.c.b16 %v5949, %v5945
    %v6194 = vpack.c.b16 %v5950, %v5946
    %v6195 = vpack.c.b16 %v5951, %v5947
    %v6196 = vpack.c.b16 %v5956, %v5952
    %v6197 = vpack.c.b16 %v5957, %v5953
    %v6198 = vpack.c.b16 %v5958, %v5954
    %v6199 = vpack.c.b16 %v5959, %v5955
    %v6200 = vpack.c.b16 %v5964, %v5960
    %v6201 = vpack.c.b16 %v5965, %v5961
    %v6202 = vpack.c.b16 %v5966, %v5962
    %v6203 = vpack.c.b16 %v5967, %v5963
    %v6204 = vpack.c.b16 %v5972, %v5968
    %v6205 = vpack.c.b16 %v5973, %v5969
    %v6206 = vpack.c.b16 %v5974, %v5970
    %v6207 = vpack.c.b16 %v5975, %v5971
    %v6208 = vpack.c.b16 %v5980, %v5976
    %v6209 = vpack.c.b16 %v5981, %v5977
    %v6210 = vpack.c.b16 %v5982, %v5978
    %v6211 = vpack.c.b16 %v5983, %v5979
    %v6212 = vpack.c.b16 %v5988, %v5984
    %v6213 = vpack.c.b16 %v5989, %v5985
    %v6214 = vpack.c.b16 %v5990, %v5986
    %v6215 = vpack.c.b16 %v5991, %v5987
    %v6216 = vpack.c.b16 %v5996, %v5992
    %v6217 = vpack.c.b16 %v5997, %v5993
    %v6218 = vpack.c.b16 %v5998, %v5994
    %v6219 = vpack.c.b16 %v5999, %v5995
    %v6220 = vpack.c.b16 %v6004, %v6000
    %v6221 = vpack.c.b16 %v6005, %v6001
    %v6222 = vpack.c.b16 %v6006, %v6002
    %v6223 = vpack.c.b16 %v6007, %v6003
    %v6224 = vpack.c.b16 %v6012, %v6008
    %v6225 = vpack.c.b16 %v6013, %v6009
    %v6226 = vpack.c.b16 %v6014, %v6010
    %v6227 = vpack.c.b16 %v6015, %v6011
    %v6228 = vpack.c.b16 %v6020, %v6016
    %v6229 = vpack.c.b16 %v6021, %v6017
    %v6230 = vpack.c.b16 %v6022, %v6018
    %v6231 = vpack.c.b16 %v6023, %v6019
    %v6232 = vpack.c.b16 %v6028, %v6024
    %v6233 = vpack.c.b16 %v6029, %v6025
    %v6234 = vpack.c.b16 %v6030, %v6026
    %v6235 = vpack.c.b16 %v6031, %v6027
    %v6236 = vpack.c.b16 %v6036, %v6032
    %v6237 = vpack.c.b16 %v6037, %v6033
    %v6238 = vpack.c.b16 %v6038, %v6034
    %v6239 = vpack.c.b16 %v6039, %v6035
    %v6240 = vpack.c.b16 %v6044, %v6040
    %v6241 = vpack.c.b16 %v6045, %v6041
    %v6242 = vpack.c.b16 %v6046, %v6042
    %v6243 = vpack.c.b16 %v6047, %v6043
    %v6244 = vpack.c.b16 %v6052, %v6048
    %v6245 = vpack.c.b16 %v6053, %v6049
    %v6246 = vpack.c.b16 %v6054, %v6050
    %v6247 = vpack.c.b16 %v6055, %v6051
    %v6248 = vpack.c.b16 %v6060, %v6056
    %v6249 = vpack.c.b16 %v6061, %v6057
    %v6250 = vpack.c.b16 %v6062, %v6058
    %v6251 = vpack.c.b16 %v6063, %v6059
    %v6252 = vpack.c.b16 %v6068, %v6064
    %v6253 = vpack.c.b16 %v6069, %v6065
    %v6254 = vpack.c.b16 %v6070, %v6066
    %v6255 = vpack.c.b16 %v6071, %v6067
    %v6256 = vpack.c.b16 %v6076, %v6072
    %v6257 = vpack.c.b16 %v6077, %v6073
    %v6258 = vpack.c.b16 %v6078, %v6074
    %v6259 = vpack.c.b16 %v6079, %v6075
    %v6260 = vpack.c.b16 %v6084, %v6080
    %v6261 = vpack.c.b16 %v6085, %v6081
    %v6262 = vpack.c.b16 %v6086, %v6082
    %v6263 = vpack.c.b16 %v6087, %v6083
    %v6264 = vpack.c.b16 %v6092, %v6088
    %v6265 = vpack.c.b16 %v6093, %v6089
    %v6266 = vpack.c.b16 %v6094, %v6090
    %v6267 = vpack.c.b16 %v6095, %v6091
    %v6268 = vpack.c.b16 %v6100, %v6096
    %v6269 = vpack.c.b16 %v6101, %v6097
    %v6270 = vpack.c.b16 %v6102, %v6098
    %v6271 = vpack.c.b16 %v6103, %v6099
    %v6272 = vpack.c.b16 %v6108, %v6104
    %v6273 = vpack.c.b16 %v6109, %v6105
    %v6274 = vpack.c.b16 %v6110, %v6106
    %v6275 = vpack.c.b16 %v6111, %v6107
    %v6276 = vpack.c.b16 %v6116, %v6112
    %v6277 = vpack.c.b16 %v6117, %v6113
    %v6278 = vpack.c.b16 %v6118, %v6114
    %v6279 = vpack.c.b16 %v6119, %v6115
    %v6280 = vpack.c.b16 %v6124, %v6120
    %v6281 = vpack.c.b16 %v6125, %v6121
    %v6282 = vpack.c.b16 %v6126, %v6122
    %v6283 = vpack.c.b16 %v6127, %v6123
    %v6284 = vpack.c.b16 %v6132, %v6128
    %v6285 = vpack.c.b16 %v6133, %v6129
    %v6286 = vpack.c.b16 %v6134, %v6130
    %v6287 = vpack.c.b16 %v6135, %v6131
    %v6288 = vpack.c.b16 %v6140, %v6136
    %v6289 = vpack.c.b16 %v6141, %v6137
    %v6290 = vpack.c.b16 %v6142, %v6138
    %v6291 = vpack.c.b16 %v6143, %v6139
    %v6292 = vpack.c.b16 %v6148, %v6144
    %v6293 = vpack.c.b16 %v6149, %v6145
    %v6294 = vpack.c.b16 %v6150, %v6146
    %v6295 = vpack.c.b16 %v6151, %v6147
    %v6296 = vpack.c.b16 %v6156, %v6152
    %v6297 = vpack.c.b16 %v6157, %v6153
    %v6298 = vpack.c.b16 %v6158, %v6154
    %v6299 = vpack.c.b16 %v6159, %v6155
    %v6300 = vpack.c.b16 %v6164, %v6160
    %v6301 = vpack.c.b16 %v6165, %v6161
    %v6302 = vpack.c.b16 %v6166, %v6162
    %v6303 = vpack.c.b16 %v6167, %v6163
    %v6304 = vpack.c.b16 %v6172, %v6168
    %v6305 = vpack.c.b16 %v6173, %v6169
    %v6306 = vpack.c.b16 %v6174, %v6170
    %v6307 = vpack.c.b16 %v6175, %v6171
    %v6308 = vpack.c.b16 %v6180, %v6176
    %v6309 = vpack.c.b16 %v6181, %v6177
    %v6310 = vpack.c.b16 %v6182, %v6178
    %v6311 = vpack.c.b16 %v6183, %v6179
    %6440 = vmatpush.bf16.msra.mxu0 %v6212
    %6441 = vmatpush.bf16.msra.mxu0 %v6208
    %6442 = vmatpush.bf16.msra.mxu0 %v6204
    %6443 = vmatpush.bf16.msra.mxu0 %v6200
    %6444 = vmatpush.bf16.msra.mxu0 %v6196
    %6445 = vmatpush.bf16.msra.mxu0 %v6192
    %6446 = vmatpush.bf16.msra.mxu0 %v6188
    %6447 = vmatpush.bf16.msra.mxu0 %v6184
    %6448 = vmatmul.bf16.gmra.mxu0 %v5796
    %v6449 = vpop.f32.mrf.mxu0
    %v6450 = vadd.f32 %v4678, %v6449
    %v6451 = vpop.f32.mrf.mxu0
    %6452 = vdwg.mxu0
    %6453 = vmatpush.bf16.msra.mxu0 %v6244
    %6454 = vmatpush.bf16.msra.mxu0 %v6240
    %6455 = vmatpush.bf16.msra.mxu0 %v6236
    %6456 = vmatpush.bf16.msra.mxu0 %v6232
    %6457 = vmatpush.bf16.msra.mxu0 %v6228
    %6458 = vmatpush.bf16.msra.mxu0 %v6224
    %6459 = vmatpush.bf16.msra.mxu0 %v6220
    %6460 = vmatpush.bf16.msra.mxu0 %v6216
    %6461 = vmatmul.bf16.gmra.mxu0 %v5797
    %v6462 = vpop.f32.mrf.mxu0
    %v6463 = vadd.f32 %v6450, %v6462
    %v6464 = vpop.f32.mrf.mxu0
    %6465 = vdwg.mxu0
    %6466 = vmatpush.bf16.msra.mxu0 %v6276
    %6467 = vmatpush.bf16.msra.mxu0 %v6272
    %6468 = vmatpush.bf16.msra.mxu0 %v6268
    %6469 = vmatpush.bf16.msra.mxu0 %v6264
    %6470 = vmatpush.bf16.msra.mxu0 %v6260
    %6471 = vmatpush.bf16.msra.mxu0 %v6256
    %6472 = vmatpush.bf16.msra.mxu0 %v6252
    %6473 = vmatpush.bf16.msra.mxu0 %v6248
    %6474 = vmatmul.bf16.gmra.mxu0 %v5798
    %v6475 = vpop.f32.mrf.mxu0
    %v6476 = vadd.f32 %v6463, %v6475
    %v6477 = vpop.f32.mrf.mxu0
    %6478 = vdwg.mxu0
    %6479 = vmatpush.bf16.msra.mxu0 %v6308
    %6480 = vmatpush.bf16.msra.mxu0 %v6304
    %6481 = vmatpush.bf16.msra.mxu0 %v6300
    %6482 = vmatpush.bf16.msra.mxu0 %v6296
    %6483 = vmatpush.bf16.msra.mxu0 %v6292
    %6484 = vmatpush.bf16.msra.mxu0 %v6288
    %6485 = vmatpush.bf16.msra.mxu0 %v6284
    %6486 = vmatpush.bf16.msra.mxu0 %v6280
    %6487 = vmatmul.bf16.gmra.mxu0 %v5799
    %v6488 = vpop.f32.mrf.mxu0
    %v6489 = vadd.f32 %v6476, %v6488
    %v6490 = vpop.f32.mrf.mxu0
    %6491 = vdwg.mxu0
    %6492 = vmatpush.bf16.msra.mxu0 %v6213
    %6493 = vmatpush.bf16.msra.mxu0 %v6209
    %6494 = vmatpush.bf16.msra.mxu0 %v6205
    %6495 = vmatpush.bf16.msra.mxu0 %v6201
    %6496 = vmatpush.bf16.msra.mxu0 %v6197
    %6497 = vmatpush.bf16.msra.mxu0 %v6193
    %6498 = vmatpush.bf16.msra.mxu0 %v6189
    %6499 = vmatpush.bf16.msra.mxu0 %v6185
    %6500 = vmatmul.bf16.gmra.mxu0 %v5796
    %v6501 = vpop.f32.mrf.mxu0
    %v6502 = vadd.f32 %v4679, %v6501
    %v6503 = vpop.f32.mrf.mxu0
    %6504 = vdwg.mxu0
    %6505 = vmatpush.bf16.msra.mxu0 %v6245
    %6506 = vmatpush.bf16.msra.mxu0 %v6241
    %6507 = vmatpush.bf16.msra.mxu0 %v6237
    %6508 = vmatpush.bf16.msra.mxu0 %v6233
    %6509 = vmatpush.bf16.msra.mxu0 %v6229
    %6510 = vmatpush.bf16.msra.mxu0 %v6225
    %6511 = vmatpush.bf16.msra.mxu0 %v6221
    %6512 = vmatpush.bf16.msra.mxu0 %v6217
    %6513 = vmatmul.bf16.gmra.mxu0 %v5797
    %v6514 = vpop.f32.mrf.mxu0
    %v6515 = vadd.f32 %v6502, %v6514
    %v6516 = vpop.f32.mrf.mxu0
    %6517 = vdwg.mxu0
    %6518 = vmatpush.bf16.msra.mxu0 %v6277
    %6519 = vmatpush.bf16.msra.mxu0 %v6273
    %6520 = vmatpush.bf16.msra.mxu0 %v6269
    %6521 = vmatpush.bf16.msra.mxu0 %v6265
    %6522 = vmatpush.bf16.msra.mxu0 %v6261
    %6523 = vmatpush.bf16.msra.mxu0 %v6257
    %6524 = vmatpush.bf16.msra.mxu0 %v6253
    %6525 = vmatpush.bf16.msra.mxu0 %v6249
    %6526 = vmatmul.bf16.gmra.mxu0 %v5798
    %v6527 = vpop.f32.mrf.mxu0
    %v6528 = vadd.f32 %v6515, %v6527
    %v6529 = vpop.f32.mrf.mxu0
    %6530 = vdwg.mxu0
    %6531 = vmatpush.bf16.msra.mxu0 %v6309
    %6532 = vmatpush.bf16.msra.mxu0 %v6305
    %6533 = vmatpush.bf16.msra.mxu0 %v6301
    %6534 = vmatpush.bf16.msra.mxu0 %v6297
    %6535 = vmatpush.bf16.msra.mxu0 %v6293
    %6536 = vmatpush.bf16.msra.mxu0 %v6289
    %6537 = vmatpush.bf16.msra.mxu0 %v6285
    %6538 = vmatpush.bf16.msra.mxu0 %v6281
    %6539 = vmatmul.bf16.gmra.mxu0 %v5799
    %v6540 = vpop.f32.mrf.mxu0
    %v6541 = vadd.f32 %v6528, %v6540
    %v6542 = vpop.f32.mrf.mxu0
    %6543 = vdwg.mxu0
    %6544 = vmatpush.bf16.msra.mxu0 %v6214
    %6545 = vmatpush.bf16.msra.mxu0 %v6210
    %6546 = vmatpush.bf16.msra.mxu0 %v6206
    %6547 = vmatpush.bf16.msra.mxu0 %v6202
    %6548 = vmatpush.bf16.msra.mxu0 %v6198
    %6549 = vmatpush.bf16.msra.mxu0 %v6194
    %6550 = vmatpush.bf16.msra.mxu0 %v6190
    %6551 = vmatpush.bf16.msra.mxu0 %v6186
    %6552 = vmatmul.bf16.gmra.mxu0 %v5796
    %v6553 = vpop.f32.mrf.mxu0
    %v6554 = vadd.f32 %v4680, %v6553
    %v6555 = vpop.f32.mrf.mxu0
    %6556 = vdwg.mxu0
    %6557 = vmatpush.bf16.msra.mxu0 %v6246
    %6558 = vmatpush.bf16.msra.mxu0 %v6242
    %6559 = vmatpush.bf16.msra.mxu0 %v6238
    %6560 = vmatpush.bf16.msra.mxu0 %v6234
    %6561 = vmatpush.bf16.msra.mxu0 %v6230
    %6562 = vmatpush.bf16.msra.mxu0 %v6226
    %6563 = vmatpush.bf16.msra.mxu0 %v6222
    %6564 = vmatpush.bf16.msra.mxu0 %v6218
    %6565 = vmatmul.bf16.gmra.mxu0 %v5797
    %v6566 = vpop.f32.mrf.mxu0
    %v6567 = vadd.f32 %v6554, %v6566
    %v6568 = vpop.f32.mrf.mxu0
    %6569 = vdwg.mxu0
    %6570 = vmatpush.bf16.msra.mxu0 %v6278
    %6571 = vmatpush.bf16.msra.mxu0 %v6274
    %6572 = vmatpush.bf16.msra.mxu0 %v6270
    %6573 = vmatpush.bf16.msra.mxu0 %v6266
    %6574 = vmatpush.bf16.msra.mxu0 %v6262
    %6575 = vmatpush.bf16.msra.mxu0 %v6258
    %6576 = vmatpush.bf16.msra.mxu0 %v6254
    %6577 = vmatpush.bf16.msra.mxu0 %v6250
    %6578 = vmatmul.bf16.gmra.mxu0 %v5798
    %v6579 = vpop.f32.mrf.mxu0
    %v6580 = vadd.f32 %v6567, %v6579
    %v6581 = vpop.f32.mrf.mxu0
    %6582 = vdwg.mxu0
    %6583 = vmatpush.bf16.msra.mxu0 %v6310
    %6584 = vmatpush.bf16.msra.mxu0 %v6306
    %6585 = vmatpush.bf16.msra.mxu0 %v6302
    %6586 = vmatpush.bf16.msra.mxu0 %v6298
    %6587 = vmatpush.bf16.msra.mxu0 %v6294
    %6588 = vmatpush.bf16.msra.mxu0 %v6290
    %6589 = vmatpush.bf16.msra.mxu0 %v6286
    %6590 = vmatpush.bf16.msra.mxu0 %v6282
    %6591 = vmatmul.bf16.gmra.mxu0 %v5799
    %v6592 = vpop.f32.mrf.mxu0
    %v6593 = vadd.f32 %v6580, %v6592
    %v6594 = vpop.f32.mrf.mxu0
    %6595 = vdwg.mxu0
    %6596 = vmatpush.bf16.msra.mxu0 %v6215
    %6597 = vmatpush.bf16.msra.mxu0 %v6211
    %6598 = vmatpush.bf16.msra.mxu0 %v6207
    %6599 = vmatpush.bf16.msra.mxu0 %v6203
    %6600 = vmatpush.bf16.msra.mxu0 %v6199
    %6601 = vmatpush.bf16.msra.mxu0 %v6195
    %6602 = vmatpush.bf16.msra.mxu0 %v6191
    %6603 = vmatpush.bf16.msra.mxu0 %v6187
    %6604 = vmatmul.bf16.gmra.mxu0 %v5796
    %v6605 = vpop.f32.mrf.mxu0
    %v6606 = vadd.f32 %v4681, %v6605
    %v6607 = vpop.f32.mrf.mxu0
    %6608 = vdwg.mxu0
    %6609 = vmatpush.bf16.msra.mxu0 %v6247
    %6610 = vmatpush.bf16.msra.mxu0 %v6243
    %6611 = vmatpush.bf16.msra.mxu0 %v6239
    %6612 = vmatpush.bf16.msra.mxu0 %v6235
    %6613 = vmatpush.bf16.msra.mxu0 %v6231
    %6614 = vmatpush.bf16.msra.mxu0 %v6227
    %6615 = vmatpush.bf16.msra.mxu0 %v6223
    %6616 = vmatpush.bf16.msra.mxu0 %v6219
    %6617 = vmatmul.bf16.gmra.mxu0 %v5797
    %v6618 = vpop.f32.mrf.mxu0
    %v6619 = vadd.f32 %v6606, %v6618
    %v6620 = vpop.f32.mrf.mxu0
    %6621 = vdwg.mxu0
    %6622 = vmatpush.bf16.msra.mxu0 %v6279
    %6623 = vmatpush.bf16.msra.mxu0 %v6275
    %6624 = vmatpush.bf16.msra.mxu0 %v6271
    %6625 = vmatpush.bf16.msra.mxu0 %v6267
    %6626 = vmatpush.bf16.msra.mxu0 %v6263
    %6627 = vmatpush.bf16.msra.mxu0 %v6259
    %6628 = vmatpush.bf16.msra.mxu0 %v6255
    %6629 = vmatpush.bf16.msra.mxu0 %v6251
    %6630 = vmatmul.bf16.gmra.mxu0 %v5798
    %v6631 = vpop.f32.mrf.mxu0
    %v6632 = vadd.f32 %v6619, %v6631
    %v6633 = vpop.f32.mrf.mxu0
    %6634 = vdwg.mxu0
    %6635 = vmatpush.bf16.msra.mxu0 %v6311
    %6636 = vmatpush.bf16.msra.mxu0 %v6307
    %6637 = vmatpush.bf16.msra.mxu0 %v6303
    %6638 = vmatpush.bf16.msra.mxu0 %v6299
    %6639 = vmatpush.bf16.msra.mxu0 %v6295
    %6640 = vmatpush.bf16.msra.mxu0 %v6291
    %6641 = vmatpush.bf16.msra.mxu0 %v6287
    %6642 = vmatpush.bf16.msra.mxu0 %v6283
    %6643 = vmatmul.bf16.gmra.mxu0 %v5799
    %v6644 = vpop.f32.mrf.mxu0
    %v6645 = vadd.f32 %v6632, %v6644
    %v6646 = vpop.f32.mrf.mxu0
    %6647 = vdwg.mxu0
    %v6648 = vmax.f32 %v6489, 0.0
    %v6649 = vmax.f32 %v6541, 0.0
    %v6650 = vmax.f32 %v6593, 0.0
    %v6651 = vmax.f32 %v6645, 0.0
    %v6652 = vld [vmem:[%s5] sm:$0xff]
    %v6653 = vld [vmem:[%s5 + $0x8] sm:$0xff]
    %v6654 = vld [vmem:[%s5 + $0x10] sm:$0xff]
    %v6655 = vld [vmem:[%s5 + $0x18] sm:$0xff]
    %v6656 = vld [vmem:[%s5 + $0x20] sm:$0xff]
    %v6657 = vld [vmem:[%s5 + $0x28] sm:$0xff]
    %v6658 = vld [vmem:[%s5 + $0x30] sm:$0xff]
    %v6659 = vld [vmem:[%s5 + $0x38] sm:$0xff]
    %v6660 = vld [vmem:[%s6] sm:$0xff]
    %v6661 = vld [vmem:[%s6 + $0x8] sm:$0xff]
    %v6662 = vld [vmem:[%s6 + $0x10] sm:$0xff]
    %v6663 = vld [vmem:[%s6 + $0x18] sm:$0xff]
    %v6664 = vld [vmem:[%s6 + $0x20] sm:$0xff]
    %v6665 = vld [vmem:[%s6 + $0x28] sm:$0xff]
    %v6666 = vld [vmem:[%s6 + $0x30] sm:$0xff]
    %v6667 = vld [vmem:[%s6 + $0x38] sm:$0xff]
    %v6668 = vld [vmem:[%s6 + $0x40] sm:$0xff]
    %v6669 = vld [vmem:[%s6 + $0x48] sm:$0xff]
    %v6670 = vld [vmem:[%s6 + $0x50] sm:$0xff]
    %v6671 = vld [vmem:[%s6 + $0x58] sm:$0xff]
    %v6672 = vld [vmem:[%s6 + $0x60] sm:$0xff]
    %v6673 = vld [vmem:[%s6 + $0x68] sm:$0xff]
    %v6674 = vld [vmem:[%s6 + $0x70] sm:$0xff]
    %v6675 = vld [vmem:[%s6 + $0x78] sm:$0xff]
    %v6676 = vld [vmem:[%s6 + $0x80] sm:$0xff]
    %v6677 = vld [vmem:[%s6 + $0x88] sm:$0xff]
    %v6678 = vld [vmem:[%s6 + $0x90] sm:$0xff]
    %v6679 = vld [vmem:[%s6 + $0x98] sm:$0xff]
    %v6680 = vld [vmem:[%s6 + $0xa0] sm:$0xff]
    %v6681 = vld [vmem:[%s6 + $0xa8] sm:$0xff]
    %v6682 = vld [vmem:[%s6 + $0xb0] sm:$0xff]
    %v6683 = vld [vmem:[%s6 + $0xb8] sm:$0xff]
    %v6684 = vld [vmem:[%s6 + $0xc0] sm:$0xff]
    %v6685 = vld [vmem:[%s6 + $0xc8] sm:$0xff]
    %v6686 = vld [vmem:[%s6 + $0xd0] sm:$0xff]
    %v6687 = vld [vmem:[%s6 + $0xd8] sm:$0xff]
    %v6688 = vld [vmem:[%s6 + $0xe0] sm:$0xff]
    %v6689 = vld [vmem:[%s6 + $0xe8] sm:$0xff]
    %v6690 = vld [vmem:[%s6 + $0xf0] sm:$0xff]
    %v6691 = vld [vmem:[%s6 + $0xf8] sm:$0xff]
    %v6692 = vld [vmem:[%s6 + $0x100] sm:$0xff]
    %v6693 = vld [vmem:[%s6 + $0x108] sm:$0xff]
    %v6694 = vld [vmem:[%s6 + $0x110] sm:$0xff]
    %v6695 = vld [vmem:[%s6 + $0x118] sm:$0xff]
    %v6696 = vld [vmem:[%s6 + $0x120] sm:$0xff]
    %v6697 = vld [vmem:[%s6 + $0x128] sm:$0xff]
    %v6698 = vld [vmem:[%s6 + $0x130] sm:$0xff]
    %v6699 = vld [vmem:[%s6 + $0x138] sm:$0xff]
    %v6700 = vld [vmem:[%s6 + $0x140] sm:$0xff]
    %v6701 = vld [vmem:[%s6 + $0x148] sm:$0xff]
    %v6702 = vld [vmem:[%s6 + $0x150] sm:$0xff]
    %v6703 = vld [vmem:[%s6 + $0x158] sm:$0xff]
    %v6704 = vld [vmem:[%s6 + $0x160] sm:$0xff]
    %v6705 = vld [vmem:[%s6 + $0x168] sm:$0xff]
    %v6706 = vld [vmem:[%s6 + $0x170] sm:$0xff]
    %v6707 = vld [vmem:[%s6 + $0x178] sm:$0xff]
    %v6708 = vld [vmem:[%s6 + $0x180] sm:$0xff]
    %v6709 = vld [vmem:[%s6 + $0x188] sm:$0xff]
    %v6710 = vld [vmem:[%s6 + $0x190] sm:$0xff]
    %v6711 = vld [vmem:[%s6 + $0x198] sm:$0xff]
    %v6712 = vld [vmem:[%s6 + $0x1a0] sm:$0xff]
    %v6713 = vld [vmem:[%s6 + $0x1a8] sm:$0xff]
    %v6714 = vld [vmem:[%s6 + $0x1b0] sm:$0xff]
    %v6715 = vld [vmem:[%s6 + $0x1b8] sm:$0xff]
    %v6716 = vld [vmem:[%s6 + $0x1c0] sm:$0xff]
    %v6717 = vld [vmem:[%s6 + $0x1c8] sm:$0xff]
    %v6718 = vld [vmem:[%s6 + $0x1d0] sm:$0xff]
    %v6719 = vld [vmem:[%s6 + $0x1d8] sm:$0xff]
    %v6720 = vld [vmem:[%s6 + $0x1e0] sm:$0xff]
    %v6721 = vld [vmem:[%s6 + $0x1e8] sm:$0xff]
    %v6722 = vld [vmem:[%s6 + $0x1f0] sm:$0xff]
    %v6723 = vld [vmem:[%s6 + $0x1f8] sm:$0xff]
    %6724 = vmatpush.msra.mxu0 %v6675
    %6725 = vmatpush.msra.mxu0 %v6674
    %6726 = vmatpush.msra.mxu0 %v6673
    %6727 = vmatpush.msra.mxu0 %v6672
    %6728 = vmatpush.msra.mxu0 %v6671
    %6729 = vmatpush.msra.mxu0 %v6670
    %6730 = vmatpush.msra.mxu0 %v6669
    %6731 = vmatpush.msra.mxu0 %v6668
    %6732 = vmatpush.msra.mxu0 %v6667
    %6733 = vmatpush.msra.mxu0 %v6666
    %6734 = vmatpush.msra.mxu0 %v6665
    %6735 = vmatpush.msra.mxu0 %v6664
    %6736 = vmatpush.msra.mxu0 %v6663
    %6737 = vmatpush.msra.mxu0 %v6662
    %6738 = vmatpush.msra.mxu0 %v6661
    %6739 = vmatpush.msra.mxu0 %v6660
    %6740 = vmatmul.f32.gmra.mxu0 %v6648
    %v6741 = vpop.f32.mrf.mxu0
    %v6742 = vadd.f32 0.0, %v6741
    %6743 = vdwg.mxu0
    %6744 = vmatpush.msra.mxu0 %v6691
    %6745 = vmatpush.msra.mxu0 %v6690
    %6746 = vmatpush.msra.mxu0 %v6689
    %6747 = vmatpush.msra.mxu0 %v6688
    %6748 = vmatpush.msra.mxu0 %v6687
    %6749 = vmatpush.msra.mxu0 %v6686
    %6750 = vmatpush.msra.mxu0 %v6685
    %6751 = vmatpush.msra.mxu0 %v6684
    %6752 = vmatpush.msra.mxu0 %v6683
    %6753 = vmatpush.msra.mxu0 %v6682
    %6754 = vmatpush.msra.mxu0 %v6681
    %6755 = vmatpush.msra.mxu0 %v6680
    %6756 = vmatpush.msra.mxu0 %v6679
    %6757 = vmatpush.msra.mxu0 %v6678
    %6758 = vmatpush.msra.mxu0 %v6677
    %6759 = vmatpush.msra.mxu0 %v6676
    %6760 = vmatmul.f32.gmra.mxu0 %v6649
    %v6761 = vpop.f32.mrf.mxu0
    %v6762 = vadd.f32 %v6742, %v6761
    %6763 = vdwg.mxu0
    %6764 = vmatpush.msra.mxu0 %v6707
    %6765 = vmatpush.msra.mxu0 %v6706
    %6766 = vmatpush.msra.mxu0 %v6705
    %6767 = vmatpush.msra.mxu0 %v6704
    %6768 = vmatpush.msra.mxu0 %v6703
    %6769 = vmatpush.msra.mxu0 %v6702
    %6770 = vmatpush.msra.mxu0 %v6701
    %6771 = vmatpush.msra.mxu0 %v6700
    %6772 = vmatpush.msra.mxu0 %v6699
    %6773 = vmatpush.msra.mxu0 %v6698
    %6774 = vmatpush.msra.mxu0 %v6697
    %6775 = vmatpush.msra.mxu0 %v6696
    %6776 = vmatpush.msra.mxu0 %v6695
    %6777 = vmatpush.msra.mxu0 %v6694
    %6778 = vmatpush.msra.mxu0 %v6693
    %6779 = vmatpush.msra.mxu0 %v6692
    %6780 = vmatmul.f32.gmra.mxu0 %v6650
    %v6781 = vpop.f32.mrf.mxu0
    %v6782 = vadd.f32 %v6762, %v6781
    %6783 = vdwg.mxu0
    %6784 = vmatpush.msra.mxu0 %v6723
    %6785 = vmatpush.msra.mxu0 %v6722
    %6786 = vmatpush.msra.mxu0 %v6721
    %6787 = vmatpush.msra.mxu0 %v6720
    %6788 = vmatpush.msra.mxu0 %v6719
    %6789 = vmatpush.msra.mxu0 %v6718
    %6790 = vmatpush.msra.mxu0 %v6717
    %6791 = vmatpush.msra.mxu0 %v6716
    %6792 = vmatpush.msra.mxu0 %v6715
    %6793 = vmatpush.msra.mxu0 %v6714
    %6794 = vmatpush.msra.mxu0 %v6713
    %6795 = vmatpush.msra.mxu0 %v6712
    %6796 = vmatpush.msra.mxu0 %v6711
    %6797 = vmatpush.msra.mxu0 %v6710
    %6798 = vmatpush.msra.mxu0 %v6709
    %6799 = vmatpush.msra.mxu0 %v6708
    %6800 = vmatmul.f32.gmra.mxu0 %v6651
    %v6801 = vpop.f32.mrf.mxu0
    %v6802 = vadd.f32 %v6782, %v6801
    %6803 = vdwg.mxu0
    %v6805 = vsel %vm350, %v1119, 0
    %6807 = vmatpush.msra.mxu0 0.0
    %6808 = vmatpush.msra.mxu0 0.0
    %6809 = vmatpush.msra.mxu0 0.0
    %6810 = vmatpush.msra.mxu0 0.0
    %6811 = vmatpush.msra.mxu0 0.0
    %6812 = vmatpush.msra.mxu0 0.0
    %6813 = vmatpush.msra.mxu0 0.0
    %6814 = vmatpush.msra.mxu0 0.0
    %6815 = vmatpush.msra.mxu0 %v6659
    %6816 = vmatpush.msra.mxu0 %v6658
    %6817 = vmatpush.msra.mxu0 %v6657
    %6818 = vmatpush.msra.mxu0 %v6656
    %6819 = vmatpush.msra.mxu0 %v6655
    %6820 = vmatpush.msra.mxu0 %v6654
    %6821 = vmatpush.msra.mxu0 %v6653
    %6822 = vmatpush.msra.mxu0 %v6652
    %6823 = vmatmul.f32.gmra.mxu0 %v6805
    %v6824 = vpop.f32.mrf.mxu0
    %v6825 = vadd.f32 %v6802, %v6824
    %6826 = vdwg.mxu0
    %v6827 = vld [vmem:[#allocation19] sm:$0x1]
    %v6829 = vperm.slane %v6827, 0
    %v6831 = vadd.f32 %v6825, %v6829
    %vm6832 = vcmask 9216
    %6833 = vst.msk [vmem:[#allocation21] sm:$0x3] %vm6832, %v6831
    // Predicated region
    $region86: #{tpu_custom_call.1} parent=1 // pred_check
      _
    $region87: #{tpu_custom_call.1} parent=1 // pred_check_branch
      %6835 = sbr.rel (0) target = $region89
    $region88: #{tpu_custom_call.1} parent=1 // pred_region
      %6837 = vsyncadd [#allocation12], 0
      %s6839 = sshll.u32 [#allocation21], 4
      %s6840 = int_to_ptr.vmem [resolvable:$true] %s6839
      %s6841 = sshll.u32 %s15, 4
      %s6842 = int_to_ptr.hbm [resolvable:$true] %s6841
      %6844 = dma.vmem_to_hbm [thread:$0]  %s6840, 32, %s6842, [#allocation12]
    $region89: #{tpu_custom_call.1} parent=1 // pred_fallthru
      _
    // Predicated region
    $region90: #{tpu_custom_call.1} parent=1 // pred_check
      _
    $region91: #{tpu_custom_call.1} parent=1 // pred_check_branch
      %6846 = sbr.rel (0) target = $region93
    $region92: #{tpu_custom_call.1} parent=1 // pred_region
      %6848 = dma.done [#allocation12], 32
    $region93: #{tpu_custom_call.1} parent=1 // pred_fallthru
      _
    %6849 = vsyncpa [#allocation11], 1
    %6850 = vsyncpa [#allocation14], 1
    %6851 = vsyncpa [#allocation17], 1
    %6852 = vsyncpa [#allocation20], 1
    %6853 = vsyncpa [#allocation12], 1
  %6854 = vsyncmov [#allocation9]
  %s6855 = vpop.sfrf %6854
  %p6856 = scmp.eq.s32.totalorder %s6855, 0
  %p6857 = pneg %p6856
  %6859 = shalt.err (%p6857)
  %s6860 = scalar_lea.sflag [#allocation9], 1
  %6861 = vsyncmov %s6860
  %s6862 = vpop.sfrf %6861
  %p6863 = scmp.eq.s32.totalorder %s6862, 0
  %p6864 = pneg %p6863
  %6866 = shalt.err (%p6864)
  %s6867 = scalar_lea.sflag [#allocation9], 2
  %6868 = vsyncmov %s6867
  %s6869 = vpop.sfrf %6868
  %p6870 = scmp.eq.s32.totalorder %s6869, 0
  %p6871 = pneg %p6870
  %6873 = shalt.err (%p6871)
  %s6874 = scalar_lea.sflag [#allocation9], 3
  %6875 = vsyncmov %s6874
  %s6876 = vpop.sfrf %6875
  %p6877 = scmp.eq.s32.totalorder %s6876, 0
  %p6878 = pneg %p6877
  %6880 = shalt.err (%p6878)
  %s6881 = scalar_lea.sflag [#allocation9], 4
  %6882 = vsyncmov %s6881
  %s6883 = vpop.sfrf %6882
  %p6884 = scmp.eq.s32.totalorder %s6883, 0
  %p6885 = pneg %p6884
  %6887 = shalt.err (%p6885)
  %s6888 = scalar_lea.sflag [#allocation9], 5
  %6889 = vsyncmov %s6888
  %s6890 = vpop.sfrf %6889
  %p6891 = scmp.eq.s32.totalorder %s6890, 0
  %p6892 = pneg %p6891
  %6894 = shalt.err (%p6892)
  %s6895 = scalar_lea.sflag [#allocation9], 6
  %6896 = vsyncmov %s6895
  %s6897 = vpop.sfrf %6896
  %p6898 = scmp.eq.s32.totalorder %s6897, 0
  %p6899 = pneg %p6898
  %6901 = shalt.err (%p6899)

</llo_original>
